<compile_context>
chip_gen: v7x
topology: tpu7x:2x2x1
jax: 0.10.0
libtpu: 0.0.40
codegen_flags: <defaults>
</compile_context>

<pallas_src>
import jax
import jax.numpy as jnp
from jax.experimental import pallas as pl
from jax.experimental.pallas import tpu as pltpu

EPS = 1e-6

# (dw1_kernel, dw1_dil, dw2_kernel, dw2_dil, gate_kernel) per branch.
_BRANCH_GEOM = (
    (3, 1, 5, 2, 5),   # LKA3 branch, gated by X5
    (5, 1, 7, 3, 5),   # LKA5 branch, gated by X5
    (7, 1, 9, 4, 7),   # LKA7 branch, gated by X7
)
_BRANCH_KEYS = (
    ('lka3_dw1', 'lka3_dw2', 'lka3_pw', 'x5'),
    ('lka5_dw1', 'lka5_dw2', 'lka5_pw', 'x5'),
    ('lka7_dw1', 'lka7_dw2', 'lka7_pw', 'x7'),
)


def _const_spec(shape):
    """Whole-array VMEM block, same block every grid step."""
    nd = len(shape)
    return pl.BlockSpec(shape, lambda n, _nd=nd: (0,) * _nd)


def mlka_pallas(x, p):
    N, C, H, W = x.shape
    assert C % 3 == 0
    n3 = C // 3
    R, Rb = C * H, n3 * H          # slab rows total / per branch
    f32 = jnp.float32
    eyeH = jnp.eye(H, dtype=f32)

    def kron_rows(w):              # 1x1-conv weight (O, I) -> (O*H, I*H)
        return jnp.kron(w.astype(f32), eyeH)

    def rows(v):                   # per-channel (M,) -> per-slab-row (M*H, 1)
        return jnp.repeat(v.astype(f32), H)[:, None]

    def make_bands(w_flat, k, dil):
        """Block-diagonal band matrix per column offset of a depthwise conv.

        bands[i] @ slab = sum_kh w[c, kh, kw_i] * slab[c*H + h + kh*dil - pad]
        with zero padding in H already applied; only the W-axis shift (lane
        roll + border mask) is left for the kernel.
        """
        pad = (k // 2) * dil
        mats, dws = [], []
        for kw in range(k):
            dw = kw * dil - pad
            if dw <= -W or dw >= W:            # tap column fully outside
                continue
            B = jnp.zeros((Rb, Rb), f32)
            for kh in range(k):
                dh = kh * dil - pad
                if dh <= -H or dh >= H:        # tap row fully outside
                    continue
                B = B + jnp.kron(jnp.diag(w_flat[:, kh * k + kw].astype(f32)),
                                 jnp.eye(H, H, k=dh, dtype=f32))
            mats.append(B)
            dws.append(dw)
        return jnp.stack(mats), tuple(dws)

    # ---- wrapper-side weight folds: LN affine -> proj_first, scale -> proj_last
    pf_w_eff = p['pf_w'].astype(f32) * p['ln_w'].astype(f32)[None, :]
    pf_b_eff = p['pf_b'].astype(f32) + p['pf_w'].astype(f32) @ p['ln_b'].astype(f32)
    scale_rows = rows(p['scale'])

    operands = [kron_rows(pf_w_eff),                                   # (2R, R)
                rows(pf_b_eff),                                        # (2R, 1)
                rows(p['scale'].astype(f32) * p['pl_b'].astype(f32))]  # (R, 1)
    branch_dws = []
    for b, ((k1, d1, k2, d2, kx), (kd1, kd2, kpw, kxg)) in enumerate(
            zip(_BRANCH_GEOM, _BRANCH_KEYS)):
        b1, dws1 = make_bands(p[kd1 + '_w'], k1, d1)
        b2, dws2 = make_bands(p[kd2 + '_w'], k2, d2)
        bx, dwsx = make_bands(p[kxg + '_w'], kx, 1)
        kpl_b = scale_rows * kron_rows(p['pl_w'][:, b * n3:(b + 1) * n3])
        operands += [b1, rows(p[kd1 + '_b']),
                     b2, rows(p[kd2 + '_b']),
                     bx, rows(p[kxg + '_b']),
                     kron_rows(p[kpw + '_w']), rows(p[kpw + '_b']),
                     kpl_b]
        branch_dws.append((dws1, dws2, dwsx))

    inv_w = 1.0 / W

    def kernel(x_ref, *refs):
        o_ref = refs[-1]
        kpf, pfb, plb = refs[0], refs[1], refs[2]
        br = refs[3:-1]                       # 9 refs per branch

        xin = x_ref[0].astype(f32)            # (C*H, W) slab, row = (c, h)

        # LayerNorm over W per (c, h) row (two-pass); affine folded into kpf/pfb.
        mean = jnp.sum(xin, axis=-1, keepdims=True) * inv_w
        xc = xin - mean
        var = jnp.sum(xc * xc, axis=-1, keepdims=True) * inv_w
        xhat = xc * jax.lax.rsqrt(var + EPS)

        # proj_first: single (2*C*H, C*H) @ (C*H, W) MXU matmul.
        y = jnp.dot(kpf[...], xhat, preferred_element_type=f32) + pfb[...]
        a_all = y[:R]        # first chunk ("a" in the reference)
        g_all = y[R:]        # second chunk (gate)

        col = jax.lax.broadcasted_iota(jnp.int32, (Rb, W), 1)

        def dwconv(pln, band_ref, bias_ref, dws):
            # Depthwise conv: H-axis on the MXU (banded matmul), W-axis as one
            # lane roll + one border select + one add per column offset.
            acc = None
            for i, dw in enumerate(dws):
                t = jnp.dot(band_ref[i], pln, preferred_element_type=f32)
                if dw > 0:
                    t = jnp.where(col < W - dw,
                                  pltpu.roll(t, shift=(-dw) % W, axis=1), 0.0)
                elif dw < 0:
                    t = jnp.where(col >= -dw,
                                  pltpu.roll(t, shift=(-dw) % W, axis=1), 0.0)
                acc = t if acc is None else acc + t
            return acc + bias_ref[...]

        # Three LKA branches; proj_last (scale folded in) accumulated per
        # branch so the gated C-channel stack is never materialised.
        out = xin                             # residual shortcut
        for b in range(3):
            (b1, b1b, b2, b2b, bx, bxb, kpw, pwb, kplb) = br[9 * b: 9 * (b + 1)]
            dws1, dws2, dwsx = branch_dws[b]
            r0 = b * Rb
            a_b = a_all[r0:r0 + Rb]
            t = dwconv(a_b, b1, b1b, dws1)            # DW k1
            t = dwconv(t, b2, b2b, dws2)              # DW k2 (dilated)
            lka = jnp.dot(kpw[...], t, preferred_element_type=f32) + pwb[...]
            attn = lka * dwconv(a_b, bx, bxb, dwsx)   # gate by X5 / X7
            gated = g_all[r0:r0 + Rb] * attn
            out = out + jnp.dot(kplb[...], gated, preferred_element_type=f32)

        out = out + plb[...]                  # scale * proj_last bias
        o_ref[0] = out.astype(o_ref.dtype)

    x_slab = x.reshape(N, R, W)               # free, row-major identical
    out = pl.pallas_call(
        kernel,
        out_shape=jax.ShapeDtypeStruct((N, R, W), x.dtype),
        grid=(N,),
        in_specs=[pl.BlockSpec((1, R, W), lambda n: (n, 0, 0))]
                 + [_const_spec(a.shape) for a in operands],
        out_specs=pl.BlockSpec((1, R, W), lambda n: (n, 0, 0)),
        compiler_params=pltpu.CompilerParams(
            dimension_semantics=("parallel",)),
    )(x_slab, *operands)
    return out.reshape(N, C, H, W)


# ---------------------------- pure-JAX reference -----------------------------
def _dw_ref(x_, w_flat, b, k, dil):
    n = x_.shape[1]
    pad = (k // 2) * dil
    out = jax.lax.conv_general_dilated(
        x_, w_flat.reshape(n, 1, k, k),
        window_strides=(1, 1), padding=[(pad, pad), (pad, pad)],
        rhs_dilation=(dil, dil),
        dimension_numbers=('NCHW', 'OIHW', 'NCHW'),
        feature_group_count=n, precision=jax.lax.Precision.HIGHEST)
    return out + b[None, :, None, None]


def _pw_ref(x_, w, b):
    out = jnp.einsum('oc,nchw->nohw', w, x_,
                     precision=jax.lax.Precision.HIGHEST)
    return out + b[None, :, None, None]


def mlka_reference(x, p):
    """Matches the PyTorch MLKA.forward exactly (in f32)."""
    N, C, H, W = x.shape
    n3 = C // 3
    shortcut = x
    u = jnp.mean(x, axis=-1, keepdims=True)
    s = jnp.mean((x - u) ** 2, axis=-1, keepdims=True)
    xn = (x - u) / jnp.sqrt(s + EPS)
    xn = p['ln_w'][None, :, None, None] * xn + p['ln_b'][None, :, None, None]
    y = _pw_ref(xn, p['pf_w'], p['pf_b'])
    a, xg = y[:, :C], y[:, C:]
    a1, a2, a3 = a[:, :n3], a[:, n3:2 * n3], a[:, 2 * n3:]
    lka3 = _pw_ref(_dw_ref(_dw_ref(a1, p['lka3_dw1_w'], p['lka3_dw1_b'], 3, 1),
                           p['lka3_dw2_w'], p['lka3_dw2_b'], 5, 2),
                   p['lka3_pw_w'], p['lka3_pw_b'])
    lka5 = _pw_ref(_dw_ref(_dw_ref(a2, p['lka5_dw1_w'], p['lka5_dw1_b'], 5, 1),
                           p['lka5_dw2_w'], p['lka5_dw2_b'], 7, 3),
                   p['lka5_pw_w'], p['lka5_pw_b'])
    lka7 = _pw_ref(_dw_ref(_dw_ref(a3, p['lka7_dw1_w'], p['lka7_dw1_b'], 7, 1),
                           p['lka7_dw2_w'], p['lka7_dw2_b'], 9, 4),
                   p['lka7_pw_w'], p['lka7_pw_b'])
    attn = jnp.concatenate([
        lka3 * _dw_ref(a1, p['x5_w'], p['x5_b'], 5, 1),
        lka5 * _dw_ref(a2, p['x5_w'], p['x5_b'], 5, 1),
        lka7 * _dw_ref(a3, p['x7_w'], p['x7_b'], 7, 1)], axis=1)
    z = _pw_ref(xg * attn, p['pl_w'], p['pl_b'])
    return z * p['scale'][None, :, None, None] + shortcut


if __name__ == "__main__":
    n_feats = 6            # MLKA requires n_feats % 3 == 0
    n3 = n_feats // 3
    N, H, W = 2, 16, 128   # W = 128 -> lane-dense, (8,128)-aligned blocks

    key = jax.random.PRNGKey(0)
    kit = iter(jax.random.split(key, 32))

    def rnd(shape, s):
        return s * jax.random.normal(next(kit), shape, jnp.float32)

    p = {
        # LayerNorm (PyTorch init is weight=1 / bias=0 -- perturbed so the
        # affine path is actually exercised by the check)
        'ln_w': 1.0 + rnd((n_feats,), 0.1),
        'ln_b': rnd((n_feats,), 0.1),
        # proj_first: 1x1 conv n_feats -> 2*n_feats
        'pf_w': rnd((2 * n_feats, n_feats), 0.3),
        'pf_b': rnd((2 * n_feats,), 0.1),
        # LKA3 = DW3 -> DW5(dil 2) -> 1x1
        'lka3_dw1_w': rnd((n3, 3 * 3), 0.15), 'lka3_dw1_b': rnd((n3,), 0.1),
        'lka3_dw2_w': rnd((n3, 5 * 5), 0.15), 'lka3_dw2_b': rnd((n3,), 0.1),
        'lka3_pw_w': rnd((n3, n3), 0.4),      'lka3_pw_b': rnd((n3,), 0.1),
        # LKA5 = DW5 -> DW7(dil 3) -> 1x1
        'lka5_dw1_w': rnd((n3, 5 * 5), 0.15), 'lka5_dw1_b': rnd((n3,), 0.1),
        'lka5_dw2_w': rnd((n3, 7 * 7), 0.15), 'lka5_dw2_b': rnd((n3,), 0.1),
        'lka5_pw_w': rnd((n3, n3), 0.4),      'lka5_pw_b': rnd((n3,), 0.1),
        # LKA7 = DW7 -> DW9(dil 4) -> 1x1
        'lka7_dw1_w': rnd((n3, 7 * 7), 0.15), 'lka7_dw1_b': rnd((n3,), 0.1),
        'lka7_dw2_w': rnd((n3, 9 * 9), 0.15), 'lka7_dw2_b': rnd((n3,), 0.1),
        'lka7_pw_w': rnd((n3, n3), 0.4),      'lka7_pw_b': rnd((n3,), 0.1),
        # X5 / X7 depthwise gates (X5 shared by the LKA3 and LKA5 branches)
        'x5_w': rnd((n3, 5 * 5), 0.15), 'x5_b': rnd((n3,), 0.1),
        'x7_w': rnd((n3, 7 * 7), 0.15), 'x7_b': rnd((n3,), 0.1),
        # proj_last: 1x1 conv n_feats -> n_feats
        'pl_w': rnd((n_feats, n_feats), 0.3),
        'pl_b': rnd((n_feats,), 0.1),
        # PyTorch initialises scale to zeros; randomised here so the whole
        # compute path (not just the residual) is validated.
        'scale': rnd((n_feats,), 0.5),
    }

    x = jax.random.normal(next(kit), (N, n_feats, H, W), jnp.float32)

    out = jax.block_until_ready(mlka_pallas(x, p))
    ref = jax.block_until_ready(mlka_reference(x, p))

    assert out.shape == x.shape and out.dtype == x.dtype
    err = jnp.max(jnp.abs(out - ref))
    assert jnp.allclose(out, ref, atol=2e-3, rtol=2e-3), f"max abs err = {err}"
    print("KERNEL_OK")
</pallas_src>

<mosaic_0001>
module attributes {stable_mosaic.version = 11 : i64} {
  func.func @kernel(%arg0: i32, %arg1: memref<1x96x128xf32, #tpu.memory_space<vmem>>, %arg2: memref<192x96xf32, #tpu.memory_space<vmem>>, %arg3: memref<192x1xf32, #tpu.memory_space<vmem>>, %arg4: memref<96x1xf32, #tpu.memory_space<vmem>>, %arg5: memref<3x32x32xf32, #tpu.memory_space<vmem>>, %arg6: memref<32x1xf32, #tpu.memory_space<vmem>>, %arg7: memref<5x32x32xf32, #tpu.memory_space<vmem>>, %arg8: memref<32x1xf32, #tpu.memory_space<vmem>>, %arg9: memref<5x32x32xf32, #tpu.memory_space<vmem>>, %arg10: memref<32x1xf32, #tpu.memory_space<vmem>>, %arg11: memref<32x32xf32, #tpu.memory_space<vmem>>, %arg12: memref<32x1xf32, #tpu.memory_space<vmem>>, %arg13: memref<96x32xf32, #tpu.memory_space<vmem>>, %arg14: memref<5x32x32xf32, #tpu.memory_space<vmem>>, %arg15: memref<32x1xf32, #tpu.memory_space<vmem>>, %arg16: memref<7x32x32xf32, #tpu.memory_space<vmem>>, %arg17: memref<32x1xf32, #tpu.memory_space<vmem>>, %arg18: memref<5x32x32xf32, #tpu.memory_space<vmem>>, %arg19: memref<32x1xf32, #tpu.memory_space<vmem>>, %arg20: memref<32x32xf32, #tpu.memory_space<vmem>>, %arg21: memref<32x1xf32, #tpu.memory_space<vmem>>, %arg22: memref<96x32xf32, #tpu.memory_space<vmem>>, %arg23: memref<7x32x32xf32, #tpu.memory_space<vmem>>, %arg24: memref<32x1xf32, #tpu.memory_space<vmem>>, %arg25: memref<9x32x32xf32, #tpu.memory_space<vmem>>, %arg26: memref<32x1xf32, #tpu.memory_space<vmem>>, %arg27: memref<7x32x32xf32, #tpu.memory_space<vmem>>, %arg28: memref<32x1xf32, #tpu.memory_space<vmem>>, %arg29: memref<32x32xf32, #tpu.memory_space<vmem>>, %arg30: memref<32x1xf32, #tpu.memory_space<vmem>>, %arg31: memref<96x32xf32, #tpu.memory_space<vmem>>, %arg32: memref<1x96x128xf32, #tpu.memory_space<vmem>>) attributes {dimension_semantics = [#tpu.dimension_semantics<parallel>], iteration_bounds = array<i64: 2>, scalar_prefetch = 0 : i64, scratch_operands = 0 : i64, tpu.core_type = #tpu.core_type<tc>, window_params = [{transform_indices = @transform_0, window_bounds = array<i64: 1, 96, 128>}, {pipeline_mode = #tpu.pipeline_mode<synchronous>, transform_indices = @transform_1, window_bounds = array<i64: 192, 96>}, {pipeline_mode = #tpu.pipeline_mode<synchronous>, transform_indices = @transform_2, window_bounds = array<i64: 192, 1>}, {pipeline_mode = #tpu.pipeline_mode<synchronous>, transform_indices = @transform_3, window_bounds = array<i64: 96, 1>}, {pipeline_mode = #tpu.pipeline_mode<synchronous>, transform_indices = @transform_4, window_bounds = array<i64: 3, 32, 32>}, {pipeline_mode = #tpu.pipeline_mode<synchronous>, transform_indices = @transform_5, window_bounds = array<i64: 32, 1>}, {pipeline_mode = #tpu.pipeline_mode<synchronous>, transform_indices = @transform_6, window_bounds = array<i64: 5, 32, 32>}, {pipeline_mode = #tpu.pipeline_mode<synchronous>, transform_indices = @transform_7, window_bounds = array<i64: 32, 1>}, {pipeline_mode = #tpu.pipeline_mode<synchronous>, transform_indices = @transform_8, window_bounds = array<i64: 5, 32, 32>}, {pipeline_mode = #tpu.pipeline_mode<synchronous>, transform_indices = @transform_9, window_bounds = array<i64: 32, 1>}, {pipeline_mode = #tpu.pipeline_mode<synchronous>, transform_indices = @transform_10, window_bounds = array<i64: 32, 32>}, {pipeline_mode = #tpu.pipeline_mode<synchronous>, transform_indices = @transform_11, window_bounds = array<i64: 32, 1>}, {pipeline_mode = #tpu.pipeline_mode<synchronous>, transform_indices = @transform_12, window_bounds = array<i64: 96, 32>}, {pipeline_mode = #tpu.pipeline_mode<synchronous>, transform_indices = @transform_13, window_bounds = array<i64: 5, 32, 32>}, {pipeline_mode = #tpu.pipeline_mode<synchronous>, transform_indices = @transform_14, window_bounds = array<i64: 32, 1>}, {pipeline_mode = #tpu.pipeline_mode<synchronous>, transform_indices = @transform_15, window_bounds = array<i64: 7, 32, 32>}, {pipeline_mode = #tpu.pipeline_mode<synchronous>, transform_indices = @transform_16, window_bounds = array<i64: 32, 1>}, {pipeline_mode = #tpu.pipeline_mode<synchronous>, transform_indices = @transform_17, window_bounds = array<i64: 5, 32, 32>}, {pipeline_mode = #tpu.pipeline_mode<synchronous>, transform_indices = @transform_18, window_bounds = array<i64: 32, 1>}, {pipeline_mode = #tpu.pipeline_mode<synchronous>, transform_indices = @transform_19, window_bounds = array<i64: 32, 32>}, {pipeline_mode = #tpu.pipeline_mode<synchronous>, transform_indices = @transform_20, window_bounds = array<i64: 32, 1>}, {pipeline_mode = #tpu.pipeline_mode<synchronous>, transform_indices = @transform_21, window_bounds = array<i64: 96, 32>}, {pipeline_mode = #tpu.pipeline_mode<synchronous>, transform_indices = @transform_22, window_bounds = array<i64: 7, 32, 32>}, {pipeline_mode = #tpu.pipeline_mode<synchronous>, transform_indices = @transform_23, window_bounds = array<i64: 32, 1>}, {pipeline_mode = #tpu.pipeline_mode<synchronous>, transform_indices = @transform_24, window_bounds = array<i64: 9, 32, 32>}, {pipeline_mode = #tpu.pipeline_mode<synchronous>, transform_indices = @transform_25, window_bounds = array<i64: 32, 1>}, {pipeline_mode = #tpu.pipeline_mode<synchronous>, transform_indices = @transform_26, window_bounds = array<i64: 7, 32, 32>}, {pipeline_mode = #tpu.pipeline_mode<synchronous>, transform_indices = @transform_27, window_bounds = array<i64: 32, 1>}, {pipeline_mode = #tpu.pipeline_mode<synchronous>, transform_indices = @transform_28, window_bounds = array<i64: 32, 32>}, {pipeline_mode = #tpu.pipeline_mode<synchronous>, transform_indices = @transform_29, window_bounds = array<i64: 32, 1>}, {pipeline_mode = #tpu.pipeline_mode<synchronous>, transform_indices = @transform_30, window_bounds = array<i64: 96, 32>}, {transform_indices = @transform_31, window_bounds = array<i64: 1, 96, 128>}]} {
    %c0 = arith.constant 0 : index
    %c0_0 = arith.constant 0 : index
    %c0_1 = arith.constant 0 : index
    %0 = vector.load %arg1[%c0, %c0_0, %c0_1] : memref<1x96x128xf32, #tpu.memory_space<vmem>>, vector<1x96x128xf32>
    %1 = vector.shape_cast %0 : vector<1x96x128xf32> to vector<96x128xf32>
    %cst = arith.constant dense<0.000000e+00> : vector<96xf32>
    %2 = vector.multi_reduction <add>, %1, %cst [1] : vector<96x128xf32> to vector<96xf32>
    %3 = vector.shape_cast %2 : vector<96xf32> to vector<96x1xf32>
    %cst_2 = arith.constant 7.812500e-03 : f32
    %4 = vector.broadcast %cst_2 : f32 to vector<96x1xf32>
    %5 = arith.mulf %3, %4 : vector<96x1xf32>
    %6 = vector.broadcast %5 : vector<96x1xf32> to vector<96x128xf32>
    %7 = arith.subf %1, %6 : vector<96x128xf32>
    %8 = arith.mulf %7, %7 : vector<96x128xf32>
    %cst_3 = arith.constant dense<0.000000e+00> : vector<96xf32>
    %9 = vector.multi_reduction <add>, %8, %cst_3 [1] : vector<96x128xf32> to vector<96xf32>
    %10 = vector.shape_cast %9 : vector<96xf32> to vector<96x1xf32>
    %cst_4 = arith.constant 7.812500e-03 : f32
    %11 = vector.broadcast %cst_4 : f32 to vector<96x1xf32>
    %12 = arith.mulf %10, %11 : vector<96x1xf32>
    %cst_5 = arith.constant 9.99999997E-7 : f32
    %13 = vector.broadcast %cst_5 : f32 to vector<96x1xf32>
    %14 = arith.addf %12, %13 : vector<96x1xf32>
    %15 = math.rsqrt %14 : vector<96x1xf32>
    %16 = vector.broadcast %15 : vector<96x1xf32> to vector<96x128xf32>
    %17 = arith.mulf %7, %16 : vector<96x128xf32>
    %c0_6 = arith.constant 0 : index
    %c0_7 = arith.constant 0 : index
    %18 = vector.load %arg2[%c0_6, %c0_7] : memref<192x96xf32, #tpu.memory_space<vmem>>, vector<192x96xf32>
    %cst_8 = arith.constant dense<0.000000e+00> : vector<192x128xf32>
    %19 = tpu.matmul %18, %17, %cst_8 {dimension_numbers = #tpu.dot_dimension_numbers<[1], [0], [0], [1], [0, 0, 1, 1], [], []>} : vector<192x96xf32>, vector<96x128xf32>, vector<192x128xf32> -> vector<192x128xf32>
    %c0_9 = arith.constant 0 : index
    %c0_10 = arith.constant 0 : index
    %20 = vector.load %arg3[%c0_9, %c0_10] : memref<192x1xf32, #tpu.memory_space<vmem>>, vector<192x1xf32>
    %21 = vector.broadcast %20 : vector<192x1xf32> to vector<192x128xf32>
    %22 = arith.addf %19, %21 : vector<192x128xf32>
    %23 = vector.extract_strided_slice %22 {offsets = [0, 0], sizes = [96, 128], strides = [1, 1]} : vector<192x128xf32> to vector<96x128xf32>
    %24 = vector.extract_strided_slice %22 {offsets = [96, 0], sizes = [96, 128], strides = [1, 1]} : vector<192x128xf32> to vector<96x128xf32>
    %25 = tpu.iota {dimensions = array<i32: 1>} : vector<32x128xi32>
    %26 = vector.extract_strided_slice %23 {offsets = [0, 0], sizes = [32, 128], strides = [1, 1]} : vector<96x128xf32> to vector<32x128xf32>
    %c0_11 = arith.constant 0 : index
    %c0_12 = arith.constant 0 : index
    %c0_13 = arith.constant 0 : index
    %27 = vector.load %arg5[%c0_11, %c0_12, %c0_13] : memref<3x32x32xf32, #tpu.memory_space<vmem>>, vector<1x32x32xf32>
    %28 = vector.shape_cast %27 : vector<1x32x32xf32> to vector<32x32xf32>
    %cst_14 = arith.constant dense<0.000000e+00> : vector<32x128xf32>
    %29 = tpu.matmul %28, %26, %cst_14 {dimension_numbers = #tpu.dot_dimension_numbers<[1], [0], [0], [1], [0, 0, 1, 1], [], []>} : vector<32x32xf32>, vector<32x128xf32>, vector<32x128xf32> -> vector<32x128xf32>
    %c1_i32 = arith.constant 1 : i32
    %30 = vector.broadcast %c1_i32 : i32 to vector<32x128xi32>
    %31 = arith.cmpi sge, %25, %30 : vector<32x128xi32>
    %c1_i32_15 = arith.constant 1 : i32
    %32 = tpu.dynamic_rotate %29 by %c1_i32_15 dim 1 : vector<32x128xf32>, i32 -> vector<32x128xf32>
    %cst_16 = arith.constant 0.000000e+00 : f32
    %33 = vector.broadcast %cst_16 : f32 to vector<32x128xf32>
    %34 = arith.select %31, %32, %33 : vector<32x128xi1>, vector<32x128xf32>
    %c1 = arith.constant 1 : index
    %c0_17 = arith.constant 0 : index
    %c0_18 = arith.constant 0 : index
    %35 = vector.load %arg5[%c1, %c0_17, %c0_18] : memref<3x32x32xf32, #tpu.memory_space<vmem>>, vector<1x32x32xf32>
    %36 = vector.shape_cast %35 : vector<1x32x32xf32> to vector<32x32xf32>
    %cst_19 = arith.constant dense<0.000000e+00> : vector<32x128xf32>
    %37 = tpu.matmul %36, %26, %cst_19 {dimension_numbers = #tpu.dot_dimension_numbers<[1], [0], [0], [1], [0, 0, 1, 1], [], []>} : vector<32x32xf32>, vector<32x128xf32>, vector<32x128xf32> -> vector<32x128xf32>
    %38 = arith.addf %34, %37 : vector<32x128xf32>
    %c2 = arith.constant 2 : index
    %c0_20 = arith.constant 0 : index
    %c0_21 = arith.constant 0 : index
    %39 = vector.load %arg5[%c2, %c0_20, %c0_21] : memref<3x32x32xf32, #tpu.memory_space<vmem>>, vector<1x32x32xf32>
    %40 = vector.shape_cast %39 : vector<1x32x32xf32> to vector<32x32xf32>
    %cst_22 = arith.constant dense<0.000000e+00> : vector<32x128xf32>
    %41 = tpu.matmul %40, %26, %cst_22 {dimension_numbers = #tpu.dot_dimension_numbers<[1], [0], [0], [1], [0, 0, 1, 1], [], []>} : vector<32x32xf32>, vector<32x128xf32>, vector<32x128xf32> -> vector<32x128xf32>
    %c127_i32 = arith.constant 127 : i32
    %42 = vector.broadcast %c127_i32 : i32 to vector<32x128xi32>
    %43 = arith.cmpi slt, %25, %42 : vector<32x128xi32>
    %c127_i32_23 = arith.constant 127 : i32
    %44 = tpu.dynamic_rotate %41 by %c127_i32_23 dim 1 : vector<32x128xf32>, i32 -> vector<32x128xf32>
    %cst_24 = arith.constant 0.000000e+00 : f32
    %45 = vector.broadcast %cst_24 : f32 to vector<32x128xf32>
    %46 = arith.select %43, %44, %45 : vector<32x128xi1>, vector<32x128xf32>
    %47 = arith.addf %38, %46 : vector<32x128xf32>
    %c0_25 = arith.constant 0 : index
    %c0_26 = arith.constant 0 : index
    %48 = vector.load %arg6[%c0_25, %c0_26] : memref<32x1xf32, #tpu.memory_space<vmem>>, vector<32x1xf32>
    %49 = vector.broadcast %48 : vector<32x1xf32> to vector<32x128xf32>
    %50 = arith.addf %47, %49 : vector<32x128xf32>
    %c0_27 = arith.constant 0 : index
    %c0_28 = arith.constant 0 : index
    %c0_29 = arith.constant 0 : index
    %51 = vector.load %arg7[%c0_27, %c0_28, %c0_29] : memref<5x32x32xf32, #tpu.memory_space<vmem>>, vector<1x32x32xf32>
    %52 = vector.shape_cast %51 : vector<1x32x32xf32> to vector<32x32xf32>
    %cst_30 = arith.constant dense<0.000000e+00> : vector<32x128xf32>
    %53 = tpu.matmul %52, %50, %cst_30 {dimension_numbers = #tpu.dot_dimension_numbers<[1], [0], [0], [1], [0, 0, 1, 1], [], []>} : vector<32x32xf32>, vector<32x128xf32>, vector<32x128xf32> -> vector<32x128xf32>
    %c4_i32 = arith.constant 4 : i32
    %54 = vector.broadcast %c4_i32 : i32 to vector<32x128xi32>
    %55 = arith.cmpi sge, %25, %54 : vector<32x128xi32>
    %c4_i32_31 = arith.constant 4 : i32
    %56 = tpu.dynamic_rotate %53 by %c4_i32_31 dim 1 : vector<32x128xf32>, i32 -> vector<32x128xf32>
    %cst_32 = arith.constant 0.000000e+00 : f32
    %57 = vector.broadcast %cst_32 : f32 to vector<32x128xf32>
    %58 = arith.select %55, %56, %57 : vector<32x128xi1>, vector<32x128xf32>
    %c1_33 = arith.constant 1 : index
    %c0_34 = arith.constant 0 : index
    %c0_35 = arith.constant 0 : index
    %59 = vector.load %arg7[%c1_33, %c0_34, %c0_35] : memref<5x32x32xf32, #tpu.memory_space<vmem>>, vector<1x32x32xf32>
    %60 = vector.shape_cast %59 : vector<1x32x32xf32> to vector<32x32xf32>
    %cst_36 = arith.constant dense<0.000000e+00> : vector<32x128xf32>
    %61 = tpu.matmul %60, %50, %cst_36 {dimension_numbers = #tpu.dot_dimension_numbers<[1], [0], [0], [1], [0, 0, 1, 1], [], []>} : vector<32x32xf32>, vector<32x128xf32>, vector<32x128xf32> -> vector<32x128xf32>
    %c2_i32 = arith.constant 2 : i32
    %62 = vector.broadcast %c2_i32 : i32 to vector<32x128xi32>
    %63 = arith.cmpi sge, %25, %62 : vector<32x128xi32>
    %c2_i32_37 = arith.constant 2 : i32
    %64 = tpu.dynamic_rotate %61 by %c2_i32_37 dim 1 : vector<32x128xf32>, i32 -> vector<32x128xf32>
    %cst_38 = arith.constant 0.000000e+00 : f32
    %65 = vector.broadcast %cst_38 : f32 to vector<32x128xf32>
    %66 = arith.select %63, %64, %65 : vector<32x128xi1>, vector<32x128xf32>
    %67 = arith.addf %58, %66 : vector<32x128xf32>
    %c2_39 = arith.constant 2 : index
    %c0_40 = arith.constant 0 : index
    %c0_41 = arith.constant 0 : index
    %68 = vector.load %arg7[%c2_39, %c0_40, %c0_41] : memref<5x32x32xf32, #tpu.memory_space<vmem>>, vector<1x32x32xf32>
    %69 = vector.shape_cast %68 : vector<1x32x32xf32> to vector<32x32xf32>
    %cst_42 = arith.constant dense<0.000000e+00> : vector<32x128xf32>
    %70 = tpu.matmul %69, %50, %cst_42 {dimension_numbers = #tpu.dot_dimension_numbers<[1], [0], [0], [1], [0, 0, 1, 1], [], []>} : vector<32x32xf32>, vector<32x128xf32>, vector<32x128xf32> -> vector<32x128xf32>
    %71 = arith.addf %67, %70 : vector<32x128xf32>
    %c3 = arith.constant 3 : index
    %c0_43 = arith.constant 0 : index
    %c0_44 = arith.constant 0 : index
    %72 = vector.load %arg7[%c3, %c0_43, %c0_44] : memref<5x32x32xf32, #tpu.memory_space<vmem>>, vector<1x32x32xf32>
    %73 = vector.shape_cast %72 : vector<1x32x32xf32> to vector<32x32xf32>
    %cst_45 = arith.constant dense<0.000000e+00> : vector<32x128xf32>
    %74 = tpu.matmul %73, %50, %cst_45 {dimension_numbers = #tpu.dot_dimension_numbers<[1], [0], [0], [1], [0, 0, 1, 1], [], []>} : vector<32x32xf32>, vector<32x128xf32>, vector<32x128xf32> -> vector<32x128xf32>
    %c126_i32 = arith.constant 126 : i32
    %75 = vector.broadcast %c126_i32 : i32 to vector<32x128xi32>
    %76 = arith.cmpi slt, %25, %75 : vector<32x128xi32>
    %c126_i32_46 = arith.constant 126 : i32
    %77 = tpu.dynamic_rotate %74 by %c126_i32_46 dim 1 : vector<32x128xf32>, i32 -> vector<32x128xf32>
    %cst_47 = arith.constant 0.000000e+00 : f32
    %78 = vector.broadcast %cst_47 : f32 to vector<32x128xf32>
    %79 = arith.select %76, %77, %78 : vector<32x128xi1>, vector<32x128xf32>
    %80 = arith.addf %71, %79 : vector<32x128xf32>
    %c4 = arith.constant 4 : index
    %c0_48 = arith.constant 0 : index
    %c0_49 = arith.constant 0 : index
    %81 = vector.load %arg7[%c4, %c0_48, %c0_49] : memref<5x32x32xf32, #tpu.memory_space<vmem>>, vector<1x32x32xf32>
    %82 = vector.shape_cast %81 : vector<1x32x32xf32> to vector<32x32xf32>
    %cst_50 = arith.constant dense<0.000000e+00> : vector<32x128xf32>
    %83 = tpu.matmul %82, %50, %cst_50 {dimension_numbers = #tpu.dot_dimension_numbers<[1], [0], [0], [1], [0, 0, 1, 1], [], []>} : vector<32x32xf32>, vector<32x128xf32>, vector<32x128xf32> -> vector<32x128xf32>
    %c124_i32 = arith.constant 124 : i32
    %84 = vector.broadcast %c124_i32 : i32 to vector<32x128xi32>
    %85 = arith.cmpi slt, %25, %84 : vector<32x128xi32>
    %c124_i32_51 = arith.constant 124 : i32
    %86 = tpu.dynamic_rotate %83 by %c124_i32_51 dim 1 : vector<32x128xf32>, i32 -> vector<32x128xf32>
    %cst_52 = arith.constant 0.000000e+00 : f32
    %87 = vector.broadcast %cst_52 : f32 to vector<32x128xf32>
    %88 = arith.select %85, %86, %87 : vector<32x128xi1>, vector<32x128xf32>
    %89 = arith.addf %80, %88 : vector<32x128xf32>
    %c0_53 = arith.constant 0 : index
    %c0_54 = arith.constant 0 : index
    %90 = vector.load %arg8[%c0_53, %c0_54] : memref<32x1xf32, #tpu.memory_space<vmem>>, vector<32x1xf32>
    %91 = vector.broadcast %90 : vector<32x1xf32> to vector<32x128xf32>
    %92 = arith.addf %89, %91 : vector<32x128xf32>
    %c0_55 = arith.constant 0 : index
    %c0_56 = arith.constant 0 : index
    %93 = vector.load %arg11[%c0_55, %c0_56] : memref<32x32xf32, #tpu.memory_space<vmem>>, vector<32x32xf32>
    %cst_57 = arith.constant dense<0.000000e+00> : vector<32x128xf32>
    %94 = tpu.matmul %93, %92, %cst_57 {dimension_numbers = #tpu.dot_dimension_numbers<[1], [0], [0], [1], [0, 0, 1, 1], [], []>} : vector<32x32xf32>, vector<32x128xf32>, vector<32x128xf32> -> vector<32x128xf32>
    %c0_58 = arith.constant 0 : index
    %c0_59 = arith.constant 0 : index
    %95 = vector.load %arg12[%c0_58, %c0_59] : memref<32x1xf32, #tpu.memory_space<vmem>>, vector<32x1xf32>
    %96 = vector.broadcast %95 : vector<32x1xf32> to vector<32x128xf32>
    %97 = arith.addf %94, %96 : vector<32x128xf32>
    %c0_60 = arith.constant 0 : index
    %c0_61 = arith.constant 0 : index
    %c0_62 = arith.constant 0 : index
    %98 = vector.load %arg9[%c0_60, %c0_61, %c0_62] : memref<5x32x32xf32, #tpu.memory_space<vmem>>, vector<1x32x32xf32>
    %99 = vector.shape_cast %98 : vector<1x32x32xf32> to vector<32x32xf32>
    %cst_63 = arith.constant dense<0.000000e+00> : vector<32x128xf32>
    %100 = tpu.matmul %99, %26, %cst_63 {dimension_numbers = #tpu.dot_dimension_numbers<[1], [0], [0], [1], [0, 0, 1, 1], [], []>} : vector<32x32xf32>, vector<32x128xf32>, vector<32x128xf32> -> vector<32x128xf32>
    %c2_i32_64 = arith.constant 2 : i32
    %101 = vector.broadcast %c2_i32_64 : i32 to vector<32x128xi32>
    %102 = arith.cmpi sge, %25, %101 : vector<32x128xi32>
    %c2_i32_65 = arith.constant 2 : i32
    %103 = tpu.dynamic_rotate %100 by %c2_i32_65 dim 1 : vector<32x128xf32>, i32 -> vector<32x128xf32>
    %cst_66 = arith.constant 0.000000e+00 : f32
    %104 = vector.broadcast %cst_66 : f32 to vector<32x128xf32>
    %105 = arith.select %102, %103, %104 : vector<32x128xi1>, vector<32x128xf32>
    %c1_67 = arith.constant 1 : index
    %c0_68 = arith.constant 0 : index
    %c0_69 = arith.constant 0 : index
    %106 = vector.load %arg9[%c1_67, %c0_68, %c0_69] : memref<5x32x32xf32, #tpu.memory_space<vmem>>, vector<1x32x32xf32>
    %107 = vector.shape_cast %106 : vector<1x32x32xf32> to vector<32x32xf32>
    %cst_70 = arith.constant dense<0.000000e+00> : vector<32x128xf32>
    %108 = tpu.matmul %107, %26, %cst_70 {dimension_numbers = #tpu.dot_dimension_numbers<[1], [0], [0], [1], [0, 0, 1, 1], [], []>} : vector<32x32xf32>, vector<32x128xf32>, vector<32x128xf32> -> vector<32x128xf32>
    %c1_i32_71 = arith.constant 1 : i32
    %109 = vector.broadcast %c1_i32_71 : i32 to vector<32x128xi32>
    %110 = arith.cmpi sge, %25, %109 : vector<32x128xi32>
    %c1_i32_72 = arith.constant 1 : i32
    %111 = tpu.dynamic_rotate %108 by %c1_i32_72 dim 1 : vector<32x128xf32>, i32 -> vector<32x128xf32>
    %cst_73 = arith.constant 0.000000e+00 : f32
    %112 = vector.broadcast %cst_73 : f32 to vector<32x128xf32>
    %113 = arith.select %110, %111, %112 : vector<32x128xi1>, vector<32x128xf32>
    %114 = arith.addf %105, %113 : vector<32x128xf32>
    %c2_74 = arith.constant 2 : index
    %c0_75 = arith.constant 0 : index
    %c0_76 = arith.constant 0 : index
    %115 = vector.load %arg9[%c2_74, %c0_75, %c0_76] : memref<5x32x32xf32, #tpu.memory_space<vmem>>, vector<1x32x32xf32>
    %116 = vector.shape_cast %115 : vector<1x32x32xf32> to vector<32x32xf32>
    %cst_77 = arith.constant dense<0.000000e+00> : vector<32x128xf32>
    %117 = tpu.matmul %116, %26, %cst_77 {dimension_numbers = #tpu.dot_dimension_numbers<[1], [0], [0], [1], [0, 0, 1, 1], [], []>} : vector<32x32xf32>, vector<32x128xf32>, vector<32x128xf32> -> vector<32x128xf32>
    %118 = arith.addf %114, %117 : vector<32x128xf32>
    %c3_78 = arith.constant 3 : index
    %c0_79 = arith.constant 0 : index
    %c0_80 = arith.constant 0 : index
    %119 = vector.load %arg9[%c3_78, %c0_79, %c0_80] : memref<5x32x32xf32, #tpu.memory_space<vmem>>, vector<1x32x32xf32>
    %120 = vector.shape_cast %119 : vector<1x32x32xf32> to vector<32x32xf32>
    %cst_81 = arith.constant dense<0.000000e+00> : vector<32x128xf32>
    %121 = tpu.matmul %120, %26, %cst_81 {dimension_numbers = #tpu.dot_dimension_numbers<[1], [0], [0], [1], [0, 0, 1, 1], [], []>} : vector<32x32xf32>, vector<32x128xf32>, vector<32x128xf32> -> vector<32x128xf32>
    %c127_i32_82 = arith.constant 127 : i32
    %122 = vector.broadcast %c127_i32_82 : i32 to vector<32x128xi32>
    %123 = arith.cmpi slt, %25, %122 : vector<32x128xi32>
    %c127_i32_83 = arith.constant 127 : i32
    %124 = tpu.dynamic_rotate %121 by %c127_i32_83 dim 1 : vector<32x128xf32>, i32 -> vector<32x128xf32>
    %cst_84 = arith.constant 0.000000e+00 : f32
    %125 = vector.broadcast %cst_84 : f32 to vector<32x128xf32>
    %126 = arith.select %123, %124, %125 : vector<32x128xi1>, vector<32x128xf32>
    %127 = arith.addf %118, %126 : vector<32x128xf32>
    %c4_85 = arith.constant 4 : index
    %c0_86 = arith.constant 0 : index
    %c0_87 = arith.constant 0 : index
    %128 = vector.load %arg9[%c4_85, %c0_86, %c0_87] : memref<5x32x32xf32, #tpu.memory_space<vmem>>, vector<1x32x32xf32>
    %129 = vector.shape_cast %128 : vector<1x32x32xf32> to vector<32x32xf32>
    %cst_88 = arith.constant dense<0.000000e+00> : vector<32x128xf32>
    %130 = tpu.matmul %129, %26, %cst_88 {dimension_numbers = #tpu.dot_dimension_numbers<[1], [0], [0], [1], [0, 0, 1, 1], [], []>} : vector<32x32xf32>, vector<32x128xf32>, vector<32x128xf32> -> vector<32x128xf32>
    %c126_i32_89 = arith.constant 126 : i32
    %131 = vector.broadcast %c126_i32_89 : i32 to vector<32x128xi32>
    %132 = arith.cmpi slt, %25, %131 : vector<32x128xi32>
    %c126_i32_90 = arith.constant 126 : i32
    %133 = tpu.dynamic_rotate %130 by %c126_i32_90 dim 1 : vector<32x128xf32>, i32 -> vector<32x128xf32>
    %cst_91 = arith.constant 0.000000e+00 : f32
    %134 = vector.broadcast %cst_91 : f32 to vector<32x128xf32>
    %135 = arith.select %132, %133, %134 : vector<32x128xi1>, vector<32x128xf32>
    %136 = arith.addf %127, %135 : vector<32x128xf32>
    %c0_92 = arith.constant 0 : index
    %c0_93 = arith.constant 0 : index
    %137 = vector.load %arg10[%c0_92, %c0_93] : memref<32x1xf32, #tpu.memory_space<vmem>>, vector<32x1xf32>
    %138 = vector.broadcast %137 : vector<32x1xf32> to vector<32x128xf32>
    %139 = arith.addf %136, %138 : vector<32x128xf32>
    %140 = arith.mulf %97, %139 : vector<32x128xf32>
    %141 = vector.extract_strided_slice %24 {offsets = [0, 0], sizes = [32, 128], strides = [1, 1]} : vector<96x128xf32> to vector<32x128xf32>
    %142 = arith.mulf %141, %140 : vector<32x128xf32>
    %c0_94 = arith.constant 0 : index
    %c0_95 = arith.constant 0 : index
    %143 = vector.load %arg13[%c0_94, %c0_95] : memref<96x32xf32, #tpu.memory_space<vmem>>, vector<96x32xf32>
    %cst_96 = arith.constant dense<0.000000e+00> : vector<96x128xf32>
    %144 = tpu.matmul %143, %142, %cst_96 {dimension_numbers = #tpu.dot_dimension_numbers<[1], [0], [0], [1], [0, 0, 1, 1], [], []>} : vector<96x32xf32>, vector<32x128xf32>, vector<96x128xf32> -> vector<96x128xf32>
    %145 = arith.addf %1, %144 : vector<96x128xf32>
    %146 = vector.extract_strided_slice %23 {offsets = [32, 0], sizes = [32, 128], strides = [1, 1]} : vector<96x128xf32> to vector<32x128xf32>
    %c0_97 = arith.constant 0 : index
    %c0_98 = arith.constant 0 : index
    %c0_99 = arith.constant 0 : index
    %147 = vector.load %arg14[%c0_97, %c0_98, %c0_99] : memref<5x32x32xf32, #tpu.memory_space<vmem>>, vector<1x32x32xf32>
    %148 = vector.shape_cast %147 : vector<1x32x32xf32> to vector<32x32xf32>
    %cst_100 = arith.constant dense<0.000000e+00> : vector<32x128xf32>
    %149 = tpu.matmul %148, %146, %cst_100 {dimension_numbers = #tpu.dot_dimension_numbers<[1], [0], [0], [1], [0, 0, 1, 1], [], []>} : vector<32x32xf32>, vector<32x128xf32>, vector<32x128xf32> -> vector<32x128xf32>
    %c2_i32_101 = arith.constant 2 : i32
    %150 = vector.broadcast %c2_i32_101 : i32 to vector<32x128xi32>
    %151 = arith.cmpi sge, %25, %150 : vector<32x128xi32>
    %c2_i32_102 = arith.constant 2 : i32
    %152 = tpu.dynamic_rotate %149 by %c2_i32_102 dim 1 : vector<32x128xf32>, i32 -> vector<32x128xf32>
    %cst_103 = arith.constant 0.000000e+00 : f32
    %153 = vector.broadcast %cst_103 : f32 to vector<32x128xf32>
    %154 = arith.select %151, %152, %153 : vector<32x128xi1>, vector<32x128xf32>
    %c1_104 = arith.constant 1 : index
    %c0_105 = arith.constant 0 : index
    %c0_106 = arith.constant 0 : index
    %155 = vector.load %arg14[%c1_104, %c0_105, %c0_106] : memref<5x32x32xf32, #tpu.memory_space<vmem>>, vector<1x32x32xf32>
    %156 = vector.shape_cast %155 : vector<1x32x32xf32> to vector<32x32xf32>
    %cst_107 = arith.constant dense<0.000000e+00> : vector<32x128xf32>
    %157 = tpu.matmul %156, %146, %cst_107 {dimension_numbers = #tpu.dot_dimension_numbers<[1], [0], [0], [1], [0, 0, 1, 1], [], []>} : vector<32x32xf32>, vector<32x128xf32>, vector<32x128xf32> -> vector<32x128xf32>
    %c1_i32_108 = arith.constant 1 : i32
    %158 = vector.broadcast %c1_i32_108 : i32 to vector<32x128xi32>
    %159 = arith.cmpi sge, %25, %158 : vector<32x128xi32>
    %c1_i32_109 = arith.constant 1 : i32
    %160 = tpu.dynamic_rotate %157 by %c1_i32_109 dim 1 : vector<32x128xf32>, i32 -> vector<32x128xf32>
    %cst_110 = arith.constant 0.000000e+00 : f32
    %161 = vector.broadcast %cst_110 : f32 to vector<32x128xf32>
    %162 = arith.select %159, %160, %161 : vector<32x128xi1>, vector<32x128xf32>
    %163 = arith.addf %154, %162 : vector<32x128xf32>
    %c2_111 = arith.constant 2 : index
    %c0_112 = arith.constant 0 : index
    %c0_113 = arith.constant 0 : index
    %164 = vector.load %arg14[%c2_111, %c0_112, %c0_113] : memref<5x32x32xf32, #tpu.memory_space<vmem>>, vector<1x32x32xf32>
    %165 = vector.shape_cast %164 : vector<1x32x32xf32> to vector<32x32xf32>
    %cst_114 = arith.constant dense<0.000000e+00> : vector<32x128xf32>
    %166 = tpu.matmul %165, %146, %cst_114 {dimension_numbers = #tpu.dot_dimension_numbers<[1], [0], [0], [1], [0, 0, 1, 1], [], []>} : vector<32x32xf32>, vector<32x128xf32>, vector<32x128xf32> -> vector<32x128xf32>
    %167 = arith.addf %163, %166 : vector<32x128xf32>
    %c3_115 = arith.constant 3 : index
    %c0_116 = arith.constant 0 : index
    %c0_117 = arith.constant 0 : index
    %168 = vector.load %arg14[%c3_115, %c0_116, %c0_117] : memref<5x32x32xf32, #tpu.memory_space<vmem>>, vector<1x32x32xf32>
    %169 = vector.shape_cast %168 : vector<1x32x32xf32> to vector<32x32xf32>
    %cst_118 = arith.constant dense<0.000000e+00> : vector<32x128xf32>
    %170 = tpu.matmul %169, %146, %cst_118 {dimension_numbers = #tpu.dot_dimension_numbers<[1], [0], [0], [1], [0, 0, 1, 1], [], []>} : vector<32x32xf32>, vector<32x128xf32>, vector<32x128xf32> -> vector<32x128xf32>
    %c127_i32_119 = arith.constant 127 : i32
    %171 = vector.broadcast %c127_i32_119 : i32 to vector<32x128xi32>
    %172 = arith.cmpi slt, %25, %171 : vector<32x128xi32>
    %c127_i32_120 = arith.constant 127 : i32
    %173 = tpu.dynamic_rotate %170 by %c127_i32_120 dim 1 : vector<32x128xf32>, i32 -> vector<32x128xf32>
    %cst_121 = arith.constant 0.000000e+00 : f32
    %174 = vector.broadcast %cst_121 : f32 to vector<32x128xf32>
    %175 = arith.select %172, %173, %174 : vector<32x128xi1>, vector<32x128xf32>
    %176 = arith.addf %167, %175 : vector<32x128xf32>
    %c4_122 = arith.constant 4 : index
    %c0_123 = arith.constant 0 : index
    %c0_124 = arith.constant 0 : index
    %177 = vector.load %arg14[%c4_122, %c0_123, %c0_124] : memref<5x32x32xf32, #tpu.memory_space<vmem>>, vector<1x32x32xf32>
    %178 = vector.shape_cast %177 : vector<1x32x32xf32> to vector<32x32xf32>
    %cst_125 = arith.constant dense<0.000000e+00> : vector<32x128xf32>
    %179 = tpu.matmul %178, %146, %cst_125 {dimension_numbers = #tpu.dot_dimension_numbers<[1], [0], [0], [1], [0, 0, 1, 1], [], []>} : vector<32x32xf32>, vector<32x128xf32>, vector<32x128xf32> -> vector<32x128xf32>
    %c126_i32_126 = arith.constant 126 : i32
    %180 = vector.broadcast %c126_i32_126 : i32 to vector<32x128xi32>
    %181 = arith.cmpi slt, %25, %180 : vector<32x128xi32>
    %c126_i32_127 = arith.constant 126 : i32
    %182 = tpu.dynamic_rotate %179 by %c126_i32_127 dim 1 : vector<32x128xf32>, i32 -> vector<32x128xf32>
    %cst_128 = arith.constant 0.000000e+00 : f32
    %183 = vector.broadcast %cst_128 : f32 to vector<32x128xf32>
    %184 = arith.select %181, %182, %183 : vector<32x128xi1>, vector<32x128xf32>
    %185 = arith.addf %176, %184 : vector<32x128xf32>
    %c0_129 = arith.constant 0 : index
    %c0_130 = arith.constant 0 : index
    %186 = vector.load %arg15[%c0_129, %c0_130] : memref<32x1xf32, #tpu.memory_space<vmem>>, vector<32x1xf32>
    %187 = vector.broadcast %186 : vector<32x1xf32> to vector<32x128xf32>
    %188 = arith.addf %185, %187 : vector<32x128xf32>
    %c0_131 = arith.constant 0 : index
    %c0_132 = arith.constant 0 : index
    %c0_133 = arith.constant 0 : index
    %189 = vector.load %arg16[%c0_131, %c0_132, %c0_133] : memref<7x32x32xf32, #tpu.memory_space<vmem>>, vector<1x32x32xf32>
    %190 = vector.shape_cast %189 : vector<1x32x32xf32> to vector<32x32xf32>
    %cst_134 = arith.constant dense<0.000000e+00> : vector<32x128xf32>
    %191 = tpu.matmul %190, %188, %cst_134 {dimension_numbers = #tpu.dot_dimension_numbers<[1], [0], [0], [1], [0, 0, 1, 1], [], []>} : vector<32x32xf32>, vector<32x128xf32>, vector<32x128xf32> -> vector<32x128xf32>
    %c9_i32 = arith.constant 9 : i32
    %192 = vector.broadcast %c9_i32 : i32 to vector<32x128xi32>
    %193 = arith.cmpi sge, %25, %192 : vector<32x128xi32>
    %c9_i32_135 = arith.constant 9 : i32
    %194 = tpu.dynamic_rotate %191 by %c9_i32_135 dim 1 : vector<32x128xf32>, i32 -> vector<32x128xf32>
    %cst_136 = arith.constant 0.000000e+00 : f32
    %195 = vector.broadcast %cst_136 : f32 to vector<32x128xf32>
    %196 = arith.select %193, %194, %195 : vector<32x128xi1>, vector<32x128xf32>
    %c1_137 = arith.constant 1 : index
    %c0_138 = arith.constant 0 : index
    %c0_139 = arith.constant 0 : index
    %197 = vector.load %arg16[%c1_137, %c0_138, %c0_139] : memref<7x32x32xf32, #tpu.memory_space<vmem>>, vector<1x32x32xf32>
    %198 = vector.shape_cast %197 : vector<1x32x32xf32> to vector<32x32xf32>
    %cst_140 = arith.constant dense<0.000000e+00> : vector<32x128xf32>
    %199 = tpu.matmul %198, %188, %cst_140 {dimension_numbers = #tpu.dot_dimension_numbers<[1], [0], [0], [1], [0, 0, 1, 1], [], []>} : vector<32x32xf32>, vector<32x128xf32>, vector<32x128xf32> -> vector<32x128xf32>
    %c6_i32 = arith.constant 6 : i32
    %200 = vector.broadcast %c6_i32 : i32 to vector<32x128xi32>
    %201 = arith.cmpi sge, %25, %200 : vector<32x128xi32>
    %c6_i32_141 = arith.constant 6 : i32
    %202 = tpu.dynamic_rotate %199 by %c6_i32_141 dim 1 : vector<32x128xf32>, i32 -> vector<32x128xf32>
    %cst_142 = arith.constant 0.000000e+00 : f32
    %203 = vector.broadcast %cst_142 : f32 to vector<32x128xf32>
    %204 = arith.select %201, %202, %203 : vector<32x128xi1>, vector<32x128xf32>
    %205 = arith.addf %196, %204 : vector<32x128xf32>
    %c2_143 = arith.constant 2 : index
    %c0_144 = arith.constant 0 : index
    %c0_145 = arith.constant 0 : index
    %206 = vector.load %arg16[%c2_143, %c0_144, %c0_145] : memref<7x32x32xf32, #tpu.memory_space<vmem>>, vector<1x32x32xf32>
    %207 = vector.shape_cast %206 : vector<1x32x32xf32> to vector<32x32xf32>
    %cst_146 = arith.constant dense<0.000000e+00> : vector<32x128xf32>
    %208 = tpu.matmul %207, %188, %cst_146 {dimension_numbers = #tpu.dot_dimension_numbers<[1], [0], [0], [1], [0, 0, 1, 1], [], []>} : vector<32x32xf32>, vector<32x128xf32>, vector<32x128xf32> -> vector<32x128xf32>
    %c3_i32 = arith.constant 3 : i32
    %209 = vector.broadcast %c3_i32 : i32 to vector<32x128xi32>
    %210 = arith.cmpi sge, %25, %209 : vector<32x128xi32>
    %c3_i32_147 = arith.constant 3 : i32
    %211 = tpu.dynamic_rotate %208 by %c3_i32_147 dim 1 : vector<32x128xf32>, i32 -> vector<32x128xf32>
    %cst_148 = arith.constant 0.000000e+00 : f32
    %212 = vector.broadcast %cst_148 : f32 to vector<32x128xf32>
    %213 = arith.select %210, %211, %212 : vector<32x128xi1>, vector<32x128xf32>
    %214 = arith.addf %205, %213 : vector<32x128xf32>
    %c3_149 = arith.constant 3 : index
    %c0_150 = arith.constant 0 : index
    %c0_151 = arith.constant 0 : index
    %215 = vector.load %arg16[%c3_149, %c0_150, %c0_151] : memref<7x32x32xf32, #tpu.memory_space<vmem>>, vector<1x32x32xf32>
    %216 = vector.shape_cast %215 : vector<1x32x32xf32> to vector<32x32xf32>
    %cst_152 = arith.constant dense<0.000000e+00> : vector<32x128xf32>
    %217 = tpu.matmul %216, %188, %cst_152 {dimension_numbers = #tpu.dot_dimension_numbers<[1], [0], [0], [1], [0, 0, 1, 1], [], []>} : vector<32x32xf32>, vector<32x128xf32>, vector<32x128xf32> -> vector<32x128xf32>
    %218 = arith.addf %214, %217 : vector<32x128xf32>
    %c4_153 = arith.constant 4 : index
    %c0_154 = arith.constant 0 : index
    %c0_155 = arith.constant 0 : index
    %219 = vector.load %arg16[%c4_153, %c0_154, %c0_155] : memref<7x32x32xf32, #tpu.memory_space<vmem>>, vector<1x32x32xf32>
    %220 = vector.shape_cast %219 : vector<1x32x32xf32> to vector<32x32xf32>
    %cst_156 = arith.constant dense<0.000000e+00> : vector<32x128xf32>
    %221 = tpu.matmul %220, %188, %cst_156 {dimension_numbers = #tpu.dot_dimension_numbers<[1], [0], [0], [1], [0, 0, 1, 1], [], []>} : vector<32x32xf32>, vector<32x128xf32>, vector<32x128xf32> -> vector<32x128xf32>
    %c125_i32 = arith.constant 125 : i32
    %222 = vector.broadcast %c125_i32 : i32 to vector<32x128xi32>
    %223 = arith.cmpi slt, %25, %222 : vector<32x128xi32>
    %c125_i32_157 = arith.constant 125 : i32
    %224 = tpu.dynamic_rotate %221 by %c125_i32_157 dim 1 : vector<32x128xf32>, i32 -> vector<32x128xf32>
    %cst_158 = arith.constant 0.000000e+00 : f32
    %225 = vector.broadcast %cst_158 : f32 to vector<32x128xf32>
    %226 = arith.select %223, %224, %225 : vector<32x128xi1>, vector<32x128xf32>
    %227 = arith.addf %218, %226 : vector<32x128xf32>
    %c5 = arith.constant 5 : index
    %c0_159 = arith.constant 0 : index
    %c0_160 = arith.constant 0 : index
    %228 = vector.load %arg16[%c5, %c0_159, %c0_160] : memref<7x32x32xf32, #tpu.memory_space<vmem>>, vector<1x32x32xf32>
    %229 = vector.shape_cast %228 : vector<1x32x32xf32> to vector<32x32xf32>
    %cst_161 = arith.constant dense<0.000000e+00> : vector<32x128xf32>
    %230 = tpu.matmul %229, %188, %cst_161 {dimension_numbers = #tpu.dot_dimension_numbers<[1], [0], [0], [1], [0, 0, 1, 1], [], []>} : vector<32x32xf32>, vector<32x128xf32>, vector<32x128xf32> -> vector<32x128xf32>
    %c122_i32 = arith.constant 122 : i32
    %231 = vector.broadcast %c122_i32 : i32 to vector<32x128xi32>
    %232 = arith.cmpi slt, %25, %231 : vector<32x128xi32>
    %c122_i32_162 = arith.constant 122 : i32
    %233 = tpu.dynamic_rotate %230 by %c122_i32_162 dim 1 : vector<32x128xf32>, i32 -> vector<32x128xf32>
    %cst_163 = arith.constant 0.000000e+00 : f32
    %234 = vector.broadcast %cst_163 : f32 to vector<32x128xf32>
    %235 = arith.select %232, %233, %234 : vector<32x128xi1>, vector<32x128xf32>
    %236 = arith.addf %227, %235 : vector<32x128xf32>
    %c6 = arith.constant 6 : index
    %c0_164 = arith.constant 0 : index
    %c0_165 = arith.constant 0 : index
    %237 = vector.load %arg16[%c6, %c0_164, %c0_165] : memref<7x32x32xf32, #tpu.memory_space<vmem>>, vector<1x32x32xf32>
    %238 = vector.shape_cast %237 : vector<1x32x32xf32> to vector<32x32xf32>
    %cst_166 = arith.constant dense<0.000000e+00> : vector<32x128xf32>
    %239 = tpu.matmul %238, %188, %cst_166 {dimension_numbers = #tpu.dot_dimension_numbers<[1], [0], [0], [1], [0, 0, 1, 1], [], []>} : vector<32x32xf32>, vector<32x128xf32>, vector<32x128xf32> -> vector<32x128xf32>
    %c119_i32 = arith.constant 119 : i32
    %240 = vector.broadcast %c119_i32 : i32 to vector<32x128xi32>
    %241 = arith.cmpi slt, %25, %240 : vector<32x128xi32>
    %c119_i32_167 = arith.constant 119 : i32
    %242 = tpu.dynamic_rotate %239 by %c119_i32_167 dim 1 : vector<32x128xf32>, i32 -> vector<32x128xf32>
    %cst_168 = arith.constant 0.000000e+00 : f32
    %243 = vector.broadcast %cst_168 : f32 to vector<32x128xf32>
    %244 = arith.select %241, %242, %243 : vector<32x128xi1>, vector<32x128xf32>
    %245 = arith.addf %236, %244 : vector<32x128xf32>
    %c0_169 = arith.constant 0 : index
    %c0_170 = arith.constant 0 : index
    %246 = vector.load %arg17[%c0_169, %c0_170] : memref<32x1xf32, #tpu.memory_space<vmem>>, vector<32x1xf32>
    %247 = vector.broadcast %246 : vector<32x1xf32> to vector<32x128xf32>
    %248 = arith.addf %245, %247 : vector<32x128xf32>
    %c0_171 = arith.constant 0 : index
    %c0_172 = arith.constant 0 : index
    %249 = vector.load %arg20[%c0_171, %c0_172] : memref<32x32xf32, #tpu.memory_space<vmem>>, vector<32x32xf32>
    %cst_173 = arith.constant dense<0.000000e+00> : vector<32x128xf32>
    %250 = tpu.matmul %249, %248, %cst_173 {dimension_numbers = #tpu.dot_dimension_numbers<[1], [0], [0], [1], [0, 0, 1, 1], [], []>} : vector<32x32xf32>, vector<32x128xf32>, vector<32x128xf32> -> vector<32x128xf32>
    %c0_174 = arith.constant 0 : index
    %c0_175 = arith.constant 0 : index
    %251 = vector.load %arg21[%c0_174, %c0_175] : memref<32x1xf32, #tpu.memory_space<vmem>>, vector<32x1xf32>
    %252 = vector.broadcast %251 : vector<32x1xf32> to vector<32x128xf32>
    %253 = arith.addf %250, %252 : vector<32x128xf32>
    %c0_176 = arith.constant 0 : index
    %c0_177 = arith.constant 0 : index
    %c0_178 = arith.constant 0 : index
    %254 = vector.load %arg18[%c0_176, %c0_177, %c0_178] : memref<5x32x32xf32, #tpu.memory_space<vmem>>, vector<1x32x32xf32>
    %255 = vector.shape_cast %254 : vector<1x32x32xf32> to vector<32x32xf32>
    %cst_179 = arith.constant dense<0.000000e+00> : vector<32x128xf32>
    %256 = tpu.matmul %255, %146, %cst_179 {dimension_numbers = #tpu.dot_dimension_numbers<[1], [0], [0], [1], [0, 0, 1, 1], [], []>} : vector<32x32xf32>, vector<32x128xf32>, vector<32x128xf32> -> vector<32x128xf32>
    %c2_i32_180 = arith.constant 2 : i32
    %257 = vector.broadcast %c2_i32_180 : i32 to vector<32x128xi32>
    %258 = arith.cmpi sge, %25, %257 : vector<32x128xi32>
    %c2_i32_181 = arith.constant 2 : i32
    %259 = tpu.dynamic_rotate %256 by %c2_i32_181 dim 1 : vector<32x128xf32>, i32 -> vector<32x128xf32>
    %cst_182 = arith.constant 0.000000e+00 : f32
    %260 = vector.broadcast %cst_182 : f32 to vector<32x128xf32>
    %261 = arith.select %258, %259, %260 : vector<32x128xi1>, vector<32x128xf32>
    %c1_183 = arith.constant 1 : index
    %c0_184 = arith.constant 0 : index
    %c0_185 = arith.constant 0 : index
    %262 = vector.load %arg18[%c1_183, %c0_184, %c0_185] : memref<5x32x32xf32, #tpu.memory_space<vmem>>, vector<1x32x32xf32>
    %263 = vector.shape_cast %262 : vector<1x32x32xf32> to vector<32x32xf32>
    %cst_186 = arith.constant dense<0.000000e+00> : vector<32x128xf32>
    %264 = tpu.matmul %263, %146, %cst_186 {dimension_numbers = #tpu.dot_dimension_numbers<[1], [0], [0], [1], [0, 0, 1, 1], [], []>} : vector<32x32xf32>, vector<32x128xf32>, vector<32x128xf32> -> vector<32x128xf32>
    %c1_i32_187 = arith.constant 1 : i32
    %265 = vector.broadcast %c1_i32_187 : i32 to vector<32x128xi32>
    %266 = arith.cmpi sge, %25, %265 : vector<32x128xi32>
    %c1_i32_188 = arith.constant 1 : i32
    %267 = tpu.dynamic_rotate %264 by %c1_i32_188 dim 1 : vector<32x128xf32>, i32 -> vector<32x128xf32>
    %cst_189 = arith.constant 0.000000e+00 : f32
    %268 = vector.broadcast %cst_189 : f32 to vector<32x128xf32>
    %269 = arith.select %266, %267, %268 : vector<32x128xi1>, vector<32x128xf32>
    %270 = arith.addf %261, %269 : vector<32x128xf32>
    %c2_190 = arith.constant 2 : index
    %c0_191 = arith.constant 0 : index
    %c0_192 = arith.constant 0 : index
    %271 = vector.load %arg18[%c2_190, %c0_191, %c0_192] : memref<5x32x32xf32, #tpu.memory_space<vmem>>, vector<1x32x32xf32>
    %272 = vector.shape_cast %271 : vector<1x32x32xf32> to vector<32x32xf32>
    %cst_193 = arith.constant dense<0.000000e+00> : vector<32x128xf32>
    %273 = tpu.matmul %272, %146, %cst_193 {dimension_numbers = #tpu.dot_dimension_numbers<[1], [0], [0], [1], [0, 0, 1, 1], [], []>} : vector<32x32xf32>, vector<32x128xf32>, vector<32x128xf32> -> vector<32x128xf32>
    %274 = arith.addf %270, %273 : vector<32x128xf32>
    %c3_194 = arith.constant 3 : index
    %c0_195 = arith.constant 0 : index
    %c0_196 = arith.constant 0 : index
    %275 = vector.load %arg18[%c3_194, %c0_195, %c0_196] : memref<5x32x32xf32, #tpu.memory_space<vmem>>, vector<1x32x32xf32>
    %276 = vector.shape_cast %275 : vector<1x32x32xf32> to vector<32x32xf32>
    %cst_197 = arith.constant dense<0.000000e+00> : vector<32x128xf32>
    %277 = tpu.matmul %276, %146, %cst_197 {dimension_numbers = #tpu.dot_dimension_numbers<[1], [0], [0], [1], [0, 0, 1, 1], [], []>} : vector<32x32xf32>, vector<32x128xf32>, vector<32x128xf32> -> vector<32x128xf32>
    %c127_i32_198 = arith.constant 127 : i32
    %278 = vector.broadcast %c127_i32_198 : i32 to vector<32x128xi32>
    %279 = arith.cmpi slt, %25, %278 : vector<32x128xi32>
    %c127_i32_199 = arith.constant 127 : i32
    %280 = tpu.dynamic_rotate %277 by %c127_i32_199 dim 1 : vector<32x128xf32>, i32 -> vector<32x128xf32>
    %cst_200 = arith.constant 0.000000e+00 : f32
    %281 = vector.broadcast %cst_200 : f32 to vector<32x128xf32>
    %282 = arith.select %279, %280, %281 : vector<32x128xi1>, vector<32x128xf32>
    %283 = arith.addf %274, %282 : vector<32x128xf32>
    %c4_201 = arith.constant 4 : index
    %c0_202 = arith.constant 0 : index
    %c0_203 = arith.constant 0 : index
    %284 = vector.load %arg18[%c4_201, %c0_202, %c0_203] : memref<5x32x32xf32, #tpu.memory_space<vmem>>, vector<1x32x32xf32>
    %285 = vector.shape_cast %284 : vector<1x32x32xf32> to vector<32x32xf32>
    %cst_204 = arith.constant dense<0.000000e+00> : vector<32x128xf32>
    %286 = tpu.matmul %285, %146, %cst_204 {dimension_numbers = #tpu.dot_dimension_numbers<[1], [0], [0], [1], [0, 0, 1, 1], [], []>} : vector<32x32xf32>, vector<32x128xf32>, vector<32x128xf32> -> vector<32x128xf32>
    %c126_i32_205 = arith.constant 126 : i32
    %287 = vector.broadcast %c126_i32_205 : i32 to vector<32x128xi32>
    %288 = arith.cmpi slt, %25, %287 : vector<32x128xi32>
    %c126_i32_206 = arith.constant 126 : i32
    %289 = tpu.dynamic_rotate %286 by %c126_i32_206 dim 1 : vector<32x128xf32>, i32 -> vector<32x128xf32>
    %cst_207 = arith.constant 0.000000e+00 : f32
    %290 = vector.broadcast %cst_207 : f32 to vector<32x128xf32>
    %291 = arith.select %288, %289, %290 : vector<32x128xi1>, vector<32x128xf32>
    %292 = arith.addf %283, %291 : vector<32x128xf32>
    %c0_208 = arith.constant 0 : index
    %c0_209 = arith.constant 0 : index
    %293 = vector.load %arg19[%c0_208, %c0_209] : memref<32x1xf32, #tpu.memory_space<vmem>>, vector<32x1xf32>
    %294 = vector.broadcast %293 : vector<32x1xf32> to vector<32x128xf32>
    %295 = arith.addf %292, %294 : vector<32x128xf32>
    %296 = arith.mulf %253, %295 : vector<32x128xf32>
    %297 = vector.extract_strided_slice %24 {offsets = [32, 0], sizes = [32, 128], strides = [1, 1]} : vector<96x128xf32> to vector<32x128xf32>
    %298 = arith.mulf %297, %296 : vector<32x128xf32>
    %c0_210 = arith.constant 0 : index
    %c0_211 = arith.constant 0 : index
    %299 = vector.load %arg22[%c0_210, %c0_211] : memref<96x32xf32, #tpu.memory_space<vmem>>, vector<96x32xf32>
    %cst_212 = arith.constant dense<0.000000e+00> : vector<96x128xf32>
    %300 = tpu.matmul %299, %298, %cst_212 {dimension_numbers = #tpu.dot_dimension_numbers<[1], [0], [0], [1], [0, 0, 1, 1], [], []>} : vector<96x32xf32>, vector<32x128xf32>, vector<96x128xf32> -> vector<96x128xf32>
    %301 = arith.addf %145, %300 : vector<96x128xf32>
    %302 = vector.extract_strided_slice %23 {offsets = [64, 0], sizes = [32, 128], strides = [1, 1]} : vector<96x128xf32> to vector<32x128xf32>
    %c0_213 = arith.constant 0 : index
    %c0_214 = arith.constant 0 : index
    %c0_215 = arith.constant 0 : index
    %303 = vector.load %arg23[%c0_213, %c0_214, %c0_215] : memref<7x32x32xf32, #tpu.memory_space<vmem>>, vector<1x32x32xf32>
    %304 = vector.shape_cast %303 : vector<1x32x32xf32> to vector<32x32xf32>
    %cst_216 = arith.constant dense<0.000000e+00> : vector<32x128xf32>
    %305 = tpu.matmul %304, %302, %cst_216 {dimension_numbers = #tpu.dot_dimension_numbers<[1], [0], [0], [1], [0, 0, 1, 1], [], []>} : vector<32x32xf32>, vector<32x128xf32>, vector<32x128xf32> -> vector<32x128xf32>
    %c3_i32_217 = arith.constant 3 : i32
    %306 = vector.broadcast %c3_i32_217 : i32 to vector<32x128xi32>
    %307 = arith.cmpi sge, %25, %306 : vector<32x128xi32>
    %c3_i32_218 = arith.constant 3 : i32
    %308 = tpu.dynamic_rotate %305 by %c3_i32_218 dim 1 : vector<32x128xf32>, i32 -> vector<32x128xf32>
    %cst_219 = arith.constant 0.000000e+00 : f32
    %309 = vector.broadcast %cst_219 : f32 to vector<32x128xf32>
    %310 = arith.select %307, %308, %309 : vector<32x128xi1>, vector<32x128xf32>
    %c1_220 = arith.constant 1 : index
    %c0_221 = arith.constant 0 : index
    %c0_222 = arith.constant 0 : index
    %311 = vector.load %arg23[%c1_220, %c0_221, %c0_222] : memref<7x32x32xf32, #tpu.memory_space<vmem>>, vector<1x32x32xf32>
    %312 = vector.shape_cast %311 : vector<1x32x32xf32> to vector<32x32xf32>
    %cst_223 = arith.constant dense<0.000000e+00> : vector<32x128xf32>
    %313 = tpu.matmul %312, %302, %cst_223 {dimension_numbers = #tpu.dot_dimension_numbers<[1], [0], [0], [1], [0, 0, 1, 1], [], []>} : vector<32x32xf32>, vector<32x128xf32>, vector<32x128xf32> -> vector<32x128xf32>
    %c2_i32_224 = arith.constant 2 : i32
    %314 = vector.broadcast %c2_i32_224 : i32 to vector<32x128xi32>
    %315 = arith.cmpi sge, %25, %314 : vector<32x128xi32>
    %c2_i32_225 = arith.constant 2 : i32
    %316 = tpu.dynamic_rotate %313 by %c2_i32_225 dim 1 : vector<32x128xf32>, i32 -> vector<32x128xf32>
    %cst_226 = arith.constant 0.000000e+00 : f32
    %317 = vector.broadcast %cst_226 : f32 to vector<32x128xf32>
    %318 = arith.select %315, %316, %317 : vector<32x128xi1>, vector<32x128xf32>
    %319 = arith.addf %310, %318 : vector<32x128xf32>
    %c2_227 = arith.constant 2 : index
    %c0_228 = arith.constant 0 : index
    %c0_229 = arith.constant 0 : index
    %320 = vector.load %arg23[%c2_227, %c0_228, %c0_229] : memref<7x32x32xf32, #tpu.memory_space<vmem>>, vector<1x32x32xf32>
    %321 = vector.shape_cast %320 : vector<1x32x32xf32> to vector<32x32xf32>
    %cst_230 = arith.constant dense<0.000000e+00> : vector<32x128xf32>
    %322 = tpu.matmul %321, %302, %cst_230 {dimension_numbers = #tpu.dot_dimension_numbers<[1], [0], [0], [1], [0, 0, 1, 1], [], []>} : vector<32x32xf32>, vector<32x128xf32>, vector<32x128xf32> -> vector<32x128xf32>
    %c1_i32_231 = arith.constant 1 : i32
    %323 = vector.broadcast %c1_i32_231 : i32 to vector<32x128xi32>
    %324 = arith.cmpi sge, %25, %323 : vector<32x128xi32>
    %c1_i32_232 = arith.constant 1 : i32
    %325 = tpu.dynamic_rotate %322 by %c1_i32_232 dim 1 : vector<32x128xf32>, i32 -> vector<32x128xf32>
    %cst_233 = arith.constant 0.000000e+00 : f32
    %326 = vector.broadcast %cst_233 : f32 to vector<32x128xf32>
    %327 = arith.select %324, %325, %326 : vector<32x128xi1>, vector<32x128xf32>
    %328 = arith.addf %319, %327 : vector<32x128xf32>
    %c3_234 = arith.constant 3 : index
    %c0_235 = arith.constant 0 : index
    %c0_236 = arith.constant 0 : index
    %329 = vector.load %arg23[%c3_234, %c0_235, %c0_236] : memref<7x32x32xf32, #tpu.memory_space<vmem>>, vector<1x32x32xf32>
    %330 = vector.shape_cast %329 : vector<1x32x32xf32> to vector<32x32xf32>
    %cst_237 = arith.constant dense<0.000000e+00> : vector<32x128xf32>
    %331 = tpu.matmul %330, %302, %cst_237 {dimension_numbers = #tpu.dot_dimension_numbers<[1], [0], [0], [1], [0, 0, 1, 1], [], []>} : vector<32x32xf32>, vector<32x128xf32>, vector<32x128xf32> -> vector<32x128xf32>
    %332 = arith.addf %328, %331 : vector<32x128xf32>
    %c4_238 = arith.constant 4 : index
    %c0_239 = arith.constant 0 : index
    %c0_240 = arith.constant 0 : index
    %333 = vector.load %arg23[%c4_238, %c0_239, %c0_240] : memref<7x32x32xf32, #tpu.memory_space<vmem>>, vector<1x32x32xf32>
    %334 = vector.shape_cast %333 : vector<1x32x32xf32> to vector<32x32xf32>
    %cst_241 = arith.constant dense<0.000000e+00> : vector<32x128xf32>
    %335 = tpu.matmul %334, %302, %cst_241 {dimension_numbers = #tpu.dot_dimension_numbers<[1], [0], [0], [1], [0, 0, 1, 1], [], []>} : vector<32x32xf32>, vector<32x128xf32>, vector<32x128xf32> -> vector<32x128xf32>
    %c127_i32_242 = arith.constant 127 : i32
    %336 = vector.broadcast %c127_i32_242 : i32 to vector<32x128xi32>
    %337 = arith.cmpi slt, %25, %336 : vector<32x128xi32>
    %c127_i32_243 = arith.constant 127 : i32
    %338 = tpu.dynamic_rotate %335 by %c127_i32_243 dim 1 : vector<32x128xf32>, i32 -> vector<32x128xf32>
    %cst_244 = arith.constant 0.000000e+00 : f32
    %339 = vector.broadcast %cst_244 : f32 to vector<32x128xf32>
    %340 = arith.select %337, %338, %339 : vector<32x128xi1>, vector<32x128xf32>
    %341 = arith.addf %332, %340 : vector<32x128xf32>
    %c5_245 = arith.constant 5 : index
    %c0_246 = arith.constant 0 : index
    %c0_247 = arith.constant 0 : index
    %342 = vector.load %arg23[%c5_245, %c0_246, %c0_247] : memref<7x32x32xf32, #tpu.memory_space<vmem>>, vector<1x32x32xf32>
    %343 = vector.shape_cast %342 : vector<1x32x32xf32> to vector<32x32xf32>
    %cst_248 = arith.constant dense<0.000000e+00> : vector<32x128xf32>
    %344 = tpu.matmul %343, %302, %cst_248 {dimension_numbers = #tpu.dot_dimension_numbers<[1], [0], [0], [1], [0, 0, 1, 1], [], []>} : vector<32x32xf32>, vector<32x128xf32>, vector<32x128xf32> -> vector<32x128xf32>
    %c126_i32_249 = arith.constant 126 : i32
    %345 = vector.broadcast %c126_i32_249 : i32 to vector<32x128xi32>
    %346 = arith.cmpi slt, %25, %345 : vector<32x128xi32>
    %c126_i32_250 = arith.constant 126 : i32
    %347 = tpu.dynamic_rotate %344 by %c126_i32_250 dim 1 : vector<32x128xf32>, i32 -> vector<32x128xf32>
    %cst_251 = arith.constant 0.000000e+00 : f32
    %348 = vector.broadcast %cst_251 : f32 to vector<32x128xf32>
    %349 = arith.select %346, %347, %348 : vector<32x128xi1>, vector<32x128xf32>
    %350 = arith.addf %341, %349 : vector<32x128xf32>
    %c6_252 = arith.constant 6 : index
    %c0_253 = arith.constant 0 : index
    %c0_254 = arith.constant 0 : index
    %351 = vector.load %arg23[%c6_252, %c0_253, %c0_254] : memref<7x32x32xf32, #tpu.memory_space<vmem>>, vector<1x32x32xf32>
    %352 = vector.shape_cast %351 : vector<1x32x32xf32> to vector<32x32xf32>
    %cst_255 = arith.constant dense<0.000000e+00> : vector<32x128xf32>
    %353 = tpu.matmul %352, %302, %cst_255 {dimension_numbers = #tpu.dot_dimension_numbers<[1], [0], [0], [1], [0, 0, 1, 1], [], []>} : vector<32x32xf32>, vector<32x128xf32>, vector<32x128xf32> -> vector<32x128xf32>
    %c125_i32_256 = arith.constant 125 : i32
    %354 = vector.broadcast %c125_i32_256 : i32 to vector<32x128xi32>
    %355 = arith.cmpi slt, %25, %354 : vector<32x128xi32>
    %c125_i32_257 = arith.constant 125 : i32
    %356 = tpu.dynamic_rotate %353 by %c125_i32_257 dim 1 : vector<32x128xf32>, i32 -> vector<32x128xf32>
    %cst_258 = arith.constant 0.000000e+00 : f32
    %357 = vector.broadcast %cst_258 : f32 to vector<32x128xf32>
    %358 = arith.select %355, %356, %357 : vector<32x128xi1>, vector<32x128xf32>
    %359 = arith.addf %350, %358 : vector<32x128xf32>
    %c0_259 = arith.constant 0 : index
    %c0_260 = arith.constant 0 : index
    %360 = vector.load %arg24[%c0_259, %c0_260] : memref<32x1xf32, #tpu.memory_space<vmem>>, vector<32x1xf32>
    %361 = vector.broadcast %360 : vector<32x1xf32> to vector<32x128xf32>
    %362 = arith.addf %359, %361 : vector<32x128xf32>
    %c0_261 = arith.constant 0 : index
    %c0_262 = arith.constant 0 : index
    %c0_263 = arith.constant 0 : index
    %363 = vector.load %arg25[%c0_261, %c0_262, %c0_263] : memref<9x32x32xf32, #tpu.memory_space<vmem>>, vector<1x32x32xf32>
    %364 = vector.shape_cast %363 : vector<1x32x32xf32> to vector<32x32xf32>
    %cst_264 = arith.constant dense<0.000000e+00> : vector<32x128xf32>
    %365 = tpu.matmul %364, %362, %cst_264 {dimension_numbers = #tpu.dot_dimension_numbers<[1], [0], [0], [1], [0, 0, 1, 1], [], []>} : vector<32x32xf32>, vector<32x128xf32>, vector<32x128xf32> -> vector<32x128xf32>
    %c16_i32 = arith.constant 16 : i32
    %366 = vector.broadcast %c16_i32 : i32 to vector<32x128xi32>
    %367 = arith.cmpi sge, %25, %366 : vector<32x128xi32>
    %c16_i32_265 = arith.constant 16 : i32
    %368 = tpu.dynamic_rotate %365 by %c16_i32_265 dim 1 : vector<32x128xf32>, i32 -> vector<32x128xf32>
    %cst_266 = arith.constant 0.000000e+00 : f32
    %369 = vector.broadcast %cst_266 : f32 to vector<32x128xf32>
    %370 = arith.select %367, %368, %369 : vector<32x128xi1>, vector<32x128xf32>
    %c1_267 = arith.constant 1 : index
    %c0_268 = arith.constant 0 : index
    %c0_269 = arith.constant 0 : index
    %371 = vector.load %arg25[%c1_267, %c0_268, %c0_269] : memref<9x32x32xf32, #tpu.memory_space<vmem>>, vector<1x32x32xf32>
    %372 = vector.shape_cast %371 : vector<1x32x32xf32> to vector<32x32xf32>
    %cst_270 = arith.constant dense<0.000000e+00> : vector<32x128xf32>
    %373 = tpu.matmul %372, %362, %cst_270 {dimension_numbers = #tpu.dot_dimension_numbers<[1], [0], [0], [1], [0, 0, 1, 1], [], []>} : vector<32x32xf32>, vector<32x128xf32>, vector<32x128xf32> -> vector<32x128xf32>
    %c12_i32 = arith.constant 12 : i32
    %374 = vector.broadcast %c12_i32 : i32 to vector<32x128xi32>
    %375 = arith.cmpi sge, %25, %374 : vector<32x128xi32>
    %c12_i32_271 = arith.constant 12 : i32
    %376 = tpu.dynamic_rotate %373 by %c12_i32_271 dim 1 : vector<32x128xf32>, i32 -> vector<32x128xf32>
    %cst_272 = arith.constant 0.000000e+00 : f32
    %377 = vector.broadcast %cst_272 : f32 to vector<32x128xf32>
    %378 = arith.select %375, %376, %377 : vector<32x128xi1>, vector<32x128xf32>
    %379 = arith.addf %370, %378 : vector<32x128xf32>
    %c2_273 = arith.constant 2 : index
    %c0_274 = arith.constant 0 : index
    %c0_275 = arith.constant 0 : index
    %380 = vector.load %arg25[%c2_273, %c0_274, %c0_275] : memref<9x32x32xf32, #tpu.memory_space<vmem>>, vector<1x32x32xf32>
    %381 = vector.shape_cast %380 : vector<1x32x32xf32> to vector<32x32xf32>
    %cst_276 = arith.constant dense<0.000000e+00> : vector<32x128xf32>
    %382 = tpu.matmul %381, %362, %cst_276 {dimension_numbers = #tpu.dot_dimension_numbers<[1], [0], [0], [1], [0, 0, 1, 1], [], []>} : vector<32x32xf32>, vector<32x128xf32>, vector<32x128xf32> -> vector<32x128xf32>
    %c8_i32 = arith.constant 8 : i32
    %383 = vector.broadcast %c8_i32 : i32 to vector<32x128xi32>
    %384 = arith.cmpi sge, %25, %383 : vector<32x128xi32>
    %c8_i32_277 = arith.constant 8 : i32
    %385 = tpu.dynamic_rotate %382 by %c8_i32_277 dim 1 : vector<32x128xf32>, i32 -> vector<32x128xf32>
    %cst_278 = arith.constant 0.000000e+00 : f32
    %386 = vector.broadcast %cst_278 : f32 to vector<32x128xf32>
    %387 = arith.select %384, %385, %386 : vector<32x128xi1>, vector<32x128xf32>
    %388 = arith.addf %379, %387 : vector<32x128xf32>
    %c3_279 = arith.constant 3 : index
    %c0_280 = arith.constant 0 : index
    %c0_281 = arith.constant 0 : index
    %389 = vector.load %arg25[%c3_279, %c0_280, %c0_281] : memref<9x32x32xf32, #tpu.memory_space<vmem>>, vector<1x32x32xf32>
    %390 = vector.shape_cast %389 : vector<1x32x32xf32> to vector<32x32xf32>
    %cst_282 = arith.constant dense<0.000000e+00> : vector<32x128xf32>
    %391 = tpu.matmul %390, %362, %cst_282 {dimension_numbers = #tpu.dot_dimension_numbers<[1], [0], [0], [1], [0, 0, 1, 1], [], []>} : vector<32x32xf32>, vector<32x128xf32>, vector<32x128xf32> -> vector<32x128xf32>
    %c4_i32_283 = arith.constant 4 : i32
    %392 = vector.broadcast %c4_i32_283 : i32 to vector<32x128xi32>
    %393 = arith.cmpi sge, %25, %392 : vector<32x128xi32>
    %c4_i32_284 = arith.constant 4 : i32
    %394 = tpu.dynamic_rotate %391 by %c4_i32_284 dim 1 : vector<32x128xf32>, i32 -> vector<32x128xf32>
    %cst_285 = arith.constant 0.000000e+00 : f32
    %395 = vector.broadcast %cst_285 : f32 to vector<32x128xf32>
    %396 = arith.select %393, %394, %395 : vector<32x128xi1>, vector<32x128xf32>
    %397 = arith.addf %388, %396 : vector<32x128xf32>
    %c4_286 = arith.constant 4 : index
    %c0_287 = arith.constant 0 : index
    %c0_288 = arith.constant 0 : index
    %398 = vector.load %arg25[%c4_286, %c0_287, %c0_288] : memref<9x32x32xf32, #tpu.memory_space<vmem>>, vector<1x32x32xf32>
    %399 = vector.shape_cast %398 : vector<1x32x32xf32> to vector<32x32xf32>
    %cst_289 = arith.constant dense<0.000000e+00> : vector<32x128xf32>
    %400 = tpu.matmul %399, %362, %cst_289 {dimension_numbers = #tpu.dot_dimension_numbers<[1], [0], [0], [1], [0, 0, 1, 1], [], []>} : vector<32x32xf32>, vector<32x128xf32>, vector<32x128xf32> -> vector<32x128xf32>
    %401 = arith.addf %397, %400 : vector<32x128xf32>
    %c5_290 = arith.constant 5 : index
    %c0_291 = arith.constant 0 : index
    %c0_292 = arith.constant 0 : index
    %402 = vector.load %arg25[%c5_290, %c0_291, %c0_292] : memref<9x32x32xf32, #tpu.memory_space<vmem>>, vector<1x32x32xf32>
    %403 = vector.shape_cast %402 : vector<1x32x32xf32> to vector<32x32xf32>
    %cst_293 = arith.constant dense<0.000000e+00> : vector<32x128xf32>
    %404 = tpu.matmul %403, %362, %cst_293 {dimension_numbers = #tpu.dot_dimension_numbers<[1], [0], [0], [1], [0, 0, 1, 1], [], []>} : vector<32x32xf32>, vector<32x128xf32>, vector<32x128xf32> -> vector<32x128xf32>
    %c124_i32_294 = arith.constant 124 : i32
    %405 = vector.broadcast %c124_i32_294 : i32 to vector<32x128xi32>
    %406 = arith.cmpi slt, %25, %405 : vector<32x128xi32>
    %c124_i32_295 = arith.constant 124 : i32
    %407 = tpu.dynamic_rotate %404 by %c124_i32_295 dim 1 : vector<32x128xf32>, i32 -> vector<32x128xf32>
    %cst_296 = arith.constant 0.000000e+00 : f32
    %408 = vector.broadcast %cst_296 : f32 to vector<32x128xf32>
    %409 = arith.select %406, %407, %408 : vector<32x128xi1>, vector<32x128xf32>
    %410 = arith.addf %401, %409 : vector<32x128xf32>
    %c6_297 = arith.constant 6 : index
    %c0_298 = arith.constant 0 : index
    %c0_299 = arith.constant 0 : index
    %411 = vector.load %arg25[%c6_297, %c0_298, %c0_299] : memref<9x32x32xf32, #tpu.memory_space<vmem>>, vector<1x32x32xf32>
    %412 = vector.shape_cast %411 : vector<1x32x32xf32> to vector<32x32xf32>
    %cst_300 = arith.constant dense<0.000000e+00> : vector<32x128xf32>
    %413 = tpu.matmul %412, %362, %cst_300 {dimension_numbers = #tpu.dot_dimension_numbers<[1], [0], [0], [1], [0, 0, 1, 1], [], []>} : vector<32x32xf32>, vector<32x128xf32>, vector<32x128xf32> -> vector<32x128xf32>
    %c120_i32 = arith.constant 120 : i32
    %414 = vector.broadcast %c120_i32 : i32 to vector<32x128xi32>
    %415 = arith.cmpi slt, %25, %414 : vector<32x128xi32>
    %c120_i32_301 = arith.constant 120 : i32
    %416 = tpu.dynamic_rotate %413 by %c120_i32_301 dim 1 : vector<32x128xf32>, i32 -> vector<32x128xf32>
    %cst_302 = arith.constant 0.000000e+00 : f32
    %417 = vector.broadcast %cst_302 : f32 to vector<32x128xf32>
    %418 = arith.select %415, %416, %417 : vector<32x128xi1>, vector<32x128xf32>
    %419 = arith.addf %410, %418 : vector<32x128xf32>
    %c7 = arith.constant 7 : index
    %c0_303 = arith.constant 0 : index
    %c0_304 = arith.constant 0 : index
    %420 = vector.load %arg25[%c7, %c0_303, %c0_304] : memref<9x32x32xf32, #tpu.memory_space<vmem>>, vector<1x32x32xf32>
    %421 = vector.shape_cast %420 : vector<1x32x32xf32> to vector<32x32xf32>
    %cst_305 = arith.constant dense<0.000000e+00> : vector<32x128xf32>
    %422 = tpu.matmul %421, %362, %cst_305 {dimension_numbers = #tpu.dot_dimension_numbers<[1], [0], [0], [1], [0, 0, 1, 1], [], []>} : vector<32x32xf32>, vector<32x128xf32>, vector<32x128xf32> -> vector<32x128xf32>
    %c116_i32 = arith.constant 116 : i32
    %423 = vector.broadcast %c116_i32 : i32 to vector<32x128xi32>
    %424 = arith.cmpi slt, %25, %423 : vector<32x128xi32>
    %c116_i32_306 = arith.constant 116 : i32
    %425 = tpu.dynamic_rotate %422 by %c116_i32_306 dim 1 : vector<32x128xf32>, i32 -> vector<32x128xf32>
    %cst_307 = arith.constant 0.000000e+00 : f32
    %426 = vector.broadcast %cst_307 : f32 to vector<32x128xf32>
    %427 = arith.select %424, %425, %426 : vector<32x128xi1>, vector<32x128xf32>
    %428 = arith.addf %419, %427 : vector<32x128xf32>
    %c8 = arith.constant 8 : index
    %c0_308 = arith.constant 0 : index
    %c0_309 = arith.constant 0 : index
    %429 = vector.load %arg25[%c8, %c0_308, %c0_309] : memref<9x32x32xf32, #tpu.memory_space<vmem>>, vector<1x32x32xf32>
    %430 = vector.shape_cast %429 : vector<1x32x32xf32> to vector<32x32xf32>
    %cst_310 = arith.constant dense<0.000000e+00> : vector<32x128xf32>
    %431 = tpu.matmul %430, %362, %cst_310 {dimension_numbers = #tpu.dot_dimension_numbers<[1], [0], [0], [1], [0, 0, 1, 1], [], []>} : vector<32x32xf32>, vector<32x128xf32>, vector<32x128xf32> -> vector<32x128xf32>
    %c112_i32 = arith.constant 112 : i32
    %432 = vector.broadcast %c112_i32 : i32 to vector<32x128xi32>
    %433 = arith.cmpi slt, %25, %432 : vector<32x128xi32>
    %c112_i32_311 = arith.constant 112 : i32
    %434 = tpu.dynamic_rotate %431 by %c112_i32_311 dim 1 : vector<32x128xf32>, i32 -> vector<32x128xf32>
    %cst_312 = arith.constant 0.000000e+00 : f32
    %435 = vector.broadcast %cst_312 : f32 to vector<32x128xf32>
    %436 = arith.select %433, %434, %435 : vector<32x128xi1>, vector<32x128xf32>
    %437 = arith.addf %428, %436 : vector<32x128xf32>
    %c0_313 = arith.constant 0 : index
    %c0_314 = arith.constant 0 : index
    %438 = vector.load %arg26[%c0_313, %c0_314] : memref<32x1xf32, #tpu.memory_space<vmem>>, vector<32x1xf32>
    %439 = vector.broadcast %438 : vector<32x1xf32> to vector<32x128xf32>
    %440 = arith.addf %437, %439 : vector<32x128xf32>
    %c0_315 = arith.constant 0 : index
    %c0_316 = arith.constant 0 : index
    %441 = vector.load %arg29[%c0_315, %c0_316] : memref<32x32xf32, #tpu.memory_space<vmem>>, vector<32x32xf32>
    %cst_317 = arith.constant dense<0.000000e+00> : vector<32x128xf32>
    %442 = tpu.matmul %441, %440, %cst_317 {dimension_numbers = #tpu.dot_dimension_numbers<[1], [0], [0], [1], [0, 0, 1, 1], [], []>} : vector<32x32xf32>, vector<32x128xf32>, vector<32x128xf32> -> vector<32x128xf32>
    %c0_318 = arith.constant 0 : index
    %c0_319 = arith.constant 0 : index
    %443 = vector.load %arg30[%c0_318, %c0_319] : memref<32x1xf32, #tpu.memory_space<vmem>>, vector<32x1xf32>
    %444 = vector.broadcast %443 : vector<32x1xf32> to vector<32x128xf32>
    %445 = arith.addf %442, %444 : vector<32x128xf32>
    %c0_320 = arith.constant 0 : index
    %c0_321 = arith.constant 0 : index
    %c0_322 = arith.constant 0 : index
    %446 = vector.load %arg27[%c0_320, %c0_321, %c0_322] : memref<7x32x32xf32, #tpu.memory_space<vmem>>, vector<1x32x32xf32>
    %447 = vector.shape_cast %446 : vector<1x32x32xf32> to vector<32x32xf32>
    %cst_323 = arith.constant dense<0.000000e+00> : vector<32x128xf32>
    %448 = tpu.matmul %447, %302, %cst_323 {dimension_numbers = #tpu.dot_dimension_numbers<[1], [0], [0], [1], [0, 0, 1, 1], [], []>} : vector<32x32xf32>, vector<32x128xf32>, vector<32x128xf32> -> vector<32x128xf32>
    %c3_i32_324 = arith.constant 3 : i32
    %449 = vector.broadcast %c3_i32_324 : i32 to vector<32x128xi32>
    %450 = arith.cmpi sge, %25, %449 : vector<32x128xi32>
    %c3_i32_325 = arith.constant 3 : i32
    %451 = tpu.dynamic_rotate %448 by %c3_i32_325 dim 1 : vector<32x128xf32>, i32 -> vector<32x128xf32>
    %cst_326 = arith.constant 0.000000e+00 : f32
    %452 = vector.broadcast %cst_326 : f32 to vector<32x128xf32>
    %453 = arith.select %450, %451, %452 : vector<32x128xi1>, vector<32x128xf32>
    %c1_327 = arith.constant 1 : index
    %c0_328 = arith.constant 0 : index
    %c0_329 = arith.constant 0 : index
    %454 = vector.load %arg27[%c1_327, %c0_328, %c0_329] : memref<7x32x32xf32, #tpu.memory_space<vmem>>, vector<1x32x32xf32>
    %455 = vector.shape_cast %454 : vector<1x32x32xf32> to vector<32x32xf32>
    %cst_330 = arith.constant dense<0.000000e+00> : vector<32x128xf32>
    %456 = tpu.matmul %455, %302, %cst_330 {dimension_numbers = #tpu.dot_dimension_numbers<[1], [0], [0], [1], [0, 0, 1, 1], [], []>} : vector<32x32xf32>, vector<32x128xf32>, vector<32x128xf32> -> vector<32x128xf32>
    %c2_i32_331 = arith.constant 2 : i32
    %457 = vector.broadcast %c2_i32_331 : i32 to vector<32x128xi32>
    %458 = arith.cmpi sge, %25, %457 : vector<32x128xi32>
    %c2_i32_332 = arith.constant 2 : i32
    %459 = tpu.dynamic_rotate %456 by %c2_i32_332 dim 1 : vector<32x128xf32>, i32 -> vector<32x128xf32>
    %cst_333 = arith.constant 0.000000e+00 : f32
    %460 = vector.broadcast %cst_333 : f32 to vector<32x128xf32>
    %461 = arith.select %458, %459, %460 : vector<32x128xi1>, vector<32x128xf32>
    %462 = arith.addf %453, %461 : vector<32x128xf32>
    %c2_334 = arith.constant 2 : index
    %c0_335 = arith.constant 0 : index
    %c0_336 = arith.constant 0 : index
    %463 = vector.load %arg27[%c2_334, %c0_335, %c0_336] : memref<7x32x32xf32, #tpu.memory_space<vmem>>, vector<1x32x32xf32>
    %464 = vector.shape_cast %463 : vector<1x32x32xf32> to vector<32x32xf32>
    %cst_337 = arith.constant dense<0.000000e+00> : vector<32x128xf32>
    %465 = tpu.matmul %464, %302, %cst_337 {dimension_numbers = #tpu.dot_dimension_numbers<[1], [0], [0], [1], [0, 0, 1, 1], [], []>} : vector<32x32xf32>, vector<32x128xf32>, vector<32x128xf32> -> vector<32x128xf32>
    %c1_i32_338 = arith.constant 1 : i32
    %466 = vector.broadcast %c1_i32_338 : i32 to vector<32x128xi32>
    %467 = arith.cmpi sge, %25, %466 : vector<32x128xi32>
    %c1_i32_339 = arith.constant 1 : i32
    %468 = tpu.dynamic_rotate %465 by %c1_i32_339 dim 1 : vector<32x128xf32>, i32 -> vector<32x128xf32>
    %cst_340 = arith.constant 0.000000e+00 : f32
    %469 = vector.broadcast %cst_340 : f32 to vector<32x128xf32>
    %470 = arith.select %467, %468, %469 : vector<32x128xi1>, vector<32x128xf32>
    %471 = arith.addf %462, %470 : vector<32x128xf32>
    %c3_341 = arith.constant 3 : index
    %c0_342 = arith.constant 0 : index
    %c0_343 = arith.constant 0 : index
    %472 = vector.load %arg27[%c3_341, %c0_342, %c0_343] : memref<7x32x32xf32, #tpu.memory_space<vmem>>, vector<1x32x32xf32>
    %473 = vector.shape_cast %472 : vector<1x32x32xf32> to vector<32x32xf32>
    %cst_344 = arith.constant dense<0.000000e+00> : vector<32x128xf32>
    %474 = tpu.matmul %473, %302, %cst_344 {dimension_numbers = #tpu.dot_dimension_numbers<[1], [0], [0], [1], [0, 0, 1, 1], [], []>} : vector<32x32xf32>, vector<32x128xf32>, vector<32x128xf32> -> vector<32x128xf32>
    %475 = arith.addf %471, %474 : vector<32x128xf32>
    %c4_345 = arith.constant 4 : index
    %c0_346 = arith.constant 0 : index
    %c0_347 = arith.constant 0 : index
    %476 = vector.load %arg27[%c4_345, %c0_346, %c0_347] : memref<7x32x32xf32, #tpu.memory_space<vmem>>, vector<1x32x32xf32>
    %477 = vector.shape_cast %476 : vector<1x32x32xf32> to vector<32x32xf32>
    %cst_348 = arith.constant dense<0.000000e+00> : vector<32x128xf32>
    %478 = tpu.matmul %477, %302, %cst_348 {dimension_numbers = #tpu.dot_dimension_numbers<[1], [0], [0], [1], [0, 0, 1, 1], [], []>} : vector<32x32xf32>, vector<32x128xf32>, vector<32x128xf32> -> vector<32x128xf32>
    %c127_i32_349 = arith.constant 127 : i32
    %479 = vector.broadcast %c127_i32_349 : i32 to vector<32x128xi32>
    %480 = arith.cmpi slt, %25, %479 : vector<32x128xi32>
    %c127_i32_350 = arith.constant 127 : i32
    %481 = tpu.dynamic_rotate %478 by %c127_i32_350 dim 1 : vector<32x128xf32>, i32 -> vector<32x128xf32>
    %cst_351 = arith.constant 0.000000e+00 : f32
    %482 = vector.broadcast %cst_351 : f32 to vector<32x128xf32>
    %483 = arith.select %480, %481, %482 : vector<32x128xi1>, vector<32x128xf32>
    %484 = arith.addf %475, %483 : vector<32x128xf32>
    %c5_352 = arith.constant 5 : index
    %c0_353 = arith.constant 0 : index
    %c0_354 = arith.constant 0 : index
    %485 = vector.load %arg27[%c5_352, %c0_353, %c0_354] : memref<7x32x32xf32, #tpu.memory_space<vmem>>, vector<1x32x32xf32>
    %486 = vector.shape_cast %485 : vector<1x32x32xf32> to vector<32x32xf32>
    %cst_355 = arith.constant dense<0.000000e+00> : vector<32x128xf32>
    %487 = tpu.matmul %486, %302, %cst_355 {dimension_numbers = #tpu.dot_dimension_numbers<[1], [0], [0], [1], [0, 0, 1, 1], [], []>} : vector<32x32xf32>, vector<32x128xf32>, vector<32x128xf32> -> vector<32x128xf32>
    %c126_i32_356 = arith.constant 126 : i32
    %488 = vector.broadcast %c126_i32_356 : i32 to vector<32x128xi32>
    %489 = arith.cmpi slt, %25, %488 : vector<32x128xi32>
    %c126_i32_357 = arith.constant 126 : i32
    %490 = tpu.dynamic_rotate %487 by %c126_i32_357 dim 1 : vector<32x128xf32>, i32 -> vector<32x128xf32>
    %cst_358 = arith.constant 0.000000e+00 : f32
    %491 = vector.broadcast %cst_358 : f32 to vector<32x128xf32>
    %492 = arith.select %489, %490, %491 : vector<32x128xi1>, vector<32x128xf32>
    %493 = arith.addf %484, %492 : vector<32x128xf32>
    %c6_359 = arith.constant 6 : index
    %c0_360 = arith.constant 0 : index
    %c0_361 = arith.constant 0 : index
    %494 = vector.load %arg27[%c6_359, %c0_360, %c0_361] : memref<7x32x32xf32, #tpu.memory_space<vmem>>, vector<1x32x32xf32>
    %495 = vector.shape_cast %494 : vector<1x32x32xf32> to vector<32x32xf32>
    %cst_362 = arith.constant dense<0.000000e+00> : vector<32x128xf32>
    %496 = tpu.matmul %495, %302, %cst_362 {dimension_numbers = #tpu.dot_dimension_numbers<[1], [0], [0], [1], [0, 0, 1, 1], [], []>} : vector<32x32xf32>, vector<32x128xf32>, vector<32x128xf32> -> vector<32x128xf32>
    %c125_i32_363 = arith.constant 125 : i32
    %497 = vector.broadcast %c125_i32_363 : i32 to vector<32x128xi32>
    %498 = arith.cmpi slt, %25, %497 : vector<32x128xi32>
    %c125_i32_364 = arith.constant 125 : i32
    %499 = tpu.dynamic_rotate %496 by %c125_i32_364 dim 1 : vector<32x128xf32>, i32 -> vector<32x128xf32>
    %cst_365 = arith.constant 0.000000e+00 : f32
    %500 = vector.broadcast %cst_365 : f32 to vector<32x128xf32>
    %501 = arith.select %498, %499, %500 : vector<32x128xi1>, vector<32x128xf32>
    %502 = arith.addf %493, %501 : vector<32x128xf32>
    %c0_366 = arith.constant 0 : index
    %c0_367 = arith.constant 0 : index
    %503 = vector.load %arg28[%c0_366, %c0_367] : memref<32x1xf32, #tpu.memory_space<vmem>>, vector<32x1xf32>
    %504 = vector.broadcast %503 : vector<32x1xf32> to vector<32x128xf32>
    %505 = arith.addf %502, %504 : vector<32x128xf32>
    %506 = arith.mulf %445, %505 : vector<32x128xf32>
    %507 = vector.extract_strided_slice %24 {offsets = [64, 0], sizes = [32, 128], strides = [1, 1]} : vector<96x128xf32> to vector<32x128xf32>
    %508 = arith.mulf %507, %506 : vector<32x128xf32>
    %c0_368 = arith.constant 0 : index
    %c0_369 = arith.constant 0 : index
    %509 = vector.load %arg31[%c0_368, %c0_369] : memref<96x32xf32, #tpu.memory_space<vmem>>, vector<96x32xf32>
    %cst_370 = arith.constant dense<0.000000e+00> : vector<96x128xf32>
    %510 = tpu.matmul %509, %508, %cst_370 {dimension_numbers = #tpu.dot_dimension_numbers<[1], [0], [0], [1], [0, 0, 1, 1], [], []>} : vector<96x32xf32>, vector<32x128xf32>, vector<96x128xf32> -> vector<96x128xf32>
    %511 = arith.addf %301, %510 : vector<96x128xf32>
    %c0_371 = arith.constant 0 : index
    %c0_372 = arith.constant 0 : index
    %512 = vector.load %arg4[%c0_371, %c0_372] : memref<96x1xf32, #tpu.memory_space<vmem>>, vector<96x1xf32>
    %513 = vector.broadcast %512 : vector<96x1xf32> to vector<96x128xf32>
    %514 = arith.addf %511, %513 : vector<96x128xf32>
    %c0_373 = arith.constant 0 : index
    %c0_374 = arith.constant 0 : index
    %c0_375 = arith.constant 0 : index
    %515 = vector.load %arg32[%c0_373, %c0_374, %c0_375] : memref<1x96x128xf32, #tpu.memory_space<vmem>>, vector<1x96x128xf32>
    %516 = vector.shape_cast %515 : vector<1x96x128xf32> to vector<96x128xf32>
    %517 = vector.shape_cast %514 : vector<96x128xf32> to vector<1x96x128xf32>
    tpu.vector_store %arg32[%c0_373, %c0_374, %c0_375], %517 {strides = array<i32>} : memref<1x96x128xf32, #tpu.memory_space<vmem>>, vector<1x96x128xf32>,
    return
  }
  func.func @transform_0(%arg0: i32) -> (i32, i32, i32) {
    %c0_i32 = arith.constant 0 : i32
    %c0_i32_0 = arith.constant 0 : i32
    %c0_i32_1 = arith.constant 0 : i32
    return %arg0, %c0_i32, %c0_i32_0 : i32, i32, i32
  }
  func.func @transform_1(%arg0: i32) -> (i32, i32) {
    %c0_i32 = arith.constant 0 : i32
    %c0_i32_0 = arith.constant 0 : i32
    %c0_i32_1 = arith.constant 0 : i32
    return %c0_i32, %c0_i32_0 : i32, i32
  }
  func.func @transform_2(%arg0: i32) -> (i32, i32) {
    %c0_i32 = arith.constant 0 : i32
    %c0_i32_0 = arith.constant 0 : i32
    %c0_i32_1 = arith.constant 0 : i32
    return %c0_i32, %c0_i32_0 : i32, i32
  }
  func.func @transform_3(%arg0: i32) -> (i32, i32) {
    %c0_i32 = arith.constant 0 : i32
    %c0_i32_0 = arith.constant 0 : i32
    %c0_i32_1 = arith.constant 0 : i32
    return %c0_i32, %c0_i32_0 : i32, i32
  }
  func.func @transform_4(%arg0: i32) -> (i32, i32, i32) {
    %c0_i32 = arith.constant 0 : i32
    %c0_i32_0 = arith.constant 0 : i32
    %c0_i32_1 = arith.constant 0 : i32
    %c0_i32_2 = arith.constant 0 : i32
    return %c0_i32, %c0_i32_0, %c0_i32_1 : i32, i32, i32
  }
  func.func @transform_5(%arg0: i32) -> (i32, i32) {
    %c0_i32 = arith.constant 0 : i32
    %c0_i32_0 = arith.constant 0 : i32
    %c0_i32_1 = arith.constant 0 : i32
    return %c0_i32, %c0_i32_0 : i32, i32
  }
  func.func @transform_6(%arg0: i32) -> (i32, i32, i32) {
    %c0_i32 = arith.constant 0 : i32
    %c0_i32_0 = arith.constant 0 : i32
    %c0_i32_1 = arith.constant 0 : i32
    %c0_i32_2 = arith.constant 0 : i32
    return %c0_i32, %c0_i32_0, %c0_i32_1 : i32, i32, i32
  }
  func.func @transform_7(%arg0: i32) -> (i32, i32) {
    %c0_i32 = arith.constant 0 : i32
    %c0_i32_0 = arith.constant 0 : i32
    %c0_i32_1 = arith.constant 0 : i32
    return %c0_i32, %c0_i32_0 : i32, i32
  }
  func.func @transform_8(%arg0: i32) -> (i32, i32, i32) {
    %c0_i32 = arith.constant 0 : i32
    %c0_i32_0 = arith.constant 0 : i32
    %c0_i32_1 = arith.constant 0 : i32
    %c0_i32_2 = arith.constant 0 : i32
    return %c0_i32, %c0_i32_0, %c0_i32_1 : i32, i32, i32
  }
  func.func @transform_9(%arg0: i32) -> (i32, i32) {
    %c0_i32 = arith.constant 0 : i32
    %c0_i32_0 = arith.constant 0 : i32
    %c0_i32_1 = arith.constant 0 : i32
    return %c0_i32, %c0_i32_0 : i32, i32
  }
  func.func @transform_10(%arg0: i32) -> (i32, i32) {
    %c0_i32 = arith.constant 0 : i32
    %c0_i32_0 = arith.constant 0 : i32
    %c0_i32_1 = arith.constant 0 : i32
    return %c0_i32, %c0_i32_0 : i32, i32
  }
  func.func @transform_11(%arg0: i32) -> (i32, i32) {
    %c0_i32 = arith.constant 0 : i32
    %c0_i32_0 = arith.constant 0 : i32
    %c0_i32_1 = arith.constant 0 : i32
    return %c0_i32, %c0_i32_0 : i32, i32
  }
  func.func @transform_12(%arg0: i32) -> (i32, i32) {
    %c0_i32 = arith.constant 0 : i32
    %c0_i32_0 = arith.constant 0 : i32
    %c0_i32_1 = arith.constant 0 : i32
    return %c0_i32, %c0_i32_0 : i32, i32
  }
  func.func @transform_13(%arg0: i32) -> (i32, i32, i32) {
    %c0_i32 = arith.constant 0 : i32
    %c0_i32_0 = arith.constant 0 : i32
    %c0_i32_1 = arith.constant 0 : i32
    %c0_i32_2 = arith.constant 0 : i32
    return %c0_i32, %c0_i32_0, %c0_i32_1 : i32, i32, i32
  }
  func.func @transform_14(%arg0: i32) -> (i32, i32) {
    %c0_i32 = arith.constant 0 : i32
    %c0_i32_0 = arith.constant 0 : i32
    %c0_i32_1 = arith.constant 0 : i32
    return %c0_i32, %c0_i32_0 : i32, i32
  }
  func.func @transform_15(%arg0: i32) -> (i32, i32, i32) {
    %c0_i32 = arith.constant 0 : i32
    %c0_i32_0 = arith.constant 0 : i32
    %c0_i32_1 = arith.constant 0 : i32
    %c0_i32_2 = arith.constant 0 : i32
    return %c0_i32, %c0_i32_0, %c0_i32_1 : i32, i32, i32
  }
  func.func @transform_16(%arg0: i32) -> (i32, i32) {
    %c0_i32 = arith.constant 0 : i32
    %c0_i32_0 = arith.constant 0 : i32
    %c0_i32_1 = arith.constant 0 : i32
    return %c0_i32, %c0_i32_0 : i32, i32
  }
  func.func @transform_17(%arg0: i32) -> (i32, i32, i32) {
    %c0_i32 = arith.constant 0 : i32
    %c0_i32_0 = arith.constant 0 : i32
    %c0_i32_1 = arith.constant 0 : i32
    %c0_i32_2 = arith.constant 0 : i32
    return %c0_i32, %c0_i32_0, %c0_i32_1 : i32, i32, i32
  }
  func.func @transform_18(%arg0: i32) -> (i32, i32) {
    %c0_i32 = arith.constant 0 : i32
    %c0_i32_0 = arith.constant 0 : i32
    %c0_i32_1 = arith.constant 0 : i32
    return %c0_i32, %c0_i32_0 : i32, i32
  }
  func.func @transform_19(%arg0: i32) -> (i32, i32) {
    %c0_i32 = arith.constant 0 : i32
    %c0_i32_0 = arith.constant 0 : i32
    %c0_i32_1 = arith.constant 0 : i32
    return %c0_i32, %c0_i32_0 : i32, i32
  }
  func.func @transform_20(%arg0: i32) -> (i32, i32) {
    %c0_i32 = arith.constant 0 : i32
    %c0_i32_0 = arith.constant 0 : i32
    %c0_i32_1 = arith.constant 0 : i32
    return %c0_i32, %c0_i32_0 : i32, i32
  }
  func.func @transform_21(%arg0: i32) -> (i32, i32) {
    %c0_i32 = arith.constant 0 : i32
    %c0_i32_0 = arith.constant 0 : i32
    %c0_i32_1 = arith.constant 0 : i32
    return %c0_i32, %c0_i32_0 : i32, i32
  }
  func.func @transform_22(%arg0: i32) -> (i32, i32, i32) {
    %c0_i32 = arith.constant 0 : i32
    %c0_i32_0 = arith.constant 0 : i32
    %c0_i32_1 = arith.constant 0 : i32
    %c0_i32_2 = arith.constant 0 : i32
    return %c0_i32, %c0_i32_0, %c0_i32_1 : i32, i32, i32
  }
  func.func @transform_23(%arg0: i32) -> (i32, i32) {
    %c0_i32 = arith.constant 0 : i32
    %c0_i32_0 = arith.constant 0 : i32
    %c0_i32_1 = arith.constant 0 : i32
    return %c0_i32, %c0_i32_0 : i32, i32
  }
  func.func @transform_24(%arg0: i32) -> (i32, i32, i32) {
    %c0_i32 = arith.constant 0 : i32
    %c0_i32_0 = arith.constant 0 : i32
    %c0_i32_1 = arith.constant 0 : i32
    %c0_i32_2 = arith.constant 0 : i32
    return %c0_i32, %c0_i32_0, %c0_i32_1 : i32, i32, i32
  }
  func.func @transform_25(%arg0: i32) -> (i32, i32) {
    %c0_i32 = arith.constant 0 : i32
    %c0_i32_0 = arith.constant 0 : i32
    %c0_i32_1 = arith.constant 0 : i32
    return %c0_i32, %c0_i32_0 : i32, i32
  }
  func.func @transform_26(%arg0: i32) -> (i32, i32, i32) {
    %c0_i32 = arith.constant 0 : i32
    %c0_i32_0 = arith.constant 0 : i32
    %c0_i32_1 = arith.constant 0 : i32
    %c0_i32_2 = arith.constant 0 : i32
    return %c0_i32, %c0_i32_0, %c0_i32_1 : i32, i32, i32
  }
  func.func @transform_27(%arg0: i32) -> (i32, i32) {
    %c0_i32 = arith.constant 0 : i32
    %c0_i32_0 = arith.constant 0 : i32
    %c0_i32_1 = arith.constant 0 : i32
    return %c0_i32, %c0_i32_0 : i32, i32
  }
  func.func @transform_28(%arg0: i32) -> (i32, i32) {
    %c0_i32 = arith.constant 0 : i32
    %c0_i32_0 = arith.constant 0 : i32
    %c0_i32_1 = arith.constant 0 : i32
    return %c0_i32, %c0_i32_0 : i32, i32
  }
  func.func @transform_29(%arg0: i32) -> (i32, i32) {
    %c0_i32 = arith.constant 0 : i32
    %c0_i32_0 = arith.constant 0 : i32
    %c0_i32_1 = arith.constant 0 : i32
    return %c0_i32, %c0_i32_0 : i32, i32
  }
  func.func @transform_30(%arg0: i32) -> (i32, i32) {
    %c0_i32 = arith.constant 0 : i32
    %c0_i32_0 = arith.constant 0 : i32
    %c0_i32_1 = arith.constant 0 : i32
    return %c0_i32, %c0_i32_0 : i32, i32
  }
  func.func @transform_31(%arg0: i32) -> (i32, i32, i32) {
    %c0_i32 = arith.constant 0 : i32
    %c0_i32_0 = arith.constant 0 : i32
    %c0_i32_1 = arith.constant 0 : i32
    return %arg0, %c0_i32, %c0_i32_0 : i32, i32, i32
  }
}

</mosaic_0001>

<llo_original>
// kernel: tpu_custom_call.1
$region0: #{tpu_custom_call.1}
  #allocation0 [shape = 'u32[]', space=smem, size = 0x4, offset = 0x4, fixed_abs, tag = 'smem constant byte address 0x4 - core index']
  #allocation1 [shape = 'u32[144,128]{1,0:T(1,128)}', space=vmem, size = 0x12000, scoped, tag = 'internal scratch']
  %s0 = inlined_call_operand.smem [shape: u32[32], index: -1, kind: input, shape index: {}]
  %s1 = sld [smem:[%s0]]
  %s2 = scalar_lea.smem %s0, 1
  %s3 = sld [smem:[%s2]]
  %s4 = scalar_lea.smem %s0, 2
  %s5 = sld [smem:[%s4]]
  %s6 = scalar_lea.smem %s0, 3
  %s7 = sld [smem:[%s6]]
  %s8 = scalar_lea.smem %s0, 4
  %s9 = sld [smem:[%s8]]
  %s10 = scalar_lea.smem %s0, 5
  %s11 = sld [smem:[%s10]]
  %s12 = scalar_lea.smem %s0, 6
  %s13 = sld [smem:[%s12]]
  %s14 = scalar_lea.smem %s0, 7
  %s15 = sld [smem:[%s14]]
  %s16 = scalar_lea.smem %s0, 8
  %s17 = sld [smem:[%s16]]
  %s18 = scalar_lea.smem %s0, 9
  %s19 = sld [smem:[%s18]]
  %s20 = scalar_lea.smem %s0, 10
  %s21 = sld [smem:[%s20]]
  %s22 = scalar_lea.smem %s0, 11
  %s23 = sld [smem:[%s22]]
  %s24 = scalar_lea.smem %s0, 12
  %s25 = sld [smem:[%s24]]
  %s26 = scalar_lea.smem %s0, 13
  %s27 = sld [smem:[%s26]]
  %s28 = scalar_lea.smem %s0, 14
  %s29 = sld [smem:[%s28]]
  %s30 = scalar_lea.smem %s0, 15
  %s31 = sld [smem:[%s30]]
  %s32 = scalar_lea.smem %s0, 16
  %s33 = sld [smem:[%s32]]
  %s34 = scalar_lea.smem %s0, 17
  %s35 = sld [smem:[%s34]]
  %s36 = scalar_lea.smem %s0, 18
  %s37 = sld [smem:[%s36]]
  %s38 = scalar_lea.smem %s0, 19
  %s39 = sld [smem:[%s38]]
  %s40 = scalar_lea.smem %s0, 20
  %s41 = sld [smem:[%s40]]
  %s42 = scalar_lea.smem %s0, 21
  %s43 = sld [smem:[%s42]]
  %s44 = scalar_lea.smem %s0, 22
  %s45 = sld [smem:[%s44]]
  %s46 = scalar_lea.smem %s0, 23
  %s47 = sld [smem:[%s46]]
  %s48 = scalar_lea.smem %s0, 24
  %s49 = sld [smem:[%s48]]
  %s50 = scalar_lea.smem %s0, 25
  %s51 = sld [smem:[%s50]]
  %s52 = scalar_lea.smem %s0, 26
  %s53 = sld [smem:[%s52]]
  %s54 = scalar_lea.smem %s0, 27
  %s55 = sld [smem:[%s54]]
  %s56 = scalar_lea.smem %s0, 28
  %s57 = sld [smem:[%s56]]
  %s58 = scalar_lea.smem %s0, 29
  %s59 = sld [smem:[%s58]]
  %s60 = scalar_lea.smem %s0, 30
  %s61 = sld [smem:[%s60]]
  %s62 = scalar_lea.smem %s0, 31
  %s63 = sld [smem:[%s62]]
  %s64 = sld [smem:[#allocation0]]
  $region193: #{tpu_custom_call.1} parent=0
    _
  %s66 = ssub.s32 1, %s64
  %s67 = scalar_select 0, %s66, %s64
  $region1: #{tpu_custom_call.1} parent=0
    #allocation2 [shape = 'u8[98304]{0}', space=vmem, size = 0x18000, scoped, tag = 'input window, operand 0']
    #allocation3 [shape = 's32[2]{0}', space=sflag, size = 0x8, scoped, tag = 'scoped memory for tpu_custom_call.1']
    #allocation4 [shape = 's32[2]{0}', space=sflag, size = 0x8, scoped, tag = 'scoped memory for tpu_custom_call.1']
    #allocation5 [shape = 'u8[98304]{0}', space=vmem, size = 0x18000, scoped, tag = 'input window, operand 1, single buffered']
    #allocation6 [shape = 's32[1]{0}', space=sflag, size = 0x4, scoped, tag = 'scoped memory for tpu_custom_call.1']
    #allocation7 [shape = 'u8[49152]{0}', space=vmem, size = 0xc000, scoped, tag = 'input window, operand 4, single buffered']
    #allocation8 [shape = 'u8[81920]{0}', space=vmem, size = 0x14000, scoped, tag = 'input window, operand 6, single buffered']
    #allocation9 [shape = 's32[1]{0}', space=sflag, size = 0x4, scoped, tag = 'scoped memory for tpu_custom_call.1']
    #allocation10 [shape = 'u8[81920]{0}', space=vmem, size = 0x14000, scoped, tag = 'input window, operand 8, single buffered']
    #allocation11 [shape = 'u8[16384]{0}', space=vmem, size = 0x4000, scoped, tag = 'input window, operand 10, single buffered']
    #allocation12 [shape = 's32[1]{0}', space=sflag, size = 0x4, scoped, tag = 'scoped memory for tpu_custom_call.1']
    #allocation13 [shape = 'u8[81920]{0}', space=vmem, size = 0x14000, scoped, tag = 'input window, operand 13, single buffered']
    #allocation14 [shape = 'u8[16384]{0}', space=vmem, size = 0x4000, scoped, tag = 'input window, operand 19, single buffered']
    #allocation15 [shape = 's32[1]{0}', space=sflag, size = 0x4, scoped, tag = 'scoped memory for tpu_custom_call.1']
    #allocation16 [shape = 'u8[16384]{0}', space=vmem, size = 0x4000, scoped, tag = 'input window, operand 28, single buffered']
    #allocation17 [shape = 'u8[98304]{0}', space=vmem, size = 0x18000, scoped, tag = 'output window, operand 0']
    %68 = vsyncpa [#allocation3], 0
    %s69 = scalar_lea.sflag [#allocation3], 1
    %70 = vsyncpa %s69, 0
    %71 = vsyncpa [#allocation6], 0
    %72 = vsyncpa [#allocation9], 0
    %73 = vsyncpa [#allocation12], 0
    %74 = vsyncpa [#allocation15], 0
    %75 = vsyncpa [#allocation4], 0
    %s76 = scalar_lea.sflag [#allocation4], 1
    %77 = vsyncpa %s76, 0
    loop: start=0, step=1, limit=4
    $region2: #{tpu_custom_call.1} parent=1 // loop_pre_header
      _
    $region3: #{tpu_custom_call.1} parent=1 // loop_header
      %s79 = sphi 0, %s83
      %p80 = scmp.ge.s32.totalorder %s79, 4
      %s89 = sphi 0, %s91
      %s92 = sphi 0, %s89
      %s93 = sphi 0, %s92
      %s109 = sphi 0, %s93
      %s113 = sphi 0, %s113
      %s115 = sphi 0, %s113
      %s116 = sphi 0, %s115
      %s130 = sphi 0, %s116
      %s134 = sphi 0, %s134
      %s136 = sphi 0, %s134
      %s137 = sphi 0, %s136
      %s151 = sphi 0, %s137
      %s155 = sphi 0, %s155
      %s157 = sphi 0, %s155
      %s158 = sphi 0, %s157
      %s172 = sphi 0, %s158
      %s176 = sphi 0, %s176
      %s178 = sphi 0, %s176
      %s179 = sphi 0, %s178
      %s193 = sphi 0, %s179
      %s197 = sphi 0, %s197
      %s199 = sphi 0, %s197
      %s200 = sphi 0, %s199
      %s214 = sphi 0, %s200
      %s218 = sphi 0, %s218
      %s220 = sphi 0, %s218
      %s221 = sphi 0, %s220
      %s235 = sphi 0, %s221
      %s239 = sphi 0, %s239
      %s241 = sphi 0, %s239
      %s242 = sphi 0, %s241
      %s256 = sphi 0, %s242
      %s260 = sphi 0, %s260
      %s262 = sphi 0, %s260
      %s263 = sphi 0, %s262
      %s277 = sphi 0, %s263
      %s281 = sphi 0, %s281
      %s283 = sphi 0, %s281
      %s284 = sphi 0, %s283
      %s298 = sphi 0, %s284
      %s302 = sphi 0, %s302
      %s304 = sphi 0, %s302
      %s305 = sphi 0, %s304
      %s319 = sphi 0, %s305
      %s323 = sphi 0, %s323
      %s325 = sphi 0, %s323
      %s326 = sphi 0, %s325
      %s340 = sphi 0, %s326
      %s344 = sphi 0, %s344
      %s346 = sphi 0, %s344
      %s347 = sphi 0, %s346
      %s361 = sphi 0, %s347
      %s365 = sphi 0, %s365
      %s367 = sphi 0, %s365
      %s368 = sphi 0, %s367
      %s382 = sphi 0, %s368
      %s386 = sphi 0, %s386
      %s388 = sphi 0, %s386
      %s389 = sphi 0, %s388
      %s403 = sphi 0, %s389
      %s407 = sphi 0, %s407
      %s409 = sphi 0, %s407
      %s410 = sphi 0, %s409
      %s424 = sphi 0, %s410
      %s428 = sphi 0, %s428
      %s430 = sphi 0, %s428
      %s431 = sphi 0, %s430
      %s445 = sphi 0, %s431
      %s449 = sphi 0, %s449
      %s451 = sphi 0, %s449
      %s452 = sphi 0, %s451
      %s466 = sphi 0, %s452
      %s470 = sphi 0, %s470
      %s472 = sphi 0, %s470
      %s473 = sphi 0, %s472
      %s487 = sphi 0, %s473
      %s491 = sphi 0, %s491
      %s493 = sphi 0, %s491
      %s494 = sphi 0, %s493
      %s508 = sphi 0, %s494
      %s512 = sphi 0, %s512
      %s514 = sphi 0, %s512
      %s515 = sphi 0, %s514
      %s529 = sphi 0, %s515
      %s533 = sphi 0, %s533
      %s535 = sphi 0, %s533
      %s536 = sphi 0, %s535
      %s550 = sphi 0, %s536
      %s554 = sphi 0, %s554
      %s556 = sphi 0, %s554
      %s557 = sphi 0, %s556
      %s571 = sphi 0, %s557
      %s575 = sphi 0, %s575
      %s577 = sphi 0, %s575
      %s578 = sphi 0, %s577
      %s592 = sphi 0, %s578
      %s596 = sphi 0, %s596
      %s598 = sphi 0, %s596
      %s599 = sphi 0, %s598
      %s613 = sphi 0, %s599
      %s617 = sphi 0, %s617
      %s619 = sphi 0, %s617
      %s620 = sphi 0, %s619
      %s634 = sphi 0, %s620
      %s638 = sphi 0, %s638
      %s640 = sphi 0, %s638
      %s641 = sphi 0, %s640
      %s655 = sphi 0, %s641
      %s659 = sphi 0, %s659
      %s661 = sphi 0, %s659
      %s662 = sphi 0, %s661
      %s676 = sphi 0, %s662
      %s680 = sphi 0, %s680
      %s682 = sphi 0, %s680
      %s683 = sphi 0, %s682
      %s697 = sphi 0, %s683
      %s701 = sphi 0, %s701
      %s703 = sphi 0, %s701
      %s704 = sphi 0, %s703
      %s718 = sphi 0, %s704
      %s722 = sphi 0, %s722
      %s724 = sphi 0, %s722
      %s725 = sphi 0, %s724
      %s739 = sphi 0, %s725
      %s745 = sphi 0, %s747
      %s748 = sphi 0, %s745
      %s749 = sphi 0, %s748
      %s765 = sphi 0, %s749
    $region4: #{tpu_custom_call.1} parent=1 // loop_header_branch
      %82 = sbr.rel (%p80) target = $region8
    $region5: #{tpu_custom_call.1} parent=1 // loop_body
      %s84 = ssub.s32 %s79, 1
      %s85 = ssub.s32 %s79, 2
      %s86 = sadd.s32 %s79, 1
      %s87 = ssub.s32 %s79, %s86
      %p88 = scmp.eq.s32.totalorder %s87, 0
      %s90 = sadd.s32 %s89, 1
      %s91 = scalar_select %p88, %s89, %s90
      %p94 = pneg %p88
      %p95 = scmp.eq.s32.totalorder %s79, 1
      %p96 = por %p94, %p95
      %p97 = scmp.ne.s32.totalorder %s89, %s92
      %p98 = scmp.eq.s32.totalorder %s79, 0
      %p99 = por %p97, %p98
      %p100 = scmp.ne.s32.totalorder %s89, %s92
      %p101 = scmp.eq.s32.totalorder %s84, 1
      %p102 = por %p100, %p101
      %p103 = scmp.ne.s32.totalorder %s92, %s93
      %p104 = scmp.eq.s32.totalorder %s84, 0
      %p105 = por %p103, %p104
      %p106 = scmp.ne.s32.totalorder %s92, %s93
      %p107 = scmp.eq.s32.totalorder %s85, 1
      %p108 = por %p106, %p107
      %p110 = scmp.ne.s32.totalorder %s93, %s109
      %p111 = scmp.eq.s32.totalorder %s85, 0
      %p112 = por %p110, %p111
      %s114 = sadd.s32 %s113, 1
      %p117 = scmp.eq.s32.totalorder %s79, 1
      %p118 = scmp.ne.s32.totalorder %s113, %s115
      %p119 = scmp.eq.s32.totalorder %s79, 0
      %p120 = por %p118, %p119
      %p121 = scmp.ne.s32.totalorder %s113, %s115
      %p122 = scmp.eq.s32.totalorder %s84, 1
      %p123 = por %p121, %p122
      %p124 = scmp.ne.s32.totalorder %s115, %s116
      %p125 = scmp.eq.s32.totalorder %s84, 0
      %p126 = por %p124, %p125
      %p127 = scmp.ne.s32.totalorder %s115, %s116
      %p128 = scmp.eq.s32.totalorder %s85, 1
      %p129 = por %p127, %p128
      %p131 = scmp.ne.s32.totalorder %s116, %s130
      %p132 = scmp.eq.s32.totalorder %s85, 0
      %p133 = por %p131, %p132
      %s135 = sadd.s32 %s134, 1
      %p138 = scmp.eq.s32.totalorder %s79, 1
      %p139 = scmp.ne.s32.totalorder %s134, %s136
      %p140 = scmp.eq.s32.totalorder %s79, 0
      %p141 = por %p139, %p140
      %p142 = scmp.ne.s32.totalorder %s134, %s136
      %p143 = scmp.eq.s32.totalorder %s84, 1
      %p144 = por %p142, %p143
      %p145 = scmp.ne.s32.totalorder %s136, %s137
      %p146 = scmp.eq.s32.totalorder %s84, 0
      %p147 = por %p145, %p146
      %p148 = scmp.ne.s32.totalorder %s136, %s137
      %p149 = scmp.eq.s32.totalorder %s85, 1
      %p150 = por %p148, %p149
      %p152 = scmp.ne.s32.totalorder %s137, %s151
      %p153 = scmp.eq.s32.totalorder %s85, 0
      %p154 = por %p152, %p153
      %s156 = sadd.s32 %s155, 1
      %p159 = scmp.eq.s32.totalorder %s79, 1
      %p160 = scmp.ne.s32.totalorder %s155, %s157
      %p161 = scmp.eq.s32.totalorder %s79, 0
      %p162 = por %p160, %p161
      %p163 = scmp.ne.s32.totalorder %s155, %s157
      %p164 = scmp.eq.s32.totalorder %s84, 1
      %p165 = por %p163, %p164
      %p166 = scmp.ne.s32.totalorder %s157, %s158
      %p167 = scmp.eq.s32.totalorder %s84, 0
      %p168 = por %p166, %p167
      %p169 = scmp.ne.s32.totalorder %s157, %s158
      %p170 = scmp.eq.s32.totalorder %s85, 1
      %p171 = por %p169, %p170
      %p173 = scmp.ne.s32.totalorder %s158, %s172
      %p174 = scmp.eq.s32.totalorder %s85, 0
      %p175 = por %p173, %p174
      %s177 = sadd.s32 %s176, 1
      %p180 = scmp.eq.s32.totalorder %s79, 1
      %p181 = scmp.ne.s32.totalorder %s176, %s178
      %p182 = scmp.eq.s32.totalorder %s79, 0
      %p183 = por %p181, %p182
      %p184 = scmp.ne.s32.totalorder %s176, %s178
      %p185 = scmp.eq.s32.totalorder %s84, 1
      %p186 = por %p184, %p185
      %p187 = scmp.ne.s32.totalorder %s178, %s179
      %p188 = scmp.eq.s32.totalorder %s84, 0
      %p189 = por %p187, %p188
      %p190 = scmp.ne.s32.totalorder %s178, %s179
      %p191 = scmp.eq.s32.totalorder %s85, 1
      %p192 = por %p190, %p191
      %p194 = scmp.ne.s32.totalorder %s179, %s193
      %p195 = scmp.eq.s32.totalorder %s85, 0
      %p196 = por %p194, %p195
      %s198 = sadd.s32 %s197, 1
      %p201 = scmp.eq.s32.totalorder %s79, 1
      %p202 = scmp.ne.s32.totalorder %s197, %s199
      %p203 = scmp.eq.s32.totalorder %s79, 0
      %p204 = por %p202, %p203
      %p205 = scmp.ne.s32.totalorder %s197, %s199
      %p206 = scmp.eq.s32.totalorder %s84, 1
      %p207 = por %p205, %p206
      %p208 = scmp.ne.s32.totalorder %s199, %s200
      %p209 = scmp.eq.s32.totalorder %s84, 0
      %p210 = por %p208, %p209
      %p211 = scmp.ne.s32.totalorder %s199, %s200
      %p212 = scmp.eq.s32.totalorder %s85, 1
      %p213 = por %p211, %p212
      %p215 = scmp.ne.s32.totalorder %s200, %s214
      %p216 = scmp.eq.s32.totalorder %s85, 0
      %p217 = por %p215, %p216
      %s219 = sadd.s32 %s218, 1
      %p222 = scmp.eq.s32.totalorder %s79, 1
      %p223 = scmp.ne.s32.totalorder %s218, %s220
      %p224 = scmp.eq.s32.totalorder %s79, 0
      %p225 = por %p223, %p224
      %p226 = scmp.ne.s32.totalorder %s218, %s220
      %p227 = scmp.eq.s32.totalorder %s84, 1
      %p228 = por %p226, %p227
      %p229 = scmp.ne.s32.totalorder %s220, %s221
      %p230 = scmp.eq.s32.totalorder %s84, 0
      %p231 = por %p229, %p230
      %p232 = scmp.ne.s32.totalorder %s220, %s221
      %p233 = scmp.eq.s32.totalorder %s85, 1
      %p234 = por %p232, %p233
      %p236 = scmp.ne.s32.totalorder %s221, %s235
      %p237 = scmp.eq.s32.totalorder %s85, 0
      %p238 = por %p236, %p237
      %s240 = sadd.s32 %s239, 1
      %p243 = scmp.eq.s32.totalorder %s79, 1
      %p244 = scmp.ne.s32.totalorder %s239, %s241
      %p245 = scmp.eq.s32.totalorder %s79, 0
      %p246 = por %p244, %p245
      %p247 = scmp.ne.s32.totalorder %s239, %s241
      %p248 = scmp.eq.s32.totalorder %s84, 1
      %p249 = por %p247, %p248
      %p250 = scmp.ne.s32.totalorder %s241, %s242
      %p251 = scmp.eq.s32.totalorder %s84, 0
      %p252 = por %p250, %p251
      %p253 = scmp.ne.s32.totalorder %s241, %s242
      %p254 = scmp.eq.s32.totalorder %s85, 1
      %p255 = por %p253, %p254
      %p257 = scmp.ne.s32.totalorder %s242, %s256
      %p258 = scmp.eq.s32.totalorder %s85, 0
      %p259 = por %p257, %p258
      %s261 = sadd.s32 %s260, 1
      %p264 = scmp.eq.s32.totalorder %s79, 1
      %p265 = scmp.ne.s32.totalorder %s260, %s262
      %p266 = scmp.eq.s32.totalorder %s79, 0
      %p267 = por %p265, %p266
      %p268 = scmp.ne.s32.totalorder %s260, %s262
      %p269 = scmp.eq.s32.totalorder %s84, 1
      %p270 = por %p268, %p269
      %p271 = scmp.ne.s32.totalorder %s262, %s263
      %p272 = scmp.eq.s32.totalorder %s84, 0
      %p273 = por %p271, %p272
      %p274 = scmp.ne.s32.totalorder %s262, %s263
      %p275 = scmp.eq.s32.totalorder %s85, 1
      %p276 = por %p274, %p275
      %p278 = scmp.ne.s32.totalorder %s263, %s277
      %p279 = scmp.eq.s32.totalorder %s85, 0
      %p280 = por %p278, %p279
      %s282 = sadd.s32 %s281, 1
      %p285 = scmp.eq.s32.totalorder %s79, 1
      %p286 = scmp.ne.s32.totalorder %s281, %s283
      %p287 = scmp.eq.s32.totalorder %s79, 0
      %p288 = por %p286, %p287
      %p289 = scmp.ne.s32.totalorder %s281, %s283
      %p290 = scmp.eq.s32.totalorder %s84, 1
      %p291 = por %p289, %p290
      %p292 = scmp.ne.s32.totalorder %s283, %s284
      %p293 = scmp.eq.s32.totalorder %s84, 0
      %p294 = por %p292, %p293
      %p295 = scmp.ne.s32.totalorder %s283, %s284
      %p296 = scmp.eq.s32.totalorder %s85, 1
      %p297 = por %p295, %p296
      %p299 = scmp.ne.s32.totalorder %s284, %s298
      %p300 = scmp.eq.s32.totalorder %s85, 0
      %p301 = por %p299, %p300
      %s303 = sadd.s32 %s302, 1
      %p306 = scmp.eq.s32.totalorder %s79, 1
      %p307 = scmp.ne.s32.totalorder %s302, %s304
      %p308 = scmp.eq.s32.totalorder %s79, 0
      %p309 = por %p307, %p308
      %p310 = scmp.ne.s32.totalorder %s302, %s304
      %p311 = scmp.eq.s32.totalorder %s84, 1
      %p312 = por %p310, %p311
      %p313 = scmp.ne.s32.totalorder %s304, %s305
      %p314 = scmp.eq.s32.totalorder %s84, 0
      %p315 = por %p313, %p314
      %p316 = scmp.ne.s32.totalorder %s304, %s305
      %p317 = scmp.eq.s32.totalorder %s85, 1
      %p318 = por %p316, %p317
      %p320 = scmp.ne.s32.totalorder %s305, %s319
      %p321 = scmp.eq.s32.totalorder %s85, 0
      %p322 = por %p320, %p321
      %s324 = sadd.s32 %s323, 1
      %p327 = scmp.eq.s32.totalorder %s79, 1
      %p328 = scmp.ne.s32.totalorder %s323, %s325
      %p329 = scmp.eq.s32.totalorder %s79, 0
      %p330 = por %p328, %p329
      %p331 = scmp.ne.s32.totalorder %s323, %s325
      %p332 = scmp.eq.s32.totalorder %s84, 1
      %p333 = por %p331, %p332
      %p334 = scmp.ne.s32.totalorder %s325, %s326
      %p335 = scmp.eq.s32.totalorder %s84, 0
      %p336 = por %p334, %p335
      %p337 = scmp.ne.s32.totalorder %s325, %s326
      %p338 = scmp.eq.s32.totalorder %s85, 1
      %p339 = por %p337, %p338
      %p341 = scmp.ne.s32.totalorder %s326, %s340
      %p342 = scmp.eq.s32.totalorder %s85, 0
      %p343 = por %p341, %p342
      %s345 = sadd.s32 %s344, 1
      %p348 = scmp.eq.s32.totalorder %s79, 1
      %p349 = scmp.ne.s32.totalorder %s344, %s346
      %p350 = scmp.eq.s32.totalorder %s79, 0
      %p351 = por %p349, %p350
      %p352 = scmp.ne.s32.totalorder %s344, %s346
      %p353 = scmp.eq.s32.totalorder %s84, 1
      %p354 = por %p352, %p353
      %p355 = scmp.ne.s32.totalorder %s346, %s347
      %p356 = scmp.eq.s32.totalorder %s84, 0
      %p357 = por %p355, %p356
      %p358 = scmp.ne.s32.totalorder %s346, %s347
      %p359 = scmp.eq.s32.totalorder %s85, 1
      %p360 = por %p358, %p359
      %p362 = scmp.ne.s32.totalorder %s347, %s361
      %p363 = scmp.eq.s32.totalorder %s85, 0
      %p364 = por %p362, %p363
      %s366 = sadd.s32 %s365, 1
      %p369 = scmp.eq.s32.totalorder %s79, 1
      %p370 = scmp.ne.s32.totalorder %s365, %s367
      %p371 = scmp.eq.s32.totalorder %s79, 0
      %p372 = por %p370, %p371
      %p373 = scmp.ne.s32.totalorder %s365, %s367
      %p374 = scmp.eq.s32.totalorder %s84, 1
      %p375 = por %p373, %p374
      %p376 = scmp.ne.s32.totalorder %s367, %s368
      %p377 = scmp.eq.s32.totalorder %s84, 0
      %p378 = por %p376, %p377
      %p379 = scmp.ne.s32.totalorder %s367, %s368
      %p380 = scmp.eq.s32.totalorder %s85, 1
      %p381 = por %p379, %p380
      %p383 = scmp.ne.s32.totalorder %s368, %s382
      %p384 = scmp.eq.s32.totalorder %s85, 0
      %p385 = por %p383, %p384
      %s387 = sadd.s32 %s386, 1
      %p390 = scmp.eq.s32.totalorder %s79, 1
      %p391 = scmp.ne.s32.totalorder %s386, %s388
      %p392 = scmp.eq.s32.totalorder %s79, 0
      %p393 = por %p391, %p392
      %p394 = scmp.ne.s32.totalorder %s386, %s388
      %p395 = scmp.eq.s32.totalorder %s84, 1
      %p396 = por %p394, %p395
      %p397 = scmp.ne.s32.totalorder %s388, %s389
      %p398 = scmp.eq.s32.totalorder %s84, 0
      %p399 = por %p397, %p398
      %p400 = scmp.ne.s32.totalorder %s388, %s389
      %p401 = scmp.eq.s32.totalorder %s85, 1
      %p402 = por %p400, %p401
      %p404 = scmp.ne.s32.totalorder %s389, %s403
      %p405 = scmp.eq.s32.totalorder %s85, 0
      %p406 = por %p404, %p405
      %s408 = sadd.s32 %s407, 1
      %p411 = scmp.eq.s32.totalorder %s79, 1
      %p412 = scmp.ne.s32.totalorder %s407, %s409
      %p413 = scmp.eq.s32.totalorder %s79, 0
      %p414 = por %p412, %p413
      %p415 = scmp.ne.s32.totalorder %s407, %s409
      %p416 = scmp.eq.s32.totalorder %s84, 1
      %p417 = por %p415, %p416
      %p418 = scmp.ne.s32.totalorder %s409, %s410
      %p419 = scmp.eq.s32.totalorder %s84, 0
      %p420 = por %p418, %p419
      %p421 = scmp.ne.s32.totalorder %s409, %s410
      %p422 = scmp.eq.s32.totalorder %s85, 1
      %p423 = por %p421, %p422
      %p425 = scmp.ne.s32.totalorder %s410, %s424
      %p426 = scmp.eq.s32.totalorder %s85, 0
      %p427 = por %p425, %p426
      %s429 = sadd.s32 %s428, 1
      %p432 = scmp.eq.s32.totalorder %s79, 1
      %p433 = scmp.ne.s32.totalorder %s428, %s430
      %p434 = scmp.eq.s32.totalorder %s79, 0
      %p435 = por %p433, %p434
      %p436 = scmp.ne.s32.totalorder %s428, %s430
      %p437 = scmp.eq.s32.totalorder %s84, 1
      %p438 = por %p436, %p437
      %p439 = scmp.ne.s32.totalorder %s430, %s431
      %p440 = scmp.eq.s32.totalorder %s84, 0
      %p441 = por %p439, %p440
      %p442 = scmp.ne.s32.totalorder %s430, %s431
      %p443 = scmp.eq.s32.totalorder %s85, 1
      %p444 = por %p442, %p443
      %p446 = scmp.ne.s32.totalorder %s431, %s445
      %p447 = scmp.eq.s32.totalorder %s85, 0
      %p448 = por %p446, %p447
      %s450 = sadd.s32 %s449, 1
      %p453 = scmp.eq.s32.totalorder %s79, 1
      %p454 = scmp.ne.s32.totalorder %s449, %s451
      %p455 = scmp.eq.s32.totalorder %s79, 0
      %p456 = por %p454, %p455
      %p457 = scmp.ne.s32.totalorder %s449, %s451
      %p458 = scmp.eq.s32.totalorder %s84, 1
      %p459 = por %p457, %p458
      %p460 = scmp.ne.s32.totalorder %s451, %s452
      %p461 = scmp.eq.s32.totalorder %s84, 0
      %p462 = por %p460, %p461
      %p463 = scmp.ne.s32.totalorder %s451, %s452
      %p464 = scmp.eq.s32.totalorder %s85, 1
      %p465 = por %p463, %p464
      %p467 = scmp.ne.s32.totalorder %s452, %s466
      %p468 = scmp.eq.s32.totalorder %s85, 0
      %p469 = por %p467, %p468
      %s471 = sadd.s32 %s470, 1
      %p474 = scmp.eq.s32.totalorder %s79, 1
      %p475 = scmp.ne.s32.totalorder %s470, %s472
      %p476 = scmp.eq.s32.totalorder %s79, 0
      %p477 = por %p475, %p476
      %p478 = scmp.ne.s32.totalorder %s470, %s472
      %p479 = scmp.eq.s32.totalorder %s84, 1
      %p480 = por %p478, %p479
      %p481 = scmp.ne.s32.totalorder %s472, %s473
      %p482 = scmp.eq.s32.totalorder %s84, 0
      %p483 = por %p481, %p482
      %p484 = scmp.ne.s32.totalorder %s472, %s473
      %p485 = scmp.eq.s32.totalorder %s85, 1
      %p486 = por %p484, %p485
      %p488 = scmp.ne.s32.totalorder %s473, %s487
      %p489 = scmp.eq.s32.totalorder %s85, 0
      %p490 = por %p488, %p489
      %s492 = sadd.s32 %s491, 1
      %p495 = scmp.eq.s32.totalorder %s79, 1
      %p496 = scmp.ne.s32.totalorder %s491, %s493
      %p497 = scmp.eq.s32.totalorder %s79, 0
      %p498 = por %p496, %p497
      %p499 = scmp.ne.s32.totalorder %s491, %s493
      %p500 = scmp.eq.s32.totalorder %s84, 1
      %p501 = por %p499, %p500
      %p502 = scmp.ne.s32.totalorder %s493, %s494
      %p503 = scmp.eq.s32.totalorder %s84, 0
      %p504 = por %p502, %p503
      %p505 = scmp.ne.s32.totalorder %s493, %s494
      %p506 = scmp.eq.s32.totalorder %s85, 1
      %p507 = por %p505, %p506
      %p509 = scmp.ne.s32.totalorder %s494, %s508
      %p510 = scmp.eq.s32.totalorder %s85, 0
      %p511 = por %p509, %p510
      %s513 = sadd.s32 %s512, 1
      %p516 = scmp.eq.s32.totalorder %s79, 1
      %p517 = scmp.ne.s32.totalorder %s512, %s514
      %p518 = scmp.eq.s32.totalorder %s79, 0
      %p519 = por %p517, %p518
      %p520 = scmp.ne.s32.totalorder %s512, %s514
      %p521 = scmp.eq.s32.totalorder %s84, 1
      %p522 = por %p520, %p521
      %p523 = scmp.ne.s32.totalorder %s514, %s515
      %p524 = scmp.eq.s32.totalorder %s84, 0
      %p525 = por %p523, %p524
      %p526 = scmp.ne.s32.totalorder %s514, %s515
      %p527 = scmp.eq.s32.totalorder %s85, 1
      %p528 = por %p526, %p527
      %p530 = scmp.ne.s32.totalorder %s515, %s529
      %p531 = scmp.eq.s32.totalorder %s85, 0
      %p532 = por %p530, %p531
      %s534 = sadd.s32 %s533, 1
      %p537 = scmp.eq.s32.totalorder %s79, 1
      %p538 = scmp.ne.s32.totalorder %s533, %s535
      %p539 = scmp.eq.s32.totalorder %s79, 0
      %p540 = por %p538, %p539
      %p541 = scmp.ne.s32.totalorder %s533, %s535
      %p542 = scmp.eq.s32.totalorder %s84, 1
      %p543 = por %p541, %p542
      %p544 = scmp.ne.s32.totalorder %s535, %s536
      %p545 = scmp.eq.s32.totalorder %s84, 0
      %p546 = por %p544, %p545
      %p547 = scmp.ne.s32.totalorder %s535, %s536
      %p548 = scmp.eq.s32.totalorder %s85, 1
      %p549 = por %p547, %p548
      %p551 = scmp.ne.s32.totalorder %s536, %s550
      %p552 = scmp.eq.s32.totalorder %s85, 0
      %p553 = por %p551, %p552
      %s555 = sadd.s32 %s554, 1
      %p558 = scmp.eq.s32.totalorder %s79, 1
      %p559 = scmp.ne.s32.totalorder %s554, %s556
      %p560 = scmp.eq.s32.totalorder %s79, 0
      %p561 = por %p559, %p560
      %p562 = scmp.ne.s32.totalorder %s554, %s556
      %p563 = scmp.eq.s32.totalorder %s84, 1
      %p564 = por %p562, %p563
      %p565 = scmp.ne.s32.totalorder %s556, %s557
      %p566 = scmp.eq.s32.totalorder %s84, 0
      %p567 = por %p565, %p566
      %p568 = scmp.ne.s32.totalorder %s556, %s557
      %p569 = scmp.eq.s32.totalorder %s85, 1
      %p570 = por %p568, %p569
      %p572 = scmp.ne.s32.totalorder %s557, %s571
      %p573 = scmp.eq.s32.totalorder %s85, 0
      %p574 = por %p572, %p573
      %s576 = sadd.s32 %s575, 1
      %p579 = scmp.eq.s32.totalorder %s79, 1
      %p580 = scmp.ne.s32.totalorder %s575, %s577
      %p581 = scmp.eq.s32.totalorder %s79, 0
      %p582 = por %p580, %p581
      %p583 = scmp.ne.s32.totalorder %s575, %s577
      %p584 = scmp.eq.s32.totalorder %s84, 1
      %p585 = por %p583, %p584
      %p586 = scmp.ne.s32.totalorder %s577, %s578
      %p587 = scmp.eq.s32.totalorder %s84, 0
      %p588 = por %p586, %p587
      %p589 = scmp.ne.s32.totalorder %s577, %s578
      %p590 = scmp.eq.s32.totalorder %s85, 1
      %p591 = por %p589, %p590
      %p593 = scmp.ne.s32.totalorder %s578, %s592
      %p594 = scmp.eq.s32.totalorder %s85, 0
      %p595 = por %p593, %p594
      %s597 = sadd.s32 %s596, 1
      %p600 = scmp.eq.s32.totalorder %s79, 1
      %p601 = scmp.ne.s32.totalorder %s596, %s598
      %p602 = scmp.eq.s32.totalorder %s79, 0
      %p603 = por %p601, %p602
      %p604 = scmp.ne.s32.totalorder %s596, %s598
      %p605 = scmp.eq.s32.totalorder %s84, 1
      %p606 = por %p604, %p605
      %p607 = scmp.ne.s32.totalorder %s598, %s599
      %p608 = scmp.eq.s32.totalorder %s84, 0
      %p609 = por %p607, %p608
      %p610 = scmp.ne.s32.totalorder %s598, %s599
      %p611 = scmp.eq.s32.totalorder %s85, 1
      %p612 = por %p610, %p611
      %p614 = scmp.ne.s32.totalorder %s599, %s613
      %p615 = scmp.eq.s32.totalorder %s85, 0
      %p616 = por %p614, %p615
      %s618 = sadd.s32 %s617, 1
      %p621 = scmp.eq.s32.totalorder %s79, 1
      %p622 = scmp.ne.s32.totalorder %s617, %s619
      %p623 = scmp.eq.s32.totalorder %s79, 0
      %p624 = por %p622, %p623
      %p625 = scmp.ne.s32.totalorder %s617, %s619
      %p626 = scmp.eq.s32.totalorder %s84, 1
      %p627 = por %p625, %p626
      %p628 = scmp.ne.s32.totalorder %s619, %s620
      %p629 = scmp.eq.s32.totalorder %s84, 0
      %p630 = por %p628, %p629
      %p631 = scmp.ne.s32.totalorder %s619, %s620
      %p632 = scmp.eq.s32.totalorder %s85, 1
      %p633 = por %p631, %p632
      %p635 = scmp.ne.s32.totalorder %s620, %s634
      %p636 = scmp.eq.s32.totalorder %s85, 0
      %p637 = por %p635, %p636
      %s639 = sadd.s32 %s638, 1
      %p642 = scmp.eq.s32.totalorder %s79, 1
      %p643 = scmp.ne.s32.totalorder %s638, %s640
      %p644 = scmp.eq.s32.totalorder %s79, 0
      %p645 = por %p643, %p644
      %p646 = scmp.ne.s32.totalorder %s638, %s640
      %p647 = scmp.eq.s32.totalorder %s84, 1
      %p648 = por %p646, %p647
      %p649 = scmp.ne.s32.totalorder %s640, %s641
      %p650 = scmp.eq.s32.totalorder %s84, 0
      %p651 = por %p649, %p650
      %p652 = scmp.ne.s32.totalorder %s640, %s641
      %p653 = scmp.eq.s32.totalorder %s85, 1
      %p654 = por %p652, %p653
      %p656 = scmp.ne.s32.totalorder %s641, %s655
      %p657 = scmp.eq.s32.totalorder %s85, 0
      %p658 = por %p656, %p657
      %s660 = sadd.s32 %s659, 1
      %p663 = scmp.eq.s32.totalorder %s79, 1
      %p664 = scmp.ne.s32.totalorder %s659, %s661
      %p665 = scmp.eq.s32.totalorder %s79, 0
      %p666 = por %p664, %p665
      %p667 = scmp.ne.s32.totalorder %s659, %s661
      %p668 = scmp.eq.s32.totalorder %s84, 1
      %p669 = por %p667, %p668
      %p670 = scmp.ne.s32.totalorder %s661, %s662
      %p671 = scmp.eq.s32.totalorder %s84, 0
      %p672 = por %p670, %p671
      %p673 = scmp.ne.s32.totalorder %s661, %s662
      %p674 = scmp.eq.s32.totalorder %s85, 1
      %p675 = por %p673, %p674
      %p677 = scmp.ne.s32.totalorder %s662, %s676
      %p678 = scmp.eq.s32.totalorder %s85, 0
      %p679 = por %p677, %p678
      %s681 = sadd.s32 %s680, 1
      %p684 = scmp.eq.s32.totalorder %s79, 1
      %p685 = scmp.ne.s32.totalorder %s680, %s682
      %p686 = scmp.eq.s32.totalorder %s79, 0
      %p687 = por %p685, %p686
      %p688 = scmp.ne.s32.totalorder %s680, %s682
      %p689 = scmp.eq.s32.totalorder %s84, 1
      %p690 = por %p688, %p689
      %p691 = scmp.ne.s32.totalorder %s682, %s683
      %p692 = scmp.eq.s32.totalorder %s84, 0
      %p693 = por %p691, %p692
      %p694 = scmp.ne.s32.totalorder %s682, %s683
      %p695 = scmp.eq.s32.totalorder %s85, 1
      %p696 = por %p694, %p695
      %p698 = scmp.ne.s32.totalorder %s683, %s697
      %p699 = scmp.eq.s32.totalorder %s85, 0
      %p700 = por %p698, %p699
      %s702 = sadd.s32 %s701, 1
      %p705 = scmp.eq.s32.totalorder %s79, 1
      %p706 = scmp.ne.s32.totalorder %s701, %s703
      %p707 = scmp.eq.s32.totalorder %s79, 0
      %p708 = por %p706, %p707
      %p709 = scmp.ne.s32.totalorder %s701, %s703
      %p710 = scmp.eq.s32.totalorder %s84, 1
      %p711 = por %p709, %p710
      %p712 = scmp.ne.s32.totalorder %s703, %s704
      %p713 = scmp.eq.s32.totalorder %s84, 0
      %p714 = por %p712, %p713
      %p715 = scmp.ne.s32.totalorder %s703, %s704
      %p716 = scmp.eq.s32.totalorder %s85, 1
      %p717 = por %p715, %p716
      %p719 = scmp.ne.s32.totalorder %s704, %s718
      %p720 = scmp.eq.s32.totalorder %s85, 0
      %p721 = por %p719, %p720
      %s723 = sadd.s32 %s722, 1
      %p726 = scmp.eq.s32.totalorder %s79, 1
      %p727 = scmp.ne.s32.totalorder %s722, %s724
      %p728 = scmp.eq.s32.totalorder %s79, 0
      %p729 = por %p727, %p728
      %p730 = scmp.ne.s32.totalorder %s722, %s724
      %p731 = scmp.eq.s32.totalorder %s84, 1
      %p732 = por %p730, %p731
      %p733 = scmp.ne.s32.totalorder %s724, %s725
      %p734 = scmp.eq.s32.totalorder %s84, 0
      %p735 = por %p733, %p734
      %p736 = scmp.ne.s32.totalorder %s724, %s725
      %p737 = scmp.eq.s32.totalorder %s85, 1
      %p738 = por %p736, %p737
      %p740 = scmp.ne.s32.totalorder %s725, %s739
      %p741 = scmp.eq.s32.totalorder %s85, 0
      %p742 = por %p740, %p741
      %s743 = ssub.s32 %s79, %s86
      %p744 = scmp.eq.s32.totalorder %s743, 0
      %s746 = sadd.s32 %s745, 1
      %s747 = scalar_select %p744, %s745, %s746
      %p750 = pneg %p744
      %p751 = scmp.eq.s32.totalorder %s79, 1
      %p752 = por %p750, %p751
      %p753 = scmp.ne.s32.totalorder %s745, %s748
      %p754 = scmp.eq.s32.totalorder %s79, 0
      %p755 = por %p753, %p754
      %p756 = scmp.ne.s32.totalorder %s745, %s748
      %p757 = scmp.eq.s32.totalorder %s84, 1
      %p758 = por %p756, %p757
      %p759 = scmp.ne.s32.totalorder %s748, %s749
      %p760 = scmp.eq.s32.totalorder %s84, 0
      %p761 = por %p759, %p760
      %p762 = scmp.ne.s32.totalorder %s748, %s749
      %p763 = scmp.eq.s32.totalorder %s85, 1
      %p764 = por %p762, %p763
      %p766 = scmp.ne.s32.totalorder %s749, %s765
      %p767 = scmp.eq.s32.totalorder %s85, 0
      %p768 = por %p766, %p767
      %p769 = scmp.le.s32.totalorder 1, %s79
      %p770 = scmp.lt.s32.totalorder %s79, 3
      %p771 = pnand %p769, %p770
      %p772 = pneg %p771
      // Predicated region
      $region9: #{tpu_custom_call.1} parent=5 // pred_check
        _
      $region10: #{tpu_custom_call.1} parent=5 // pred_check_branch
        %774 = sbr.rel (%p771) target = $region12
      $region11: #{tpu_custom_call.1} parent=5 // pred_region
        %s775 = ssub.s32 %s79, 1
        // Predicated region
        $region13: #{tpu_custom_call.1} parent=11 // pred_check
          %p776 = pneg %p126
        $region14: #{tpu_custom_call.1} parent=11 // pred_check_branch
          %778 = sbr.rel (%p776) target = $region16
        $region15: #{tpu_custom_call.1} parent=11 // pred_region
          %s780 = ssub.s32 3072, 3072
          %781 = vsyncadd [#allocation6], %s780
          %s782 = sshll.u32 [#allocation5], 4
          %s783 = int_to_ptr.vmem [resolvable:$true] %s782
          %788 = dma.hbm_to_vmem [thread:$0]  %s3, 3072, %s783, [#allocation6], 128, 128, 8
        $region16: #{tpu_custom_call.1} parent=11 // pred_fallthru
          _
        // Predicated region
        $region17: #{tpu_custom_call.1} parent=11 // pred_check
          %p789 = pneg %p147
        $region18: #{tpu_custom_call.1} parent=11 // pred_check_branch
          %791 = sbr.rel (%p789) target = $region20
        $region19: #{tpu_custom_call.1} parent=11 // pred_region
          _
        $region20: #{tpu_custom_call.1} parent=11 // pred_fallthru
          _
        // Predicated region
        $region21: #{tpu_custom_call.1} parent=11 // pred_check
          %p792 = pneg %p168
        $region22: #{tpu_custom_call.1} parent=11 // pred_check_branch
          %794 = sbr.rel (%p792) target = $region24
        $region23: #{tpu_custom_call.1} parent=11 // pred_region
          _
        $region24: #{tpu_custom_call.1} parent=11 // pred_fallthru
          _
        // Predicated region
        $region25: #{tpu_custom_call.1} parent=11 // pred_check
          %p795 = pneg %p189
        $region26: #{tpu_custom_call.1} parent=11 // pred_check_branch
          %797 = sbr.rel (%p795) target = $region28
        $region27: #{tpu_custom_call.1} parent=11 // pred_region
          %s799 = ssub.s32 1536, 1536
          %800 = vsyncadd [#allocation6], %s799
          %s801 = sshll.u32 [#allocation7], 4
          %s802 = int_to_ptr.vmem [resolvable:$true] %s801
          %807 = dma.hbm_to_vmem [thread:$0]  %s9, 1536, %s802, [#allocation6], 128, 128, 8
        $region28: #{tpu_custom_call.1} parent=11 // pred_fallthru
          _
        // Predicated region
        $region29: #{tpu_custom_call.1} parent=11 // pred_check
          %p808 = pneg %p210
        $region30: #{tpu_custom_call.1} parent=11 // pred_check_branch
          %810 = sbr.rel (%p808) target = $region32
        $region31: #{tpu_custom_call.1} parent=11 // pred_region
          _
        $region32: #{tpu_custom_call.1} parent=11 // pred_fallthru
          _
        // Predicated region
        $region33: #{tpu_custom_call.1} parent=11 // pred_check
          %p811 = pneg %p231
        $region34: #{tpu_custom_call.1} parent=11 // pred_check_branch
          %813 = sbr.rel (%p811) target = $region36
        $region35: #{tpu_custom_call.1} parent=11 // pred_region
          %s815 = ssub.s32 2560, 2560
          %816 = vsyncadd [#allocation9], %s815
          %s817 = sshll.u32 [#allocation8], 4
          %s818 = int_to_ptr.vmem [resolvable:$true] %s817
          %823 = dma.hbm_to_vmem [thread:$0]  %s13, 2560, %s818, [#allocation9], 128, 128, 8
        $region36: #{tpu_custom_call.1} parent=11 // pred_fallthru
          _
        // Predicated region
        $region37: #{tpu_custom_call.1} parent=11 // pred_check
          %p824 = pneg %p252
        $region38: #{tpu_custom_call.1} parent=11 // pred_check_branch
          %826 = sbr.rel (%p824) target = $region40
        $region39: #{tpu_custom_call.1} parent=11 // pred_region
          _
        $region40: #{tpu_custom_call.1} parent=11 // pred_fallthru
          _
        // Predicated region
        $region41: #{tpu_custom_call.1} parent=11 // pred_check
          %p827 = pneg %p273
        $region42: #{tpu_custom_call.1} parent=11 // pred_check_branch
          %829 = sbr.rel (%p827) target = $region44
        $region43: #{tpu_custom_call.1} parent=11 // pred_region
          %s831 = ssub.s32 2560, 2560
          %832 = vsyncadd [#allocation9], %s831
          %s833 = sshll.u32 [#allocation10], 4
          %s834 = int_to_ptr.vmem [resolvable:$true] %s833
          %839 = dma.hbm_to_vmem [thread:$0]  %s17, 2560, %s834, [#allocation9], 128, 128, 8
        $region44: #{tpu_custom_call.1} parent=11 // pred_fallthru
          _
        // Predicated region
        $region45: #{tpu_custom_call.1} parent=11 // pred_check
          %p840 = pneg %p294
        $region46: #{tpu_custom_call.1} parent=11 // pred_check_branch
          %842 = sbr.rel (%p840) target = $region48
        $region47: #{tpu_custom_call.1} parent=11 // pred_region
          _
        $region48: #{tpu_custom_call.1} parent=11 // pred_fallthru
          _
        // Predicated region
        $region49: #{tpu_custom_call.1} parent=11 // pred_check
          %p843 = pneg %p315
        $region50: #{tpu_custom_call.1} parent=11 // pred_check_branch
          %845 = sbr.rel (%p843) target = $region52
        $region51: #{tpu_custom_call.1} parent=11 // pred_region
          %s847 = ssub.s32 512, 512
          %848 = vsyncadd [#allocation12], %s847
          %s849 = sshll.u32 [#allocation11], 4
          %s850 = int_to_ptr.vmem [resolvable:$true] %s849
          %855 = dma.hbm_to_vmem [thread:$0]  %s21, 512, %s850, [#allocation12], 128, 128, 8
        $region52: #{tpu_custom_call.1} parent=11 // pred_fallthru
          _
        // Predicated region
        $region53: #{tpu_custom_call.1} parent=11 // pred_check
          %p856 = pneg %p336
        $region54: #{tpu_custom_call.1} parent=11 // pred_check_branch
          %858 = sbr.rel (%p856) target = $region56
        $region55: #{tpu_custom_call.1} parent=11 // pred_region
          _
        $region56: #{tpu_custom_call.1} parent=11 // pred_fallthru
          _
        // Predicated region
        $region57: #{tpu_custom_call.1} parent=11 // pred_check
          %p859 = pneg %p357
        $region58: #{tpu_custom_call.1} parent=11 // pred_check_branch
          %861 = sbr.rel (%p859) target = $region60
        $region59: #{tpu_custom_call.1} parent=11 // pred_region
          _
        $region60: #{tpu_custom_call.1} parent=11 // pred_fallthru
          _
        // Predicated region
        $region61: #{tpu_custom_call.1} parent=11 // pred_check
          %p862 = pneg %p378
        $region62: #{tpu_custom_call.1} parent=11 // pred_check_branch
          %864 = sbr.rel (%p862) target = $region64
        $region63: #{tpu_custom_call.1} parent=11 // pred_region
          %s866 = ssub.s32 2560, 2560
          %867 = vsyncadd [#allocation12], %s866
          %s868 = sshll.u32 [#allocation13], 4
          %s869 = int_to_ptr.vmem [resolvable:$true] %s868
          %874 = dma.hbm_to_vmem [thread:$0]  %s27, 2560, %s869, [#allocation12], 128, 128, 8
        $region64: #{tpu_custom_call.1} parent=11 // pred_fallthru
          _
        // Predicated region
        $region65: #{tpu_custom_call.1} parent=11 // pred_check
          %p875 = pneg %p399
        $region66: #{tpu_custom_call.1} parent=11 // pred_check_branch
          %877 = sbr.rel (%p875) target = $region68
        $region67: #{tpu_custom_call.1} parent=11 // pred_region
          _
        $region68: #{tpu_custom_call.1} parent=11 // pred_fallthru
          _
        // Predicated region
        $region69: #{tpu_custom_call.1} parent=11 // pred_check
          %p878 = pneg %p420
        $region70: #{tpu_custom_call.1} parent=11 // pred_check_branch
          %880 = sbr.rel (%p878) target = $region72
        $region71: #{tpu_custom_call.1} parent=11 // pred_region
          _
        $region72: #{tpu_custom_call.1} parent=11 // pred_fallthru
          _
        // Predicated region
        $region73: #{tpu_custom_call.1} parent=11 // pred_check
          %p881 = pneg %p441
        $region74: #{tpu_custom_call.1} parent=11 // pred_check_branch
          %883 = sbr.rel (%p881) target = $region76
        $region75: #{tpu_custom_call.1} parent=11 // pred_region
          _
        $region76: #{tpu_custom_call.1} parent=11 // pred_fallthru
          _
        // Predicated region
        $region77: #{tpu_custom_call.1} parent=11 // pred_check
          %p884 = pneg %p462
        $region78: #{tpu_custom_call.1} parent=11 // pred_check_branch
          %886 = sbr.rel (%p884) target = $region80
        $region79: #{tpu_custom_call.1} parent=11 // pred_region
          _
        $region80: #{tpu_custom_call.1} parent=11 // pred_fallthru
          _
        // Predicated region
        $region81: #{tpu_custom_call.1} parent=11 // pred_check
          %p887 = pneg %p483
        $region82: #{tpu_custom_call.1} parent=11 // pred_check_branch
          %889 = sbr.rel (%p887) target = $region84
        $region83: #{tpu_custom_call.1} parent=11 // pred_region
          _
        $region84: #{tpu_custom_call.1} parent=11 // pred_fallthru
          _
        // Predicated region
        $region85: #{tpu_custom_call.1} parent=11 // pred_check
          %p890 = pneg %p504
        $region86: #{tpu_custom_call.1} parent=11 // pred_check_branch
          %892 = sbr.rel (%p890) target = $region88
        $region87: #{tpu_custom_call.1} parent=11 // pred_region
          %s894 = ssub.s32 512, 512
          %895 = vsyncadd [#allocation15], %s894
          %s896 = sshll.u32 [#allocation14], 4
          %s897 = int_to_ptr.vmem [resolvable:$true] %s896
          %902 = dma.hbm_to_vmem [thread:$0]  %s39, 512, %s897, [#allocation15], 128, 128, 8
        $region88: #{tpu_custom_call.1} parent=11 // pred_fallthru
          _
        // Predicated region
        $region89: #{tpu_custom_call.1} parent=11 // pred_check
          %p903 = pneg %p525
        $region90: #{tpu_custom_call.1} parent=11 // pred_check_branch
          %905 = sbr.rel (%p903) target = $region92
        $region91: #{tpu_custom_call.1} parent=11 // pred_region
          _
        $region92: #{tpu_custom_call.1} parent=11 // pred_fallthru
          _
        // Predicated region
        $region93: #{tpu_custom_call.1} parent=11 // pred_check
          %p906 = pneg %p546
        $region94: #{tpu_custom_call.1} parent=11 // pred_check_branch
          %908 = sbr.rel (%p906) target = $region96
        $region95: #{tpu_custom_call.1} parent=11 // pred_region
          _
        $region96: #{tpu_custom_call.1} parent=11 // pred_fallthru
          _
        // Predicated region
        $region97: #{tpu_custom_call.1} parent=11 // pred_check
          %p909 = pneg %p567
        $region98: #{tpu_custom_call.1} parent=11 // pred_check_branch
          %911 = sbr.rel (%p909) target = $region100
        $region99: #{tpu_custom_call.1} parent=11 // pred_region
          _
        $region100: #{tpu_custom_call.1} parent=11 // pred_fallthru
          _
        // Predicated region
        $region101: #{tpu_custom_call.1} parent=11 // pred_check
          %p912 = pneg %p588
        $region102: #{tpu_custom_call.1} parent=11 // pred_check_branch
          %914 = sbr.rel (%p912) target = $region104
        $region103: #{tpu_custom_call.1} parent=11 // pred_region
          _
        $region104: #{tpu_custom_call.1} parent=11 // pred_fallthru
          _
        // Predicated region
        $region105: #{tpu_custom_call.1} parent=11 // pred_check
          %p915 = pneg %p609
        $region106: #{tpu_custom_call.1} parent=11 // pred_check_branch
          %917 = sbr.rel (%p915) target = $region108
        $region107: #{tpu_custom_call.1} parent=11 // pred_region
          _
        $region108: #{tpu_custom_call.1} parent=11 // pred_fallthru
          _
        // Predicated region
        $region109: #{tpu_custom_call.1} parent=11 // pred_check
          %p918 = pneg %p630
        $region110: #{tpu_custom_call.1} parent=11 // pred_check_branch
          %920 = sbr.rel (%p918) target = $region112
        $region111: #{tpu_custom_call.1} parent=11 // pred_region
          _
        $region112: #{tpu_custom_call.1} parent=11 // pred_fallthru
          _
        // Predicated region
        $region113: #{tpu_custom_call.1} parent=11 // pred_check
          %p921 = pneg %p651
        $region114: #{tpu_custom_call.1} parent=11 // pred_check_branch
          %923 = sbr.rel (%p921) target = $region116
        $region115: #{tpu_custom_call.1} parent=11 // pred_region
          _
        $region116: #{tpu_custom_call.1} parent=11 // pred_fallthru
          _
        // Predicated region
        $region117: #{tpu_custom_call.1} parent=11 // pred_check
          %p924 = pneg %p672
        $region118: #{tpu_custom_call.1} parent=11 // pred_check_branch
          %926 = sbr.rel (%p924) target = $region120
        $region119: #{tpu_custom_call.1} parent=11 // pred_region
          _
        $region120: #{tpu_custom_call.1} parent=11 // pred_fallthru
          _
        // Predicated region
        $region121: #{tpu_custom_call.1} parent=11 // pred_check
          %p927 = pneg %p693
        $region122: #{tpu_custom_call.1} parent=11 // pred_check_branch
          %929 = sbr.rel (%p927) target = $region124
        $region123: #{tpu_custom_call.1} parent=11 // pred_region
          %s931 = ssub.s32 512, 512
          %932 = vsyncadd [#allocation15], %s931
          %s933 = sshll.u32 [#allocation16], 4
          %s934 = int_to_ptr.vmem [resolvable:$true] %s933
          %939 = dma.hbm_to_vmem [thread:$0]  %s57, 512, %s934, [#allocation15], 128, 128, 8
        $region124: #{tpu_custom_call.1} parent=11 // pred_fallthru
          _
        // Predicated region
        $region125: #{tpu_custom_call.1} parent=11 // pred_check
          %p940 = pneg %p714
        $region126: #{tpu_custom_call.1} parent=11 // pred_check_branch
          %942 = sbr.rel (%p940) target = $region128
        $region127: #{tpu_custom_call.1} parent=11 // pred_region
          _
        $region128: #{tpu_custom_call.1} parent=11 // pred_fallthru
          _
        // Predicated region
        $region129: #{tpu_custom_call.1} parent=11 // pred_check
          %p943 = pneg %p735
        $region130: #{tpu_custom_call.1} parent=11 // pred_check_branch
          %945 = sbr.rel (%p943) target = $region132
        $region131: #{tpu_custom_call.1} parent=11 // pred_region
          _
        $region132: #{tpu_custom_call.1} parent=11 // pred_fallthru
          _
      $region12: #{tpu_custom_call.1} parent=5 // pred_fallthru
        _
      %p946 = scmp.lt.s32.totalorder %s79, 2
      // Predicated region
      $region133: #{tpu_custom_call.1} parent=5 // pred_check
        %p947 = pneg %p946
      $region134: #{tpu_custom_call.1} parent=5 // pred_check_branch
        %949 = sbr.rel (%p947) target = $region136
      $region135: #{tpu_custom_call.1} parent=5 // pred_region
        // Predicated region
        $region137: #{tpu_custom_call.1} parent=135 // pred_check
          %p950 = pneg %p99
        $region138: #{tpu_custom_call.1} parent=135 // pred_check_branch
          %952 = sbr.rel (%p950) target = $region140
        $region139: #{tpu_custom_call.1} parent=135 // pred_region
          %s953 = sand.u32 %s89, 1
          %s954 = scalar_lea.sflag [#allocation3], %s953
          %s955 = sand.u32 %s89, 1
          %s956 = smul.addr %s955, 96
          %s957 = scalar_lea.vmem [#allocation2], %s956
          %s959 = ssub.s32 1536, 1536
          %960 = vsyncadd %s954, %s959
          %s961 = smul.addr %s79, 12
          %s962 = smul.addr %s961, 128
          %s963 = scalar_lea.hbm %s1, %s962
          %s964 = sshll.u32 %s957, 4
          %s965 = int_to_ptr.vmem [resolvable:$true] %s964
          %970 = dma.hbm_to_vmem [thread:$0]  %s963, 1536, %s965, %s954, 128, 128, 8
        $region140: #{tpu_custom_call.1} parent=135 // pred_fallthru
          _
      $region136: #{tpu_custom_call.1} parent=5 // pred_fallthru
        _
      %p971 = scmp.le.s32.totalorder 1, %s79
      %p972 = scmp.lt.s32.totalorder %s79, 3
      %p973 = pnand %p971, %p972
      %p974 = pneg %p973
      // Predicated region
      $region141: #{tpu_custom_call.1} parent=5 // pred_check
        _
      $region142: #{tpu_custom_call.1} parent=5 // pred_check_branch
        %976 = sbr.rel (%p973) target = $region144
      $region143: #{tpu_custom_call.1} parent=5 // pred_region
        %s977 = ssub.s32 %s79, 1
        %s978 = sand.u32 %s92, 1
        %s979 = scalar_lea.sflag [#allocation3], %s978
        %s980 = sand.u32 %s92, 1
        %s981 = smul.addr %s980, 96
        %s982 = scalar_lea.vmem [#allocation2], %s981
        // Predicated region
        $region145: #{tpu_custom_call.1} parent=143 // pred_check
          %p983 = pneg %p105
        $region146: #{tpu_custom_call.1} parent=143 // pred_check_branch
          %985 = sbr.rel (%p983) target = $region148
        $region147: #{tpu_custom_call.1} parent=143 // pred_region
          %986 = dma.done %s979, 1536
        $region148: #{tpu_custom_call.1} parent=143 // pred_fallthru
          _
        // Predicated region
        $region149: #{tpu_custom_call.1} parent=143 // pred_check
          %p987 = pneg %p126
        $region150: #{tpu_custom_call.1} parent=143 // pred_check_branch
          %989 = sbr.rel (%p987) target = $region152
        $region151: #{tpu_custom_call.1} parent=143 // pred_region
          %990 = dma.done [#allocation6], 3072
        $region152: #{tpu_custom_call.1} parent=143 // pred_fallthru
          _
        // Predicated region
        $region153: #{tpu_custom_call.1} parent=143 // pred_check
          %p991 = pneg %p189
        $region154: #{tpu_custom_call.1} parent=143 // pred_check_branch
          %993 = sbr.rel (%p991) target = $region156
        $region155: #{tpu_custom_call.1} parent=143 // pred_region
          %994 = dma.done [#allocation6], 1536
        $region156: #{tpu_custom_call.1} parent=143 // pred_fallthru
          _
        // Predicated region
        $region157: #{tpu_custom_call.1} parent=143 // pred_check
          %p995 = pneg %p231
        $region158: #{tpu_custom_call.1} parent=143 // pred_check_branch
          %997 = sbr.rel (%p995) target = $region160
        $region159: #{tpu_custom_call.1} parent=143 // pred_region
          %998 = dma.done [#allocation9], 2560
        $region160: #{tpu_custom_call.1} parent=143 // pred_fallthru
          _
        // Predicated region
        $region161: #{tpu_custom_call.1} parent=143 // pred_check
          %p999 = pneg %p273
        $region162: #{tpu_custom_call.1} parent=143 // pred_check_branch
          %1001 = sbr.rel (%p999) target = $region164
        $region163: #{tpu_custom_call.1} parent=143 // pred_region
          %1002 = dma.done [#allocation9], 2560
        $region164: #{tpu_custom_call.1} parent=143 // pred_fallthru
          _
        // Predicated region
        $region165: #{tpu_custom_call.1} parent=143 // pred_check
          %p1003 = pneg %p315
        $region166: #{tpu_custom_call.1} parent=143 // pred_check_branch
          %1005 = sbr.rel (%p1003) target = $region168
        $region167: #{tpu_custom_call.1} parent=143 // pred_region
          %1006 = dma.done [#allocation12], 512
        $region168: #{tpu_custom_call.1} parent=143 // pred_fallthru
          _
        // Predicated region
        $region169: #{tpu_custom_call.1} parent=143 // pred_check
          %p1007 = pneg %p378
        $region170: #{tpu_custom_call.1} parent=143 // pred_check_branch
          %1009 = sbr.rel (%p1007) target = $region172
        $region171: #{tpu_custom_call.1} parent=143 // pred_region
          %1010 = dma.done [#allocation12], 2560
        $region172: #{tpu_custom_call.1} parent=143 // pred_fallthru
          _
        // Predicated region
        $region173: #{tpu_custom_call.1} parent=143 // pred_check
          %p1011 = pneg %p504
        $region174: #{tpu_custom_call.1} parent=143 // pred_check_branch
          %1013 = sbr.rel (%p1011) target = $region176
        $region175: #{tpu_custom_call.1} parent=143 // pred_region
          %1014 = dma.done [#allocation15], 512
        $region176: #{tpu_custom_call.1} parent=143 // pred_fallthru
          _
        // Predicated region
        $region177: #{tpu_custom_call.1} parent=143 // pred_check
          %p1015 = pneg %p693
        $region178: #{tpu_custom_call.1} parent=143 // pred_check_branch
          %1017 = sbr.rel (%p1015) target = $region180
        $region179: #{tpu_custom_call.1} parent=143 // pred_region
          %1018 = dma.done [#allocation15], 512
        $region180: #{tpu_custom_call.1} parent=143 // pred_fallthru
          _
        %s1019 = sand.u32 %s92, 1
        %s1020 = scalar_lea.sflag [#allocation3], %s1019
        %s1021 = sand.u32 %s92, 1
        %s1022 = smul.addr %s1021, 96
        %s1023 = scalar_lea.vmem [#allocation2], %s1022
        %p1024 = pneg %p105
        %p1025 = pneg %p102
        %p1026 = pneg %p126
        %p1027 = pneg %p123
        %p1028 = pneg %p147
        %p1029 = pneg %p144
        %p1030 = pneg %p168
        %p1031 = pneg %p165
        %p1032 = pneg %p189
        %p1033 = pneg %p186
        %p1034 = pneg %p210
        %p1035 = pneg %p207
        %p1036 = pneg %p231
        %p1037 = pneg %p228
        %p1038 = pneg %p252
        %p1039 = pneg %p249
        %p1040 = pneg %p273
        %p1041 = pneg %p270
        %p1042 = pneg %p294
        %p1043 = pneg %p291
        %p1044 = pneg %p315
        %p1045 = pneg %p312
        %p1046 = pneg %p336
        %p1047 = pneg %p333
        %p1048 = pneg %p357
        %p1049 = pneg %p354
        %p1050 = pneg %p378
        %p1051 = pneg %p375
        %p1052 = pneg %p399
        %p1053 = pneg %p396
        %p1054 = pneg %p420
        %p1055 = pneg %p417
        %p1056 = pneg %p441
        %p1057 = pneg %p438
        %p1058 = pneg %p462
        %p1059 = pneg %p459
        %p1060 = pneg %p483
        %p1061 = pneg %p480
        %p1062 = pneg %p504
        %p1063 = pneg %p501
        %p1064 = pneg %p525
        %p1065 = pneg %p522
        %p1066 = pneg %p546
        %p1067 = pneg %p543
        %p1068 = pneg %p567
        %p1069 = pneg %p564
        %p1070 = pneg %p588
        %p1071 = pneg %p585
        %p1072 = pneg %p609
        %p1073 = pneg %p606
        %p1074 = pneg %p630
        %p1075 = pneg %p627
        %p1076 = pneg %p651
        %p1077 = pneg %p648
        %p1078 = pneg %p672
        %p1079 = pneg %p669
        %p1080 = pneg %p693
        %p1081 = pneg %p690
        %p1082 = pneg %p714
        %p1083 = pneg %p711
        %p1084 = pneg %p735
        %p1085 = pneg %p732
        %p1086 = pneg %p761
        %p1087 = pneg %p758
        %s1088 = sand.u32 %s748, 1
        %s1089 = scalar_lea.sflag [#allocation4], %s1088
        %s1090 = sand.u32 %s748, 1
        %s1091 = smul.addr %s1090, 96
        %s1092 = scalar_lea.vmem [#allocation17], %s1091
        %v1093 = vld [vmem:[%s982] sm:$0xff]
        %v1094 = vld [vmem:[%s982 + $0x8] sm:$0xff]
        %v1095 = vld [vmem:[%s982 + $0x10] sm:$0xff]
        %v1096 = vld [vmem:[%s982 + $0x18] sm:$0xff]
        %v1097 = vld [vmem:[%s982 + $0x20] sm:$0xff]
        %v1098 = vld [vmem:[%s982 + $0x28] sm:$0xff]
        %v1099 = vld [vmem:[%s982 + $0x30] sm:$0xff]
        %v1100 = vld [vmem:[%s982 + $0x38] sm:$0xff]
        %v1101 = vld [vmem:[%s982 + $0x40] sm:$0xff]
        %v1102 = vld [vmem:[%s982 + $0x48] sm:$0xff]
        %v1103 = vld [vmem:[%s982 + $0x50] sm:$0xff]
        %v1104 = vld [vmem:[%s982 + $0x58] sm:$0xff]
        %1105 = vadd.xlane.f32.xlu0 %v1093
        %v1106 = vpop.xlane.xlu0 %1105
        %1107 = vadd.xlane.f32.xlu0 %v1094
        %v1108 = vpop.xlane.xlu0 %1107
        %1109 = vadd.xlane.f32.xlu0 %v1095
        %v1110 = vpop.xlane.xlu0 %1109
        %1111 = vadd.xlane.f32.xlu0 %v1096
        %v1112 = vpop.xlane.xlu0 %1111
        %1113 = vadd.xlane.f32.xlu0 %v1097
        %v1114 = vpop.xlane.xlu0 %1113
        %1115 = vadd.xlane.f32.xlu0 %v1098
        %v1116 = vpop.xlane.xlu0 %1115
        %1117 = vadd.xlane.f32.xlu0 %v1099
        %v1118 = vpop.xlane.xlu0 %1117
        %1119 = vadd.xlane.f32.xlu0 %v1100
        %v1120 = vpop.xlane.xlu0 %1119
        %1121 = vadd.xlane.f32.xlu0 %v1101
        %v1122 = vpop.xlane.xlu0 %1121
        %1123 = vadd.xlane.f32.xlu0 %v1102
        %v1124 = vpop.xlane.xlu0 %1123
        %1125 = vadd.xlane.f32.xlu0 %v1103
        %v1126 = vpop.xlane.xlu0 %1125
        %1127 = vadd.xlane.f32.xlu0 %v1104
        %v1128 = vpop.xlane.xlu0 %1127
        %v1129 = vmul.f32 %v1106, 0.0078125
        %v1130 = vmul.f32 %v1108, 0.0078125
        %v1131 = vmul.f32 %v1110, 0.0078125
        %v1132 = vmul.f32 %v1112, 0.0078125
        %v1133 = vmul.f32 %v1114, 0.0078125
        %v1134 = vmul.f32 %v1116, 0.0078125
        %v1135 = vmul.f32 %v1118, 0.0078125
        %v1136 = vmul.f32 %v1120, 0.0078125
        %v1137 = vmul.f32 %v1122, 0.0078125
        %v1138 = vmul.f32 %v1124, 0.0078125
        %v1139 = vmul.f32 %v1126, 0.0078125
        %v1140 = vmul.f32 %v1128, 0.0078125
        %v1141 = vsub.f32 %v1093, %v1129
        %v1142 = vsub.f32 %v1094, %v1130
        %v1143 = vsub.f32 %v1095, %v1131
        %v1144 = vsub.f32 %v1096, %v1132
        %v1145 = vsub.f32 %v1097, %v1133
        %v1146 = vsub.f32 %v1098, %v1134
        %v1147 = vsub.f32 %v1099, %v1135
        %v1148 = vsub.f32 %v1100, %v1136
        %v1149 = vsub.f32 %v1101, %v1137
        %v1150 = vsub.f32 %v1102, %v1138
        %v1151 = vsub.f32 %v1103, %v1139
        %v1152 = vsub.f32 %v1104, %v1140
        %v1153 = vmul.f32 %v1141, %v1141
        %v1154 = vmul.f32 %v1142, %v1142
        %v1155 = vmul.f32 %v1143, %v1143
        %v1156 = vmul.f32 %v1144, %v1144
        %v1157 = vmul.f32 %v1145, %v1145
        %v1158 = vmul.f32 %v1146, %v1146
        %v1159 = vmul.f32 %v1147, %v1147
        %v1160 = vmul.f32 %v1148, %v1148
        %v1161 = vmul.f32 %v1149, %v1149
        %v1162 = vmul.f32 %v1150, %v1150
        %v1163 = vmul.f32 %v1151, %v1151
        %v1164 = vmul.f32 %v1152, %v1152
        %1165 = vadd.xlane.f32.xlu0 %v1153
        %v1166 = vpop.xlane.xlu0 %1165
        %1167 = vadd.xlane.f32.xlu0 %v1154
        %v1168 = vpop.xlane.xlu0 %1167
        %1169 = vadd.xlane.f32.xlu0 %v1155
        %v1170 = vpop.xlane.xlu0 %1169
        %1171 = vadd.xlane.f32.xlu0 %v1156
        %v1172 = vpop.xlane.xlu0 %1171
        %1173 = vadd.xlane.f32.xlu0 %v1157
        %v1174 = vpop.xlane.xlu0 %1173
        %1175 = vadd.xlane.f32.xlu0 %v1158
        %v1176 = vpop.xlane.xlu0 %1175
        %1177 = vadd.xlane.f32.xlu0 %v1159
        %v1178 = vpop.xlane.xlu0 %1177
        %1179 = vadd.xlane.f32.xlu0 %v1160
        %v1180 = vpop.xlane.xlu0 %1179
        %1181 = vadd.xlane.f32.xlu0 %v1161
        %v1182 = vpop.xlane.xlu0 %1181
        %1183 = vadd.xlane.f32.xlu0 %v1162
        %v1184 = vpop.xlane.xlu0 %1183
        %1185 = vadd.xlane.f32.xlu0 %v1163
        %v1186 = vpop.xlane.xlu0 %1185
        %1187 = vadd.xlane.f32.xlu0 %v1164
        %v1188 = vpop.xlane.xlu0 %1187
        %v1189 = vmul.f32 %v1166, 0.0078125
        %v1190 = vmul.f32 %v1168, 0.0078125
        %v1191 = vmul.f32 %v1170, 0.0078125
        %v1192 = vmul.f32 %v1172, 0.0078125
        %v1193 = vmul.f32 %v1174, 0.0078125
        %v1194 = vmul.f32 %v1176, 0.0078125
        %v1195 = vmul.f32 %v1178, 0.0078125
        %v1196 = vmul.f32 %v1180, 0.0078125
        %v1197 = vmul.f32 %v1182, 0.0078125
        %v1198 = vmul.f32 %v1184, 0.0078125
        %v1199 = vmul.f32 %v1186, 0.0078125
        %v1200 = vmul.f32 %v1188, 0.0078125
        %v1201 = vadd.f32 %v1189, 1e-06
        %v1202 = vadd.f32 %v1190, 1e-06
        %v1203 = vadd.f32 %v1191, 1e-06
        %v1204 = vadd.f32 %v1192, 1e-06
        %v1205 = vadd.f32 %v1193, 1e-06
        %v1206 = vadd.f32 %v1194, 1e-06
        %v1207 = vadd.f32 %v1195, 1e-06
        %v1208 = vadd.f32 %v1196, 1e-06
        %v1209 = vadd.f32 %v1197, 1e-06
        %v1210 = vadd.f32 %v1198, 1e-06
        %v1211 = vadd.f32 %v1199, 1e-06
        %v1212 = vadd.f32 %v1200, 1e-06
        %v1213 = vrsqrt.pop %v1201
        %v1214 = vrsqrt.pop %v1202
        %v1215 = vrsqrt.pop %v1203
        %v1216 = vrsqrt.pop %v1204
        %v1217 = vrsqrt.pop %v1205
        %v1218 = vrsqrt.pop %v1206
        %v1219 = vrsqrt.pop %v1207
        %v1220 = vrsqrt.pop %v1208
        %v1221 = vrsqrt.pop %v1209
        %v1222 = vrsqrt.pop %v1210
        %v1223 = vrsqrt.pop %v1211
        %v1224 = vrsqrt.pop %v1212
        %v1225 = vmul.f32 %v1141, %v1213
        %v1226 = vmul.f32 %v1142, %v1214
        %v1227 = vmul.f32 %v1143, %v1215
        %v1228 = vmul.f32 %v1144, %v1216
        %v1229 = vmul.f32 %v1145, %v1217
        %v1230 = vmul.f32 %v1146, %v1218
        %v1231 = vmul.f32 %v1147, %v1219
        %v1232 = vmul.f32 %v1148, %v1220
        %v1233 = vmul.f32 %v1149, %v1221
        %v1234 = vmul.f32 %v1150, %v1222
        %v1235 = vmul.f32 %v1151, %v1223
        %v1236 = vmul.f32 %v1152, %v1224
        %v1237 = vld [vmem:[#allocation5] sm:$0xff]
        %v1238 = vld [vmem:[#allocation5 + $0x8] sm:$0xff]
        %v1239 = vld [vmem:[#allocation5 + $0x10] sm:$0xff]
        %v1240 = vld [vmem:[#allocation5 + $0x18] sm:$0xff]
        %v1241 = vld [vmem:[#allocation5 + $0x20] sm:$0xff]
        %v1242 = vld [vmem:[#allocation5 + $0x28] sm:$0xff]
        %v1243 = vld [vmem:[#allocation5 + $0x30] sm:$0xff]
        %v1244 = vld [vmem:[#allocation5 + $0x38] sm:$0xff]
        %v1245 = vld [vmem:[#allocation5 + $0x40] sm:$0xff]
        %v1246 = vld [vmem:[#allocation5 + $0x48] sm:$0xff]
        %v1247 = vld [vmem:[#allocation5 + $0x50] sm:$0xff]
        %v1248 = vld [vmem:[#allocation5 + $0x58] sm:$0xff]
        %v1249 = vld [vmem:[#allocation5 + $0x60] sm:$0xff]
        %v1250 = vld [vmem:[#allocation5 + $0x68] sm:$0xff]
        %v1251 = vld [vmem:[#allocation5 + $0x70] sm:$0xff]
        %v1252 = vld [vmem:[#allocation5 + $0x78] sm:$0xff]
        %v1253 = vld [vmem:[#allocation5 + $0x80] sm:$0xff]
        %v1254 = vld [vmem:[#allocation5 + $0x88] sm:$0xff]
        %v1255 = vld [vmem:[#allocation5 + $0x90] sm:$0xff]
        %v1256 = vld [vmem:[#allocation5 + $0x98] sm:$0xff]
        %v1257 = vld [vmem:[#allocation5 + $0xa0] sm:$0xff]
        %v1258 = vld [vmem:[#allocation5 + $0xa8] sm:$0xff]
        %v1259 = vld [vmem:[#allocation5 + $0xb0] sm:$0xff]
        %v1260 = vld [vmem:[#allocation5 + $0xb8] sm:$0xff]
        %v1261 = vld [vmem:[%s5] sm:$0xff]
        %v1262 = vld [vmem:[%s5 + $0x8] sm:$0xff]
        %v1263 = vld [vmem:[%s5 + $0x10] sm:$0xff]
        %v1264 = vld [vmem:[%s5 + $0x18] sm:$0xff]
        %v1265 = vld [vmem:[%s5 + $0x20] sm:$0xff]
        %v1266 = vld [vmem:[%s5 + $0x28] sm:$0xff]
        %v1267 = vld [vmem:[%s5 + $0x30] sm:$0xff]
        %v1268 = vld [vmem:[%s5 + $0x38] sm:$0xff]
        %v1269 = vld [vmem:[%s5 + $0x40] sm:$0xff]
        %v1270 = vld [vmem:[%s5 + $0x48] sm:$0xff]
        %v1271 = vld [vmem:[%s5 + $0x50] sm:$0xff]
        %v1272 = vld [vmem:[%s5 + $0x58] sm:$0xff]
        %v1273 = vld [vmem:[%s5 + $0x60] sm:$0xff]
        %v1274 = vld [vmem:[%s5 + $0x68] sm:$0xff]
        %v1275 = vld [vmem:[%s5 + $0x70] sm:$0xff]
        %v1276 = vld [vmem:[%s5 + $0x78] sm:$0xff]
        %v1277 = vld [vmem:[%s5 + $0x80] sm:$0xff]
        %v1278 = vld [vmem:[%s5 + $0x88] sm:$0xff]
        %v1279 = vld [vmem:[%s5 + $0x90] sm:$0xff]
        %v1280 = vld [vmem:[%s5 + $0x98] sm:$0xff]
        %v1281 = vld [vmem:[%s5 + $0xa0] sm:$0xff]
        %v1282 = vld [vmem:[%s5 + $0xa8] sm:$0xff]
        %v1283 = vld [vmem:[%s5 + $0xb0] sm:$0xff]
        %v1284 = vld [vmem:[%s5 + $0xb8] sm:$0xff]
        %1286 = vset.pattern.permute.xlu0 0
        %1287 = vperm.xlu0 %1286, %v1261
        %v1288 = vpop.permute.xlu0 %1287
        %1291 = vset.pattern.permute.xlu0 0
        %1292 = vperm.xlu0 %1291, %v1262
        %v1293 = vpop.permute.xlu0 %1292
        %1296 = vset.pattern.permute.xlu0 0
        %1297 = vperm.xlu0 %1296, %v1263
        %v1298 = vpop.permute.xlu0 %1297
        %1301 = vset.pattern.permute.xlu0 0
        %1302 = vperm.xlu0 %1301, %v1264
        %v1303 = vpop.permute.xlu0 %1302
        %1306 = vset.pattern.permute.xlu0 0
        %1307 = vperm.xlu0 %1306, %v1265
        %v1308 = vpop.permute.xlu0 %1307
        %1311 = vset.pattern.permute.xlu0 0
        %1312 = vperm.xlu0 %1311, %v1266
        %v1313 = vpop.permute.xlu0 %1312
        %1316 = vset.pattern.permute.xlu0 0
        %1317 = vperm.xlu0 %1316, %v1267
        %v1318 = vpop.permute.xlu0 %1317
        %1321 = vset.pattern.permute.xlu0 0
        %1322 = vperm.xlu0 %1321, %v1268
        %v1323 = vpop.permute.xlu0 %1322
        %1326 = vset.pattern.permute.xlu0 0
        %1327 = vperm.xlu0 %1326, %v1269
        %v1328 = vpop.permute.xlu0 %1327
        %1331 = vset.pattern.permute.xlu0 0
        %1332 = vperm.xlu0 %1331, %v1270
        %v1333 = vpop.permute.xlu0 %1332
        %1336 = vset.pattern.permute.xlu0 0
        %1337 = vperm.xlu0 %1336, %v1271
        %v1338 = vpop.permute.xlu0 %1337
        %1341 = vset.pattern.permute.xlu0 0
        %1342 = vperm.xlu0 %1341, %v1272
        %v1343 = vpop.permute.xlu0 %1342
        %1346 = vset.pattern.permute.xlu0 0
        %1347 = vperm.xlu0 %1346, %v1273
        %v1348 = vpop.permute.xlu0 %1347
        %1351 = vset.pattern.permute.xlu0 0
        %1352 = vperm.xlu0 %1351, %v1274
        %v1353 = vpop.permute.xlu0 %1352
        %1356 = vset.pattern.permute.xlu0 0
        %1357 = vperm.xlu0 %1356, %v1275
        %v1358 = vpop.permute.xlu0 %1357
        %1361 = vset.pattern.permute.xlu0 0
        %1362 = vperm.xlu0 %1361, %v1276
        %v1363 = vpop.permute.xlu0 %1362
        %1366 = vset.pattern.permute.xlu0 0
        %1367 = vperm.xlu0 %1366, %v1277
        %v1368 = vpop.permute.xlu0 %1367
        %1371 = vset.pattern.permute.xlu0 0
        %1372 = vperm.xlu0 %1371, %v1278
        %v1373 = vpop.permute.xlu0 %1372
        %1376 = vset.pattern.permute.xlu0 0
        %1377 = vperm.xlu0 %1376, %v1279
        %v1378 = vpop.permute.xlu0 %1377
        %1381 = vset.pattern.permute.xlu0 0
        %1382 = vperm.xlu0 %1381, %v1280
        %v1383 = vpop.permute.xlu0 %1382
        %1386 = vset.pattern.permute.xlu0 0
        %1387 = vperm.xlu0 %1386, %v1281
        %v1388 = vpop.permute.xlu0 %1387
        %1391 = vset.pattern.permute.xlu0 0
        %1392 = vperm.xlu0 %1391, %v1282
        %v1393 = vpop.permute.xlu0 %1392
        %1396 = vset.pattern.permute.xlu0 0
        %1397 = vperm.xlu0 %1396, %v1283
        %v1398 = vpop.permute.xlu0 %1397
        %1401 = vset.pattern.permute.xlu0 0
        %1402 = vperm.xlu0 %1401, %v1284
        %v1403 = vpop.permute.xlu0 %1402
        %vm1405 = vcmask 785408
        %v1407 = vsel %vm1405, %v1237, 0
        %v1410 = vsel %vm1405, %v1238, 0
        %v1413 = vsel %vm1405, %v1239, 0
        %v1416 = vsel %vm1405, %v1240, 0
        %v1419 = vsel %vm1405, %v1241, 0
        %v1422 = vsel %vm1405, %v1242, 0
        %v1425 = vsel %vm1405, %v1243, 0
        %v1428 = vsel %vm1405, %v1244, 0
        %v1431 = vsel %vm1405, %v1245, 0
        %v1434 = vsel %vm1405, %v1246, 0
        %v1437 = vsel %vm1405, %v1247, 0
        %v1440 = vsel %vm1405, %v1248, 0
        %v1443 = vsel %vm1405, %v1249, 0
        %v1446 = vsel %vm1405, %v1250, 0
        %v1449 = vsel %vm1405, %v1251, 0
        %v1452 = vsel %vm1405, %v1252, 0
        %v1455 = vsel %vm1405, %v1253, 0
        %v1458 = vsel %vm1405, %v1254, 0
        %v1461 = vsel %vm1405, %v1255, 0
        %v1464 = vsel %vm1405, %v1256, 0
        %v1467 = vsel %vm1405, %v1257, 0
        %v1470 = vsel %vm1405, %v1258, 0
        %v1473 = vsel %vm1405, %v1259, 0
        %v1476 = vsel %vm1405, %v1260, 0
        %1478 = vmatprep.subr.mxu0 0.0
        %1479 = vmatpush1.msra.mxu0 %v1225
        %1480 = vmatprep.subr.mxu0 0.0
        %1481 = vmatpush1.msra.mxu0 %v1226
        %1482 = vmatprep.subr.mxu0 0.0
        %1483 = vmatpush1.msra.mxu0 %v1227
        %1484 = vmatprep.subr.mxu0 0.0
        %1485 = vmatpush1.msra.mxu0 %v1228
        %1486 = vmatprep.subr.mxu0 0.0
        %1487 = vmatpush1.msra.mxu0 %v1229
        %1488 = vmatprep.subr.mxu0 0.0
        %1489 = vmatpush1.msra.mxu0 %v1230
        %1490 = vmatprep.subr.mxu0 0.0
        %1491 = vmatpush1.msra.mxu0 %v1231
        %1492 = vmatprep.subr.mxu0 0.0
        %1493 = vmatpush1.msra.mxu0 %v1232
        %1494 = vmatprep.subr.mxu0 0.0
        %1495 = vmatpush1.msra.mxu0 %v1233
        %1496 = vmatprep.subr.mxu0 0.0
        %1497 = vmatpush1.msra.mxu0 %v1234
        %1498 = vmatprep.subr.mxu0 0.0
        %1499 = vmatpush1.msra.mxu0 %v1235
        %1500 = vmatprep.subr.mxu0 0.0
        %1501 = vmatpush1.msra.mxu0 %v1236
        %1502 = vmatprep.subr.mxu0 0.0
        %1503 = vmatpush1.msra.mxu0 0.0
        %1504 = vmatprep.subr.mxu0 0.0
        %1505 = vmatpush1.msra.mxu0 0.0
        %1506 = vmatprep.subr.mxu0 0.0
        %1507 = vmatpush1.msra.mxu0 0.0
        %1508 = vmatprep.subr.mxu0 0.0
        %1509 = vmatpush1.msra.mxu0 0.0
        %1510 = vmatprep.subr.mxu0 0.0
        %1511 = vmatpush1.msra.mxu0 0.0
        %1512 = vmatprep.subr.mxu0 0.0
        %1513 = vmatpush1.msra.mxu0 0.0
        %1514 = vmatprep.subr.mxu0 0.0
        %1515 = vmatpush1.msra.mxu0 0.0
        %1516 = vmatprep.subr.mxu0 0.0
        %1517 = vmatpush1.msra.mxu0 0.0
        %1518 = vmatprep.subr.mxu0 0.0
        %1519 = vmatpush1.msra.mxu0 0.0
        %1520 = vmatprep.subr.mxu0 0.0
        %1521 = vmatpush1.msra.mxu0 0.0
        %1522 = vmatprep.subr.mxu0 0.0
        %1523 = vmatpush1.msra.mxu0 0.0
        %1524 = vmatprep.subr.mxu0 0.0
        %1525 = vmatpush1.msra.mxu0 0.0
        %1526 = vmatprep.subr.mxu0 0.0
        %1527 = vmatpush1.msra.mxu0 0.0
        %1528 = vmatprep.subr.mxu0 0.0
        %1529 = vmatpush1.msra.mxu0 0.0
        %1530 = vmatprep.subr.mxu0 0.0
        %1531 = vmatpush1.msra.mxu0 0.0
        %1532 = vmatprep.subr.mxu0 0.0
        %1533 = vmatpush1.msra.mxu0 0.0
        %1534 = vmatprep.subr.mxu0 0.0
        %1535 = vmatpush1.msra.mxu0 0.0
        %1536 = vmatprep.subr.mxu0 0.0
        %1537 = vmatpush1.msra.mxu0 0.0
        %1538 = vmatprep.subr.mxu0 0.0
        %1539 = vmatpush1.msra.mxu0 0.0
        %1540 = vmatprep.subr.mxu0 0.0
        %1541 = vmatpush1.msra.mxu0 0.0
        %1542 = vmatprep.mubr.f32.mxu0 0.0
        %1543 = vmatmul.mubr.f32.gmra.mrb[0].mxu0 %v1407
        %v1544 = vpop.f32.mrb[0].mxu0
        %v1545 = vadd.f32 %v1288, %v1544
        %v1546 = vpop.f32.mrb[0].mxu0
        %1547 = vmatprep.mubr.f32.mxu0 0.0
        %1548 = vmatmul.mubr.f32.gmra.mrb[0].mxu0 %v1410
        %v1549 = vpop.f32.mrb[0].mxu0
        %v1550 = vadd.f32 %v1293, %v1549
        %v1551 = vpop.f32.mrb[0].mxu0
        %1552 = vmatprep.mubr.f32.mxu0 0.0
        %1553 = vmatmul.mubr.f32.gmra.mrb[0].mxu0 %v1413
        %v1554 = vpop.f32.mrb[0].mxu0
        %v1555 = vadd.f32 %v1298, %v1554
        %v1556 = vpop.f32.mrb[0].mxu0
        %1557 = vmatprep.mubr.f32.mxu0 0.0
        %1558 = vmatmul.mubr.f32.gmra.mrb[0].mxu0 %v1416
        %v1559 = vpop.f32.mrb[0].mxu0
        %v1560 = vadd.f32 %v1303, %v1559
        %v1561 = vpop.f32.mrb[0].mxu0
        %1562 = vmatprep.mubr.f32.mxu0 0.0
        %1563 = vmatmul.mubr.f32.gmra.mrb[0].mxu0 %v1419
        %v1564 = vpop.f32.mrb[0].mxu0
        %v1565 = vadd.f32 %v1308, %v1564
        %v1566 = vpop.f32.mrb[0].mxu0
        %1567 = vmatprep.mubr.f32.mxu0 0.0
        %1568 = vmatmul.mubr.f32.gmra.mrb[0].mxu0 %v1422
        %v1569 = vpop.f32.mrb[0].mxu0
        %v1570 = vadd.f32 %v1313, %v1569
        %v1571 = vpop.f32.mrb[0].mxu0
        %1572 = vmatprep.mubr.f32.mxu0 0.0
        %1573 = vmatmul.mubr.f32.gmra.mrb[0].mxu0 %v1425
        %v1574 = vpop.f32.mrb[0].mxu0
        %v1575 = vadd.f32 %v1318, %v1574
        %v1576 = vpop.f32.mrb[0].mxu0
        %1577 = vmatprep.mubr.f32.mxu0 0.0
        %1578 = vmatmul.mubr.f32.gmra.mrb[0].mxu0 %v1428
        %v1579 = vpop.f32.mrb[0].mxu0
        %v1580 = vadd.f32 %v1323, %v1579
        %v1581 = vpop.f32.mrb[0].mxu0
        %1582 = vmatprep.mubr.f32.mxu0 0.0
        %1583 = vmatmul.mubr.f32.gmra.mrb[0].mxu0 %v1431
        %v1584 = vpop.f32.mrb[0].mxu0
        %v1585 = vadd.f32 %v1328, %v1584
        %v1586 = vpop.f32.mrb[0].mxu0
        %1587 = vmatprep.mubr.f32.mxu0 0.0
        %1588 = vmatmul.mubr.f32.gmra.mrb[0].mxu0 %v1434
        %v1589 = vpop.f32.mrb[0].mxu0
        %v1590 = vadd.f32 %v1333, %v1589
        %v1591 = vpop.f32.mrb[0].mxu0
        %1592 = vmatprep.mubr.f32.mxu0 0.0
        %1593 = vmatmul.mubr.f32.gmra.mrb[0].mxu0 %v1437
        %v1594 = vpop.f32.mrb[0].mxu0
        %v1595 = vadd.f32 %v1338, %v1594
        %v1596 = vpop.f32.mrb[0].mxu0
        %1597 = vmatprep.mubr.f32.mxu0 0.0
        %1598 = vmatmul.mubr.f32.gmra.mrb[0].mxu0 %v1440
        %v1599 = vpop.f32.mrb[0].mxu0
        %v1600 = vadd.f32 %v1343, %v1599
        %v1601 = vpop.f32.mrb[0].mxu0
        %1602 = vmatprep.mubr.f32.mxu0 0.0
        %1603 = vmatmul.mubr.f32.gmra.mrb[0].mxu0 %v1443
        %v1604 = vpop.f32.mrb[0].mxu0
        %v1605 = vadd.f32 %v1348, %v1604
        %v1606 = vpop.f32.mrb[0].mxu0
        %1607 = vmatprep.mubr.f32.mxu0 0.0
        %1608 = vmatmul.mubr.f32.gmra.mrb[0].mxu0 %v1446
        %v1609 = vpop.f32.mrb[0].mxu0
        %v1610 = vadd.f32 %v1353, %v1609
        %v1611 = vpop.f32.mrb[0].mxu0
        %1612 = vmatprep.mubr.f32.mxu0 0.0
        %1613 = vmatmul.mubr.f32.gmra.mrb[0].mxu0 %v1449
        %v1614 = vpop.f32.mrb[0].mxu0
        %v1615 = vadd.f32 %v1358, %v1614
        %v1616 = vpop.f32.mrb[0].mxu0
        %1617 = vmatprep.mubr.f32.mxu0 0.0
        %1618 = vmatmul.mubr.f32.gmra.mrb[0].mxu0 %v1452
        %v1619 = vpop.f32.mrb[0].mxu0
        %v1620 = vadd.f32 %v1363, %v1619
        %v1621 = vpop.f32.mrb[0].mxu0
        %1622 = vmatprep.mubr.f32.mxu0 0.0
        %1623 = vmatmul.mubr.f32.gmra.mrb[0].mxu0 %v1455
        %v1624 = vpop.f32.mrb[0].mxu0
        %v1625 = vadd.f32 %v1368, %v1624
        %v1626 = vpop.f32.mrb[0].mxu0
        %1627 = vmatprep.mubr.f32.mxu0 0.0
        %1628 = vmatmul.mubr.f32.gmra.mrb[0].mxu0 %v1458
        %v1629 = vpop.f32.mrb[0].mxu0
        %v1630 = vadd.f32 %v1373, %v1629
        %v1631 = vpop.f32.mrb[0].mxu0
        %1632 = vmatprep.mubr.f32.mxu0 0.0
        %1633 = vmatmul.mubr.f32.gmra.mrb[0].mxu0 %v1461
        %v1634 = vpop.f32.mrb[0].mxu0
        %v1635 = vadd.f32 %v1378, %v1634
        %v1636 = vpop.f32.mrb[0].mxu0
        %1637 = vmatprep.mubr.f32.mxu0 0.0
        %1638 = vmatmul.mubr.f32.gmra.mrb[0].mxu0 %v1464
        %v1639 = vpop.f32.mrb[0].mxu0
        %v1640 = vadd.f32 %v1383, %v1639
        %v1641 = vpop.f32.mrb[0].mxu0
        %1642 = vmatprep.mubr.f32.mxu0 0.0
        %1643 = vmatmul.mubr.f32.gmra.mrb[0].mxu0 %v1467
        %v1644 = vpop.f32.mrb[0].mxu0
        %v1645 = vadd.f32 %v1388, %v1644
        %v1646 = vpop.f32.mrb[0].mxu0
        %1647 = vmatprep.mubr.f32.mxu0 0.0
        %1648 = vmatmul.mubr.f32.gmra.mrb[0].mxu0 %v1470
        %v1649 = vpop.f32.mrb[0].mxu0
        %v1650 = vadd.f32 %v1393, %v1649
        %v1651 = vpop.f32.mrb[0].mxu0
        %1652 = vmatprep.mubr.f32.mxu0 0.0
        %1653 = vmatmul.mubr.f32.gmra.mrb[0].mxu0 %v1473
        %v1654 = vpop.f32.mrb[0].mxu0
        %v1655 = vadd.f32 %v1398, %v1654
        %v1656 = vpop.f32.mrb[0].mxu0
        %1657 = vmatprep.mubr.f32.mxu0 0.0
        %1658 = vmatmul.mubr.f32.gmra.mrb[0].mxu0 %v1476
        %v1659 = vpop.f32.mrb[0].mxu0
        %v1660 = vadd.f32 %v1403, %v1659
        %v1661 = vpop.f32.mrb[0].mxu0
        %1662 = vdwg.mxu0
        %v1663 = vlaneseq
        %v1664 = vand.u32 %v1663, 127
        %v1665 = vld [vmem:[#allocation7] sm:$0xff]
        %v1666 = vld [vmem:[#allocation7 + $0x8] sm:$0xff]
        %v1667 = vld [vmem:[#allocation7 + $0x10] sm:$0xff]
        %v1668 = vld [vmem:[#allocation7 + $0x18] sm:$0xff]
        %vm1669 = vcmask 261120
        %v1671 = vsel %vm1669, %v1665, 0
        %v1674 = vsel %vm1669, %v1666, 0
        %v1677 = vsel %vm1669, %v1667, 0
        %v1680 = vsel %vm1669, %v1668, 0
        %1682 = vmatprep.subr.mxu0 0.0
        %1683 = vmatpush1.msra.mxu0 %v1545
        %1684 = vmatprep.subr.mxu0 0.0
        %1685 = vmatpush1.msra.mxu0 %v1550
        %1686 = vmatprep.subr.mxu0 0.0
        %1687 = vmatpush1.msra.mxu0 %v1555
        %1688 = vmatprep.subr.mxu0 0.0
        %1689 = vmatpush1.msra.mxu0 %v1560
        %1690 = vmatprep.subr.mxu0 0.0
        %1691 = vmatpush1.msra.mxu0 0.0
        %1692 = vmatprep.subr.mxu0 0.0
        %1693 = vmatpush1.msra.mxu0 0.0
        %1694 = vmatprep.subr.mxu0 0.0
        %1695 = vmatpush1.msra.mxu0 0.0
        %1696 = vmatprep.subr.mxu0 0.0
        %1697 = vmatpush1.msra.mxu0 0.0
        %1698 = vmatprep.subr.mxu0 0.0
        %1699 = vmatpush1.msra.mxu0 0.0
        %1700 = vmatprep.subr.mxu0 0.0
        %1701 = vmatpush1.msra.mxu0 0.0
        %1702 = vmatprep.subr.mxu0 0.0
        %1703 = vmatpush1.msra.mxu0 0.0
        %1704 = vmatprep.subr.mxu0 0.0
        %1705 = vmatpush1.msra.mxu0 0.0
        %1706 = vmatprep.subr.mxu0 0.0
        %1707 = vmatpush1.msra.mxu0 0.0
        %1708 = vmatprep.subr.mxu0 0.0
        %1709 = vmatpush1.msra.mxu0 0.0
        %1710 = vmatprep.subr.mxu0 0.0
        %1711 = vmatpush1.msra.mxu0 0.0
        %1712 = vmatprep.subr.mxu0 0.0
        %1713 = vmatpush1.msra.mxu0 0.0
        %1714 = vmatprep.subr.mxu0 0.0
        %1715 = vmatpush1.msra.mxu0 0.0
        %1716 = vmatprep.subr.mxu0 0.0
        %1717 = vmatpush1.msra.mxu0 0.0
        %1718 = vmatprep.subr.mxu0 0.0
        %1719 = vmatpush1.msra.mxu0 0.0
        %1720 = vmatprep.subr.mxu0 0.0
        %1721 = vmatpush1.msra.mxu0 0.0
        %1722 = vmatprep.subr.mxu0 0.0
        %1723 = vmatpush1.msra.mxu0 0.0
        %1724 = vmatprep.subr.mxu0 0.0
        %1725 = vmatpush1.msra.mxu0 0.0
        %1726 = vmatprep.subr.mxu0 0.0
        %1727 = vmatpush1.msra.mxu0 0.0
        %1728 = vmatprep.subr.mxu0 0.0
        %1729 = vmatpush1.msra.mxu0 0.0
        %1730 = vmatprep.subr.mxu0 0.0
        %1731 = vmatpush1.msra.mxu0 0.0
        %1732 = vmatprep.subr.mxu0 0.0
        %1733 = vmatpush1.msra.mxu0 0.0
        %1734 = vmatprep.subr.mxu0 0.0
        %1735 = vmatpush1.msra.mxu0 0.0
        %1736 = vmatprep.subr.mxu0 0.0
        %1737 = vmatpush1.msra.mxu0 0.0
        %1738 = vmatprep.subr.mxu0 0.0
        %1739 = vmatpush1.msra.mxu0 0.0
        %1740 = vmatprep.subr.mxu0 0.0
        %1741 = vmatpush1.msra.mxu0 0.0
        %1742 = vmatprep.subr.mxu0 0.0
        %1743 = vmatpush1.msra.mxu0 0.0
        %1744 = vmatprep.subr.mxu0 0.0
        %1745 = vmatpush1.msra.mxu0 0.0
        %1746 = vmatprep.mubr.f32.mxu0 0.0
        %1747 = vmatmul.mubr.f32.gmra.mrb[0].mxu0 %v1671
        %v1748 = vpop.f32.mrb[0].mxu0
        %v1749 = vadd.f32 0.0, %v1748
        %v1750 = vpop.f32.mrb[0].mxu0
        %1751 = vmatprep.mubr.f32.mxu0 0.0
        %1752 = vmatmul.mubr.f32.gmra.mrb[0].mxu0 %v1674
        %v1753 = vpop.f32.mrb[0].mxu0
        %v1754 = vadd.f32 0.0, %v1753
        %v1755 = vpop.f32.mrb[0].mxu0
        %1756 = vmatprep.mubr.f32.mxu0 0.0
        %1757 = vmatmul.mubr.f32.gmra.mrb[0].mxu0 %v1677
        %v1758 = vpop.f32.mrb[0].mxu0
        %v1759 = vadd.f32 0.0, %v1758
        %v1760 = vpop.f32.mrb[0].mxu0
        %1761 = vmatprep.mubr.f32.mxu0 0.0
        %1762 = vmatmul.mubr.f32.gmra.mrb[0].mxu0 %v1680
        %v1763 = vpop.f32.mrb[0].mxu0
        %v1764 = vadd.f32 0.0, %v1763
        %v1765 = vpop.f32.mrb[0].mxu0
        %1766 = vdwg.mxu0
        %vm1767 = vcmp.ge.s32.totalorder %v1664, 1
        %1768 = vrot.lane.b32.xlu0 %v1749, 1
        %v1769 = vpop.permute.xlu0 %1768
        %1770 = vrot.lane.b32.xlu0 %v1754, 1
        %v1771 = vpop.permute.xlu0 %1770
        %1772 = vrot.lane.b32.xlu0 %v1759, 1
        %v1773 = vpop.permute.xlu0 %1772
        %1774 = vrot.lane.b32.xlu0 %v1764, 1
        %v1775 = vpop.permute.xlu0 %1774
        %v1776 = vsel %vm1767, %v1769, 0.0
        %v1777 = vsel %vm1767, %v1771, 0.0
        %v1778 = vsel %vm1767, %v1773, 0.0
        %v1779 = vsel %vm1767, %v1775, 0.0
        %s1780 = scalar_lea.vmem [#allocation7], 32
        %v1781 = vld [vmem:[%s1780] sm:$0xff]
        %v1782 = vld [vmem:[%s1780 + $0x8] sm:$0xff]
        %v1783 = vld [vmem:[%s1780 + $0x10] sm:$0xff]
        %v1784 = vld [vmem:[%s1780 + $0x18] sm:$0xff]
        %v1786 = vsel %vm1669, %v1781, 0
        %v1789 = vsel %vm1669, %v1782, 0
        %v1792 = vsel %vm1669, %v1783, 0
        %v1795 = vsel %vm1669, %v1784, 0
        %1797 = vmatprep.subr.mxu0 0.0
        %1798 = vmatpush1.msra.mxu0 %v1545
        %1799 = vmatprep.subr.mxu0 0.0
        %1800 = vmatpush1.msra.mxu0 %v1550
        %1801 = vmatprep.subr.mxu0 0.0
        %1802 = vmatpush1.msra.mxu0 %v1555
        %1803 = vmatprep.subr.mxu0 0.0
        %1804 = vmatpush1.msra.mxu0 %v1560
        %1805 = vmatprep.subr.mxu0 0.0
        %1806 = vmatpush1.msra.mxu0 0.0
        %1807 = vmatprep.subr.mxu0 0.0
        %1808 = vmatpush1.msra.mxu0 0.0
        %1809 = vmatprep.subr.mxu0 0.0
        %1810 = vmatpush1.msra.mxu0 0.0
        %1811 = vmatprep.subr.mxu0 0.0
        %1812 = vmatpush1.msra.mxu0 0.0
        %1813 = vmatprep.subr.mxu0 0.0
        %1814 = vmatpush1.msra.mxu0 0.0
        %1815 = vmatprep.subr.mxu0 0.0
        %1816 = vmatpush1.msra.mxu0 0.0
        %1817 = vmatprep.subr.mxu0 0.0
        %1818 = vmatpush1.msra.mxu0 0.0
        %1819 = vmatprep.subr.mxu0 0.0
        %1820 = vmatpush1.msra.mxu0 0.0
        %1821 = vmatprep.subr.mxu0 0.0
        %1822 = vmatpush1.msra.mxu0 0.0
        %1823 = vmatprep.subr.mxu0 0.0
        %1824 = vmatpush1.msra.mxu0 0.0
        %1825 = vmatprep.subr.mxu0 0.0
        %1826 = vmatpush1.msra.mxu0 0.0
        %1827 = vmatprep.subr.mxu0 0.0
        %1828 = vmatpush1.msra.mxu0 0.0
        %1829 = vmatprep.subr.mxu0 0.0
        %1830 = vmatpush1.msra.mxu0 0.0
        %1831 = vmatprep.subr.mxu0 0.0
        %1832 = vmatpush1.msra.mxu0 0.0
        %1833 = vmatprep.subr.mxu0 0.0
        %1834 = vmatpush1.msra.mxu0 0.0
        %1835 = vmatprep.subr.mxu0 0.0
        %1836 = vmatpush1.msra.mxu0 0.0
        %1837 = vmatprep.subr.mxu0 0.0
        %1838 = vmatpush1.msra.mxu0 0.0
        %1839 = vmatprep.subr.mxu0 0.0
        %1840 = vmatpush1.msra.mxu0 0.0
        %1841 = vmatprep.subr.mxu0 0.0
        %1842 = vmatpush1.msra.mxu0 0.0
        %1843 = vmatprep.subr.mxu0 0.0
        %1844 = vmatpush1.msra.mxu0 0.0
        %1845 = vmatprep.subr.mxu0 0.0
        %1846 = vmatpush1.msra.mxu0 0.0
        %1847 = vmatprep.subr.mxu0 0.0
        %1848 = vmatpush1.msra.mxu0 0.0
        %1849 = vmatprep.subr.mxu0 0.0
        %1850 = vmatpush1.msra.mxu0 0.0
        %1851 = vmatprep.subr.mxu0 0.0
        %1852 = vmatpush1.msra.mxu0 0.0
        %1853 = vmatprep.subr.mxu0 0.0
        %1854 = vmatpush1.msra.mxu0 0.0
        %1855 = vmatprep.subr.mxu0 0.0
        %1856 = vmatpush1.msra.mxu0 0.0
        %1857 = vmatprep.subr.mxu0 0.0
        %1858 = vmatpush1.msra.mxu0 0.0
        %1859 = vmatprep.subr.mxu0 0.0
        %1860 = vmatpush1.msra.mxu0 0.0
        %1861 = vmatprep.mubr.f32.mxu0 0.0
        %1862 = vmatmul.mubr.f32.gmra.mrb[0].mxu0 %v1786
        %v1863 = vpop.f32.mrb[0].mxu0
        %v1864 = vadd.f32 0.0, %v1863
        %v1865 = vpop.f32.mrb[0].mxu0
        %1866 = vmatprep.mubr.f32.mxu0 0.0
        %1867 = vmatmul.mubr.f32.gmra.mrb[0].mxu0 %v1789
        %v1868 = vpop.f32.mrb[0].mxu0
        %v1869 = vadd.f32 0.0, %v1868
        %v1870 = vpop.f32.mrb[0].mxu0
        %1871 = vmatprep.mubr.f32.mxu0 0.0
        %1872 = vmatmul.mubr.f32.gmra.mrb[0].mxu0 %v1792
        %v1873 = vpop.f32.mrb[0].mxu0
        %v1874 = vadd.f32 0.0, %v1873
        %v1875 = vpop.f32.mrb[0].mxu0
        %1876 = vmatprep.mubr.f32.mxu0 0.0
        %1877 = vmatmul.mubr.f32.gmra.mrb[0].mxu0 %v1795
        %v1878 = vpop.f32.mrb[0].mxu0
        %v1879 = vadd.f32 0.0, %v1878
        %v1880 = vpop.f32.mrb[0].mxu0
        %1881 = vdwg.mxu0
        %v1882 = vadd.f32 %v1776, %v1864
        %v1883 = vadd.f32 %v1777, %v1869
        %v1884 = vadd.f32 %v1778, %v1874
        %v1885 = vadd.f32 %v1779, %v1879
        %s1886 = scalar_lea.vmem [#allocation7], 64
        %v1887 = vld [vmem:[%s1886] sm:$0xff]
        %v1888 = vld [vmem:[%s1886 + $0x8] sm:$0xff]
        %v1889 = vld [vmem:[%s1886 + $0x10] sm:$0xff]
        %v1890 = vld [vmem:[%s1886 + $0x18] sm:$0xff]
        %v1892 = vsel %vm1669, %v1887, 0
        %v1895 = vsel %vm1669, %v1888, 0
        %v1898 = vsel %vm1669, %v1889, 0
        %v1901 = vsel %vm1669, %v1890, 0
        %1903 = vmatprep.subr.mxu0 0.0
        %1904 = vmatpush1.msra.mxu0 %v1545
        %1905 = vmatprep.subr.mxu0 0.0
        %1906 = vmatpush1.msra.mxu0 %v1550
        %1907 = vmatprep.subr.mxu0 0.0
        %1908 = vmatpush1.msra.mxu0 %v1555
        %1909 = vmatprep.subr.mxu0 0.0
        %1910 = vmatpush1.msra.mxu0 %v1560
        %1911 = vmatprep.subr.mxu0 0.0
        %1912 = vmatpush1.msra.mxu0 0.0
        %1913 = vmatprep.subr.mxu0 0.0
        %1914 = vmatpush1.msra.mxu0 0.0
        %1915 = vmatprep.subr.mxu0 0.0
        %1916 = vmatpush1.msra.mxu0 0.0
        %1917 = vmatprep.subr.mxu0 0.0
        %1918 = vmatpush1.msra.mxu0 0.0
        %1919 = vmatprep.subr.mxu0 0.0
        %1920 = vmatpush1.msra.mxu0 0.0
        %1921 = vmatprep.subr.mxu0 0.0
        %1922 = vmatpush1.msra.mxu0 0.0
        %1923 = vmatprep.subr.mxu0 0.0
        %1924 = vmatpush1.msra.mxu0 0.0
        %1925 = vmatprep.subr.mxu0 0.0
        %1926 = vmatpush1.msra.mxu0 0.0
        %1927 = vmatprep.subr.mxu0 0.0
        %1928 = vmatpush1.msra.mxu0 0.0
        %1929 = vmatprep.subr.mxu0 0.0
        %1930 = vmatpush1.msra.mxu0 0.0
        %1931 = vmatprep.subr.mxu0 0.0
        %1932 = vmatpush1.msra.mxu0 0.0
        %1933 = vmatprep.subr.mxu0 0.0
        %1934 = vmatpush1.msra.mxu0 0.0
        %1935 = vmatprep.subr.mxu0 0.0
        %1936 = vmatpush1.msra.mxu0 0.0
        %1937 = vmatprep.subr.mxu0 0.0
        %1938 = vmatpush1.msra.mxu0 0.0
        %1939 = vmatprep.subr.mxu0 0.0
        %1940 = vmatpush1.msra.mxu0 0.0
        %1941 = vmatprep.subr.mxu0 0.0
        %1942 = vmatpush1.msra.mxu0 0.0
        %1943 = vmatprep.subr.mxu0 0.0
        %1944 = vmatpush1.msra.mxu0 0.0
        %1945 = vmatprep.subr.mxu0 0.0
        %1946 = vmatpush1.msra.mxu0 0.0
        %1947 = vmatprep.subr.mxu0 0.0
        %1948 = vmatpush1.msra.mxu0 0.0
        %1949 = vmatprep.subr.mxu0 0.0
        %1950 = vmatpush1.msra.mxu0 0.0
        %1951 = vmatprep.subr.mxu0 0.0
        %1952 = vmatpush1.msra.mxu0 0.0
        %1953 = vmatprep.subr.mxu0 0.0
        %1954 = vmatpush1.msra.mxu0 0.0
        %1955 = vmatprep.subr.mxu0 0.0
        %1956 = vmatpush1.msra.mxu0 0.0
        %1957 = vmatprep.subr.mxu0 0.0
        %1958 = vmatpush1.msra.mxu0 0.0
        %1959 = vmatprep.subr.mxu0 0.0
        %1960 = vmatpush1.msra.mxu0 0.0
        %1961 = vmatprep.subr.mxu0 0.0
        %1962 = vmatpush1.msra.mxu0 0.0
        %1963 = vmatprep.subr.mxu0 0.0
        %1964 = vmatpush1.msra.mxu0 0.0
        %1965 = vmatprep.subr.mxu0 0.0
        %1966 = vmatpush1.msra.mxu0 0.0
        %1967 = vmatprep.mubr.f32.mxu0 0.0
        %1968 = vmatmul.mubr.f32.gmra.mrb[0].mxu0 %v1892
        %v1969 = vpop.f32.mrb[0].mxu0
        %v1970 = vadd.f32 0.0, %v1969
        %v1971 = vpop.f32.mrb[0].mxu0
        %1972 = vmatprep.mubr.f32.mxu0 0.0
        %1973 = vmatmul.mubr.f32.gmra.mrb[0].mxu0 %v1895
        %v1974 = vpop.f32.mrb[0].mxu0
        %v1975 = vadd.f32 0.0, %v1974
        %v1976 = vpop.f32.mrb[0].mxu0
        %1977 = vmatprep.mubr.f32.mxu0 0.0
        %1978 = vmatmul.mubr.f32.gmra.mrb[0].mxu0 %v1898
        %v1979 = vpop.f32.mrb[0].mxu0
        %v1980 = vadd.f32 0.0, %v1979
        %v1981 = vpop.f32.mrb[0].mxu0
        %1982 = vmatprep.mubr.f32.mxu0 0.0
        %1983 = vmatmul.mubr.f32.gmra.mrb[0].mxu0 %v1901
        %v1984 = vpop.f32.mrb[0].mxu0
        %v1985 = vadd.f32 0.0, %v1984
        %v1986 = vpop.f32.mrb[0].mxu0
        %1987 = vdwg.mxu0
        %vm1988 = vcmp.lt.s32.totalorder %v1664, 127
        %1989 = vrot.lane.b32.xlu0 %v1970, 127
        %v1990 = vpop.permute.xlu0 %1989
        %1991 = vrot.lane.b32.xlu0 %v1975, 127
        %v1992 = vpop.permute.xlu0 %1991
        %1993 = vrot.lane.b32.xlu0 %v1980, 127
        %v1994 = vpop.permute.xlu0 %1993
        %1995 = vrot.lane.b32.xlu0 %v1985, 127
        %v1996 = vpop.permute.xlu0 %1995
        %v1997 = vsel %vm1988, %v1990, 0.0
        %v1998 = vsel %vm1988, %v1992, 0.0
        %v1999 = vsel %vm1988, %v1994, 0.0
        %v2000 = vsel %vm1988, %v1996, 0.0
        %v2001 = vadd.f32 %v1882, %v1997
        %v2002 = vadd.f32 %v1883, %v1998
        %v2003 = vadd.f32 %v1884, %v1999
        %v2004 = vadd.f32 %v1885, %v2000
        %v2005 = vld [vmem:[%s11] sm:$0xff]
        %v2006 = vld [vmem:[%s11 + $0x8] sm:$0xff]
        %v2007 = vld [vmem:[%s11 + $0x10] sm:$0xff]
        %v2008 = vld [vmem:[%s11 + $0x18] sm:$0xff]
        %2010 = vset.pattern.permute.xlu0 0
        %2011 = vperm.xlu0 %2010, %v2005
        %v2012 = vpop.permute.xlu0 %2011
        %2015 = vset.pattern.permute.xlu0 0
        %2016 = vperm.xlu0 %2015, %v2006
        %v2017 = vpop.permute.xlu0 %2016
        %2020 = vset.pattern.permute.xlu0 0
        %2021 = vperm.xlu0 %2020, %v2007
        %v2022 = vpop.permute.xlu0 %2021
        %2025 = vset.pattern.permute.xlu0 0
        %2026 = vperm.xlu0 %2025, %v2008
        %v2027 = vpop.permute.xlu0 %2026
        %v2029 = vadd.f32 %v2001, %v2012
        %v2030 = vadd.f32 %v2002, %v2017
        %v2031 = vadd.f32 %v2003, %v2022
        %v2032 = vadd.f32 %v2004, %v2027
        %v2033 = vld [vmem:[#allocation8] sm:$0xff]
        %v2034 = vld [vmem:[#allocation8 + $0x8] sm:$0xff]
        %v2035 = vld [vmem:[#allocation8 + $0x10] sm:$0xff]
        %v2036 = vld [vmem:[#allocation8 + $0x18] sm:$0xff]
        %v2038 = vsel %vm1669, %v2033, 0
        %v2041 = vsel %vm1669, %v2034, 0
        %v2044 = vsel %vm1669, %v2035, 0
        %v2047 = vsel %vm1669, %v2036, 0
        %2049 = vmatprep.subr.mxu0 0.0
        %2050 = vmatpush1.msra.mxu0 %v2029
        %2051 = vmatprep.subr.mxu0 0.0
        %2052 = vmatpush1.msra.mxu0 %v2030
        %2053 = vmatprep.subr.mxu0 0.0
        %2054 = vmatpush1.msra.mxu0 %v2031
        %2055 = vmatprep.subr.mxu0 0.0
        %2056 = vmatpush1.msra.mxu0 %v2032
        %2057 = vmatprep.subr.mxu0 0.0
        %2058 = vmatpush1.msra.mxu0 0.0
        %2059 = vmatprep.subr.mxu0 0.0
        %2060 = vmatpush1.msra.mxu0 0.0
        %2061 = vmatprep.subr.mxu0 0.0
        %2062 = vmatpush1.msra.mxu0 0.0
        %2063 = vmatprep.subr.mxu0 0.0
        %2064 = vmatpush1.msra.mxu0 0.0
        %2065 = vmatprep.subr.mxu0 0.0
        %2066 = vmatpush1.msra.mxu0 0.0
        %2067 = vmatprep.subr.mxu0 0.0
        %2068 = vmatpush1.msra.mxu0 0.0
        %2069 = vmatprep.subr.mxu0 0.0
        %2070 = vmatpush1.msra.mxu0 0.0
        %2071 = vmatprep.subr.mxu0 0.0
        %2072 = vmatpush1.msra.mxu0 0.0
        %2073 = vmatprep.subr.mxu0 0.0
        %2074 = vmatpush1.msra.mxu0 0.0
        %2075 = vmatprep.subr.mxu0 0.0
        %2076 = vmatpush1.msra.mxu0 0.0
        %2077 = vmatprep.subr.mxu0 0.0
        %2078 = vmatpush1.msra.mxu0 0.0
        %2079 = vmatprep.subr.mxu0 0.0
        %2080 = vmatpush1.msra.mxu0 0.0
        %2081 = vmatprep.subr.mxu0 0.0
        %2082 = vmatpush1.msra.mxu0 0.0
        %2083 = vmatprep.subr.mxu0 0.0
        %2084 = vmatpush1.msra.mxu0 0.0
        %2085 = vmatprep.subr.mxu0 0.0
        %2086 = vmatpush1.msra.mxu0 0.0
        %2087 = vmatprep.subr.mxu0 0.0
        %2088 = vmatpush1.msra.mxu0 0.0
        %2089 = vmatprep.subr.mxu0 0.0
        %2090 = vmatpush1.msra.mxu0 0.0
        %2091 = vmatprep.subr.mxu0 0.0
        %2092 = vmatpush1.msra.mxu0 0.0
        %2093 = vmatprep.subr.mxu0 0.0
        %2094 = vmatpush1.msra.mxu0 0.0
        %2095 = vmatprep.subr.mxu0 0.0
        %2096 = vmatpush1.msra.mxu0 0.0
        %2097 = vmatprep.subr.mxu0 0.0
        %2098 = vmatpush1.msra.mxu0 0.0
        %2099 = vmatprep.subr.mxu0 0.0
        %2100 = vmatpush1.msra.mxu0 0.0
        %2101 = vmatprep.subr.mxu0 0.0
        %2102 = vmatpush1.msra.mxu0 0.0
        %2103 = vmatprep.subr.mxu0 0.0
        %2104 = vmatpush1.msra.mxu0 0.0
        %2105 = vmatprep.subr.mxu0 0.0
        %2106 = vmatpush1.msra.mxu0 0.0
        %2107 = vmatprep.subr.mxu0 0.0
        %2108 = vmatpush1.msra.mxu0 0.0
        %2109 = vmatprep.subr.mxu0 0.0
        %2110 = vmatpush1.msra.mxu0 0.0
        %2111 = vmatprep.subr.mxu0 0.0
        %2112 = vmatpush1.msra.mxu0 0.0
        %2113 = vmatprep.mubr.f32.mxu0 0.0
        %2114 = vmatmul.mubr.f32.gmra.mrb[0].mxu0 %v2038
        %v2115 = vpop.f32.mrb[0].mxu0
        %v2116 = vadd.f32 0.0, %v2115
        %v2117 = vpop.f32.mrb[0].mxu0
        %2118 = vmatprep.mubr.f32.mxu0 0.0
        %2119 = vmatmul.mubr.f32.gmra.mrb[0].mxu0 %v2041
        %v2120 = vpop.f32.mrb[0].mxu0
        %v2121 = vadd.f32 0.0, %v2120
        %v2122 = vpop.f32.mrb[0].mxu0
        %2123 = vmatprep.mubr.f32.mxu0 0.0
        %2124 = vmatmul.mubr.f32.gmra.mrb[0].mxu0 %v2044
        %v2125 = vpop.f32.mrb[0].mxu0
        %v2126 = vadd.f32 0.0, %v2125
        %v2127 = vpop.f32.mrb[0].mxu0
        %2128 = vmatprep.mubr.f32.mxu0 0.0
        %2129 = vmatmul.mubr.f32.gmra.mrb[0].mxu0 %v2047
        %v2130 = vpop.f32.mrb[0].mxu0
        %v2131 = vadd.f32 0.0, %v2130
        %v2132 = vpop.f32.mrb[0].mxu0
        %2133 = vdwg.mxu0
        %vm2134 = vcmp.ge.s32.totalorder %v1664, 4
        %2135 = vrot.lane.b32.xlu0 %v2116, 4
        %v2136 = vpop.permute.xlu0 %2135
        %2137 = vrot.lane.b32.xlu0 %v2121, 4
        %v2138 = vpop.permute.xlu0 %2137
        %2139 = vrot.lane.b32.xlu0 %v2126, 4
        %v2140 = vpop.permute.xlu0 %2139
        %2141 = vrot.lane.b32.xlu0 %v2131, 4
        %v2142 = vpop.permute.xlu0 %2141
        %v2143 = vsel %vm2134, %v2136, 0.0
        %v2144 = vsel %vm2134, %v2138, 0.0
        %v2145 = vsel %vm2134, %v2140, 0.0
        %v2146 = vsel %vm2134, %v2142, 0.0
        %s2147 = scalar_lea.vmem [#allocation8], 32
        %v2148 = vld [vmem:[%s2147] sm:$0xff]
        %v2149 = vld [vmem:[%s2147 + $0x8] sm:$0xff]
        %v2150 = vld [vmem:[%s2147 + $0x10] sm:$0xff]
        %v2151 = vld [vmem:[%s2147 + $0x18] sm:$0xff]
        %v2153 = vsel %vm1669, %v2148, 0
        %v2156 = vsel %vm1669, %v2149, 0
        %v2159 = vsel %vm1669, %v2150, 0
        %v2162 = vsel %vm1669, %v2151, 0
        %2164 = vmatprep.subr.mxu0 0.0
        %2165 = vmatpush1.msra.mxu0 %v2029
        %2166 = vmatprep.subr.mxu0 0.0
        %2167 = vmatpush1.msra.mxu0 %v2030
        %2168 = vmatprep.subr.mxu0 0.0
        %2169 = vmatpush1.msra.mxu0 %v2031
        %2170 = vmatprep.subr.mxu0 0.0
        %2171 = vmatpush1.msra.mxu0 %v2032
        %2172 = vmatprep.subr.mxu0 0.0
        %2173 = vmatpush1.msra.mxu0 0.0
        %2174 = vmatprep.subr.mxu0 0.0
        %2175 = vmatpush1.msra.mxu0 0.0
        %2176 = vmatprep.subr.mxu0 0.0
        %2177 = vmatpush1.msra.mxu0 0.0
        %2178 = vmatprep.subr.mxu0 0.0
        %2179 = vmatpush1.msra.mxu0 0.0
        %2180 = vmatprep.subr.mxu0 0.0
        %2181 = vmatpush1.msra.mxu0 0.0
        %2182 = vmatprep.subr.mxu0 0.0
        %2183 = vmatpush1.msra.mxu0 0.0
        %2184 = vmatprep.subr.mxu0 0.0
        %2185 = vmatpush1.msra.mxu0 0.0
        %2186 = vmatprep.subr.mxu0 0.0
        %2187 = vmatpush1.msra.mxu0 0.0
        %2188 = vmatprep.subr.mxu0 0.0
        %2189 = vmatpush1.msra.mxu0 0.0
        %2190 = vmatprep.subr.mxu0 0.0
        %2191 = vmatpush1.msra.mxu0 0.0
        %2192 = vmatprep.subr.mxu0 0.0
        %2193 = vmatpush1.msra.mxu0 0.0
        %2194 = vmatprep.subr.mxu0 0.0
        %2195 = vmatpush1.msra.mxu0 0.0
        %2196 = vmatprep.subr.mxu0 0.0
        %2197 = vmatpush1.msra.mxu0 0.0
        %2198 = vmatprep.subr.mxu0 0.0
        %2199 = vmatpush1.msra.mxu0 0.0
        %2200 = vmatprep.subr.mxu0 0.0
        %2201 = vmatpush1.msra.mxu0 0.0
        %2202 = vmatprep.subr.mxu0 0.0
        %2203 = vmatpush1.msra.mxu0 0.0
        %2204 = vmatprep.subr.mxu0 0.0
        %2205 = vmatpush1.msra.mxu0 0.0
        %2206 = vmatprep.subr.mxu0 0.0
        %2207 = vmatpush1.msra.mxu0 0.0
        %2208 = vmatprep.subr.mxu0 0.0
        %2209 = vmatpush1.msra.mxu0 0.0
        %2210 = vmatprep.subr.mxu0 0.0
        %2211 = vmatpush1.msra.mxu0 0.0
        %2212 = vmatprep.subr.mxu0 0.0
        %2213 = vmatpush1.msra.mxu0 0.0
        %2214 = vmatprep.subr.mxu0 0.0
        %2215 = vmatpush1.msra.mxu0 0.0
        %2216 = vmatprep.subr.mxu0 0.0
        %2217 = vmatpush1.msra.mxu0 0.0
        %2218 = vmatprep.subr.mxu0 0.0
        %2219 = vmatpush1.msra.mxu0 0.0
        %2220 = vmatprep.subr.mxu0 0.0
        %2221 = vmatpush1.msra.mxu0 0.0
        %2222 = vmatprep.subr.mxu0 0.0
        %2223 = vmatpush1.msra.mxu0 0.0
        %2224 = vmatprep.subr.mxu0 0.0
        %2225 = vmatpush1.msra.mxu0 0.0
        %2226 = vmatprep.subr.mxu0 0.0
        %2227 = vmatpush1.msra.mxu0 0.0
        %2228 = vmatprep.mubr.f32.mxu0 0.0
        %2229 = vmatmul.mubr.f32.gmra.mrb[0].mxu0 %v2153
        %v2230 = vpop.f32.mrb[0].mxu0
        %v2231 = vadd.f32 0.0, %v2230
        %v2232 = vpop.f32.mrb[0].mxu0
        %2233 = vmatprep.mubr.f32.mxu0 0.0
        %2234 = vmatmul.mubr.f32.gmra.mrb[0].mxu0 %v2156
        %v2235 = vpop.f32.mrb[0].mxu0
        %v2236 = vadd.f32 0.0, %v2235
        %v2237 = vpop.f32.mrb[0].mxu0
        %2238 = vmatprep.mubr.f32.mxu0 0.0
        %2239 = vmatmul.mubr.f32.gmra.mrb[0].mxu0 %v2159
        %v2240 = vpop.f32.mrb[0].mxu0
        %v2241 = vadd.f32 0.0, %v2240
        %v2242 = vpop.f32.mrb[0].mxu0
        %2243 = vmatprep.mubr.f32.mxu0 0.0
        %2244 = vmatmul.mubr.f32.gmra.mrb[0].mxu0 %v2162
        %v2245 = vpop.f32.mrb[0].mxu0
        %v2246 = vadd.f32 0.0, %v2245
        %v2247 = vpop.f32.mrb[0].mxu0
        %2248 = vdwg.mxu0
        %vm2249 = vcmp.ge.s32.totalorder %v1664, 2
        %2250 = vrot.lane.b32.xlu0 %v2231, 2
        %v2251 = vpop.permute.xlu0 %2250
        %2252 = vrot.lane.b32.xlu0 %v2236, 2
        %v2253 = vpop.permute.xlu0 %2252
        %2254 = vrot.lane.b32.xlu0 %v2241, 2
        %v2255 = vpop.permute.xlu0 %2254
        %2256 = vrot.lane.b32.xlu0 %v2246, 2
        %v2257 = vpop.permute.xlu0 %2256
        %v2258 = vsel %vm2249, %v2251, 0.0
        %v2259 = vsel %vm2249, %v2253, 0.0
        %v2260 = vsel %vm2249, %v2255, 0.0
        %v2261 = vsel %vm2249, %v2257, 0.0
        %v2262 = vadd.f32 %v2143, %v2258
        %v2263 = vadd.f32 %v2144, %v2259
        %v2264 = vadd.f32 %v2145, %v2260
        %v2265 = vadd.f32 %v2146, %v2261
        %s2266 = scalar_lea.vmem [#allocation8], 64
        %v2267 = vld [vmem:[%s2266] sm:$0xff]
        %v2268 = vld [vmem:[%s2266 + $0x8] sm:$0xff]
        %v2269 = vld [vmem:[%s2266 + $0x10] sm:$0xff]
        %v2270 = vld [vmem:[%s2266 + $0x18] sm:$0xff]
        %v2272 = vsel %vm1669, %v2267, 0
        %v2275 = vsel %vm1669, %v2268, 0
        %v2278 = vsel %vm1669, %v2269, 0
        %v2281 = vsel %vm1669, %v2270, 0
        %2283 = vmatprep.subr.mxu0 0.0
        %2284 = vmatpush1.msra.mxu0 %v2029
        %2285 = vmatprep.subr.mxu0 0.0
        %2286 = vmatpush1.msra.mxu0 %v2030
        %2287 = vmatprep.subr.mxu0 0.0
        %2288 = vmatpush1.msra.mxu0 %v2031
        %2289 = vmatprep.subr.mxu0 0.0
        %2290 = vmatpush1.msra.mxu0 %v2032
        %2291 = vmatprep.subr.mxu0 0.0
        %2292 = vmatpush1.msra.mxu0 0.0
        %2293 = vmatprep.subr.mxu0 0.0
        %2294 = vmatpush1.msra.mxu0 0.0
        %2295 = vmatprep.subr.mxu0 0.0
        %2296 = vmatpush1.msra.mxu0 0.0
        %2297 = vmatprep.subr.mxu0 0.0
        %2298 = vmatpush1.msra.mxu0 0.0
        %2299 = vmatprep.subr.mxu0 0.0
        %2300 = vmatpush1.msra.mxu0 0.0
        %2301 = vmatprep.subr.mxu0 0.0
        %2302 = vmatpush1.msra.mxu0 0.0
        %2303 = vmatprep.subr.mxu0 0.0
        %2304 = vmatpush1.msra.mxu0 0.0
        %2305 = vmatprep.subr.mxu0 0.0
        %2306 = vmatpush1.msra.mxu0 0.0
        %2307 = vmatprep.subr.mxu0 0.0
        %2308 = vmatpush1.msra.mxu0 0.0
        %2309 = vmatprep.subr.mxu0 0.0
        %2310 = vmatpush1.msra.mxu0 0.0
        %2311 = vmatprep.subr.mxu0 0.0
        %2312 = vmatpush1.msra.mxu0 0.0
        %2313 = vmatprep.subr.mxu0 0.0
        %2314 = vmatpush1.msra.mxu0 0.0
        %2315 = vmatprep.subr.mxu0 0.0
        %2316 = vmatpush1.msra.mxu0 0.0
        %2317 = vmatprep.subr.mxu0 0.0
        %2318 = vmatpush1.msra.mxu0 0.0
        %2319 = vmatprep.subr.mxu0 0.0
        %2320 = vmatpush1.msra.mxu0 0.0
        %2321 = vmatprep.subr.mxu0 0.0
        %2322 = vmatpush1.msra.mxu0 0.0
        %2323 = vmatprep.subr.mxu0 0.0
        %2324 = vmatpush1.msra.mxu0 0.0
        %2325 = vmatprep.subr.mxu0 0.0
        %2326 = vmatpush1.msra.mxu0 0.0
        %2327 = vmatprep.subr.mxu0 0.0
        %2328 = vmatpush1.msra.mxu0 0.0
        %2329 = vmatprep.subr.mxu0 0.0
        %2330 = vmatpush1.msra.mxu0 0.0
        %2331 = vmatprep.subr.mxu0 0.0
        %2332 = vmatpush1.msra.mxu0 0.0
        %2333 = vmatprep.subr.mxu0 0.0
        %2334 = vmatpush1.msra.mxu0 0.0
        %2335 = vmatprep.subr.mxu0 0.0
        %2336 = vmatpush1.msra.mxu0 0.0
        %2337 = vmatprep.subr.mxu0 0.0
        %2338 = vmatpush1.msra.mxu0 0.0
        %2339 = vmatprep.subr.mxu0 0.0
        %2340 = vmatpush1.msra.mxu0 0.0
        %2341 = vmatprep.subr.mxu0 0.0
        %2342 = vmatpush1.msra.mxu0 0.0
        %2343 = vmatprep.subr.mxu0 0.0
        %2344 = vmatpush1.msra.mxu0 0.0
        %2345 = vmatprep.subr.mxu0 0.0
        %2346 = vmatpush1.msra.mxu0 0.0
        %2347 = vmatprep.mubr.f32.mxu0 0.0
        %2348 = vmatmul.mubr.f32.gmra.mrb[0].mxu0 %v2272
        %v2349 = vpop.f32.mrb[0].mxu0
        %v2350 = vadd.f32 0.0, %v2349
        %v2351 = vpop.f32.mrb[0].mxu0
        %2352 = vmatprep.mubr.f32.mxu0 0.0
        %2353 = vmatmul.mubr.f32.gmra.mrb[0].mxu0 %v2275
        %v2354 = vpop.f32.mrb[0].mxu0
        %v2355 = vadd.f32 0.0, %v2354
        %v2356 = vpop.f32.mrb[0].mxu0
        %2357 = vmatprep.mubr.f32.mxu0 0.0
        %2358 = vmatmul.mubr.f32.gmra.mrb[0].mxu0 %v2278
        %v2359 = vpop.f32.mrb[0].mxu0
        %v2360 = vadd.f32 0.0, %v2359
        %v2361 = vpop.f32.mrb[0].mxu0
        %2362 = vmatprep.mubr.f32.mxu0 0.0
        %2363 = vmatmul.mubr.f32.gmra.mrb[0].mxu0 %v2281
        %v2364 = vpop.f32.mrb[0].mxu0
        %v2365 = vadd.f32 0.0, %v2364
        %v2366 = vpop.f32.mrb[0].mxu0
        %2367 = vdwg.mxu0
        %v2368 = vadd.f32 %v2262, %v2350
        %v2369 = vadd.f32 %v2263, %v2355
        %v2370 = vadd.f32 %v2264, %v2360
        %v2371 = vadd.f32 %v2265, %v2365
        %s2372 = scalar_lea.vmem [#allocation8], 96
        %v2373 = vld [vmem:[%s2372] sm:$0xff]
        %v2374 = vld [vmem:[%s2372 + $0x8] sm:$0xff]
        %v2375 = vld [vmem:[%s2372 + $0x10] sm:$0xff]
        %v2376 = vld [vmem:[%s2372 + $0x18] sm:$0xff]
        %v2378 = vsel %vm1669, %v2373, 0
        %v2381 = vsel %vm1669, %v2374, 0
        %v2384 = vsel %vm1669, %v2375, 0
        %v2387 = vsel %vm1669, %v2376, 0
        %2389 = vmatprep.subr.mxu0 0.0
        %2390 = vmatpush1.msra.mxu0 %v2029
        %2391 = vmatprep.subr.mxu0 0.0
        %2392 = vmatpush1.msra.mxu0 %v2030
        %2393 = vmatprep.subr.mxu0 0.0
        %2394 = vmatpush1.msra.mxu0 %v2031
        %2395 = vmatprep.subr.mxu0 0.0
        %2396 = vmatpush1.msra.mxu0 %v2032
        %2397 = vmatprep.subr.mxu0 0.0
        %2398 = vmatpush1.msra.mxu0 0.0
        %2399 = vmatprep.subr.mxu0 0.0
        %2400 = vmatpush1.msra.mxu0 0.0
        %2401 = vmatprep.subr.mxu0 0.0
        %2402 = vmatpush1.msra.mxu0 0.0
        %2403 = vmatprep.subr.mxu0 0.0
        %2404 = vmatpush1.msra.mxu0 0.0
        %2405 = vmatprep.subr.mxu0 0.0
        %2406 = vmatpush1.msra.mxu0 0.0
        %2407 = vmatprep.subr.mxu0 0.0
        %2408 = vmatpush1.msra.mxu0 0.0
        %2409 = vmatprep.subr.mxu0 0.0
        %2410 = vmatpush1.msra.mxu0 0.0
        %2411 = vmatprep.subr.mxu0 0.0
        %2412 = vmatpush1.msra.mxu0 0.0
        %2413 = vmatprep.subr.mxu0 0.0
        %2414 = vmatpush1.msra.mxu0 0.0
        %2415 = vmatprep.subr.mxu0 0.0
        %2416 = vmatpush1.msra.mxu0 0.0
        %2417 = vmatprep.subr.mxu0 0.0
        %2418 = vmatpush1.msra.mxu0 0.0
        %2419 = vmatprep.subr.mxu0 0.0
        %2420 = vmatpush1.msra.mxu0 0.0
        %2421 = vmatprep.subr.mxu0 0.0
        %2422 = vmatpush1.msra.mxu0 0.0
        %2423 = vmatprep.subr.mxu0 0.0
        %2424 = vmatpush1.msra.mxu0 0.0
        %2425 = vmatprep.subr.mxu0 0.0
        %2426 = vmatpush1.msra.mxu0 0.0
        %2427 = vmatprep.subr.mxu0 0.0
        %2428 = vmatpush1.msra.mxu0 0.0
        %2429 = vmatprep.subr.mxu0 0.0
        %2430 = vmatpush1.msra.mxu0 0.0
        %2431 = vmatprep.subr.mxu0 0.0
        %2432 = vmatpush1.msra.mxu0 0.0
        %2433 = vmatprep.subr.mxu0 0.0
        %2434 = vmatpush1.msra.mxu0 0.0
        %2435 = vmatprep.subr.mxu0 0.0
        %2436 = vmatpush1.msra.mxu0 0.0
        %2437 = vmatprep.subr.mxu0 0.0
        %2438 = vmatpush1.msra.mxu0 0.0
        %2439 = vmatprep.subr.mxu0 0.0
        %2440 = vmatpush1.msra.mxu0 0.0
        %2441 = vmatprep.subr.mxu0 0.0
        %2442 = vmatpush1.msra.mxu0 0.0
        %2443 = vmatprep.subr.mxu0 0.0
        %2444 = vmatpush1.msra.mxu0 0.0
        %2445 = vmatprep.subr.mxu0 0.0
        %2446 = vmatpush1.msra.mxu0 0.0
        %2447 = vmatprep.subr.mxu0 0.0
        %2448 = vmatpush1.msra.mxu0 0.0
        %2449 = vmatprep.subr.mxu0 0.0
        %2450 = vmatpush1.msra.mxu0 0.0
        %2451 = vmatprep.subr.mxu0 0.0
        %2452 = vmatpush1.msra.mxu0 0.0
        %2453 = vmatprep.mubr.f32.mxu0 0.0
        %2454 = vmatmul.mubr.f32.gmra.mrb[0].mxu0 %v2378
        %v2455 = vpop.f32.mrb[0].mxu0
        %v2456 = vadd.f32 0.0, %v2455
        %v2457 = vpop.f32.mrb[0].mxu0
        %2458 = vmatprep.mubr.f32.mxu0 0.0
        %2459 = vmatmul.mubr.f32.gmra.mrb[0].mxu0 %v2381
        %v2460 = vpop.f32.mrb[0].mxu0
        %v2461 = vadd.f32 0.0, %v2460
        %v2462 = vpop.f32.mrb[0].mxu0
        %2463 = vmatprep.mubr.f32.mxu0 0.0
        %2464 = vmatmul.mubr.f32.gmra.mrb[0].mxu0 %v2384
        %v2465 = vpop.f32.mrb[0].mxu0
        %v2466 = vadd.f32 0.0, %v2465
        %v2467 = vpop.f32.mrb[0].mxu0
        %2468 = vmatprep.mubr.f32.mxu0 0.0
        %2469 = vmatmul.mubr.f32.gmra.mrb[0].mxu0 %v2387
        %v2470 = vpop.f32.mrb[0].mxu0
        %v2471 = vadd.f32 0.0, %v2470
        %v2472 = vpop.f32.mrb[0].mxu0
        %2473 = vdwg.mxu0
        %vm2474 = vcmp.lt.s32.totalorder %v1664, 126
        %2475 = vrot.lane.b32.xlu0 %v2456, 126
        %v2476 = vpop.permute.xlu0 %2475
        %2477 = vrot.lane.b32.xlu0 %v2461, 126
        %v2478 = vpop.permute.xlu0 %2477
        %2479 = vrot.lane.b32.xlu0 %v2466, 126
        %v2480 = vpop.permute.xlu0 %2479
        %2481 = vrot.lane.b32.xlu0 %v2471, 126
        %v2482 = vpop.permute.xlu0 %2481
        %v2483 = vsel %vm2474, %v2476, 0.0
        %v2484 = vsel %vm2474, %v2478, 0.0
        %v2485 = vsel %vm2474, %v2480, 0.0
        %v2486 = vsel %vm2474, %v2482, 0.0
        %v2487 = vadd.f32 %v2368, %v2483
        %v2488 = vadd.f32 %v2369, %v2484
        %v2489 = vadd.f32 %v2370, %v2485
        %v2490 = vadd.f32 %v2371, %v2486
        %s2491 = scalar_lea.vmem [#allocation8], 128
        %v2492 = vld [vmem:[%s2491] sm:$0xff]
        %v2493 = vld [vmem:[%s2491 + $0x8] sm:$0xff]
        %v2494 = vld [vmem:[%s2491 + $0x10] sm:$0xff]
        %v2495 = vld [vmem:[%s2491 + $0x18] sm:$0xff]
        %v2497 = vsel %vm1669, %v2492, 0
        %v2500 = vsel %vm1669, %v2493, 0
        %v2503 = vsel %vm1669, %v2494, 0
        %v2506 = vsel %vm1669, %v2495, 0
        %2508 = vmatprep.subr.mxu0 0.0
        %2509 = vmatpush1.msra.mxu0 %v2029
        %2510 = vmatprep.subr.mxu0 0.0
        %2511 = vmatpush1.msra.mxu0 %v2030
        %2512 = vmatprep.subr.mxu0 0.0
        %2513 = vmatpush1.msra.mxu0 %v2031
        %2514 = vmatprep.subr.mxu0 0.0
        %2515 = vmatpush1.msra.mxu0 %v2032
        %2516 = vmatprep.subr.mxu0 0.0
        %2517 = vmatpush1.msra.mxu0 0.0
        %2518 = vmatprep.subr.mxu0 0.0
        %2519 = vmatpush1.msra.mxu0 0.0
        %2520 = vmatprep.subr.mxu0 0.0
        %2521 = vmatpush1.msra.mxu0 0.0
        %2522 = vmatprep.subr.mxu0 0.0
        %2523 = vmatpush1.msra.mxu0 0.0
        %2524 = vmatprep.subr.mxu0 0.0
        %2525 = vmatpush1.msra.mxu0 0.0
        %2526 = vmatprep.subr.mxu0 0.0
        %2527 = vmatpush1.msra.mxu0 0.0
        %2528 = vmatprep.subr.mxu0 0.0
        %2529 = vmatpush1.msra.mxu0 0.0
        %2530 = vmatprep.subr.mxu0 0.0
        %2531 = vmatpush1.msra.mxu0 0.0
        %2532 = vmatprep.subr.mxu0 0.0
        %2533 = vmatpush1.msra.mxu0 0.0
        %2534 = vmatprep.subr.mxu0 0.0
        %2535 = vmatpush1.msra.mxu0 0.0
        %2536 = vmatprep.subr.mxu0 0.0
        %2537 = vmatpush1.msra.mxu0 0.0
        %2538 = vmatprep.subr.mxu0 0.0
        %2539 = vmatpush1.msra.mxu0 0.0
        %2540 = vmatprep.subr.mxu0 0.0
        %2541 = vmatpush1.msra.mxu0 0.0
        %2542 = vmatprep.subr.mxu0 0.0
        %2543 = vmatpush1.msra.mxu0 0.0
        %2544 = vmatprep.subr.mxu0 0.0
        %2545 = vmatpush1.msra.mxu0 0.0
        %2546 = vmatprep.subr.mxu0 0.0
        %2547 = vmatpush1.msra.mxu0 0.0
        %2548 = vmatprep.subr.mxu0 0.0
        %2549 = vmatpush1.msra.mxu0 0.0
        %2550 = vmatprep.subr.mxu0 0.0
        %2551 = vmatpush1.msra.mxu0 0.0
        %2552 = vmatprep.subr.mxu0 0.0
        %2553 = vmatpush1.msra.mxu0 0.0
        %2554 = vmatprep.subr.mxu0 0.0
        %2555 = vmatpush1.msra.mxu0 0.0
        %2556 = vmatprep.subr.mxu0 0.0
        %2557 = vmatpush1.msra.mxu0 0.0
        %2558 = vmatprep.subr.mxu0 0.0
        %2559 = vmatpush1.msra.mxu0 0.0
        %2560 = vmatprep.subr.mxu0 0.0
        %2561 = vmatpush1.msra.mxu0 0.0
        %2562 = vmatprep.subr.mxu0 0.0
        %2563 = vmatpush1.msra.mxu0 0.0
        %2564 = vmatprep.subr.mxu0 0.0
        %2565 = vmatpush1.msra.mxu0 0.0
        %2566 = vmatprep.subr.mxu0 0.0
        %2567 = vmatpush1.msra.mxu0 0.0
        %2568 = vmatprep.subr.mxu0 0.0
        %2569 = vmatpush1.msra.mxu0 0.0
        %2570 = vmatprep.subr.mxu0 0.0
        %2571 = vmatpush1.msra.mxu0 0.0
        %2572 = vmatprep.mubr.f32.mxu0 0.0
        %2573 = vmatmul.mubr.f32.gmra.mrb[0].mxu0 %v2497
        %v2574 = vpop.f32.mrb[0].mxu0
        %v2575 = vadd.f32 0.0, %v2574
        %v2576 = vpop.f32.mrb[0].mxu0
        %2577 = vmatprep.mubr.f32.mxu0 0.0
        %2578 = vmatmul.mubr.f32.gmra.mrb[0].mxu0 %v2500
        %v2579 = vpop.f32.mrb[0].mxu0
        %v2580 = vadd.f32 0.0, %v2579
        %v2581 = vpop.f32.mrb[0].mxu0
        %2582 = vmatprep.mubr.f32.mxu0 0.0
        %2583 = vmatmul.mubr.f32.gmra.mrb[0].mxu0 %v2503
        %v2584 = vpop.f32.mrb[0].mxu0
        %v2585 = vadd.f32 0.0, %v2584
        %v2586 = vpop.f32.mrb[0].mxu0
        %2587 = vmatprep.mubr.f32.mxu0 0.0
        %2588 = vmatmul.mubr.f32.gmra.mrb[0].mxu0 %v2506
        %v2589 = vpop.f32.mrb[0].mxu0
        %v2590 = vadd.f32 0.0, %v2589
        %v2591 = vpop.f32.mrb[0].mxu0
        %2592 = vdwg.mxu0
        %vm2593 = vcmp.lt.s32.totalorder %v1664, 124
        %2594 = vrot.lane.b32.xlu0 %v2575, 124
        %v2595 = vpop.permute.xlu0 %2594
        %2596 = vrot.lane.b32.xlu0 %v2580, 124
        %v2597 = vpop.permute.xlu0 %2596
        %2598 = vrot.lane.b32.xlu0 %v2585, 124
        %v2599 = vpop.permute.xlu0 %2598
        %2600 = vrot.lane.b32.xlu0 %v2590, 124
        %v2601 = vpop.permute.xlu0 %2600
        %v2602 = vsel %vm2593, %v2595, 0.0
        %v2603 = vsel %vm2593, %v2597, 0.0
        %v2604 = vsel %vm2593, %v2599, 0.0
        %v2605 = vsel %vm2593, %v2601, 0.0
        %v2606 = vadd.f32 %v2487, %v2602
        %v2607 = vadd.f32 %v2488, %v2603
        %v2608 = vadd.f32 %v2489, %v2604
        %v2609 = vadd.f32 %v2490, %v2605
        %v2610 = vld [vmem:[%s15] sm:$0xff]
        %v2611 = vld [vmem:[%s15 + $0x8] sm:$0xff]
        %v2612 = vld [vmem:[%s15 + $0x10] sm:$0xff]
        %v2613 = vld [vmem:[%s15 + $0x18] sm:$0xff]
        %2615 = vset.pattern.permute.xlu0 0
        %2616 = vperm.xlu0 %2615, %v2610
        %v2617 = vpop.permute.xlu0 %2616
        %2620 = vset.pattern.permute.xlu0 0
        %2621 = vperm.xlu0 %2620, %v2611
        %v2622 = vpop.permute.xlu0 %2621
        %2625 = vset.pattern.permute.xlu0 0
        %2626 = vperm.xlu0 %2625, %v2612
        %v2627 = vpop.permute.xlu0 %2626
        %2630 = vset.pattern.permute.xlu0 0
        %2631 = vperm.xlu0 %2630, %v2613
        %v2632 = vpop.permute.xlu0 %2631
        %v2634 = vadd.f32 %v2606, %v2617
        %v2635 = vadd.f32 %v2607, %v2622
        %v2636 = vadd.f32 %v2608, %v2627
        %v2637 = vadd.f32 %v2609, %v2632
        %v2638 = vld [vmem:[#allocation11] sm:$0xff]
        %v2639 = vld [vmem:[#allocation11 + $0x8] sm:$0xff]
        %v2640 = vld [vmem:[#allocation11 + $0x10] sm:$0xff]
        %v2641 = vld [vmem:[#allocation11 + $0x18] sm:$0xff]
        %v2642 = vld [vmem:[%s23] sm:$0xff]
        %v2643 = vld [vmem:[%s23 + $0x8] sm:$0xff]
        %v2644 = vld [vmem:[%s23 + $0x10] sm:$0xff]
        %v2645 = vld [vmem:[%s23 + $0x18] sm:$0xff]
        %2647 = vset.pattern.permute.xlu0 0
        %2648 = vperm.xlu0 %2647, %v2642
        %v2649 = vpop.permute.xlu0 %2648
        %2652 = vset.pattern.permute.xlu0 0
        %2653 = vperm.xlu0 %2652, %v2643
        %v2654 = vpop.permute.xlu0 %2653
        %2657 = vset.pattern.permute.xlu0 0
        %2658 = vperm.xlu0 %2657, %v2644
        %v2659 = vpop.permute.xlu0 %2658
        %2662 = vset.pattern.permute.xlu0 0
        %2663 = vperm.xlu0 %2662, %v2645
        %v2664 = vpop.permute.xlu0 %2663
        %v2667 = vsel %vm1669, %v2638, 0
        %v2670 = vsel %vm1669, %v2639, 0
        %v2673 = vsel %vm1669, %v2640, 0
        %v2676 = vsel %vm1669, %v2641, 0
        %2678 = vmatprep.subr.mxu0 0.0
        %2679 = vmatpush1.msra.mxu0 %v2634
        %2680 = vmatprep.subr.mxu0 0.0
        %2681 = vmatpush1.msra.mxu0 %v2635
        %2682 = vmatprep.subr.mxu0 0.0
        %2683 = vmatpush1.msra.mxu0 %v2636
        %2684 = vmatprep.subr.mxu0 0.0
        %2685 = vmatpush1.msra.mxu0 %v2637
        %2686 = vmatprep.subr.mxu0 0.0
        %2687 = vmatpush1.msra.mxu0 0.0
        %2688 = vmatprep.subr.mxu0 0.0
        %2689 = vmatpush1.msra.mxu0 0.0
        %2690 = vmatprep.subr.mxu0 0.0
        %2691 = vmatpush1.msra.mxu0 0.0
        %2692 = vmatprep.subr.mxu0 0.0
        %2693 = vmatpush1.msra.mxu0 0.0
        %2694 = vmatprep.subr.mxu0 0.0
        %2695 = vmatpush1.msra.mxu0 0.0
        %2696 = vmatprep.subr.mxu0 0.0
        %2697 = vmatpush1.msra.mxu0 0.0
        %2698 = vmatprep.subr.mxu0 0.0
        %2699 = vmatpush1.msra.mxu0 0.0
        %2700 = vmatprep.subr.mxu0 0.0
        %2701 = vmatpush1.msra.mxu0 0.0
        %2702 = vmatprep.subr.mxu0 0.0
        %2703 = vmatpush1.msra.mxu0 0.0
        %2704 = vmatprep.subr.mxu0 0.0
        %2705 = vmatpush1.msra.mxu0 0.0
        %2706 = vmatprep.subr.mxu0 0.0
        %2707 = vmatpush1.msra.mxu0 0.0
        %2708 = vmatprep.subr.mxu0 0.0
        %2709 = vmatpush1.msra.mxu0 0.0
        %2710 = vmatprep.subr.mxu0 0.0
        %2711 = vmatpush1.msra.mxu0 0.0
        %2712 = vmatprep.subr.mxu0 0.0
        %2713 = vmatpush1.msra.mxu0 0.0
        %2714 = vmatprep.subr.mxu0 0.0
        %2715 = vmatpush1.msra.mxu0 0.0
        %2716 = vmatprep.subr.mxu0 0.0
        %2717 = vmatpush1.msra.mxu0 0.0
        %2718 = vmatprep.subr.mxu0 0.0
        %2719 = vmatpush1.msra.mxu0 0.0
        %2720 = vmatprep.subr.mxu0 0.0
        %2721 = vmatpush1.msra.mxu0 0.0
        %2722 = vmatprep.subr.mxu0 0.0
        %2723 = vmatpush1.msra.mxu0 0.0
        %2724 = vmatprep.subr.mxu0 0.0
        %2725 = vmatpush1.msra.mxu0 0.0
        %2726 = vmatprep.subr.mxu0 0.0
        %2727 = vmatpush1.msra.mxu0 0.0
        %2728 = vmatprep.subr.mxu0 0.0
        %2729 = vmatpush1.msra.mxu0 0.0
        %2730 = vmatprep.subr.mxu0 0.0
        %2731 = vmatpush1.msra.mxu0 0.0
        %2732 = vmatprep.subr.mxu0 0.0
        %2733 = vmatpush1.msra.mxu0 0.0
        %2734 = vmatprep.subr.mxu0 0.0
        %2735 = vmatpush1.msra.mxu0 0.0
        %2736 = vmatprep.subr.mxu0 0.0
        %2737 = vmatpush1.msra.mxu0 0.0
        %2738 = vmatprep.subr.mxu0 0.0
        %2739 = vmatpush1.msra.mxu0 0.0
        %2740 = vmatprep.subr.mxu0 0.0
        %2741 = vmatpush1.msra.mxu0 0.0
        %2742 = vmatprep.mubr.f32.mxu0 0.0
        %2743 = vmatmul.mubr.f32.gmra.mrb[0].mxu0 %v2667
        %v2744 = vpop.f32.mrb[0].mxu0
        %v2745 = vadd.f32 %v2649, %v2744
        %v2746 = vpop.f32.mrb[0].mxu0
        %2747 = vmatprep.mubr.f32.mxu0 0.0
        %2748 = vmatmul.mubr.f32.gmra.mrb[0].mxu0 %v2670
        %v2749 = vpop.f32.mrb[0].mxu0
        %v2750 = vadd.f32 %v2654, %v2749
        %v2751 = vpop.f32.mrb[0].mxu0
        %2752 = vmatprep.mubr.f32.mxu0 0.0
        %2753 = vmatmul.mubr.f32.gmra.mrb[0].mxu0 %v2673
        %v2754 = vpop.f32.mrb[0].mxu0
        %v2755 = vadd.f32 %v2659, %v2754
        %v2756 = vpop.f32.mrb[0].mxu0
        %2757 = vmatprep.mubr.f32.mxu0 0.0
        %2758 = vmatmul.mubr.f32.gmra.mrb[0].mxu0 %v2676
        %v2759 = vpop.f32.mrb[0].mxu0
        %v2760 = vadd.f32 %v2664, %v2759
        %v2761 = vpop.f32.mrb[0].mxu0
        %2762 = vdwg.mxu0
        %v2763 = vld [vmem:[#allocation10] sm:$0xff]
        %v2764 = vld [vmem:[#allocation10 + $0x8] sm:$0xff]
        %v2765 = vld [vmem:[#allocation10 + $0x10] sm:$0xff]
        %v2766 = vld [vmem:[#allocation10 + $0x18] sm:$0xff]
        %v2768 = vsel %vm1669, %v2763, 0
        %v2771 = vsel %vm1669, %v2764, 0
        %v2774 = vsel %vm1669, %v2765, 0
        %v2777 = vsel %vm1669, %v2766, 0
        %2779 = vmatprep.subr.mxu0 0.0
        %2780 = vmatpush1.msra.mxu0 %v1545
        %2781 = vmatprep.subr.mxu0 0.0
        %2782 = vmatpush1.msra.mxu0 %v1550
        %2783 = vmatprep.subr.mxu0 0.0
        %2784 = vmatpush1.msra.mxu0 %v1555
        %2785 = vmatprep.subr.mxu0 0.0
        %2786 = vmatpush1.msra.mxu0 %v1560
        %2787 = vmatprep.subr.mxu0 0.0
        %2788 = vmatpush1.msra.mxu0 0.0
        %2789 = vmatprep.subr.mxu0 0.0
        %2790 = vmatpush1.msra.mxu0 0.0
        %2791 = vmatprep.subr.mxu0 0.0
        %2792 = vmatpush1.msra.mxu0 0.0
        %2793 = vmatprep.subr.mxu0 0.0
        %2794 = vmatpush1.msra.mxu0 0.0
        %2795 = vmatprep.subr.mxu0 0.0
        %2796 = vmatpush1.msra.mxu0 0.0
        %2797 = vmatprep.subr.mxu0 0.0
        %2798 = vmatpush1.msra.mxu0 0.0
        %2799 = vmatprep.subr.mxu0 0.0
        %2800 = vmatpush1.msra.mxu0 0.0
        %2801 = vmatprep.subr.mxu0 0.0
        %2802 = vmatpush1.msra.mxu0 0.0
        %2803 = vmatprep.subr.mxu0 0.0
        %2804 = vmatpush1.msra.mxu0 0.0
        %2805 = vmatprep.subr.mxu0 0.0
        %2806 = vmatpush1.msra.mxu0 0.0
        %2807 = vmatprep.subr.mxu0 0.0
        %2808 = vmatpush1.msra.mxu0 0.0
        %2809 = vmatprep.subr.mxu0 0.0
        %2810 = vmatpush1.msra.mxu0 0.0
        %2811 = vmatprep.subr.mxu0 0.0
        %2812 = vmatpush1.msra.mxu0 0.0
        %2813 = vmatprep.subr.mxu0 0.0
        %2814 = vmatpush1.msra.mxu0 0.0
        %2815 = vmatprep.subr.mxu0 0.0
        %2816 = vmatpush1.msra.mxu0 0.0
        %2817 = vmatprep.subr.mxu0 0.0
        %2818 = vmatpush1.msra.mxu0 0.0
        %2819 = vmatprep.subr.mxu0 0.0
        %2820 = vmatpush1.msra.mxu0 0.0
        %2821 = vmatprep.subr.mxu0 0.0
        %2822 = vmatpush1.msra.mxu0 0.0
        %2823 = vmatprep.subr.mxu0 0.0
        %2824 = vmatpush1.msra.mxu0 0.0
        %2825 = vmatprep.subr.mxu0 0.0
        %2826 = vmatpush1.msra.mxu0 0.0
        %2827 = vmatprep.subr.mxu0 0.0
        %2828 = vmatpush1.msra.mxu0 0.0
        %2829 = vmatprep.subr.mxu0 0.0
        %2830 = vmatpush1.msra.mxu0 0.0
        %2831 = vmatprep.subr.mxu0 0.0
        %2832 = vmatpush1.msra.mxu0 0.0
        %2833 = vmatprep.subr.mxu0 0.0
        %2834 = vmatpush1.msra.mxu0 0.0
        %2835 = vmatprep.subr.mxu0 0.0
        %2836 = vmatpush1.msra.mxu0 0.0
        %2837 = vmatprep.subr.mxu0 0.0
        %2838 = vmatpush1.msra.mxu0 0.0
        %2839 = vmatprep.subr.mxu0 0.0
        %2840 = vmatpush1.msra.mxu0 0.0
        %2841 = vmatprep.subr.mxu0 0.0
        %2842 = vmatpush1.msra.mxu0 0.0
        %2843 = vmatprep.mubr.f32.mxu0 0.0
        %2844 = vmatmul.mubr.f32.gmra.mrb[0].mxu0 %v2768
        %v2845 = vpop.f32.mrb[0].mxu0
        %v2846 = vadd.f32 0.0, %v2845
        %v2847 = vpop.f32.mrb[0].mxu0
        %2848 = vmatprep.mubr.f32.mxu0 0.0
        %2849 = vmatmul.mubr.f32.gmra.mrb[0].mxu0 %v2771
        %v2850 = vpop.f32.mrb[0].mxu0
        %v2851 = vadd.f32 0.0, %v2850
        %v2852 = vpop.f32.mrb[0].mxu0
        %2853 = vmatprep.mubr.f32.mxu0 0.0
        %2854 = vmatmul.mubr.f32.gmra.mrb[0].mxu0 %v2774
        %v2855 = vpop.f32.mrb[0].mxu0
        %v2856 = vadd.f32 0.0, %v2855
        %v2857 = vpop.f32.mrb[0].mxu0
        %2858 = vmatprep.mubr.f32.mxu0 0.0
        %2859 = vmatmul.mubr.f32.gmra.mrb[0].mxu0 %v2777
        %v2860 = vpop.f32.mrb[0].mxu0
        %v2861 = vadd.f32 0.0, %v2860
        %v2862 = vpop.f32.mrb[0].mxu0
        %2863 = vdwg.mxu0
        %2864 = vrot.lane.b32.xlu0 %v2846, 2
        %v2865 = vpop.permute.xlu0 %2864
        %2866 = vrot.lane.b32.xlu0 %v2851, 2
        %v2867 = vpop.permute.xlu0 %2866
        %2868 = vrot.lane.b32.xlu0 %v2856, 2
        %v2869 = vpop.permute.xlu0 %2868
        %2870 = vrot.lane.b32.xlu0 %v2861, 2
        %v2871 = vpop.permute.xlu0 %2870
        %v2872 = vsel %vm2249, %v2865, 0.0
        %v2873 = vsel %vm2249, %v2867, 0.0
        %v2874 = vsel %vm2249, %v2869, 0.0
        %v2875 = vsel %vm2249, %v2871, 0.0
        %s2876 = scalar_lea.vmem [#allocation10], 32
        %v2877 = vld [vmem:[%s2876] sm:$0xff]
        %v2878 = vld [vmem:[%s2876 + $0x8] sm:$0xff]
        %v2879 = vld [vmem:[%s2876 + $0x10] sm:$0xff]
        %v2880 = vld [vmem:[%s2876 + $0x18] sm:$0xff]
        %v2882 = vsel %vm1669, %v2877, 0
        %v2885 = vsel %vm1669, %v2878, 0
        %v2888 = vsel %vm1669, %v2879, 0
        %v2891 = vsel %vm1669, %v2880, 0
        %2893 = vmatprep.subr.mxu0 0.0
        %2894 = vmatpush1.msra.mxu0 %v1545
        %2895 = vmatprep.subr.mxu0 0.0
        %2896 = vmatpush1.msra.mxu0 %v1550
        %2897 = vmatprep.subr.mxu0 0.0
        %2898 = vmatpush1.msra.mxu0 %v1555
        %2899 = vmatprep.subr.mxu0 0.0
        %2900 = vmatpush1.msra.mxu0 %v1560
        %2901 = vmatprep.subr.mxu0 0.0
        %2902 = vmatpush1.msra.mxu0 0.0
        %2903 = vmatprep.subr.mxu0 0.0
        %2904 = vmatpush1.msra.mxu0 0.0
        %2905 = vmatprep.subr.mxu0 0.0
        %2906 = vmatpush1.msra.mxu0 0.0
        %2907 = vmatprep.subr.mxu0 0.0
        %2908 = vmatpush1.msra.mxu0 0.0
        %2909 = vmatprep.subr.mxu0 0.0
        %2910 = vmatpush1.msra.mxu0 0.0
        %2911 = vmatprep.subr.mxu0 0.0
        %2912 = vmatpush1.msra.mxu0 0.0
        %2913 = vmatprep.subr.mxu0 0.0
        %2914 = vmatpush1.msra.mxu0 0.0
        %2915 = vmatprep.subr.mxu0 0.0
        %2916 = vmatpush1.msra.mxu0 0.0
        %2917 = vmatprep.subr.mxu0 0.0
        %2918 = vmatpush1.msra.mxu0 0.0
        %2919 = vmatprep.subr.mxu0 0.0
        %2920 = vmatpush1.msra.mxu0 0.0
        %2921 = vmatprep.subr.mxu0 0.0
        %2922 = vmatpush1.msra.mxu0 0.0
        %2923 = vmatprep.subr.mxu0 0.0
        %2924 = vmatpush1.msra.mxu0 0.0
        %2925 = vmatprep.subr.mxu0 0.0
        %2926 = vmatpush1.msra.mxu0 0.0
        %2927 = vmatprep.subr.mxu0 0.0
        %2928 = vmatpush1.msra.mxu0 0.0
        %2929 = vmatprep.subr.mxu0 0.0
        %2930 = vmatpush1.msra.mxu0 0.0
        %2931 = vmatprep.subr.mxu0 0.0
        %2932 = vmatpush1.msra.mxu0 0.0
        %2933 = vmatprep.subr.mxu0 0.0
        %2934 = vmatpush1.msra.mxu0 0.0
        %2935 = vmatprep.subr.mxu0 0.0
        %2936 = vmatpush1.msra.mxu0 0.0
        %2937 = vmatprep.subr.mxu0 0.0
        %2938 = vmatpush1.msra.mxu0 0.0
        %2939 = vmatprep.subr.mxu0 0.0
        %2940 = vmatpush1.msra.mxu0 0.0
        %2941 = vmatprep.subr.mxu0 0.0
        %2942 = vmatpush1.msra.mxu0 0.0
        %2943 = vmatprep.subr.mxu0 0.0
        %2944 = vmatpush1.msra.mxu0 0.0
        %2945 = vmatprep.subr.mxu0 0.0
        %2946 = vmatpush1.msra.mxu0 0.0
        %2947 = vmatprep.subr.mxu0 0.0
        %2948 = vmatpush1.msra.mxu0 0.0
        %2949 = vmatprep.subr.mxu0 0.0
        %2950 = vmatpush1.msra.mxu0 0.0
        %2951 = vmatprep.subr.mxu0 0.0
        %2952 = vmatpush1.msra.mxu0 0.0
        %2953 = vmatprep.subr.mxu0 0.0
        %2954 = vmatpush1.msra.mxu0 0.0
        %2955 = vmatprep.subr.mxu0 0.0
        %2956 = vmatpush1.msra.mxu0 0.0
        %2957 = vmatprep.mubr.f32.mxu0 0.0
        %2958 = vmatmul.mubr.f32.gmra.mrb[0].mxu0 %v2882
        %v2959 = vpop.f32.mrb[0].mxu0
        %v2960 = vadd.f32 0.0, %v2959
        %v2961 = vpop.f32.mrb[0].mxu0
        %2962 = vmatprep.mubr.f32.mxu0 0.0
        %2963 = vmatmul.mubr.f32.gmra.mrb[0].mxu0 %v2885
        %v2964 = vpop.f32.mrb[0].mxu0
        %v2965 = vadd.f32 0.0, %v2964
        %v2966 = vpop.f32.mrb[0].mxu0
        %2967 = vmatprep.mubr.f32.mxu0 0.0
        %2968 = vmatmul.mubr.f32.gmra.mrb[0].mxu0 %v2888
        %v2969 = vpop.f32.mrb[0].mxu0
        %v2970 = vadd.f32 0.0, %v2969
        %v2971 = vpop.f32.mrb[0].mxu0
        %2972 = vmatprep.mubr.f32.mxu0 0.0
        %2973 = vmatmul.mubr.f32.gmra.mrb[0].mxu0 %v2891
        %v2974 = vpop.f32.mrb[0].mxu0
        %v2975 = vadd.f32 0.0, %v2974
        %v2976 = vpop.f32.mrb[0].mxu0
        %2977 = vdwg.mxu0
        %2978 = vrot.lane.b32.xlu0 %v2960, 1
        %v2979 = vpop.permute.xlu0 %2978
        %2980 = vrot.lane.b32.xlu0 %v2965, 1
        %v2981 = vpop.permute.xlu0 %2980
        %2982 = vrot.lane.b32.xlu0 %v2970, 1
        %v2983 = vpop.permute.xlu0 %2982
        %2984 = vrot.lane.b32.xlu0 %v2975, 1
        %v2985 = vpop.permute.xlu0 %2984
        %v2986 = vsel %vm1767, %v2979, 0.0
        %v2987 = vsel %vm1767, %v2981, 0.0
        %v2988 = vsel %vm1767, %v2983, 0.0
        %v2989 = vsel %vm1767, %v2985, 0.0
        %v2990 = vadd.f32 %v2872, %v2986
        %v2991 = vadd.f32 %v2873, %v2987
        %v2992 = vadd.f32 %v2874, %v2988
        %v2993 = vadd.f32 %v2875, %v2989
        %s2994 = scalar_lea.vmem [#allocation10], 64
        %v2995 = vld [vmem:[%s2994] sm:$0xff]
        %v2996 = vld [vmem:[%s2994 + $0x8] sm:$0xff]
        %v2997 = vld [vmem:[%s2994 + $0x10] sm:$0xff]
        %v2998 = vld [vmem:[%s2994 + $0x18] sm:$0xff]
        %v3000 = vsel %vm1669, %v2995, 0
        %v3003 = vsel %vm1669, %v2996, 0
        %v3006 = vsel %vm1669, %v2997, 0
        %v3009 = vsel %vm1669, %v2998, 0
        %3011 = vmatprep.subr.mxu0 0.0
        %3012 = vmatpush1.msra.mxu0 %v1545
        %3013 = vmatprep.subr.mxu0 0.0
        %3014 = vmatpush1.msra.mxu0 %v1550
        %3015 = vmatprep.subr.mxu0 0.0
        %3016 = vmatpush1.msra.mxu0 %v1555
        %3017 = vmatprep.subr.mxu0 0.0
        %3018 = vmatpush1.msra.mxu0 %v1560
        %3019 = vmatprep.subr.mxu0 0.0
        %3020 = vmatpush1.msra.mxu0 0.0
        %3021 = vmatprep.subr.mxu0 0.0
        %3022 = vmatpush1.msra.mxu0 0.0
        %3023 = vmatprep.subr.mxu0 0.0
        %3024 = vmatpush1.msra.mxu0 0.0
        %3025 = vmatprep.subr.mxu0 0.0
        %3026 = vmatpush1.msra.mxu0 0.0
        %3027 = vmatprep.subr.mxu0 0.0
        %3028 = vmatpush1.msra.mxu0 0.0
        %3029 = vmatprep.subr.mxu0 0.0
        %3030 = vmatpush1.msra.mxu0 0.0
        %3031 = vmatprep.subr.mxu0 0.0
        %3032 = vmatpush1.msra.mxu0 0.0
        %3033 = vmatprep.subr.mxu0 0.0
        %3034 = vmatpush1.msra.mxu0 0.0
        %3035 = vmatprep.subr.mxu0 0.0
        %3036 = vmatpush1.msra.mxu0 0.0
        %3037 = vmatprep.subr.mxu0 0.0
        %3038 = vmatpush1.msra.mxu0 0.0
        %3039 = vmatprep.subr.mxu0 0.0
        %3040 = vmatpush1.msra.mxu0 0.0
        %3041 = vmatprep.subr.mxu0 0.0
        %3042 = vmatpush1.msra.mxu0 0.0
        %3043 = vmatprep.subr.mxu0 0.0
        %3044 = vmatpush1.msra.mxu0 0.0
        %3045 = vmatprep.subr.mxu0 0.0
        %3046 = vmatpush1.msra.mxu0 0.0
        %3047 = vmatprep.subr.mxu0 0.0
        %3048 = vmatpush1.msra.mxu0 0.0
        %3049 = vmatprep.subr.mxu0 0.0
        %3050 = vmatpush1.msra.mxu0 0.0
        %3051 = vmatprep.subr.mxu0 0.0
        %3052 = vmatpush1.msra.mxu0 0.0
        %3053 = vmatprep.subr.mxu0 0.0
        %3054 = vmatpush1.msra.mxu0 0.0
        %3055 = vmatprep.subr.mxu0 0.0
        %3056 = vmatpush1.msra.mxu0 0.0
        %3057 = vmatprep.subr.mxu0 0.0
        %3058 = vmatpush1.msra.mxu0 0.0
        %3059 = vmatprep.subr.mxu0 0.0
        %3060 = vmatpush1.msra.mxu0 0.0
        %3061 = vmatprep.subr.mxu0 0.0
        %3062 = vmatpush1.msra.mxu0 0.0
        %3063 = vmatprep.subr.mxu0 0.0
        %3064 = vmatpush1.msra.mxu0 0.0
        %3065 = vmatprep.subr.mxu0 0.0
        %3066 = vmatpush1.msra.mxu0 0.0
        %3067 = vmatprep.subr.mxu0 0.0
        %3068 = vmatpush1.msra.mxu0 0.0
        %3069 = vmatprep.subr.mxu0 0.0
        %3070 = vmatpush1.msra.mxu0 0.0
        %3071 = vmatprep.subr.mxu0 0.0
        %3072 = vmatpush1.msra.mxu0 0.0
        %3073 = vmatprep.subr.mxu0 0.0
        %3074 = vmatpush1.msra.mxu0 0.0
        %3075 = vmatprep.mubr.f32.mxu0 0.0
        %3076 = vmatmul.mubr.f32.gmra.mrb[0].mxu0 %v3000
        %v3077 = vpop.f32.mrb[0].mxu0
        %v3078 = vadd.f32 0.0, %v3077
        %v3079 = vpop.f32.mrb[0].mxu0
        %3080 = vmatprep.mubr.f32.mxu0 0.0
        %3081 = vmatmul.mubr.f32.gmra.mrb[0].mxu0 %v3003
        %v3082 = vpop.f32.mrb[0].mxu0
        %v3083 = vadd.f32 0.0, %v3082
        %v3084 = vpop.f32.mrb[0].mxu0
        %3085 = vmatprep.mubr.f32.mxu0 0.0
        %3086 = vmatmul.mubr.f32.gmra.mrb[0].mxu0 %v3006
        %v3087 = vpop.f32.mrb[0].mxu0
        %v3088 = vadd.f32 0.0, %v3087
        %v3089 = vpop.f32.mrb[0].mxu0
        %3090 = vmatprep.mubr.f32.mxu0 0.0
        %3091 = vmatmul.mubr.f32.gmra.mrb[0].mxu0 %v3009
        %v3092 = vpop.f32.mrb[0].mxu0
        %v3093 = vadd.f32 0.0, %v3092
        %v3094 = vpop.f32.mrb[0].mxu0
        %3095 = vdwg.mxu0
        %v3096 = vadd.f32 %v2990, %v3078
        %v3097 = vadd.f32 %v2991, %v3083
        %v3098 = vadd.f32 %v2992, %v3088
        %v3099 = vadd.f32 %v2993, %v3093
        %s3100 = scalar_lea.vmem [#allocation10], 96
        %v3101 = vld [vmem:[%s3100] sm:$0xff]
        %v3102 = vld [vmem:[%s3100 + $0x8] sm:$0xff]
        %v3103 = vld [vmem:[%s3100 + $0x10] sm:$0xff]
        %v3104 = vld [vmem:[%s3100 + $0x18] sm:$0xff]
        %v3106 = vsel %vm1669, %v3101, 0
        %v3109 = vsel %vm1669, %v3102, 0
        %v3112 = vsel %vm1669, %v3103, 0
        %v3115 = vsel %vm1669, %v3104, 0
        %3117 = vmatprep.subr.mxu0 0.0
        %3118 = vmatpush1.msra.mxu0 %v1545
        %3119 = vmatprep.subr.mxu0 0.0
        %3120 = vmatpush1.msra.mxu0 %v1550
        %3121 = vmatprep.subr.mxu0 0.0
        %3122 = vmatpush1.msra.mxu0 %v1555
        %3123 = vmatprep.subr.mxu0 0.0
        %3124 = vmatpush1.msra.mxu0 %v1560
        %3125 = vmatprep.subr.mxu0 0.0
        %3126 = vmatpush1.msra.mxu0 0.0
        %3127 = vmatprep.subr.mxu0 0.0
        %3128 = vmatpush1.msra.mxu0 0.0
        %3129 = vmatprep.subr.mxu0 0.0
        %3130 = vmatpush1.msra.mxu0 0.0
        %3131 = vmatprep.subr.mxu0 0.0
        %3132 = vmatpush1.msra.mxu0 0.0
        %3133 = vmatprep.subr.mxu0 0.0
        %3134 = vmatpush1.msra.mxu0 0.0
        %3135 = vmatprep.subr.mxu0 0.0
        %3136 = vmatpush1.msra.mxu0 0.0
        %3137 = vmatprep.subr.mxu0 0.0
        %3138 = vmatpush1.msra.mxu0 0.0
        %3139 = vmatprep.subr.mxu0 0.0
        %3140 = vmatpush1.msra.mxu0 0.0
        %3141 = vmatprep.subr.mxu0 0.0
        %3142 = vmatpush1.msra.mxu0 0.0
        %3143 = vmatprep.subr.mxu0 0.0
        %3144 = vmatpush1.msra.mxu0 0.0
        %3145 = vmatprep.subr.mxu0 0.0
        %3146 = vmatpush1.msra.mxu0 0.0
        %3147 = vmatprep.subr.mxu0 0.0
        %3148 = vmatpush1.msra.mxu0 0.0
        %3149 = vmatprep.subr.mxu0 0.0
        %3150 = vmatpush1.msra.mxu0 0.0
        %3151 = vmatprep.subr.mxu0 0.0
        %3152 = vmatpush1.msra.mxu0 0.0
        %3153 = vmatprep.subr.mxu0 0.0
        %3154 = vmatpush1.msra.mxu0 0.0
        %3155 = vmatprep.subr.mxu0 0.0
        %3156 = vmatpush1.msra.mxu0 0.0
        %3157 = vmatprep.subr.mxu0 0.0
        %3158 = vmatpush1.msra.mxu0 0.0
        %3159 = vmatprep.subr.mxu0 0.0
        %3160 = vmatpush1.msra.mxu0 0.0
        %3161 = vmatprep.subr.mxu0 0.0
        %3162 = vmatpush1.msra.mxu0 0.0
        %3163 = vmatprep.subr.mxu0 0.0
        %3164 = vmatpush1.msra.mxu0 0.0
        %3165 = vmatprep.subr.mxu0 0.0
        %3166 = vmatpush1.msra.mxu0 0.0
        %3167 = vmatprep.subr.mxu0 0.0
        %3168 = vmatpush1.msra.mxu0 0.0
        %3169 = vmatprep.subr.mxu0 0.0
        %3170 = vmatpush1.msra.mxu0 0.0
        %3171 = vmatprep.subr.mxu0 0.0
        %3172 = vmatpush1.msra.mxu0 0.0
        %3173 = vmatprep.subr.mxu0 0.0
        %3174 = vmatpush1.msra.mxu0 0.0
        %3175 = vmatprep.subr.mxu0 0.0
        %3176 = vmatpush1.msra.mxu0 0.0
        %3177 = vmatprep.subr.mxu0 0.0
        %3178 = vmatpush1.msra.mxu0 0.0
        %3179 = vmatprep.subr.mxu0 0.0
        %3180 = vmatpush1.msra.mxu0 0.0
        %3181 = vmatprep.mubr.f32.mxu0 0.0
        %3182 = vmatmul.mubr.f32.gmra.mrb[0].mxu0 %v3106
        %v3183 = vpop.f32.mrb[0].mxu0
        %v3184 = vadd.f32 0.0, %v3183
        %v3185 = vpop.f32.mrb[0].mxu0
        %3186 = vmatprep.mubr.f32.mxu0 0.0
        %3187 = vmatmul.mubr.f32.gmra.mrb[0].mxu0 %v3109
        %v3188 = vpop.f32.mrb[0].mxu0
        %v3189 = vadd.f32 0.0, %v3188
        %v3190 = vpop.f32.mrb[0].mxu0
        %3191 = vmatprep.mubr.f32.mxu0 0.0
        %3192 = vmatmul.mubr.f32.gmra.mrb[0].mxu0 %v3112
        %v3193 = vpop.f32.mrb[0].mxu0
        %v3194 = vadd.f32 0.0, %v3193
        %v3195 = vpop.f32.mrb[0].mxu0
        %3196 = vmatprep.mubr.f32.mxu0 0.0
        %3197 = vmatmul.mubr.f32.gmra.mrb[0].mxu0 %v3115
        %v3198 = vpop.f32.mrb[0].mxu0
        %v3199 = vadd.f32 0.0, %v3198
        %v3200 = vpop.f32.mrb[0].mxu0
        %3201 = vdwg.mxu0
        %3202 = vrot.lane.b32.xlu0 %v3184, 127
        %v3203 = vpop.permute.xlu0 %3202
        %3204 = vrot.lane.b32.xlu0 %v3189, 127
        %v3205 = vpop.permute.xlu0 %3204
        %3206 = vrot.lane.b32.xlu0 %v3194, 127
        %v3207 = vpop.permute.xlu0 %3206
        %3208 = vrot.lane.b32.xlu0 %v3199, 127
        %v3209 = vpop.permute.xlu0 %3208
        %v3210 = vsel %vm1988, %v3203, 0.0
        %v3211 = vsel %vm1988, %v3205, 0.0
        %v3212 = vsel %vm1988, %v3207, 0.0
        %v3213 = vsel %vm1988, %v3209, 0.0
        %v3214 = vadd.f32 %v3096, %v3210
        %v3215 = vadd.f32 %v3097, %v3211
        %v3216 = vadd.f32 %v3098, %v3212
        %v3217 = vadd.f32 %v3099, %v3213
        %s3218 = scalar_lea.vmem [#allocation10], 128
        %v3219 = vld [vmem:[%s3218] sm:$0xff]
        %v3220 = vld [vmem:[%s3218 + $0x8] sm:$0xff]
        %v3221 = vld [vmem:[%s3218 + $0x10] sm:$0xff]
        %v3222 = vld [vmem:[%s3218 + $0x18] sm:$0xff]
        %v3224 = vsel %vm1669, %v3219, 0
        %v3227 = vsel %vm1669, %v3220, 0
        %v3230 = vsel %vm1669, %v3221, 0
        %v3233 = vsel %vm1669, %v3222, 0
        %3235 = vmatprep.subr.mxu0 0.0
        %3236 = vmatpush1.msra.mxu0 %v1545
        %3237 = vmatprep.subr.mxu0 0.0
        %3238 = vmatpush1.msra.mxu0 %v1550
        %3239 = vmatprep.subr.mxu0 0.0
        %3240 = vmatpush1.msra.mxu0 %v1555
        %3241 = vmatprep.subr.mxu0 0.0
        %3242 = vmatpush1.msra.mxu0 %v1560
        %3243 = vmatprep.subr.mxu0 0.0
        %3244 = vmatpush1.msra.mxu0 0.0
        %3245 = vmatprep.subr.mxu0 0.0
        %3246 = vmatpush1.msra.mxu0 0.0
        %3247 = vmatprep.subr.mxu0 0.0
        %3248 = vmatpush1.msra.mxu0 0.0
        %3249 = vmatprep.subr.mxu0 0.0
        %3250 = vmatpush1.msra.mxu0 0.0
        %3251 = vmatprep.subr.mxu0 0.0
        %3252 = vmatpush1.msra.mxu0 0.0
        %3253 = vmatprep.subr.mxu0 0.0
        %3254 = vmatpush1.msra.mxu0 0.0
        %3255 = vmatprep.subr.mxu0 0.0
        %3256 = vmatpush1.msra.mxu0 0.0
        %3257 = vmatprep.subr.mxu0 0.0
        %3258 = vmatpush1.msra.mxu0 0.0
        %3259 = vmatprep.subr.mxu0 0.0
        %3260 = vmatpush1.msra.mxu0 0.0
        %3261 = vmatprep.subr.mxu0 0.0
        %3262 = vmatpush1.msra.mxu0 0.0
        %3263 = vmatprep.subr.mxu0 0.0
        %3264 = vmatpush1.msra.mxu0 0.0
        %3265 = vmatprep.subr.mxu0 0.0
        %3266 = vmatpush1.msra.mxu0 0.0
        %3267 = vmatprep.subr.mxu0 0.0
        %3268 = vmatpush1.msra.mxu0 0.0
        %3269 = vmatprep.subr.mxu0 0.0
        %3270 = vmatpush1.msra.mxu0 0.0
        %3271 = vmatprep.subr.mxu0 0.0
        %3272 = vmatpush1.msra.mxu0 0.0
        %3273 = vmatprep.subr.mxu0 0.0
        %3274 = vmatpush1.msra.mxu0 0.0
        %3275 = vmatprep.subr.mxu0 0.0
        %3276 = vmatpush1.msra.mxu0 0.0
        %3277 = vmatprep.subr.mxu0 0.0
        %3278 = vmatpush1.msra.mxu0 0.0
        %3279 = vmatprep.subr.mxu0 0.0
        %3280 = vmatpush1.msra.mxu0 0.0
        %3281 = vmatprep.subr.mxu0 0.0
        %3282 = vmatpush1.msra.mxu0 0.0
        %3283 = vmatprep.subr.mxu0 0.0
        %3284 = vmatpush1.msra.mxu0 0.0
        %3285 = vmatprep.subr.mxu0 0.0
        %3286 = vmatpush1.msra.mxu0 0.0
        %3287 = vmatprep.subr.mxu0 0.0
        %3288 = vmatpush1.msra.mxu0 0.0
        %3289 = vmatprep.subr.mxu0 0.0
        %3290 = vmatpush1.msra.mxu0 0.0
        %3291 = vmatprep.subr.mxu0 0.0
        %3292 = vmatpush1.msra.mxu0 0.0
        %3293 = vmatprep.subr.mxu0 0.0
        %3294 = vmatpush1.msra.mxu0 0.0
        %3295 = vmatprep.subr.mxu0 0.0
        %3296 = vmatpush1.msra.mxu0 0.0
        %3297 = vmatprep.subr.mxu0 0.0
        %3298 = vmatpush1.msra.mxu0 0.0
        %3299 = vmatprep.mubr.f32.mxu0 0.0
        %3300 = vmatmul.mubr.f32.gmra.mrb[0].mxu0 %v3224
        %v3301 = vpop.f32.mrb[0].mxu0
        %v3302 = vadd.f32 0.0, %v3301
        %v3303 = vpop.f32.mrb[0].mxu0
        %3304 = vmatprep.mubr.f32.mxu0 0.0
        %3305 = vmatmul.mubr.f32.gmra.mrb[0].mxu0 %v3227
        %v3306 = vpop.f32.mrb[0].mxu0
        %v3307 = vadd.f32 0.0, %v3306
        %v3308 = vpop.f32.mrb[0].mxu0
        %3309 = vmatprep.mubr.f32.mxu0 0.0
        %3310 = vmatmul.mubr.f32.gmra.mrb[0].mxu0 %v3230
        %v3311 = vpop.f32.mrb[0].mxu0
        %v3312 = vadd.f32 0.0, %v3311
        %v3313 = vpop.f32.mrb[0].mxu0
        %3314 = vmatprep.mubr.f32.mxu0 0.0
        %3315 = vmatmul.mubr.f32.gmra.mrb[0].mxu0 %v3233
        %v3316 = vpop.f32.mrb[0].mxu0
        %v3317 = vadd.f32 0.0, %v3316
        %v3318 = vpop.f32.mrb[0].mxu0
        %3319 = vdwg.mxu0
        %3320 = vrot.lane.b32.xlu0 %v3302, 126
        %v3321 = vpop.permute.xlu0 %3320
        %3322 = vrot.lane.b32.xlu0 %v3307, 126
        %v3323 = vpop.permute.xlu0 %3322
        %3324 = vrot.lane.b32.xlu0 %v3312, 126
        %v3325 = vpop.permute.xlu0 %3324
        %3326 = vrot.lane.b32.xlu0 %v3317, 126
        %v3327 = vpop.permute.xlu0 %3326
        %v3328 = vsel %vm2474, %v3321, 0.0
        %v3329 = vsel %vm2474, %v3323, 0.0
        %v3330 = vsel %vm2474, %v3325, 0.0
        %v3331 = vsel %vm2474, %v3327, 0.0
        %v3332 = vadd.f32 %v3214, %v3328
        %v3333 = vadd.f32 %v3215, %v3329
        %v3334 = vadd.f32 %v3216, %v3330
        %v3335 = vadd.f32 %v3217, %v3331
        %v3336 = vld [vmem:[%s19] sm:$0xff]
        %v3337 = vld [vmem:[%s19 + $0x8] sm:$0xff]
        %v3338 = vld [vmem:[%s19 + $0x10] sm:$0xff]
        %v3339 = vld [vmem:[%s19 + $0x18] sm:$0xff]
        %3341 = vset.pattern.permute.xlu0 0
        %3342 = vperm.xlu0 %3341, %v3336
        %v3343 = vpop.permute.xlu0 %3342
        %3346 = vset.pattern.permute.xlu0 0
        %3347 = vperm.xlu0 %3346, %v3337
        %v3348 = vpop.permute.xlu0 %3347
        %3351 = vset.pattern.permute.xlu0 0
        %3352 = vperm.xlu0 %3351, %v3338
        %v3353 = vpop.permute.xlu0 %3352
        %3356 = vset.pattern.permute.xlu0 0
        %3357 = vperm.xlu0 %3356, %v3339
        %v3358 = vpop.permute.xlu0 %3357
        %v3360 = vadd.f32 %v3332, %v3343
        %v3361 = vadd.f32 %v3333, %v3348
        %v3362 = vadd.f32 %v3334, %v3353
        %v3363 = vadd.f32 %v3335, %v3358
        %v3364 = vmul.f32 %v2745, %v3360
        %v3365 = vmul.f32 %v2750, %v3361
        %v3366 = vmul.f32 %v2755, %v3362
        %v3367 = vmul.f32 %v2760, %v3363
        %v3368 = vmul.f32 %v1605, %v3364
        %v3369 = vmul.f32 %v1610, %v3365
        %v3370 = vmul.f32 %v1615, %v3366
        %v3371 = vmul.f32 %v1620, %v3367
        %v3372 = vld [vmem:[%s25] sm:$0xff]
        %v3373 = vld [vmem:[%s25 + $0x8] sm:$0xff]
        %v3374 = vld [vmem:[%s25 + $0x10] sm:$0xff]
        %v3375 = vld [vmem:[%s25 + $0x18] sm:$0xff]
        %v3376 = vld [vmem:[%s25 + $0x20] sm:$0xff]
        %v3377 = vld [vmem:[%s25 + $0x28] sm:$0xff]
        %v3378 = vld [vmem:[%s25 + $0x30] sm:$0xff]
        %v3379 = vld [vmem:[%s25 + $0x38] sm:$0xff]
        %v3380 = vld [vmem:[%s25 + $0x40] sm:$0xff]
        %v3381 = vld [vmem:[%s25 + $0x48] sm:$0xff]
        %v3382 = vld [vmem:[%s25 + $0x50] sm:$0xff]
        %v3383 = vld [vmem:[%s25 + $0x58] sm:$0xff]
        %v3385 = vsel %vm1669, %v3372, 0
        %v3388 = vsel %vm1669, %v3373, 0
        %v3391 = vsel %vm1669, %v3374, 0
        %v3394 = vsel %vm1669, %v3375, 0
        %v3397 = vsel %vm1669, %v3376, 0
        %v3400 = vsel %vm1669, %v3377, 0
        %v3403 = vsel %vm1669, %v3378, 0
        %v3406 = vsel %vm1669, %v3379, 0
        %v3409 = vsel %vm1669, %v3380, 0
        %v3412 = vsel %vm1669, %v3381, 0
        %v3415 = vsel %vm1669, %v3382, 0
        %v3418 = vsel %vm1669, %v3383, 0
        %3420 = vmatprep.subr.mxu0 0.0
        %3421 = vmatpush1.msra.mxu0 %v3368
        %3422 = vmatprep.subr.mxu0 0.0
        %3423 = vmatpush1.msra.mxu0 %v3369
        %3424 = vmatprep.subr.mxu0 0.0
        %3425 = vmatpush1.msra.mxu0 %v3370
        %3426 = vmatprep.subr.mxu0 0.0
        %3427 = vmatpush1.msra.mxu0 %v3371
        %3428 = vmatprep.subr.mxu0 0.0
        %3429 = vmatpush1.msra.mxu0 0.0
        %3430 = vmatprep.subr.mxu0 0.0
        %3431 = vmatpush1.msra.mxu0 0.0
        %3432 = vmatprep.subr.mxu0 0.0
        %3433 = vmatpush1.msra.mxu0 0.0
        %3434 = vmatprep.subr.mxu0 0.0
        %3435 = vmatpush1.msra.mxu0 0.0
        %3436 = vmatprep.subr.mxu0 0.0
        %3437 = vmatpush1.msra.mxu0 0.0
        %3438 = vmatprep.subr.mxu0 0.0
        %3439 = vmatpush1.msra.mxu0 0.0
        %3440 = vmatprep.subr.mxu0 0.0
        %3441 = vmatpush1.msra.mxu0 0.0
        %3442 = vmatprep.subr.mxu0 0.0
        %3443 = vmatpush1.msra.mxu0 0.0
        %3444 = vmatprep.subr.mxu0 0.0
        %3445 = vmatpush1.msra.mxu0 0.0
        %3446 = vmatprep.subr.mxu0 0.0
        %3447 = vmatpush1.msra.mxu0 0.0
        %3448 = vmatprep.subr.mxu0 0.0
        %3449 = vmatpush1.msra.mxu0 0.0
        %3450 = vmatprep.subr.mxu0 0.0
        %3451 = vmatpush1.msra.mxu0 0.0
        %3452 = vmatprep.subr.mxu0 0.0
        %3453 = vmatpush1.msra.mxu0 0.0
        %3454 = vmatprep.subr.mxu0 0.0
        %3455 = vmatpush1.msra.mxu0 0.0
        %3456 = vmatprep.subr.mxu0 0.0
        %3457 = vmatpush1.msra.mxu0 0.0
        %3458 = vmatprep.subr.mxu0 0.0
        %3459 = vmatpush1.msra.mxu0 0.0
        %3460 = vmatprep.subr.mxu0 0.0
        %3461 = vmatpush1.msra.mxu0 0.0
        %3462 = vmatprep.subr.mxu0 0.0
        %3463 = vmatpush1.msra.mxu0 0.0
        %3464 = vmatprep.subr.mxu0 0.0
        %3465 = vmatpush1.msra.mxu0 0.0
        %3466 = vmatprep.subr.mxu0 0.0
        %3467 = vmatpush1.msra.mxu0 0.0
        %3468 = vmatprep.subr.mxu0 0.0
        %3469 = vmatpush1.msra.mxu0 0.0
        %3470 = vmatprep.subr.mxu0 0.0
        %3471 = vmatpush1.msra.mxu0 0.0
        %3472 = vmatprep.subr.mxu0 0.0
        %3473 = vmatpush1.msra.mxu0 0.0
        %3474 = vmatprep.subr.mxu0 0.0
        %3475 = vmatpush1.msra.mxu0 0.0
        %3476 = vmatprep.subr.mxu0 0.0
        %3477 = vmatpush1.msra.mxu0 0.0
        %3478 = vmatprep.subr.mxu0 0.0
        %3479 = vmatpush1.msra.mxu0 0.0
        %3480 = vmatprep.subr.mxu0 0.0
        %3481 = vmatpush1.msra.mxu0 0.0
        %3482 = vmatprep.subr.mxu0 0.0
        %3483 = vmatpush1.msra.mxu0 0.0
        %3484 = vmatprep.mubr.f32.mxu0 0.0
        %3485 = vmatmul.mubr.f32.gmra.mrb[0].mxu0 %v3385
        %v3486 = vpop.f32.mrb[0].mxu0
        %v3487 = vadd.f32 0.0, %v3486
        %v3488 = vpop.f32.mrb[0].mxu0
        %3489 = vmatprep.mubr.f32.mxu0 0.0
        %3490 = vmatmul.mubr.f32.gmra.mrb[0].mxu0 %v3388
        %v3491 = vpop.f32.mrb[0].mxu0
        %v3492 = vadd.f32 0.0, %v3491
        %v3493 = vpop.f32.mrb[0].mxu0
        %3494 = vmatprep.mubr.f32.mxu0 0.0
        %3495 = vmatmul.mubr.f32.gmra.mrb[0].mxu0 %v3391
        %v3496 = vpop.f32.mrb[0].mxu0
        %v3497 = vadd.f32 0.0, %v3496
        %v3498 = vpop.f32.mrb[0].mxu0
        %3499 = vmatprep.mubr.f32.mxu0 0.0
        %3500 = vmatmul.mubr.f32.gmra.mrb[0].mxu0 %v3394
        %v3501 = vpop.f32.mrb[0].mxu0
        %v3502 = vadd.f32 0.0, %v3501
        %v3503 = vpop.f32.mrb[0].mxu0
        %3504 = vmatprep.mubr.f32.mxu0 0.0
        %3505 = vmatmul.mubr.f32.gmra.mrb[0].mxu0 %v3397
        %v3506 = vpop.f32.mrb[0].mxu0
        %v3507 = vadd.f32 0.0, %v3506
        %v3508 = vpop.f32.mrb[0].mxu0
        %3509 = vmatprep.mubr.f32.mxu0 0.0
        %3510 = vmatmul.mubr.f32.gmra.mrb[0].mxu0 %v3400
        %v3511 = vpop.f32.mrb[0].mxu0
        %v3512 = vadd.f32 0.0, %v3511
        %v3513 = vpop.f32.mrb[0].mxu0
        %3514 = vmatprep.mubr.f32.mxu0 0.0
        %3515 = vmatmul.mubr.f32.gmra.mrb[0].mxu0 %v3403
        %v3516 = vpop.f32.mrb[0].mxu0
        %v3517 = vadd.f32 0.0, %v3516
        %v3518 = vpop.f32.mrb[0].mxu0
        %3519 = vmatprep.mubr.f32.mxu0 0.0
        %3520 = vmatmul.mubr.f32.gmra.mrb[0].mxu0 %v3406
        %v3521 = vpop.f32.mrb[0].mxu0
        %v3522 = vadd.f32 0.0, %v3521
        %v3523 = vpop.f32.mrb[0].mxu0
        %3524 = vmatprep.mubr.f32.mxu0 0.0
        %3525 = vmatmul.mubr.f32.gmra.mrb[0].mxu0 %v3409
        %v3526 = vpop.f32.mrb[0].mxu0
        %v3527 = vadd.f32 0.0, %v3526
        %v3528 = vpop.f32.mrb[0].mxu0
        %3529 = vmatprep.mubr.f32.mxu0 0.0
        %3530 = vmatmul.mubr.f32.gmra.mrb[0].mxu0 %v3412
        %v3531 = vpop.f32.mrb[0].mxu0
        %v3532 = vadd.f32 0.0, %v3531
        %v3533 = vpop.f32.mrb[0].mxu0
        %3534 = vmatprep.mubr.f32.mxu0 0.0
        %3535 = vmatmul.mubr.f32.gmra.mrb[0].mxu0 %v3415
        %v3536 = vpop.f32.mrb[0].mxu0
        %v3537 = vadd.f32 0.0, %v3536
        %v3538 = vpop.f32.mrb[0].mxu0
        %3539 = vmatprep.mubr.f32.mxu0 0.0
        %3540 = vmatmul.mubr.f32.gmra.mrb[0].mxu0 %v3418
        %v3541 = vpop.f32.mrb[0].mxu0
        %v3542 = vadd.f32 0.0, %v3541
        %v3543 = vpop.f32.mrb[0].mxu0
        %3544 = vdwg.mxu0
        %v3545 = vadd.f32 %v1093, %v3487
        %v3546 = vadd.f32 %v1094, %v3492
        %v3547 = vadd.f32 %v1095, %v3497
        %v3548 = vadd.f32 %v1096, %v3502
        %v3549 = vadd.f32 %v1097, %v3507
        %v3550 = vadd.f32 %v1098, %v3512
        %v3551 = vadd.f32 %v1099, %v3517
        %v3552 = vadd.f32 %v1100, %v3522
        %v3553 = vadd.f32 %v1101, %v3527
        %v3554 = vadd.f32 %v1102, %v3532
        %v3555 = vadd.f32 %v1103, %v3537
        %v3556 = vadd.f32 %v1104, %v3542
        %v3557 = vld [vmem:[#allocation13] sm:$0xff]
        %v3558 = vld [vmem:[#allocation13 + $0x8] sm:$0xff]
        %v3559 = vld [vmem:[#allocation13 + $0x10] sm:$0xff]
        %v3560 = vld [vmem:[#allocation13 + $0x18] sm:$0xff]
        %v3562 = vsel %vm1669, %v3557, 0
        %v3565 = vsel %vm1669, %v3558, 0
        %v3568 = vsel %vm1669, %v3559, 0
        %v3571 = vsel %vm1669, %v3560, 0
        %3573 = vmatprep.subr.mxu0 0.0
        %3574 = vmatpush1.msra.mxu0 %v1565
        %3575 = vmatprep.subr.mxu0 0.0
        %3576 = vmatpush1.msra.mxu0 %v1570
        %3577 = vmatprep.subr.mxu0 0.0
        %3578 = vmatpush1.msra.mxu0 %v1575
        %3579 = vmatprep.subr.mxu0 0.0
        %3580 = vmatpush1.msra.mxu0 %v1580
        %3581 = vmatprep.subr.mxu0 0.0
        %3582 = vmatpush1.msra.mxu0 0.0
        %3583 = vmatprep.subr.mxu0 0.0
        %3584 = vmatpush1.msra.mxu0 0.0
        %3585 = vmatprep.subr.mxu0 0.0
        %3586 = vmatpush1.msra.mxu0 0.0
        %3587 = vmatprep.subr.mxu0 0.0
        %3588 = vmatpush1.msra.mxu0 0.0
        %3589 = vmatprep.subr.mxu0 0.0
        %3590 = vmatpush1.msra.mxu0 0.0
        %3591 = vmatprep.subr.mxu0 0.0
        %3592 = vmatpush1.msra.mxu0 0.0
        %3593 = vmatprep.subr.mxu0 0.0
        %3594 = vmatpush1.msra.mxu0 0.0
        %3595 = vmatprep.subr.mxu0 0.0
        %3596 = vmatpush1.msra.mxu0 0.0
        %3597 = vmatprep.subr.mxu0 0.0
        %3598 = vmatpush1.msra.mxu0 0.0
        %3599 = vmatprep.subr.mxu0 0.0
        %3600 = vmatpush1.msra.mxu0 0.0
        %3601 = vmatprep.subr.mxu0 0.0
        %3602 = vmatpush1.msra.mxu0 0.0
        %3603 = vmatprep.subr.mxu0 0.0
        %3604 = vmatpush1.msra.mxu0 0.0
        %3605 = vmatprep.subr.mxu0 0.0
        %3606 = vmatpush1.msra.mxu0 0.0
        %3607 = vmatprep.subr.mxu0 0.0
        %3608 = vmatpush1.msra.mxu0 0.0
        %3609 = vmatprep.subr.mxu0 0.0
        %3610 = vmatpush1.msra.mxu0 0.0
        %3611 = vmatprep.subr.mxu0 0.0
        %3612 = vmatpush1.msra.mxu0 0.0
        %3613 = vmatprep.subr.mxu0 0.0
        %3614 = vmatpush1.msra.mxu0 0.0
        %3615 = vmatprep.subr.mxu0 0.0
        %3616 = vmatpush1.msra.mxu0 0.0
        %3617 = vmatprep.subr.mxu0 0.0
        %3618 = vmatpush1.msra.mxu0 0.0
        %3619 = vmatprep.subr.mxu0 0.0
        %3620 = vmatpush1.msra.mxu0 0.0
        %3621 = vmatprep.subr.mxu0 0.0
        %3622 = vmatpush1.msra.mxu0 0.0
        %3623 = vmatprep.subr.mxu0 0.0
        %3624 = vmatpush1.msra.mxu0 0.0
        %3625 = vmatprep.subr.mxu0 0.0
        %3626 = vmatpush1.msra.mxu0 0.0
        %3627 = vmatprep.subr.mxu0 0.0
        %3628 = vmatpush1.msra.mxu0 0.0
        %3629 = vmatprep.subr.mxu0 0.0
        %3630 = vmatpush1.msra.mxu0 0.0
        %3631 = vmatprep.subr.mxu0 0.0
        %3632 = vmatpush1.msra.mxu0 0.0
        %3633 = vmatprep.subr.mxu0 0.0
        %3634 = vmatpush1.msra.mxu0 0.0
        %3635 = vmatprep.subr.mxu0 0.0
        %3636 = vmatpush1.msra.mxu0 0.0
        %3637 = vmatprep.mubr.f32.mxu0 0.0
        %3638 = vmatmul.mubr.f32.gmra.mrb[0].mxu0 %v3562
        %v3639 = vpop.f32.mrb[0].mxu0
        %v3640 = vadd.f32 0.0, %v3639
        %v3641 = vpop.f32.mrb[0].mxu0
        %3642 = vmatprep.mubr.f32.mxu0 0.0
        %3643 = vmatmul.mubr.f32.gmra.mrb[0].mxu0 %v3565
        %v3644 = vpop.f32.mrb[0].mxu0
        %v3645 = vadd.f32 0.0, %v3644
        %v3646 = vpop.f32.mrb[0].mxu0
        %3647 = vmatprep.mubr.f32.mxu0 0.0
        %3648 = vmatmul.mubr.f32.gmra.mrb[0].mxu0 %v3568
        %v3649 = vpop.f32.mrb[0].mxu0
        %v3650 = vadd.f32 0.0, %v3649
        %v3651 = vpop.f32.mrb[0].mxu0
        %3652 = vmatprep.mubr.f32.mxu0 0.0
        %3653 = vmatmul.mubr.f32.gmra.mrb[0].mxu0 %v3571
        %v3654 = vpop.f32.mrb[0].mxu0
        %v3655 = vadd.f32 0.0, %v3654
        %v3656 = vpop.f32.mrb[0].mxu0
        %3657 = vdwg.mxu0
        %3658 = vrot.lane.b32.xlu0 %v3640, 2
        %v3659 = vpop.permute.xlu0 %3658
        %3660 = vrot.lane.b32.xlu0 %v3645, 2
        %v3661 = vpop.permute.xlu0 %3660
        %3662 = vrot.lane.b32.xlu0 %v3650, 2
        %v3663 = vpop.permute.xlu0 %3662
        %3664 = vrot.lane.b32.xlu0 %v3655, 2
        %v3665 = vpop.permute.xlu0 %3664
        %v3666 = vsel %vm2249, %v3659, 0.0
        %v3667 = vsel %vm2249, %v3661, 0.0
        %v3668 = vsel %vm2249, %v3663, 0.0
        %v3669 = vsel %vm2249, %v3665, 0.0
        %s3670 = scalar_lea.vmem [#allocation13], 32
        %v3671 = vld [vmem:[%s3670] sm:$0xff]
        %v3672 = vld [vmem:[%s3670 + $0x8] sm:$0xff]
        %v3673 = vld [vmem:[%s3670 + $0x10] sm:$0xff]
        %v3674 = vld [vmem:[%s3670 + $0x18] sm:$0xff]
        %v3676 = vsel %vm1669, %v3671, 0
        %v3679 = vsel %vm1669, %v3672, 0
        %v3682 = vsel %vm1669, %v3673, 0
        %v3685 = vsel %vm1669, %v3674, 0
        %3687 = vmatprep.subr.mxu0 0.0
        %3688 = vmatpush1.msra.mxu0 %v1565
        %3689 = vmatprep.subr.mxu0 0.0
        %3690 = vmatpush1.msra.mxu0 %v1570
        %3691 = vmatprep.subr.mxu0 0.0
        %3692 = vmatpush1.msra.mxu0 %v1575
        %3693 = vmatprep.subr.mxu0 0.0
        %3694 = vmatpush1.msra.mxu0 %v1580
        %3695 = vmatprep.subr.mxu0 0.0
        %3696 = vmatpush1.msra.mxu0 0.0
        %3697 = vmatprep.subr.mxu0 0.0
        %3698 = vmatpush1.msra.mxu0 0.0
        %3699 = vmatprep.subr.mxu0 0.0
        %3700 = vmatpush1.msra.mxu0 0.0
        %3701 = vmatprep.subr.mxu0 0.0
        %3702 = vmatpush1.msra.mxu0 0.0
        %3703 = vmatprep.subr.mxu0 0.0
        %3704 = vmatpush1.msra.mxu0 0.0
        %3705 = vmatprep.subr.mxu0 0.0
        %3706 = vmatpush1.msra.mxu0 0.0
        %3707 = vmatprep.subr.mxu0 0.0
        %3708 = vmatpush1.msra.mxu0 0.0
        %3709 = vmatprep.subr.mxu0 0.0
        %3710 = vmatpush1.msra.mxu0 0.0
        %3711 = vmatprep.subr.mxu0 0.0
        %3712 = vmatpush1.msra.mxu0 0.0
        %3713 = vmatprep.subr.mxu0 0.0
        %3714 = vmatpush1.msra.mxu0 0.0
        %3715 = vmatprep.subr.mxu0 0.0
        %3716 = vmatpush1.msra.mxu0 0.0
        %3717 = vmatprep.subr.mxu0 0.0
        %3718 = vmatpush1.msra.mxu0 0.0
        %3719 = vmatprep.subr.mxu0 0.0
        %3720 = vmatpush1.msra.mxu0 0.0
        %3721 = vmatprep.subr.mxu0 0.0
        %3722 = vmatpush1.msra.mxu0 0.0
        %3723 = vmatprep.subr.mxu0 0.0
        %3724 = vmatpush1.msra.mxu0 0.0
        %3725 = vmatprep.subr.mxu0 0.0
        %3726 = vmatpush1.msra.mxu0 0.0
        %3727 = vmatprep.subr.mxu0 0.0
        %3728 = vmatpush1.msra.mxu0 0.0
        %3729 = vmatprep.subr.mxu0 0.0
        %3730 = vmatpush1.msra.mxu0 0.0
        %3731 = vmatprep.subr.mxu0 0.0
        %3732 = vmatpush1.msra.mxu0 0.0
        %3733 = vmatprep.subr.mxu0 0.0
        %3734 = vmatpush1.msra.mxu0 0.0
        %3735 = vmatprep.subr.mxu0 0.0
        %3736 = vmatpush1.msra.mxu0 0.0
        %3737 = vmatprep.subr.mxu0 0.0
        %3738 = vmatpush1.msra.mxu0 0.0
        %3739 = vmatprep.subr.mxu0 0.0
        %3740 = vmatpush1.msra.mxu0 0.0
        %3741 = vmatprep.subr.mxu0 0.0
        %3742 = vmatpush1.msra.mxu0 0.0
        %3743 = vmatprep.subr.mxu0 0.0
        %3744 = vmatpush1.msra.mxu0 0.0
        %3745 = vmatprep.subr.mxu0 0.0
        %3746 = vmatpush1.msra.mxu0 0.0
        %3747 = vmatprep.subr.mxu0 0.0
        %3748 = vmatpush1.msra.mxu0 0.0
        %3749 = vmatprep.subr.mxu0 0.0
        %3750 = vmatpush1.msra.mxu0 0.0
        %3751 = vmatprep.mubr.f32.mxu0 0.0
        %3752 = vmatmul.mubr.f32.gmra.mrb[0].mxu0 %v3676
        %v3753 = vpop.f32.mrb[0].mxu0
        %v3754 = vadd.f32 0.0, %v3753
        %v3755 = vpop.f32.mrb[0].mxu0
        %3756 = vmatprep.mubr.f32.mxu0 0.0
        %3757 = vmatmul.mubr.f32.gmra.mrb[0].mxu0 %v3679
        %v3758 = vpop.f32.mrb[0].mxu0
        %v3759 = vadd.f32 0.0, %v3758
        %v3760 = vpop.f32.mrb[0].mxu0
        %3761 = vmatprep.mubr.f32.mxu0 0.0
        %3762 = vmatmul.mubr.f32.gmra.mrb[0].mxu0 %v3682
        %v3763 = vpop.f32.mrb[0].mxu0
        %v3764 = vadd.f32 0.0, %v3763
        %v3765 = vpop.f32.mrb[0].mxu0
        %3766 = vmatprep.mubr.f32.mxu0 0.0
        %3767 = vmatmul.mubr.f32.gmra.mrb[0].mxu0 %v3685
        %v3768 = vpop.f32.mrb[0].mxu0
        %v3769 = vadd.f32 0.0, %v3768
        %v3770 = vpop.f32.mrb[0].mxu0
        %3771 = vdwg.mxu0
        %3772 = vrot.lane.b32.xlu0 %v3754, 1
        %v3773 = vpop.permute.xlu0 %3772
        %3774 = vrot.lane.b32.xlu0 %v3759, 1
        %v3775 = vpop.permute.xlu0 %3774
        %3776 = vrot.lane.b32.xlu0 %v3764, 1
        %v3777 = vpop.permute.xlu0 %3776
        %3778 = vrot.lane.b32.xlu0 %v3769, 1
        %v3779 = vpop.permute.xlu0 %3778
        %v3780 = vsel %vm1767, %v3773, 0.0
        %v3781 = vsel %vm1767, %v3775, 0.0
        %v3782 = vsel %vm1767, %v3777, 0.0
        %v3783 = vsel %vm1767, %v3779, 0.0
        %v3784 = vadd.f32 %v3666, %v3780
        %v3785 = vadd.f32 %v3667, %v3781
        %v3786 = vadd.f32 %v3668, %v3782
        %v3787 = vadd.f32 %v3669, %v3783
        %s3788 = scalar_lea.vmem [#allocation13], 64
        %v3789 = vld [vmem:[%s3788] sm:$0xff]
        %v3790 = vld [vmem:[%s3788 + $0x8] sm:$0xff]
        %v3791 = vld [vmem:[%s3788 + $0x10] sm:$0xff]
        %v3792 = vld [vmem:[%s3788 + $0x18] sm:$0xff]
        %v3794 = vsel %vm1669, %v3789, 0
        %v3797 = vsel %vm1669, %v3790, 0
        %v3800 = vsel %vm1669, %v3791, 0
        %v3803 = vsel %vm1669, %v3792, 0
        %3805 = vmatprep.subr.mxu0 0.0
        %3806 = vmatpush1.msra.mxu0 %v1565
        %3807 = vmatprep.subr.mxu0 0.0
        %3808 = vmatpush1.msra.mxu0 %v1570
        %3809 = vmatprep.subr.mxu0 0.0
        %3810 = vmatpush1.msra.mxu0 %v1575
        %3811 = vmatprep.subr.mxu0 0.0
        %3812 = vmatpush1.msra.mxu0 %v1580
        %3813 = vmatprep.subr.mxu0 0.0
        %3814 = vmatpush1.msra.mxu0 0.0
        %3815 = vmatprep.subr.mxu0 0.0
        %3816 = vmatpush1.msra.mxu0 0.0
        %3817 = vmatprep.subr.mxu0 0.0
        %3818 = vmatpush1.msra.mxu0 0.0
        %3819 = vmatprep.subr.mxu0 0.0
        %3820 = vmatpush1.msra.mxu0 0.0
        %3821 = vmatprep.subr.mxu0 0.0
        %3822 = vmatpush1.msra.mxu0 0.0
        %3823 = vmatprep.subr.mxu0 0.0
        %3824 = vmatpush1.msra.mxu0 0.0
        %3825 = vmatprep.subr.mxu0 0.0
        %3826 = vmatpush1.msra.mxu0 0.0
        %3827 = vmatprep.subr.mxu0 0.0
        %3828 = vmatpush1.msra.mxu0 0.0
        %3829 = vmatprep.subr.mxu0 0.0
        %3830 = vmatpush1.msra.mxu0 0.0
        %3831 = vmatprep.subr.mxu0 0.0
        %3832 = vmatpush1.msra.mxu0 0.0
        %3833 = vmatprep.subr.mxu0 0.0
        %3834 = vmatpush1.msra.mxu0 0.0
        %3835 = vmatprep.subr.mxu0 0.0
        %3836 = vmatpush1.msra.mxu0 0.0
        %3837 = vmatprep.subr.mxu0 0.0
        %3838 = vmatpush1.msra.mxu0 0.0
        %3839 = vmatprep.subr.mxu0 0.0
        %3840 = vmatpush1.msra.mxu0 0.0
        %3841 = vmatprep.subr.mxu0 0.0
        %3842 = vmatpush1.msra.mxu0 0.0
        %3843 = vmatprep.subr.mxu0 0.0
        %3844 = vmatpush1.msra.mxu0 0.0
        %3845 = vmatprep.subr.mxu0 0.0
        %3846 = vmatpush1.msra.mxu0 0.0
        %3847 = vmatprep.subr.mxu0 0.0
        %3848 = vmatpush1.msra.mxu0 0.0
        %3849 = vmatprep.subr.mxu0 0.0
        %3850 = vmatpush1.msra.mxu0 0.0
        %3851 = vmatprep.subr.mxu0 0.0
        %3852 = vmatpush1.msra.mxu0 0.0
        %3853 = vmatprep.subr.mxu0 0.0
        %3854 = vmatpush1.msra.mxu0 0.0
        %3855 = vmatprep.subr.mxu0 0.0
        %3856 = vmatpush1.msra.mxu0 0.0
        %3857 = vmatprep.subr.mxu0 0.0
        %3858 = vmatpush1.msra.mxu0 0.0
        %3859 = vmatprep.subr.mxu0 0.0
        %3860 = vmatpush1.msra.mxu0 0.0
        %3861 = vmatprep.subr.mxu0 0.0
        %3862 = vmatpush1.msra.mxu0 0.0
        %3863 = vmatprep.subr.mxu0 0.0
        %3864 = vmatpush1.msra.mxu0 0.0
        %3865 = vmatprep.subr.mxu0 0.0
        %3866 = vmatpush1.msra.mxu0 0.0
        %3867 = vmatprep.subr.mxu0 0.0
        %3868 = vmatpush1.msra.mxu0 0.0
        %3869 = vmatprep.mubr.f32.mxu0 0.0
        %3870 = vmatmul.mubr.f32.gmra.mrb[0].mxu0 %v3794
        %v3871 = vpop.f32.mrb[0].mxu0
        %v3872 = vadd.f32 0.0, %v3871
        %v3873 = vpop.f32.mrb[0].mxu0
        %3874 = vmatprep.mubr.f32.mxu0 0.0
        %3875 = vmatmul.mubr.f32.gmra.mrb[0].mxu0 %v3797
        %v3876 = vpop.f32.mrb[0].mxu0
        %v3877 = vadd.f32 0.0, %v3876
        %v3878 = vpop.f32.mrb[0].mxu0
        %3879 = vmatprep.mubr.f32.mxu0 0.0
        %3880 = vmatmul.mubr.f32.gmra.mrb[0].mxu0 %v3800
        %v3881 = vpop.f32.mrb[0].mxu0
        %v3882 = vadd.f32 0.0, %v3881
        %v3883 = vpop.f32.mrb[0].mxu0
        %3884 = vmatprep.mubr.f32.mxu0 0.0
        %3885 = vmatmul.mubr.f32.gmra.mrb[0].mxu0 %v3803
        %v3886 = vpop.f32.mrb[0].mxu0
        %v3887 = vadd.f32 0.0, %v3886
        %v3888 = vpop.f32.mrb[0].mxu0
        %3889 = vdwg.mxu0
        %v3890 = vadd.f32 %v3784, %v3872
        %v3891 = vadd.f32 %v3785, %v3877
        %v3892 = vadd.f32 %v3786, %v3882
        %v3893 = vadd.f32 %v3787, %v3887
        %s3894 = scalar_lea.vmem [#allocation13], 96
        %v3895 = vld [vmem:[%s3894] sm:$0xff]
        %v3896 = vld [vmem:[%s3894 + $0x8] sm:$0xff]
        %v3897 = vld [vmem:[%s3894 + $0x10] sm:$0xff]
        %v3898 = vld [vmem:[%s3894 + $0x18] sm:$0xff]
        %v3900 = vsel %vm1669, %v3895, 0
        %v3903 = vsel %vm1669, %v3896, 0
        %v3906 = vsel %vm1669, %v3897, 0
        %v3909 = vsel %vm1669, %v3898, 0
        %3911 = vmatprep.subr.mxu0 0.0
        %3912 = vmatpush1.msra.mxu0 %v1565
        %3913 = vmatprep.subr.mxu0 0.0
        %3914 = vmatpush1.msra.mxu0 %v1570
        %3915 = vmatprep.subr.mxu0 0.0
        %3916 = vmatpush1.msra.mxu0 %v1575
        %3917 = vmatprep.subr.mxu0 0.0
        %3918 = vmatpush1.msra.mxu0 %v1580
        %3919 = vmatprep.subr.mxu0 0.0
        %3920 = vmatpush1.msra.mxu0 0.0
        %3921 = vmatprep.subr.mxu0 0.0
        %3922 = vmatpush1.msra.mxu0 0.0
        %3923 = vmatprep.subr.mxu0 0.0
        %3924 = vmatpush1.msra.mxu0 0.0
        %3925 = vmatprep.subr.mxu0 0.0
        %3926 = vmatpush1.msra.mxu0 0.0
        %3927 = vmatprep.subr.mxu0 0.0
        %3928 = vmatpush1.msra.mxu0 0.0
        %3929 = vmatprep.subr.mxu0 0.0
        %3930 = vmatpush1.msra.mxu0 0.0
        %3931 = vmatprep.subr.mxu0 0.0
        %3932 = vmatpush1.msra.mxu0 0.0
        %3933 = vmatprep.subr.mxu0 0.0
        %3934 = vmatpush1.msra.mxu0 0.0
        %3935 = vmatprep.subr.mxu0 0.0
        %3936 = vmatpush1.msra.mxu0 0.0
        %3937 = vmatprep.subr.mxu0 0.0
        %3938 = vmatpush1.msra.mxu0 0.0
        %3939 = vmatprep.subr.mxu0 0.0
        %3940 = vmatpush1.msra.mxu0 0.0
        %3941 = vmatprep.subr.mxu0 0.0
        %3942 = vmatpush1.msra.mxu0 0.0
        %3943 = vmatprep.subr.mxu0 0.0
        %3944 = vmatpush1.msra.mxu0 0.0
        %3945 = vmatprep.subr.mxu0 0.0
        %3946 = vmatpush1.msra.mxu0 0.0
        %3947 = vmatprep.subr.mxu0 0.0
        %3948 = vmatpush1.msra.mxu0 0.0
        %3949 = vmatprep.subr.mxu0 0.0
        %3950 = vmatpush1.msra.mxu0 0.0
        %3951 = vmatprep.subr.mxu0 0.0
        %3952 = vmatpush1.msra.mxu0 0.0
        %3953 = vmatprep.subr.mxu0 0.0
        %3954 = vmatpush1.msra.mxu0 0.0
        %3955 = vmatprep.subr.mxu0 0.0
        %3956 = vmatpush1.msra.mxu0 0.0
        %3957 = vmatprep.subr.mxu0 0.0
        %3958 = vmatpush1.msra.mxu0 0.0
        %3959 = vmatprep.subr.mxu0 0.0
        %3960 = vmatpush1.msra.mxu0 0.0
        %3961 = vmatprep.subr.mxu0 0.0
        %3962 = vmatpush1.msra.mxu0 0.0
        %3963 = vmatprep.subr.mxu0 0.0
        %3964 = vmatpush1.msra.mxu0 0.0
        %3965 = vmatprep.subr.mxu0 0.0
        %3966 = vmatpush1.msra.mxu0 0.0
        %3967 = vmatprep.subr.mxu0 0.0
        %3968 = vmatpush1.msra.mxu0 0.0
        %3969 = vmatprep.subr.mxu0 0.0
        %3970 = vmatpush1.msra.mxu0 0.0
        %3971 = vmatprep.subr.mxu0 0.0
        %3972 = vmatpush1.msra.mxu0 0.0
        %3973 = vmatprep.subr.mxu0 0.0
        %3974 = vmatpush1.msra.mxu0 0.0
        %3975 = vmatprep.mubr.f32.mxu0 0.0
        %3976 = vmatmul.mubr.f32.gmra.mrb[0].mxu0 %v3900
        %v3977 = vpop.f32.mrb[0].mxu0
        %v3978 = vadd.f32 0.0, %v3977
        %v3979 = vpop.f32.mrb[0].mxu0
        %3980 = vmatprep.mubr.f32.mxu0 0.0
        %3981 = vmatmul.mubr.f32.gmra.mrb[0].mxu0 %v3903
        %v3982 = vpop.f32.mrb[0].mxu0
        %v3983 = vadd.f32 0.0, %v3982
        %v3984 = vpop.f32.mrb[0].mxu0
        %3985 = vmatprep.mubr.f32.mxu0 0.0
        %3986 = vmatmul.mubr.f32.gmra.mrb[0].mxu0 %v3906
        %v3987 = vpop.f32.mrb[0].mxu0
        %v3988 = vadd.f32 0.0, %v3987
        %v3989 = vpop.f32.mrb[0].mxu0
        %3990 = vmatprep.mubr.f32.mxu0 0.0
        %3991 = vmatmul.mubr.f32.gmra.mrb[0].mxu0 %v3909
        %v3992 = vpop.f32.mrb[0].mxu0
        %v3993 = vadd.f32 0.0, %v3992
        %v3994 = vpop.f32.mrb[0].mxu0
        %3995 = vdwg.mxu0
        %3996 = vrot.lane.b32.xlu0 %v3978, 127
        %v3997 = vpop.permute.xlu0 %3996
        %3998 = vrot.lane.b32.xlu0 %v3983, 127
        %v3999 = vpop.permute.xlu0 %3998
        %4000 = vrot.lane.b32.xlu0 %v3988, 127
        %v4001 = vpop.permute.xlu0 %4000
        %4002 = vrot.lane.b32.xlu0 %v3993, 127
        %v4003 = vpop.permute.xlu0 %4002
        %v4004 = vsel %vm1988, %v3997, 0.0
        %v4005 = vsel %vm1988, %v3999, 0.0
        %v4006 = vsel %vm1988, %v4001, 0.0
        %v4007 = vsel %vm1988, %v4003, 0.0
        %v4008 = vadd.f32 %v3890, %v4004
        %v4009 = vadd.f32 %v3891, %v4005
        %v4010 = vadd.f32 %v3892, %v4006
        %v4011 = vadd.f32 %v3893, %v4007
        %s4012 = scalar_lea.vmem [#allocation13], 128
        %v4013 = vld [vmem:[%s4012] sm:$0xff]
        %v4014 = vld [vmem:[%s4012 + $0x8] sm:$0xff]
        %v4015 = vld [vmem:[%s4012 + $0x10] sm:$0xff]
        %v4016 = vld [vmem:[%s4012 + $0x18] sm:$0xff]
        %v4018 = vsel %vm1669, %v4013, 0
        %v4021 = vsel %vm1669, %v4014, 0
        %v4024 = vsel %vm1669, %v4015, 0
        %v4027 = vsel %vm1669, %v4016, 0
        %4029 = vmatprep.subr.mxu0 0.0
        %4030 = vmatpush1.msra.mxu0 %v1565
        %4031 = vmatprep.subr.mxu0 0.0
        %4032 = vmatpush1.msra.mxu0 %v1570
        %4033 = vmatprep.subr.mxu0 0.0
        %4034 = vmatpush1.msra.mxu0 %v1575
        %4035 = vmatprep.subr.mxu0 0.0
        %4036 = vmatpush1.msra.mxu0 %v1580
        %4037 = vmatprep.subr.mxu0 0.0
        %4038 = vmatpush1.msra.mxu0 0.0
        %4039 = vmatprep.subr.mxu0 0.0
        %4040 = vmatpush1.msra.mxu0 0.0
        %4041 = vmatprep.subr.mxu0 0.0
        %4042 = vmatpush1.msra.mxu0 0.0
        %4043 = vmatprep.subr.mxu0 0.0
        %4044 = vmatpush1.msra.mxu0 0.0
        %4045 = vmatprep.subr.mxu0 0.0
        %4046 = vmatpush1.msra.mxu0 0.0
        %4047 = vmatprep.subr.mxu0 0.0
        %4048 = vmatpush1.msra.mxu0 0.0
        %4049 = vmatprep.subr.mxu0 0.0
        %4050 = vmatpush1.msra.mxu0 0.0
        %4051 = vmatprep.subr.mxu0 0.0
        %4052 = vmatpush1.msra.mxu0 0.0
        %4053 = vmatprep.subr.mxu0 0.0
        %4054 = vmatpush1.msra.mxu0 0.0
        %4055 = vmatprep.subr.mxu0 0.0
        %4056 = vmatpush1.msra.mxu0 0.0
        %4057 = vmatprep.subr.mxu0 0.0
        %4058 = vmatpush1.msra.mxu0 0.0
        %4059 = vmatprep.subr.mxu0 0.0
        %4060 = vmatpush1.msra.mxu0 0.0
        %4061 = vmatprep.subr.mxu0 0.0
        %4062 = vmatpush1.msra.mxu0 0.0
        %4063 = vmatprep.subr.mxu0 0.0
        %4064 = vmatpush1.msra.mxu0 0.0
        %4065 = vmatprep.subr.mxu0 0.0
        %4066 = vmatpush1.msra.mxu0 0.0
        %4067 = vmatprep.subr.mxu0 0.0
        %4068 = vmatpush1.msra.mxu0 0.0
        %4069 = vmatprep.subr.mxu0 0.0
        %4070 = vmatpush1.msra.mxu0 0.0
        %4071 = vmatprep.subr.mxu0 0.0
        %4072 = vmatpush1.msra.mxu0 0.0
        %4073 = vmatprep.subr.mxu0 0.0
        %4074 = vmatpush1.msra.mxu0 0.0
        %4075 = vmatprep.subr.mxu0 0.0
        %4076 = vmatpush1.msra.mxu0 0.0
        %4077 = vmatprep.subr.mxu0 0.0
        %4078 = vmatpush1.msra.mxu0 0.0
        %4079 = vmatprep.subr.mxu0 0.0
        %4080 = vmatpush1.msra.mxu0 0.0
        %4081 = vmatprep.subr.mxu0 0.0
        %4082 = vmatpush1.msra.mxu0 0.0
        %4083 = vmatprep.subr.mxu0 0.0
        %4084 = vmatpush1.msra.mxu0 0.0
        %4085 = vmatprep.subr.mxu0 0.0
        %4086 = vmatpush1.msra.mxu0 0.0
        %4087 = vmatprep.subr.mxu0 0.0
        %4088 = vmatpush1.msra.mxu0 0.0
        %4089 = vmatprep.subr.mxu0 0.0
        %4090 = vmatpush1.msra.mxu0 0.0
        %4091 = vmatprep.subr.mxu0 0.0
        %4092 = vmatpush1.msra.mxu0 0.0
        %4093 = vmatprep.mubr.f32.mxu0 0.0
        %4094 = vmatmul.mubr.f32.gmra.mrb[0].mxu0 %v4018
        %v4095 = vpop.f32.mrb[0].mxu0
        %v4096 = vadd.f32 0.0, %v4095
        %v4097 = vpop.f32.mrb[0].mxu0
        %4098 = vmatprep.mubr.f32.mxu0 0.0
        %4099 = vmatmul.mubr.f32.gmra.mrb[0].mxu0 %v4021
        %v4100 = vpop.f32.mrb[0].mxu0
        %v4101 = vadd.f32 0.0, %v4100
        %v4102 = vpop.f32.mrb[0].mxu0
        %4103 = vmatprep.mubr.f32.mxu0 0.0
        %4104 = vmatmul.mubr.f32.gmra.mrb[0].mxu0 %v4024
        %v4105 = vpop.f32.mrb[0].mxu0
        %v4106 = vadd.f32 0.0, %v4105
        %v4107 = vpop.f32.mrb[0].mxu0
        %4108 = vmatprep.mubr.f32.mxu0 0.0
        %4109 = vmatmul.mubr.f32.gmra.mrb[0].mxu0 %v4027
        %v4110 = vpop.f32.mrb[0].mxu0
        %v4111 = vadd.f32 0.0, %v4110
        %v4112 = vpop.f32.mrb[0].mxu0
        %4113 = vdwg.mxu0
        %4114 = vrot.lane.b32.xlu0 %v4096, 126
        %v4115 = vpop.permute.xlu0 %4114
        %4116 = vrot.lane.b32.xlu0 %v4101, 126
        %v4117 = vpop.permute.xlu0 %4116
        %4118 = vrot.lane.b32.xlu0 %v4106, 126
        %v4119 = vpop.permute.xlu0 %4118
        %4120 = vrot.lane.b32.xlu0 %v4111, 126
        %v4121 = vpop.permute.xlu0 %4120
        %v4122 = vsel %vm2474, %v4115, 0.0
        %v4123 = vsel %vm2474, %v4117, 0.0
        %v4124 = vsel %vm2474, %v4119, 0.0
        %v4125 = vsel %vm2474, %v4121, 0.0
        %v4126 = vadd.f32 %v4008, %v4122
        %v4127 = vadd.f32 %v4009, %v4123
        %v4128 = vadd.f32 %v4010, %v4124
        %v4129 = vadd.f32 %v4011, %v4125
        %v4130 = vld [vmem:[%s29] sm:$0xff]
        %v4131 = vld [vmem:[%s29 + $0x8] sm:$0xff]
        %v4132 = vld [vmem:[%s29 + $0x10] sm:$0xff]
        %v4133 = vld [vmem:[%s29 + $0x18] sm:$0xff]
        %4135 = vset.pattern.permute.xlu0 0
        %4136 = vperm.xlu0 %4135, %v4130
        %v4137 = vpop.permute.xlu0 %4136
        %4140 = vset.pattern.permute.xlu0 0
        %4141 = vperm.xlu0 %4140, %v4131
        %v4142 = vpop.permute.xlu0 %4141
        %4145 = vset.pattern.permute.xlu0 0
        %4146 = vperm.xlu0 %4145, %v4132
        %v4147 = vpop.permute.xlu0 %4146
        %4150 = vset.pattern.permute.xlu0 0
        %4151 = vperm.xlu0 %4150, %v4133
        %v4152 = vpop.permute.xlu0 %4151
        %v4154 = vadd.f32 %v4126, %v4137
        %v4155 = vadd.f32 %v4127, %v4142
        %v4156 = vadd.f32 %v4128, %v4147
        %v4157 = vadd.f32 %v4129, %v4152
        %v4158 = vld [vmem:[%s31] sm:$0xff]
        %v4159 = vld [vmem:[%s31 + $0x8] sm:$0xff]
        %v4160 = vld [vmem:[%s31 + $0x10] sm:$0xff]
        %v4161 = vld [vmem:[%s31 + $0x18] sm:$0xff]
        %v4163 = vsel %vm1669, %v4158, 0
        %v4166 = vsel %vm1669, %v4159, 0
        %v4169 = vsel %vm1669, %v4160, 0
        %v4172 = vsel %vm1669, %v4161, 0
        %4174 = vmatprep.subr.mxu0 0.0
        %4175 = vmatpush1.msra.mxu0 %v4154
        %4176 = vmatprep.subr.mxu0 0.0
        %4177 = vmatpush1.msra.mxu0 %v4155
        %4178 = vmatprep.subr.mxu0 0.0
        %4179 = vmatpush1.msra.mxu0 %v4156
        %4180 = vmatprep.subr.mxu0 0.0
        %4181 = vmatpush1.msra.mxu0 %v4157
        %4182 = vmatprep.subr.mxu0 0.0
        %4183 = vmatpush1.msra.mxu0 0.0
        %4184 = vmatprep.subr.mxu0 0.0
        %4185 = vmatpush1.msra.mxu0 0.0
        %4186 = vmatprep.subr.mxu0 0.0
        %4187 = vmatpush1.msra.mxu0 0.0
        %4188 = vmatprep.subr.mxu0 0.0
        %4189 = vmatpush1.msra.mxu0 0.0
        %4190 = vmatprep.subr.mxu0 0.0
        %4191 = vmatpush1.msra.mxu0 0.0
        %4192 = vmatprep.subr.mxu0 0.0
        %4193 = vmatpush1.msra.mxu0 0.0
        %4194 = vmatprep.subr.mxu0 0.0
        %4195 = vmatpush1.msra.mxu0 0.0
        %4196 = vmatprep.subr.mxu0 0.0
        %4197 = vmatpush1.msra.mxu0 0.0
        %4198 = vmatprep.subr.mxu0 0.0
        %4199 = vmatpush1.msra.mxu0 0.0
        %4200 = vmatprep.subr.mxu0 0.0
        %4201 = vmatpush1.msra.mxu0 0.0
        %4202 = vmatprep.subr.mxu0 0.0
        %4203 = vmatpush1.msra.mxu0 0.0
        %4204 = vmatprep.subr.mxu0 0.0
        %4205 = vmatpush1.msra.mxu0 0.0
        %4206 = vmatprep.subr.mxu0 0.0
        %4207 = vmatpush1.msra.mxu0 0.0
        %4208 = vmatprep.subr.mxu0 0.0
        %4209 = vmatpush1.msra.mxu0 0.0
        %4210 = vmatprep.subr.mxu0 0.0
        %4211 = vmatpush1.msra.mxu0 0.0
        %4212 = vmatprep.subr.mxu0 0.0
        %4213 = vmatpush1.msra.mxu0 0.0
        %4214 = vmatprep.subr.mxu0 0.0
        %4215 = vmatpush1.msra.mxu0 0.0
        %4216 = vmatprep.subr.mxu0 0.0
        %4217 = vmatpush1.msra.mxu0 0.0
        %4218 = vmatprep.subr.mxu0 0.0
        %4219 = vmatpush1.msra.mxu0 0.0
        %4220 = vmatprep.subr.mxu0 0.0
        %4221 = vmatpush1.msra.mxu0 0.0
        %4222 = vmatprep.subr.mxu0 0.0
        %4223 = vmatpush1.msra.mxu0 0.0
        %4224 = vmatprep.subr.mxu0 0.0
        %4225 = vmatpush1.msra.mxu0 0.0
        %4226 = vmatprep.subr.mxu0 0.0
        %4227 = vmatpush1.msra.mxu0 0.0
        %4228 = vmatprep.subr.mxu0 0.0
        %4229 = vmatpush1.msra.mxu0 0.0
        %4230 = vmatprep.subr.mxu0 0.0
        %4231 = vmatpush1.msra.mxu0 0.0
        %4232 = vmatprep.subr.mxu0 0.0
        %4233 = vmatpush1.msra.mxu0 0.0
        %4234 = vmatprep.subr.mxu0 0.0
        %4235 = vmatpush1.msra.mxu0 0.0
        %4236 = vmatprep.subr.mxu0 0.0
        %4237 = vmatpush1.msra.mxu0 0.0
        %4238 = vmatprep.mubr.f32.mxu0 0.0
        %4239 = vmatmul.mubr.f32.gmra.mrb[0].mxu0 %v4163
        %v4240 = vpop.f32.mrb[0].mxu0
        %v4241 = vadd.f32 0.0, %v4240
        %v4242 = vpop.f32.mrb[0].mxu0
        %4243 = vmatprep.mubr.f32.mxu0 0.0
        %4244 = vmatmul.mubr.f32.gmra.mrb[0].mxu0 %v4166
        %v4245 = vpop.f32.mrb[0].mxu0
        %v4246 = vadd.f32 0.0, %v4245
        %v4247 = vpop.f32.mrb[0].mxu0
        %4248 = vmatprep.mubr.f32.mxu0 0.0
        %4249 = vmatmul.mubr.f32.gmra.mrb[0].mxu0 %v4169
        %v4250 = vpop.f32.mrb[0].mxu0
        %v4251 = vadd.f32 0.0, %v4250
        %v4252 = vpop.f32.mrb[0].mxu0
        %4253 = vmatprep.mubr.f32.mxu0 0.0
        %4254 = vmatmul.mubr.f32.gmra.mrb[0].mxu0 %v4172
        %v4255 = vpop.f32.mrb[0].mxu0
        %v4256 = vadd.f32 0.0, %v4255
        %v4257 = vpop.f32.mrb[0].mxu0
        %4258 = vdwg.mxu0
        %vm4259 = vcmp.ge.s32.totalorder %v1664, 9
        %4260 = vrot.lane.b32.xlu0 %v4241, 9
        %v4261 = vpop.permute.xlu0 %4260
        %4262 = vrot.lane.b32.xlu0 %v4246, 9
        %v4263 = vpop.permute.xlu0 %4262
        %4264 = vrot.lane.b32.xlu0 %v4251, 9
        %v4265 = vpop.permute.xlu0 %4264
        %4266 = vrot.lane.b32.xlu0 %v4256, 9
        %v4267 = vpop.permute.xlu0 %4266
        %v4268 = vsel %vm4259, %v4261, 0.0
        %v4269 = vsel %vm4259, %v4263, 0.0
        %v4270 = vsel %vm4259, %v4265, 0.0
        %v4271 = vsel %vm4259, %v4267, 0.0
        %s4272 = scalar_lea.vmem %s31, 32
        %v4273 = vld [vmem:[%s4272] sm:$0xff]
        %v4274 = vld [vmem:[%s4272 + $0x8] sm:$0xff]
        %v4275 = vld [vmem:[%s4272 + $0x10] sm:$0xff]
        %v4276 = vld [vmem:[%s4272 + $0x18] sm:$0xff]
        %v4278 = vsel %vm1669, %v4273, 0
        %v4281 = vsel %vm1669, %v4274, 0
        %v4284 = vsel %vm1669, %v4275, 0
        %v4287 = vsel %vm1669, %v4276, 0
        %4289 = vmatprep.subr.mxu0 0.0
        %4290 = vmatpush1.msra.mxu0 %v4154
        %4291 = vmatprep.subr.mxu0 0.0
        %4292 = vmatpush1.msra.mxu0 %v4155
        %4293 = vmatprep.subr.mxu0 0.0
        %4294 = vmatpush1.msra.mxu0 %v4156
        %4295 = vmatprep.subr.mxu0 0.0
        %4296 = vmatpush1.msra.mxu0 %v4157
        %4297 = vmatprep.subr.mxu0 0.0
        %4298 = vmatpush1.msra.mxu0 0.0
        %4299 = vmatprep.subr.mxu0 0.0
        %4300 = vmatpush1.msra.mxu0 0.0
        %4301 = vmatprep.subr.mxu0 0.0
        %4302 = vmatpush1.msra.mxu0 0.0
        %4303 = vmatprep.subr.mxu0 0.0
        %4304 = vmatpush1.msra.mxu0 0.0
        %4305 = vmatprep.subr.mxu0 0.0
        %4306 = vmatpush1.msra.mxu0 0.0
        %4307 = vmatprep.subr.mxu0 0.0
        %4308 = vmatpush1.msra.mxu0 0.0
        %4309 = vmatprep.subr.mxu0 0.0
        %4310 = vmatpush1.msra.mxu0 0.0
        %4311 = vmatprep.subr.mxu0 0.0
        %4312 = vmatpush1.msra.mxu0 0.0
        %4313 = vmatprep.subr.mxu0 0.0
        %4314 = vmatpush1.msra.mxu0 0.0
        %4315 = vmatprep.subr.mxu0 0.0
        %4316 = vmatpush1.msra.mxu0 0.0
        %4317 = vmatprep.subr.mxu0 0.0
        %4318 = vmatpush1.msra.mxu0 0.0
        %4319 = vmatprep.subr.mxu0 0.0
        %4320 = vmatpush1.msra.mxu0 0.0
        %4321 = vmatprep.subr.mxu0 0.0
        %4322 = vmatpush1.msra.mxu0 0.0
        %4323 = vmatprep.subr.mxu0 0.0
        %4324 = vmatpush1.msra.mxu0 0.0
        %4325 = vmatprep.subr.mxu0 0.0
        %4326 = vmatpush1.msra.mxu0 0.0
        %4327 = vmatprep.subr.mxu0 0.0
        %4328 = vmatpush1.msra.mxu0 0.0
        %4329 = vmatprep.subr.mxu0 0.0
        %4330 = vmatpush1.msra.mxu0 0.0
        %4331 = vmatprep.subr.mxu0 0.0
        %4332 = vmatpush1.msra.mxu0 0.0
        %4333 = vmatprep.subr.mxu0 0.0
        %4334 = vmatpush1.msra.mxu0 0.0
        %4335 = vmatprep.subr.mxu0 0.0
        %4336 = vmatpush1.msra.mxu0 0.0
        %4337 = vmatprep.subr.mxu0 0.0
        %4338 = vmatpush1.msra.mxu0 0.0
        %4339 = vmatprep.subr.mxu0 0.0
        %4340 = vmatpush1.msra.mxu0 0.0
        %4341 = vmatprep.subr.mxu0 0.0
        %4342 = vmatpush1.msra.mxu0 0.0
        %4343 = vmatprep.subr.mxu0 0.0
        %4344 = vmatpush1.msra.mxu0 0.0
        %4345 = vmatprep.subr.mxu0 0.0
        %4346 = vmatpush1.msra.mxu0 0.0
        %4347 = vmatprep.subr.mxu0 0.0
        %4348 = vmatpush1.msra.mxu0 0.0
        %4349 = vmatprep.subr.mxu0 0.0
        %4350 = vmatpush1.msra.mxu0 0.0
        %4351 = vmatprep.subr.mxu0 0.0
        %4352 = vmatpush1.msra.mxu0 0.0
        %4353 = vmatprep.mubr.f32.mxu0 0.0
        %4354 = vmatmul.mubr.f32.gmra.mrb[0].mxu0 %v4278
        %v4355 = vpop.f32.mrb[0].mxu0
        %v4356 = vadd.f32 0.0, %v4355
        %v4357 = vpop.f32.mrb[0].mxu0
        %4358 = vmatprep.mubr.f32.mxu0 0.0
        %4359 = vmatmul.mubr.f32.gmra.mrb[0].mxu0 %v4281
        %v4360 = vpop.f32.mrb[0].mxu0
        %v4361 = vadd.f32 0.0, %v4360
        %v4362 = vpop.f32.mrb[0].mxu0
        %4363 = vmatprep.mubr.f32.mxu0 0.0
        %4364 = vmatmul.mubr.f32.gmra.mrb[0].mxu0 %v4284
        %v4365 = vpop.f32.mrb[0].mxu0
        %v4366 = vadd.f32 0.0, %v4365
        %v4367 = vpop.f32.mrb[0].mxu0
        %4368 = vmatprep.mubr.f32.mxu0 0.0
        %4369 = vmatmul.mubr.f32.gmra.mrb[0].mxu0 %v4287
        %v4370 = vpop.f32.mrb[0].mxu0
        %v4371 = vadd.f32 0.0, %v4370
        %v4372 = vpop.f32.mrb[0].mxu0
        %4373 = vdwg.mxu0
        %vm4374 = vcmp.ge.s32.totalorder %v1664, 6
        %4375 = vrot.lane.b32.xlu0 %v4356, 6
        %v4376 = vpop.permute.xlu0 %4375
        %4377 = vrot.lane.b32.xlu0 %v4361, 6
        %v4378 = vpop.permute.xlu0 %4377
        %4379 = vrot.lane.b32.xlu0 %v4366, 6
        %v4380 = vpop.permute.xlu0 %4379
        %4381 = vrot.lane.b32.xlu0 %v4371, 6
        %v4382 = vpop.permute.xlu0 %4381
        %v4383 = vsel %vm4374, %v4376, 0.0
        %v4384 = vsel %vm4374, %v4378, 0.0
        %v4385 = vsel %vm4374, %v4380, 0.0
        %v4386 = vsel %vm4374, %v4382, 0.0
        %v4387 = vadd.f32 %v4268, %v4383
        %v4388 = vadd.f32 %v4269, %v4384
        %v4389 = vadd.f32 %v4270, %v4385
        %v4390 = vadd.f32 %v4271, %v4386
        %s4391 = scalar_lea.vmem %s31, 64
        %v4392 = vld [vmem:[%s4391] sm:$0xff]
        %v4393 = vld [vmem:[%s4391 + $0x8] sm:$0xff]
        %v4394 = vld [vmem:[%s4391 + $0x10] sm:$0xff]
        %v4395 = vld [vmem:[%s4391 + $0x18] sm:$0xff]
        %v4397 = vsel %vm1669, %v4392, 0
        %v4400 = vsel %vm1669, %v4393, 0
        %v4403 = vsel %vm1669, %v4394, 0
        %v4406 = vsel %vm1669, %v4395, 0
        %4408 = vmatprep.subr.mxu0 0.0
        %4409 = vmatpush1.msra.mxu0 %v4154
        %4410 = vmatprep.subr.mxu0 0.0
        %4411 = vmatpush1.msra.mxu0 %v4155
        %4412 = vmatprep.subr.mxu0 0.0
        %4413 = vmatpush1.msra.mxu0 %v4156
        %4414 = vmatprep.subr.mxu0 0.0
        %4415 = vmatpush1.msra.mxu0 %v4157
        %4416 = vmatprep.subr.mxu0 0.0
        %4417 = vmatpush1.msra.mxu0 0.0
        %4418 = vmatprep.subr.mxu0 0.0
        %4419 = vmatpush1.msra.mxu0 0.0
        %4420 = vmatprep.subr.mxu0 0.0
        %4421 = vmatpush1.msra.mxu0 0.0
        %4422 = vmatprep.subr.mxu0 0.0
        %4423 = vmatpush1.msra.mxu0 0.0
        %4424 = vmatprep.subr.mxu0 0.0
        %4425 = vmatpush1.msra.mxu0 0.0
        %4426 = vmatprep.subr.mxu0 0.0
        %4427 = vmatpush1.msra.mxu0 0.0
        %4428 = vmatprep.subr.mxu0 0.0
        %4429 = vmatpush1.msra.mxu0 0.0
        %4430 = vmatprep.subr.mxu0 0.0
        %4431 = vmatpush1.msra.mxu0 0.0
        %4432 = vmatprep.subr.mxu0 0.0
        %4433 = vmatpush1.msra.mxu0 0.0
        %4434 = vmatprep.subr.mxu0 0.0
        %4435 = vmatpush1.msra.mxu0 0.0
        %4436 = vmatprep.subr.mxu0 0.0
        %4437 = vmatpush1.msra.mxu0 0.0
        %4438 = vmatprep.subr.mxu0 0.0
        %4439 = vmatpush1.msra.mxu0 0.0
        %4440 = vmatprep.subr.mxu0 0.0
        %4441 = vmatpush1.msra.mxu0 0.0
        %4442 = vmatprep.subr.mxu0 0.0
        %4443 = vmatpush1.msra.mxu0 0.0
        %4444 = vmatprep.subr.mxu0 0.0
        %4445 = vmatpush1.msra.mxu0 0.0
        %4446 = vmatprep.subr.mxu0 0.0
        %4447 = vmatpush1.msra.mxu0 0.0
        %4448 = vmatprep.subr.mxu0 0.0
        %4449 = vmatpush1.msra.mxu0 0.0
        %4450 = vmatprep.subr.mxu0 0.0
        %4451 = vmatpush1.msra.mxu0 0.0
        %4452 = vmatprep.subr.mxu0 0.0
        %4453 = vmatpush1.msra.mxu0 0.0
        %4454 = vmatprep.subr.mxu0 0.0
        %4455 = vmatpush1.msra.mxu0 0.0
        %4456 = vmatprep.subr.mxu0 0.0
        %4457 = vmatpush1.msra.mxu0 0.0
        %4458 = vmatprep.subr.mxu0 0.0
        %4459 = vmatpush1.msra.mxu0 0.0
        %4460 = vmatprep.subr.mxu0 0.0
        %4461 = vmatpush1.msra.mxu0 0.0
        %4462 = vmatprep.subr.mxu0 0.0
        %4463 = vmatpush1.msra.mxu0 0.0
        %4464 = vmatprep.subr.mxu0 0.0
        %4465 = vmatpush1.msra.mxu0 0.0
        %4466 = vmatprep.subr.mxu0 0.0
        %4467 = vmatpush1.msra.mxu0 0.0
        %4468 = vmatprep.subr.mxu0 0.0
        %4469 = vmatpush1.msra.mxu0 0.0
        %4470 = vmatprep.subr.mxu0 0.0
        %4471 = vmatpush1.msra.mxu0 0.0
        %4472 = vmatprep.mubr.f32.mxu0 0.0
        %4473 = vmatmul.mubr.f32.gmra.mrb[0].mxu0 %v4397
        %v4474 = vpop.f32.mrb[0].mxu0
        %v4475 = vadd.f32 0.0, %v4474
        %v4476 = vpop.f32.mrb[0].mxu0
        %4477 = vmatprep.mubr.f32.mxu0 0.0
        %4478 = vmatmul.mubr.f32.gmra.mrb[0].mxu0 %v4400
        %v4479 = vpop.f32.mrb[0].mxu0
        %v4480 = vadd.f32 0.0, %v4479
        %v4481 = vpop.f32.mrb[0].mxu0
        %4482 = vmatprep.mubr.f32.mxu0 0.0
        %4483 = vmatmul.mubr.f32.gmra.mrb[0].mxu0 %v4403
        %v4484 = vpop.f32.mrb[0].mxu0
        %v4485 = vadd.f32 0.0, %v4484
        %v4486 = vpop.f32.mrb[0].mxu0
        %4487 = vmatprep.mubr.f32.mxu0 0.0
        %4488 = vmatmul.mubr.f32.gmra.mrb[0].mxu0 %v4406
        %v4489 = vpop.f32.mrb[0].mxu0
        %v4490 = vadd.f32 0.0, %v4489
        %v4491 = vpop.f32.mrb[0].mxu0
        %4492 = vdwg.mxu0
        %vm4493 = vcmp.ge.s32.totalorder %v1664, 3
        %4494 = vrot.lane.b32.xlu0 %v4475, 3
        %v4495 = vpop.permute.xlu0 %4494
        %4496 = vrot.lane.b32.xlu0 %v4480, 3
        %v4497 = vpop.permute.xlu0 %4496
        %4498 = vrot.lane.b32.xlu0 %v4485, 3
        %v4499 = vpop.permute.xlu0 %4498
        %4500 = vrot.lane.b32.xlu0 %v4490, 3
        %v4501 = vpop.permute.xlu0 %4500
        %v4502 = vsel %vm4493, %v4495, 0.0
        %v4503 = vsel %vm4493, %v4497, 0.0
        %v4504 = vsel %vm4493, %v4499, 0.0
        %v4505 = vsel %vm4493, %v4501, 0.0
        %v4506 = vadd.f32 %v4387, %v4502
        %v4507 = vadd.f32 %v4388, %v4503
        %v4508 = vadd.f32 %v4389, %v4504
        %v4509 = vadd.f32 %v4390, %v4505
        %s4510 = scalar_lea.vmem %s31, 96
        %v4511 = vld [vmem:[%s4510] sm:$0xff]
        %v4512 = vld [vmem:[%s4510 + $0x8] sm:$0xff]
        %v4513 = vld [vmem:[%s4510 + $0x10] sm:$0xff]
        %v4514 = vld [vmem:[%s4510 + $0x18] sm:$0xff]
        %v4516 = vsel %vm1669, %v4511, 0
        %v4519 = vsel %vm1669, %v4512, 0
        %v4522 = vsel %vm1669, %v4513, 0
        %v4525 = vsel %vm1669, %v4514, 0
        %4527 = vmatprep.subr.mxu0 0.0
        %4528 = vmatpush1.msra.mxu0 %v4154
        %4529 = vmatprep.subr.mxu0 0.0
        %4530 = vmatpush1.msra.mxu0 %v4155
        %4531 = vmatprep.subr.mxu0 0.0
        %4532 = vmatpush1.msra.mxu0 %v4156
        %4533 = vmatprep.subr.mxu0 0.0
        %4534 = vmatpush1.msra.mxu0 %v4157
        %4535 = vmatprep.subr.mxu0 0.0
        %4536 = vmatpush1.msra.mxu0 0.0
        %4537 = vmatprep.subr.mxu0 0.0
        %4538 = vmatpush1.msra.mxu0 0.0
        %4539 = vmatprep.subr.mxu0 0.0
        %4540 = vmatpush1.msra.mxu0 0.0
        %4541 = vmatprep.subr.mxu0 0.0
        %4542 = vmatpush1.msra.mxu0 0.0
        %4543 = vmatprep.subr.mxu0 0.0
        %4544 = vmatpush1.msra.mxu0 0.0
        %4545 = vmatprep.subr.mxu0 0.0
        %4546 = vmatpush1.msra.mxu0 0.0
        %4547 = vmatprep.subr.mxu0 0.0
        %4548 = vmatpush1.msra.mxu0 0.0
        %4549 = vmatprep.subr.mxu0 0.0
        %4550 = vmatpush1.msra.mxu0 0.0
        %4551 = vmatprep.subr.mxu0 0.0
        %4552 = vmatpush1.msra.mxu0 0.0
        %4553 = vmatprep.subr.mxu0 0.0
        %4554 = vmatpush1.msra.mxu0 0.0
        %4555 = vmatprep.subr.mxu0 0.0
        %4556 = vmatpush1.msra.mxu0 0.0
        %4557 = vmatprep.subr.mxu0 0.0
        %4558 = vmatpush1.msra.mxu0 0.0
        %4559 = vmatprep.subr.mxu0 0.0
        %4560 = vmatpush1.msra.mxu0 0.0
        %4561 = vmatprep.subr.mxu0 0.0
        %4562 = vmatpush1.msra.mxu0 0.0
        %4563 = vmatprep.subr.mxu0 0.0
        %4564 = vmatpush1.msra.mxu0 0.0
        %4565 = vmatprep.subr.mxu0 0.0
        %4566 = vmatpush1.msra.mxu0 0.0
        %4567 = vmatprep.subr.mxu0 0.0
        %4568 = vmatpush1.msra.mxu0 0.0
        %4569 = vmatprep.subr.mxu0 0.0
        %4570 = vmatpush1.msra.mxu0 0.0
        %4571 = vmatprep.subr.mxu0 0.0
        %4572 = vmatpush1.msra.mxu0 0.0
        %4573 = vmatprep.subr.mxu0 0.0
        %4574 = vmatpush1.msra.mxu0 0.0
        %4575 = vmatprep.subr.mxu0 0.0
        %4576 = vmatpush1.msra.mxu0 0.0
        %4577 = vmatprep.subr.mxu0 0.0
        %4578 = vmatpush1.msra.mxu0 0.0
        %4579 = vmatprep.subr.mxu0 0.0
        %4580 = vmatpush1.msra.mxu0 0.0
        %4581 = vmatprep.subr.mxu0 0.0
        %4582 = vmatpush1.msra.mxu0 0.0
        %4583 = vmatprep.subr.mxu0 0.0
        %4584 = vmatpush1.msra.mxu0 0.0
        %4585 = vmatprep.subr.mxu0 0.0
        %4586 = vmatpush1.msra.mxu0 0.0
        %4587 = vmatprep.subr.mxu0 0.0
        %4588 = vmatpush1.msra.mxu0 0.0
        %4589 = vmatprep.subr.mxu0 0.0
        %4590 = vmatpush1.msra.mxu0 0.0
        %4591 = vmatprep.mubr.f32.mxu0 0.0
        %4592 = vmatmul.mubr.f32.gmra.mrb[0].mxu0 %v4516
        %v4593 = vpop.f32.mrb[0].mxu0
        %v4594 = vadd.f32 0.0, %v4593
        %v4595 = vpop.f32.mrb[0].mxu0
        %4596 = vmatprep.mubr.f32.mxu0 0.0
        %4597 = vmatmul.mubr.f32.gmra.mrb[0].mxu0 %v4519
        %v4598 = vpop.f32.mrb[0].mxu0
        %v4599 = vadd.f32 0.0, %v4598
        %v4600 = vpop.f32.mrb[0].mxu0
        %4601 = vmatprep.mubr.f32.mxu0 0.0
        %4602 = vmatmul.mubr.f32.gmra.mrb[0].mxu0 %v4522
        %v4603 = vpop.f32.mrb[0].mxu0
        %v4604 = vadd.f32 0.0, %v4603
        %v4605 = vpop.f32.mrb[0].mxu0
        %4606 = vmatprep.mubr.f32.mxu0 0.0
        %4607 = vmatmul.mubr.f32.gmra.mrb[0].mxu0 %v4525
        %v4608 = vpop.f32.mrb[0].mxu0
        %v4609 = vadd.f32 0.0, %v4608
        %v4610 = vpop.f32.mrb[0].mxu0
        %4611 = vdwg.mxu0
        %v4612 = vadd.f32 %v4506, %v4594
        %v4613 = vadd.f32 %v4507, %v4599
        %v4614 = vadd.f32 %v4508, %v4604
        %v4615 = vadd.f32 %v4509, %v4609
        %s4616 = scalar_lea.vmem %s31, 128
        %v4617 = vld [vmem:[%s4616] sm:$0xff]
        %v4618 = vld [vmem:[%s4616 + $0x8] sm:$0xff]
        %v4619 = vld [vmem:[%s4616 + $0x10] sm:$0xff]
        %v4620 = vld [vmem:[%s4616 + $0x18] sm:$0xff]
        %v4622 = vsel %vm1669, %v4617, 0
        %v4625 = vsel %vm1669, %v4618, 0
        %v4628 = vsel %vm1669, %v4619, 0
        %v4631 = vsel %vm1669, %v4620, 0
        %4633 = vmatprep.subr.mxu0 0.0
        %4634 = vmatpush1.msra.mxu0 %v4154
        %4635 = vmatprep.subr.mxu0 0.0
        %4636 = vmatpush1.msra.mxu0 %v4155
        %4637 = vmatprep.subr.mxu0 0.0
        %4638 = vmatpush1.msra.mxu0 %v4156
        %4639 = vmatprep.subr.mxu0 0.0
        %4640 = vmatpush1.msra.mxu0 %v4157
        %4641 = vmatprep.subr.mxu0 0.0
        %4642 = vmatpush1.msra.mxu0 0.0
        %4643 = vmatprep.subr.mxu0 0.0
        %4644 = vmatpush1.msra.mxu0 0.0
        %4645 = vmatprep.subr.mxu0 0.0
        %4646 = vmatpush1.msra.mxu0 0.0
        %4647 = vmatprep.subr.mxu0 0.0
        %4648 = vmatpush1.msra.mxu0 0.0
        %4649 = vmatprep.subr.mxu0 0.0
        %4650 = vmatpush1.msra.mxu0 0.0
        %4651 = vmatprep.subr.mxu0 0.0
        %4652 = vmatpush1.msra.mxu0 0.0
        %4653 = vmatprep.subr.mxu0 0.0
        %4654 = vmatpush1.msra.mxu0 0.0
        %4655 = vmatprep.subr.mxu0 0.0
        %4656 = vmatpush1.msra.mxu0 0.0
        %4657 = vmatprep.subr.mxu0 0.0
        %4658 = vmatpush1.msra.mxu0 0.0
        %4659 = vmatprep.subr.mxu0 0.0
        %4660 = vmatpush1.msra.mxu0 0.0
        %4661 = vmatprep.subr.mxu0 0.0
        %4662 = vmatpush1.msra.mxu0 0.0
        %4663 = vmatprep.subr.mxu0 0.0
        %4664 = vmatpush1.msra.mxu0 0.0
        %4665 = vmatprep.subr.mxu0 0.0
        %4666 = vmatpush1.msra.mxu0 0.0
        %4667 = vmatprep.subr.mxu0 0.0
        %4668 = vmatpush1.msra.mxu0 0.0
        %4669 = vmatprep.subr.mxu0 0.0
        %4670 = vmatpush1.msra.mxu0 0.0
        %4671 = vmatprep.subr.mxu0 0.0
        %4672 = vmatpush1.msra.mxu0 0.0
        %4673 = vmatprep.subr.mxu0 0.0
        %4674 = vmatpush1.msra.mxu0 0.0
        %4675 = vmatprep.subr.mxu0 0.0
        %4676 = vmatpush1.msra.mxu0 0.0
        %4677 = vmatprep.subr.mxu0 0.0
        %4678 = vmatpush1.msra.mxu0 0.0
        %4679 = vmatprep.subr.mxu0 0.0
        %4680 = vmatpush1.msra.mxu0 0.0
        %4681 = vmatprep.subr.mxu0 0.0
        %4682 = vmatpush1.msra.mxu0 0.0
        %4683 = vmatprep.subr.mxu0 0.0
        %4684 = vmatpush1.msra.mxu0 0.0
        %4685 = vmatprep.subr.mxu0 0.0
        %4686 = vmatpush1.msra.mxu0 0.0
        %4687 = vmatprep.subr.mxu0 0.0
        %4688 = vmatpush1.msra.mxu0 0.0
        %4689 = vmatprep.subr.mxu0 0.0
        %4690 = vmatpush1.msra.mxu0 0.0
        %4691 = vmatprep.subr.mxu0 0.0
        %4692 = vmatpush1.msra.mxu0 0.0
        %4693 = vmatprep.subr.mxu0 0.0
        %4694 = vmatpush1.msra.mxu0 0.0
        %4695 = vmatprep.subr.mxu0 0.0
        %4696 = vmatpush1.msra.mxu0 0.0
        %4697 = vmatprep.mubr.f32.mxu0 0.0
        %4698 = vmatmul.mubr.f32.gmra.mrb[0].mxu0 %v4622
        %v4699 = vpop.f32.mrb[0].mxu0
        %v4700 = vadd.f32 0.0, %v4699
        %v4701 = vpop.f32.mrb[0].mxu0
        %4702 = vmatprep.mubr.f32.mxu0 0.0
        %4703 = vmatmul.mubr.f32.gmra.mrb[0].mxu0 %v4625
        %v4704 = vpop.f32.mrb[0].mxu0
        %v4705 = vadd.f32 0.0, %v4704
        %v4706 = vpop.f32.mrb[0].mxu0
        %4707 = vmatprep.mubr.f32.mxu0 0.0
        %4708 = vmatmul.mubr.f32.gmra.mrb[0].mxu0 %v4628
        %v4709 = vpop.f32.mrb[0].mxu0
        %v4710 = vadd.f32 0.0, %v4709
        %v4711 = vpop.f32.mrb[0].mxu0
        %4712 = vmatprep.mubr.f32.mxu0 0.0
        %4713 = vmatmul.mubr.f32.gmra.mrb[0].mxu0 %v4631
        %v4714 = vpop.f32.mrb[0].mxu0
        %v4715 = vadd.f32 0.0, %v4714
        %v4716 = vpop.f32.mrb[0].mxu0
        %4717 = vdwg.mxu0
        %vm4718 = vcmp.lt.s32.totalorder %v1664, 125
        %4719 = vrot.lane.b32.xlu0 %v4700, 125
        %v4720 = vpop.permute.xlu0 %4719
        %4721 = vrot.lane.b32.xlu0 %v4705, 125
        %v4722 = vpop.permute.xlu0 %4721
        %4723 = vrot.lane.b32.xlu0 %v4710, 125
        %v4724 = vpop.permute.xlu0 %4723
        %4725 = vrot.lane.b32.xlu0 %v4715, 125
        %v4726 = vpop.permute.xlu0 %4725
        %v4727 = vsel %vm4718, %v4720, 0.0
        %v4728 = vsel %vm4718, %v4722, 0.0
        %v4729 = vsel %vm4718, %v4724, 0.0
        %v4730 = vsel %vm4718, %v4726, 0.0
        %v4731 = vadd.f32 %v4612, %v4727
        %v4732 = vadd.f32 %v4613, %v4728
        %v4733 = vadd.f32 %v4614, %v4729
        %v4734 = vadd.f32 %v4615, %v4730
        %s4735 = scalar_lea.vmem %s31, 160
        %v4736 = vld [vmem:[%s4735] sm:$0xff]
        %v4737 = vld [vmem:[%s4735 + $0x8] sm:$0xff]
        %v4738 = vld [vmem:[%s4735 + $0x10] sm:$0xff]
        %v4739 = vld [vmem:[%s4735 + $0x18] sm:$0xff]
        %v4741 = vsel %vm1669, %v4736, 0
        %v4744 = vsel %vm1669, %v4737, 0
        %v4747 = vsel %vm1669, %v4738, 0
        %v4750 = vsel %vm1669, %v4739, 0
        %4752 = vmatprep.subr.mxu0 0.0
        %4753 = vmatpush1.msra.mxu0 %v4154
        %4754 = vmatprep.subr.mxu0 0.0
        %4755 = vmatpush1.msra.mxu0 %v4155
        %4756 = vmatprep.subr.mxu0 0.0
        %4757 = vmatpush1.msra.mxu0 %v4156
        %4758 = vmatprep.subr.mxu0 0.0
        %4759 = vmatpush1.msra.mxu0 %v4157
        %4760 = vmatprep.subr.mxu0 0.0
        %4761 = vmatpush1.msra.mxu0 0.0
        %4762 = vmatprep.subr.mxu0 0.0
        %4763 = vmatpush1.msra.mxu0 0.0
        %4764 = vmatprep.subr.mxu0 0.0
        %4765 = vmatpush1.msra.mxu0 0.0
        %4766 = vmatprep.subr.mxu0 0.0
        %4767 = vmatpush1.msra.mxu0 0.0
        %4768 = vmatprep.subr.mxu0 0.0
        %4769 = vmatpush1.msra.mxu0 0.0
        %4770 = vmatprep.subr.mxu0 0.0
        %4771 = vmatpush1.msra.mxu0 0.0
        %4772 = vmatprep.subr.mxu0 0.0
        %4773 = vmatpush1.msra.mxu0 0.0
        %4774 = vmatprep.subr.mxu0 0.0
        %4775 = vmatpush1.msra.mxu0 0.0
        %4776 = vmatprep.subr.mxu0 0.0
        %4777 = vmatpush1.msra.mxu0 0.0
        %4778 = vmatprep.subr.mxu0 0.0
        %4779 = vmatpush1.msra.mxu0 0.0
        %4780 = vmatprep.subr.mxu0 0.0
        %4781 = vmatpush1.msra.mxu0 0.0
        %4782 = vmatprep.subr.mxu0 0.0
        %4783 = vmatpush1.msra.mxu0 0.0
        %4784 = vmatprep.subr.mxu0 0.0
        %4785 = vmatpush1.msra.mxu0 0.0
        %4786 = vmatprep.subr.mxu0 0.0
        %4787 = vmatpush1.msra.mxu0 0.0
        %4788 = vmatprep.subr.mxu0 0.0
        %4789 = vmatpush1.msra.mxu0 0.0
        %4790 = vmatprep.subr.mxu0 0.0
        %4791 = vmatpush1.msra.mxu0 0.0
        %4792 = vmatprep.subr.mxu0 0.0
        %4793 = vmatpush1.msra.mxu0 0.0
        %4794 = vmatprep.subr.mxu0 0.0
        %4795 = vmatpush1.msra.mxu0 0.0
        %4796 = vmatprep.subr.mxu0 0.0
        %4797 = vmatpush1.msra.mxu0 0.0
        %4798 = vmatprep.subr.mxu0 0.0
        %4799 = vmatpush1.msra.mxu0 0.0
        %4800 = vmatprep.subr.mxu0 0.0
        %4801 = vmatpush1.msra.mxu0 0.0
        %4802 = vmatprep.subr.mxu0 0.0
        %4803 = vmatpush1.msra.mxu0 0.0
        %4804 = vmatprep.subr.mxu0 0.0
        %4805 = vmatpush1.msra.mxu0 0.0
        %4806 = vmatprep.subr.mxu0 0.0
        %4807 = vmatpush1.msra.mxu0 0.0
        %4808 = vmatprep.subr.mxu0 0.0
        %4809 = vmatpush1.msra.mxu0 0.0
        %4810 = vmatprep.subr.mxu0 0.0
        %4811 = vmatpush1.msra.mxu0 0.0
        %4812 = vmatprep.subr.mxu0 0.0
        %4813 = vmatpush1.msra.mxu0 0.0
        %4814 = vmatprep.subr.mxu0 0.0
        %4815 = vmatpush1.msra.mxu0 0.0
        %4816 = vmatprep.mubr.f32.mxu0 0.0
        %4817 = vmatmul.mubr.f32.gmra.mrb[0].mxu0 %v4741
        %v4818 = vpop.f32.mrb[0].mxu0
        %v4819 = vadd.f32 0.0, %v4818
        %v4820 = vpop.f32.mrb[0].mxu0
        %4821 = vmatprep.mubr.f32.mxu0 0.0
        %4822 = vmatmul.mubr.f32.gmra.mrb[0].mxu0 %v4744
        %v4823 = vpop.f32.mrb[0].mxu0
        %v4824 = vadd.f32 0.0, %v4823
        %v4825 = vpop.f32.mrb[0].mxu0
        %4826 = vmatprep.mubr.f32.mxu0 0.0
        %4827 = vmatmul.mubr.f32.gmra.mrb[0].mxu0 %v4747
        %v4828 = vpop.f32.mrb[0].mxu0
        %v4829 = vadd.f32 0.0, %v4828
        %v4830 = vpop.f32.mrb[0].mxu0
        %4831 = vmatprep.mubr.f32.mxu0 0.0
        %4832 = vmatmul.mubr.f32.gmra.mrb[0].mxu0 %v4750
        %v4833 = vpop.f32.mrb[0].mxu0
        %v4834 = vadd.f32 0.0, %v4833
        %v4835 = vpop.f32.mrb[0].mxu0
        %4836 = vdwg.mxu0
        %vm4837 = vcmp.lt.s32.totalorder %v1664, 122
        %4838 = vrot.lane.b32.xlu0 %v4819, 122
        %v4839 = vpop.permute.xlu0 %4838
        %4840 = vrot.lane.b32.xlu0 %v4824, 122
        %v4841 = vpop.permute.xlu0 %4840
        %4842 = vrot.lane.b32.xlu0 %v4829, 122
        %v4843 = vpop.permute.xlu0 %4842
        %4844 = vrot.lane.b32.xlu0 %v4834, 122
        %v4845 = vpop.permute.xlu0 %4844
        %v4846 = vsel %vm4837, %v4839, 0.0
        %v4847 = vsel %vm4837, %v4841, 0.0
        %v4848 = vsel %vm4837, %v4843, 0.0
        %v4849 = vsel %vm4837, %v4845, 0.0
        %v4850 = vadd.f32 %v4731, %v4846
        %v4851 = vadd.f32 %v4732, %v4847
        %v4852 = vadd.f32 %v4733, %v4848
        %v4853 = vadd.f32 %v4734, %v4849
        %s4854 = scalar_lea.vmem %s31, 192
        %v4855 = vld [vmem:[%s4854] sm:$0xff]
        %v4856 = vld [vmem:[%s4854 + $0x8] sm:$0xff]
        %v4857 = vld [vmem:[%s4854 + $0x10] sm:$0xff]
        %v4858 = vld [vmem:[%s4854 + $0x18] sm:$0xff]
        %v4860 = vsel %vm1669, %v4855, 0
        %v4863 = vsel %vm1669, %v4856, 0
        %v4866 = vsel %vm1669, %v4857, 0
        %v4869 = vsel %vm1669, %v4858, 0
        %4871 = vmatprep.subr.mxu0 0.0
        %4872 = vmatpush1.msra.mxu0 %v4154
        %4873 = vmatprep.subr.mxu0 0.0
        %4874 = vmatpush1.msra.mxu0 %v4155
        %4875 = vmatprep.subr.mxu0 0.0
        %4876 = vmatpush1.msra.mxu0 %v4156
        %4877 = vmatprep.subr.mxu0 0.0
        %4878 = vmatpush1.msra.mxu0 %v4157
        %4879 = vmatprep.subr.mxu0 0.0
        %4880 = vmatpush1.msra.mxu0 0.0
        %4881 = vmatprep.subr.mxu0 0.0
        %4882 = vmatpush1.msra.mxu0 0.0
        %4883 = vmatprep.subr.mxu0 0.0
        %4884 = vmatpush1.msra.mxu0 0.0
        %4885 = vmatprep.subr.mxu0 0.0
        %4886 = vmatpush1.msra.mxu0 0.0
        %4887 = vmatprep.subr.mxu0 0.0
        %4888 = vmatpush1.msra.mxu0 0.0
        %4889 = vmatprep.subr.mxu0 0.0
        %4890 = vmatpush1.msra.mxu0 0.0
        %4891 = vmatprep.subr.mxu0 0.0
        %4892 = vmatpush1.msra.mxu0 0.0
        %4893 = vmatprep.subr.mxu0 0.0
        %4894 = vmatpush1.msra.mxu0 0.0
        %4895 = vmatprep.subr.mxu0 0.0
        %4896 = vmatpush1.msra.mxu0 0.0
        %4897 = vmatprep.subr.mxu0 0.0
        %4898 = vmatpush1.msra.mxu0 0.0
        %4899 = vmatprep.subr.mxu0 0.0
        %4900 = vmatpush1.msra.mxu0 0.0
        %4901 = vmatprep.subr.mxu0 0.0
        %4902 = vmatpush1.msra.mxu0 0.0
        %4903 = vmatprep.subr.mxu0 0.0
        %4904 = vmatpush1.msra.mxu0 0.0
        %4905 = vmatprep.subr.mxu0 0.0
        %4906 = vmatpush1.msra.mxu0 0.0
        %4907 = vmatprep.subr.mxu0 0.0
        %4908 = vmatpush1.msra.mxu0 0.0
        %4909 = vmatprep.subr.mxu0 0.0
        %4910 = vmatpush1.msra.mxu0 0.0
        %4911 = vmatprep.subr.mxu0 0.0
        %4912 = vmatpush1.msra.mxu0 0.0
        %4913 = vmatprep.subr.mxu0 0.0
        %4914 = vmatpush1.msra.mxu0 0.0
        %4915 = vmatprep.subr.mxu0 0.0
        %4916 = vmatpush1.msra.mxu0 0.0
        %4917 = vmatprep.subr.mxu0 0.0
        %4918 = vmatpush1.msra.mxu0 0.0
        %4919 = vmatprep.subr.mxu0 0.0
        %4920 = vmatpush1.msra.mxu0 0.0
        %4921 = vmatprep.subr.mxu0 0.0
        %4922 = vmatpush1.msra.mxu0 0.0
        %4923 = vmatprep.subr.mxu0 0.0
        %4924 = vmatpush1.msra.mxu0 0.0
        %4925 = vmatprep.subr.mxu0 0.0
        %4926 = vmatpush1.msra.mxu0 0.0
        %4927 = vmatprep.subr.mxu0 0.0
        %4928 = vmatpush1.msra.mxu0 0.0
        %4929 = vmatprep.subr.mxu0 0.0
        %4930 = vmatpush1.msra.mxu0 0.0
        %4931 = vmatprep.subr.mxu0 0.0
        %4932 = vmatpush1.msra.mxu0 0.0
        %4933 = vmatprep.subr.mxu0 0.0
        %4934 = vmatpush1.msra.mxu0 0.0
        %4935 = vmatprep.mubr.f32.mxu0 0.0
        %4936 = vmatmul.mubr.f32.gmra.mrb[0].mxu0 %v4860
        %v4937 = vpop.f32.mrb[0].mxu0
        %v4938 = vadd.f32 0.0, %v4937
        %v4939 = vpop.f32.mrb[0].mxu0
        %4940 = vmatprep.mubr.f32.mxu0 0.0
        %4941 = vmatmul.mubr.f32.gmra.mrb[0].mxu0 %v4863
        %v4942 = vpop.f32.mrb[0].mxu0
        %v4943 = vadd.f32 0.0, %v4942
        %v4944 = vpop.f32.mrb[0].mxu0
        %4945 = vmatprep.mubr.f32.mxu0 0.0
        %4946 = vmatmul.mubr.f32.gmra.mrb[0].mxu0 %v4866
        %v4947 = vpop.f32.mrb[0].mxu0
        %v4948 = vadd.f32 0.0, %v4947
        %v4949 = vpop.f32.mrb[0].mxu0
        %4950 = vmatprep.mubr.f32.mxu0 0.0
        %4951 = vmatmul.mubr.f32.gmra.mrb[0].mxu0 %v4869
        %v4952 = vpop.f32.mrb[0].mxu0
        %v4953 = vadd.f32 0.0, %v4952
        %v4954 = vpop.f32.mrb[0].mxu0
        %4955 = vdwg.mxu0
        %vm4956 = vcmp.lt.s32.totalorder %v1664, 119
        %4957 = vrot.lane.b32.xlu0 %v4938, 119
        %v4958 = vpop.permute.xlu0 %4957
        %4959 = vrot.lane.b32.xlu0 %v4943, 119
        %v4960 = vpop.permute.xlu0 %4959
        %4961 = vrot.lane.b32.xlu0 %v4948, 119
        %v4962 = vpop.permute.xlu0 %4961
        %4963 = vrot.lane.b32.xlu0 %v4953, 119
        %v4964 = vpop.permute.xlu0 %4963
        %v4965 = vsel %vm4956, %v4958, 0.0
        %v4966 = vsel %vm4956, %v4960, 0.0
        %v4967 = vsel %vm4956, %v4962, 0.0
        %v4968 = vsel %vm4956, %v4964, 0.0
        %v4969 = vadd.f32 %v4850, %v4965
        %v4970 = vadd.f32 %v4851, %v4966
        %v4971 = vadd.f32 %v4852, %v4967
        %v4972 = vadd.f32 %v4853, %v4968
        %v4973 = vld [vmem:[%s33] sm:$0xff]
        %v4974 = vld [vmem:[%s33 + $0x8] sm:$0xff]
        %v4975 = vld [vmem:[%s33 + $0x10] sm:$0xff]
        %v4976 = vld [vmem:[%s33 + $0x18] sm:$0xff]
        %4978 = vset.pattern.permute.xlu0 0
        %4979 = vperm.xlu0 %4978, %v4973
        %v4980 = vpop.permute.xlu0 %4979
        %4983 = vset.pattern.permute.xlu0 0
        %4984 = vperm.xlu0 %4983, %v4974
        %v4985 = vpop.permute.xlu0 %4984
        %4988 = vset.pattern.permute.xlu0 0
        %4989 = vperm.xlu0 %4988, %v4975
        %v4990 = vpop.permute.xlu0 %4989
        %4993 = vset.pattern.permute.xlu0 0
        %4994 = vperm.xlu0 %4993, %v4976
        %v4995 = vpop.permute.xlu0 %4994
        %v4997 = vadd.f32 %v4969, %v4980
        %v4998 = vadd.f32 %v4970, %v4985
        %v4999 = vadd.f32 %v4971, %v4990
        %v5000 = vadd.f32 %v4972, %v4995
        %v5001 = vld [vmem:[#allocation14] sm:$0xff]
        %v5002 = vld [vmem:[#allocation14 + $0x8] sm:$0xff]
        %v5003 = vld [vmem:[#allocation14 + $0x10] sm:$0xff]
        %v5004 = vld [vmem:[#allocation14 + $0x18] sm:$0xff]
        %v5005 = vld [vmem:[%s41] sm:$0xff]
        %v5006 = vld [vmem:[%s41 + $0x8] sm:$0xff]
        %v5007 = vld [vmem:[%s41 + $0x10] sm:$0xff]
        %v5008 = vld [vmem:[%s41 + $0x18] sm:$0xff]
        %5010 = vset.pattern.permute.xlu0 0
        %5011 = vperm.xlu0 %5010, %v5005
        %v5012 = vpop.permute.xlu0 %5011
        %5015 = vset.pattern.permute.xlu0 0
        %5016 = vperm.xlu0 %5015, %v5006
        %v5017 = vpop.permute.xlu0 %5016
        %5020 = vset.pattern.permute.xlu0 0
        %5021 = vperm.xlu0 %5020, %v5007
        %v5022 = vpop.permute.xlu0 %5021
        %5025 = vset.pattern.permute.xlu0 0
        %5026 = vperm.xlu0 %5025, %v5008
        %v5027 = vpop.permute.xlu0 %5026
        %v5030 = vsel %vm1669, %v5001, 0
        %v5033 = vsel %vm1669, %v5002, 0
        %v5036 = vsel %vm1669, %v5003, 0
        %v5039 = vsel %vm1669, %v5004, 0
        %5041 = vmatprep.subr.mxu0 0.0
        %5042 = vmatpush1.msra.mxu0 %v4997
        %5043 = vmatprep.subr.mxu0 0.0
        %5044 = vmatpush1.msra.mxu0 %v4998
        %5045 = vmatprep.subr.mxu0 0.0
        %5046 = vmatpush1.msra.mxu0 %v4999
        %5047 = vmatprep.subr.mxu0 0.0
        %5048 = vmatpush1.msra.mxu0 %v5000
        %5049 = vmatprep.subr.mxu0 0.0
        %5050 = vmatpush1.msra.mxu0 0.0
        %5051 = vmatprep.subr.mxu0 0.0
        %5052 = vmatpush1.msra.mxu0 0.0
        %5053 = vmatprep.subr.mxu0 0.0
        %5054 = vmatpush1.msra.mxu0 0.0
        %5055 = vmatprep.subr.mxu0 0.0
        %5056 = vmatpush1.msra.mxu0 0.0
        %5057 = vmatprep.subr.mxu0 0.0
        %5058 = vmatpush1.msra.mxu0 0.0
        %5059 = vmatprep.subr.mxu0 0.0
        %5060 = vmatpush1.msra.mxu0 0.0
        %5061 = vmatprep.subr.mxu0 0.0
        %5062 = vmatpush1.msra.mxu0 0.0
        %5063 = vmatprep.subr.mxu0 0.0
        %5064 = vmatpush1.msra.mxu0 0.0
        %5065 = vmatprep.subr.mxu0 0.0
        %5066 = vmatpush1.msra.mxu0 0.0
        %5067 = vmatprep.subr.mxu0 0.0
        %5068 = vmatpush1.msra.mxu0 0.0
        %5069 = vmatprep.subr.mxu0 0.0
        %5070 = vmatpush1.msra.mxu0 0.0
        %5071 = vmatprep.subr.mxu0 0.0
        %5072 = vmatpush1.msra.mxu0 0.0
        %5073 = vmatprep.subr.mxu0 0.0
        %5074 = vmatpush1.msra.mxu0 0.0
        %5075 = vmatprep.subr.mxu0 0.0
        %5076 = vmatpush1.msra.mxu0 0.0
        %5077 = vmatprep.subr.mxu0 0.0
        %5078 = vmatpush1.msra.mxu0 0.0
        %5079 = vmatprep.subr.mxu0 0.0
        %5080 = vmatpush1.msra.mxu0 0.0
        %5081 = vmatprep.subr.mxu0 0.0
        %5082 = vmatpush1.msra.mxu0 0.0
        %5083 = vmatprep.subr.mxu0 0.0
        %5084 = vmatpush1.msra.mxu0 0.0
        %5085 = vmatprep.subr.mxu0 0.0
        %5086 = vmatpush1.msra.mxu0 0.0
        %5087 = vmatprep.subr.mxu0 0.0
        %5088 = vmatpush1.msra.mxu0 0.0
        %5089 = vmatprep.subr.mxu0 0.0
        %5090 = vmatpush1.msra.mxu0 0.0
        %5091 = vmatprep.subr.mxu0 0.0
        %5092 = vmatpush1.msra.mxu0 0.0
        %5093 = vmatprep.subr.mxu0 0.0
        %5094 = vmatpush1.msra.mxu0 0.0
        %5095 = vmatprep.subr.mxu0 0.0
        %5096 = vmatpush1.msra.mxu0 0.0
        %5097 = vmatprep.subr.mxu0 0.0
        %5098 = vmatpush1.msra.mxu0 0.0
        %5099 = vmatprep.subr.mxu0 0.0
        %5100 = vmatpush1.msra.mxu0 0.0
        %5101 = vmatprep.subr.mxu0 0.0
        %5102 = vmatpush1.msra.mxu0 0.0
        %5103 = vmatprep.subr.mxu0 0.0
        %5104 = vmatpush1.msra.mxu0 0.0
        %5105 = vmatprep.mubr.f32.mxu0 0.0
        %5106 = vmatmul.mubr.f32.gmra.mrb[0].mxu0 %v5030
        %v5107 = vpop.f32.mrb[0].mxu0
        %v5108 = vadd.f32 %v5012, %v5107
        %v5109 = vpop.f32.mrb[0].mxu0
        %5110 = vmatprep.mubr.f32.mxu0 0.0
        %5111 = vmatmul.mubr.f32.gmra.mrb[0].mxu0 %v5033
        %v5112 = vpop.f32.mrb[0].mxu0
        %v5113 = vadd.f32 %v5017, %v5112
        %v5114 = vpop.f32.mrb[0].mxu0
        %5115 = vmatprep.mubr.f32.mxu0 0.0
        %5116 = vmatmul.mubr.f32.gmra.mrb[0].mxu0 %v5036
        %v5117 = vpop.f32.mrb[0].mxu0
        %v5118 = vadd.f32 %v5022, %v5117
        %v5119 = vpop.f32.mrb[0].mxu0
        %5120 = vmatprep.mubr.f32.mxu0 0.0
        %5121 = vmatmul.mubr.f32.gmra.mrb[0].mxu0 %v5039
        %v5122 = vpop.f32.mrb[0].mxu0
        %v5123 = vadd.f32 %v5027, %v5122
        %v5124 = vpop.f32.mrb[0].mxu0
        %5125 = vdwg.mxu0
        %v5126 = vld [vmem:[%s35] sm:$0xff]
        %v5127 = vld [vmem:[%s35 + $0x8] sm:$0xff]
        %v5128 = vld [vmem:[%s35 + $0x10] sm:$0xff]
        %v5129 = vld [vmem:[%s35 + $0x18] sm:$0xff]
        %v5131 = vsel %vm1669, %v5126, 0
        %v5134 = vsel %vm1669, %v5127, 0
        %v5137 = vsel %vm1669, %v5128, 0
        %v5140 = vsel %vm1669, %v5129, 0
        %5142 = vmatprep.subr.mxu0 0.0
        %5143 = vmatpush1.msra.mxu0 %v1565
        %5144 = vmatprep.subr.mxu0 0.0
        %5145 = vmatpush1.msra.mxu0 %v1570
        %5146 = vmatprep.subr.mxu0 0.0
        %5147 = vmatpush1.msra.mxu0 %v1575
        %5148 = vmatprep.subr.mxu0 0.0
        %5149 = vmatpush1.msra.mxu0 %v1580
        %5150 = vmatprep.subr.mxu0 0.0
        %5151 = vmatpush1.msra.mxu0 0.0
        %5152 = vmatprep.subr.mxu0 0.0
        %5153 = vmatpush1.msra.mxu0 0.0
        %5154 = vmatprep.subr.mxu0 0.0
        %5155 = vmatpush1.msra.mxu0 0.0
        %5156 = vmatprep.subr.mxu0 0.0
        %5157 = vmatpush1.msra.mxu0 0.0
        %5158 = vmatprep.subr.mxu0 0.0
        %5159 = vmatpush1.msra.mxu0 0.0
        %5160 = vmatprep.subr.mxu0 0.0
        %5161 = vmatpush1.msra.mxu0 0.0
        %5162 = vmatprep.subr.mxu0 0.0
        %5163 = vmatpush1.msra.mxu0 0.0
        %5164 = vmatprep.subr.mxu0 0.0
        %5165 = vmatpush1.msra.mxu0 0.0
        %5166 = vmatprep.subr.mxu0 0.0
        %5167 = vmatpush1.msra.mxu0 0.0
        %5168 = vmatprep.subr.mxu0 0.0
        %5169 = vmatpush1.msra.mxu0 0.0
        %5170 = vmatprep.subr.mxu0 0.0
        %5171 = vmatpush1.msra.mxu0 0.0
        %5172 = vmatprep.subr.mxu0 0.0
        %5173 = vmatpush1.msra.mxu0 0.0
        %5174 = vmatprep.subr.mxu0 0.0
        %5175 = vmatpush1.msra.mxu0 0.0
        %5176 = vmatprep.subr.mxu0 0.0
        %5177 = vmatpush1.msra.mxu0 0.0
        %5178 = vmatprep.subr.mxu0 0.0
        %5179 = vmatpush1.msra.mxu0 0.0
        %5180 = vmatprep.subr.mxu0 0.0
        %5181 = vmatpush1.msra.mxu0 0.0
        %5182 = vmatprep.subr.mxu0 0.0
        %5183 = vmatpush1.msra.mxu0 0.0
        %5184 = vmatprep.subr.mxu0 0.0
        %5185 = vmatpush1.msra.mxu0 0.0
        %5186 = vmatprep.subr.mxu0 0.0
        %5187 = vmatpush1.msra.mxu0 0.0
        %5188 = vmatprep.subr.mxu0 0.0
        %5189 = vmatpush1.msra.mxu0 0.0
        %5190 = vmatprep.subr.mxu0 0.0
        %5191 = vmatpush1.msra.mxu0 0.0
        %5192 = vmatprep.subr.mxu0 0.0
        %5193 = vmatpush1.msra.mxu0 0.0
        %5194 = vmatprep.subr.mxu0 0.0
        %5195 = vmatpush1.msra.mxu0 0.0
        %5196 = vmatprep.subr.mxu0 0.0
        %5197 = vmatpush1.msra.mxu0 0.0
        %5198 = vmatprep.subr.mxu0 0.0
        %5199 = vmatpush1.msra.mxu0 0.0
        %5200 = vmatprep.subr.mxu0 0.0
        %5201 = vmatpush1.msra.mxu0 0.0
        %5202 = vmatprep.subr.mxu0 0.0
        %5203 = vmatpush1.msra.mxu0 0.0
        %5204 = vmatprep.subr.mxu0 0.0
        %5205 = vmatpush1.msra.mxu0 0.0
        %5206 = vmatprep.mubr.f32.mxu0 0.0
        %5207 = vmatmul.mubr.f32.gmra.mrb[0].mxu0 %v5131
        %v5208 = vpop.f32.mrb[0].mxu0
        %v5209 = vadd.f32 0.0, %v5208
        %v5210 = vpop.f32.mrb[0].mxu0
        %5211 = vmatprep.mubr.f32.mxu0 0.0
        %5212 = vmatmul.mubr.f32.gmra.mrb[0].mxu0 %v5134
        %v5213 = vpop.f32.mrb[0].mxu0
        %v5214 = vadd.f32 0.0, %v5213
        %v5215 = vpop.f32.mrb[0].mxu0
        %5216 = vmatprep.mubr.f32.mxu0 0.0
        %5217 = vmatmul.mubr.f32.gmra.mrb[0].mxu0 %v5137
        %v5218 = vpop.f32.mrb[0].mxu0
        %v5219 = vadd.f32 0.0, %v5218
        %v5220 = vpop.f32.mrb[0].mxu0
        %5221 = vmatprep.mubr.f32.mxu0 0.0
        %5222 = vmatmul.mubr.f32.gmra.mrb[0].mxu0 %v5140
        %v5223 = vpop.f32.mrb[0].mxu0
        %v5224 = vadd.f32 0.0, %v5223
        %v5225 = vpop.f32.mrb[0].mxu0
        %5226 = vdwg.mxu0
        %5227 = vrot.lane.b32.xlu0 %v5209, 2
        %v5228 = vpop.permute.xlu0 %5227
        %5229 = vrot.lane.b32.xlu0 %v5214, 2
        %v5230 = vpop.permute.xlu0 %5229
        %5231 = vrot.lane.b32.xlu0 %v5219, 2
        %v5232 = vpop.permute.xlu0 %5231
        %5233 = vrot.lane.b32.xlu0 %v5224, 2
        %v5234 = vpop.permute.xlu0 %5233
        %v5235 = vsel %vm2249, %v5228, 0.0
        %v5236 = vsel %vm2249, %v5230, 0.0
        %v5237 = vsel %vm2249, %v5232, 0.0
        %v5238 = vsel %vm2249, %v5234, 0.0
        %s5239 = scalar_lea.vmem %s35, 32
        %v5240 = vld [vmem:[%s5239] sm:$0xff]
        %v5241 = vld [vmem:[%s5239 + $0x8] sm:$0xff]
        %v5242 = vld [vmem:[%s5239 + $0x10] sm:$0xff]
        %v5243 = vld [vmem:[%s5239 + $0x18] sm:$0xff]
        %v5245 = vsel %vm1669, %v5240, 0
        %v5248 = vsel %vm1669, %v5241, 0
        %v5251 = vsel %vm1669, %v5242, 0
        %v5254 = vsel %vm1669, %v5243, 0
        %5256 = vmatprep.subr.mxu0 0.0
        %5257 = vmatpush1.msra.mxu0 %v1565
        %5258 = vmatprep.subr.mxu0 0.0
        %5259 = vmatpush1.msra.mxu0 %v1570
        %5260 = vmatprep.subr.mxu0 0.0
        %5261 = vmatpush1.msra.mxu0 %v1575
        %5262 = vmatprep.subr.mxu0 0.0
        %5263 = vmatpush1.msra.mxu0 %v1580
        %5264 = vmatprep.subr.mxu0 0.0
        %5265 = vmatpush1.msra.mxu0 0.0
        %5266 = vmatprep.subr.mxu0 0.0
        %5267 = vmatpush1.msra.mxu0 0.0
        %5268 = vmatprep.subr.mxu0 0.0
        %5269 = vmatpush1.msra.mxu0 0.0
        %5270 = vmatprep.subr.mxu0 0.0
        %5271 = vmatpush1.msra.mxu0 0.0
        %5272 = vmatprep.subr.mxu0 0.0
        %5273 = vmatpush1.msra.mxu0 0.0
        %5274 = vmatprep.subr.mxu0 0.0
        %5275 = vmatpush1.msra.mxu0 0.0
        %5276 = vmatprep.subr.mxu0 0.0
        %5277 = vmatpush1.msra.mxu0 0.0
        %5278 = vmatprep.subr.mxu0 0.0
        %5279 = vmatpush1.msra.mxu0 0.0
        %5280 = vmatprep.subr.mxu0 0.0
        %5281 = vmatpush1.msra.mxu0 0.0
        %5282 = vmatprep.subr.mxu0 0.0
        %5283 = vmatpush1.msra.mxu0 0.0
        %5284 = vmatprep.subr.mxu0 0.0
        %5285 = vmatpush1.msra.mxu0 0.0
        %5286 = vmatprep.subr.mxu0 0.0
        %5287 = vmatpush1.msra.mxu0 0.0
        %5288 = vmatprep.subr.mxu0 0.0
        %5289 = vmatpush1.msra.mxu0 0.0
        %5290 = vmatprep.subr.mxu0 0.0
        %5291 = vmatpush1.msra.mxu0 0.0
        %5292 = vmatprep.subr.mxu0 0.0
        %5293 = vmatpush1.msra.mxu0 0.0
        %5294 = vmatprep.subr.mxu0 0.0
        %5295 = vmatpush1.msra.mxu0 0.0
        %5296 = vmatprep.subr.mxu0 0.0
        %5297 = vmatpush1.msra.mxu0 0.0
        %5298 = vmatprep.subr.mxu0 0.0
        %5299 = vmatpush1.msra.mxu0 0.0
        %5300 = vmatprep.subr.mxu0 0.0
        %5301 = vmatpush1.msra.mxu0 0.0
        %5302 = vmatprep.subr.mxu0 0.0
        %5303 = vmatpush1.msra.mxu0 0.0
        %5304 = vmatprep.subr.mxu0 0.0
        %5305 = vmatpush1.msra.mxu0 0.0
        %5306 = vmatprep.subr.mxu0 0.0
        %5307 = vmatpush1.msra.mxu0 0.0
        %5308 = vmatprep.subr.mxu0 0.0
        %5309 = vmatpush1.msra.mxu0 0.0
        %5310 = vmatprep.subr.mxu0 0.0
        %5311 = vmatpush1.msra.mxu0 0.0
        %5312 = vmatprep.subr.mxu0 0.0
        %5313 = vmatpush1.msra.mxu0 0.0
        %5314 = vmatprep.subr.mxu0 0.0
        %5315 = vmatpush1.msra.mxu0 0.0
        %5316 = vmatprep.subr.mxu0 0.0
        %5317 = vmatpush1.msra.mxu0 0.0
        %5318 = vmatprep.subr.mxu0 0.0
        %5319 = vmatpush1.msra.mxu0 0.0
        %5320 = vmatprep.mubr.f32.mxu0 0.0
        %5321 = vmatmul.mubr.f32.gmra.mrb[0].mxu0 %v5245
        %v5322 = vpop.f32.mrb[0].mxu0
        %v5323 = vadd.f32 0.0, %v5322
        %v5324 = vpop.f32.mrb[0].mxu0
        %5325 = vmatprep.mubr.f32.mxu0 0.0
        %5326 = vmatmul.mubr.f32.gmra.mrb[0].mxu0 %v5248
        %v5327 = vpop.f32.mrb[0].mxu0
        %v5328 = vadd.f32 0.0, %v5327
        %v5329 = vpop.f32.mrb[0].mxu0
        %5330 = vmatprep.mubr.f32.mxu0 0.0
        %5331 = vmatmul.mubr.f32.gmra.mrb[0].mxu0 %v5251
        %v5332 = vpop.f32.mrb[0].mxu0
        %v5333 = vadd.f32 0.0, %v5332
        %v5334 = vpop.f32.mrb[0].mxu0
        %5335 = vmatprep.mubr.f32.mxu0 0.0
        %5336 = vmatmul.mubr.f32.gmra.mrb[0].mxu0 %v5254
        %v5337 = vpop.f32.mrb[0].mxu0
        %v5338 = vadd.f32 0.0, %v5337
        %v5339 = vpop.f32.mrb[0].mxu0
        %5340 = vdwg.mxu0
        %5341 = vrot.lane.b32.xlu0 %v5323, 1
        %v5342 = vpop.permute.xlu0 %5341
        %5343 = vrot.lane.b32.xlu0 %v5328, 1
        %v5344 = vpop.permute.xlu0 %5343
        %5345 = vrot.lane.b32.xlu0 %v5333, 1
        %v5346 = vpop.permute.xlu0 %5345
        %5347 = vrot.lane.b32.xlu0 %v5338, 1
        %v5348 = vpop.permute.xlu0 %5347
        %v5349 = vsel %vm1767, %v5342, 0.0
        %v5350 = vsel %vm1767, %v5344, 0.0
        %v5351 = vsel %vm1767, %v5346, 0.0
        %v5352 = vsel %vm1767, %v5348, 0.0
        %v5353 = vadd.f32 %v5235, %v5349
        %v5354 = vadd.f32 %v5236, %v5350
        %v5355 = vadd.f32 %v5237, %v5351
        %v5356 = vadd.f32 %v5238, %v5352
        %s5357 = scalar_lea.vmem %s35, 64
        %v5358 = vld [vmem:[%s5357] sm:$0xff]
        %v5359 = vld [vmem:[%s5357 + $0x8] sm:$0xff]
        %v5360 = vld [vmem:[%s5357 + $0x10] sm:$0xff]
        %v5361 = vld [vmem:[%s5357 + $0x18] sm:$0xff]
        %v5363 = vsel %vm1669, %v5358, 0
        %v5366 = vsel %vm1669, %v5359, 0
        %v5369 = vsel %vm1669, %v5360, 0
        %v5372 = vsel %vm1669, %v5361, 0
        %5374 = vmatprep.subr.mxu0 0.0
        %5375 = vmatpush1.msra.mxu0 %v1565
        %5376 = vmatprep.subr.mxu0 0.0
        %5377 = vmatpush1.msra.mxu0 %v1570
        %5378 = vmatprep.subr.mxu0 0.0
        %5379 = vmatpush1.msra.mxu0 %v1575
        %5380 = vmatprep.subr.mxu0 0.0
        %5381 = vmatpush1.msra.mxu0 %v1580
        %5382 = vmatprep.subr.mxu0 0.0
        %5383 = vmatpush1.msra.mxu0 0.0
        %5384 = vmatprep.subr.mxu0 0.0
        %5385 = vmatpush1.msra.mxu0 0.0
        %5386 = vmatprep.subr.mxu0 0.0
        %5387 = vmatpush1.msra.mxu0 0.0
        %5388 = vmatprep.subr.mxu0 0.0
        %5389 = vmatpush1.msra.mxu0 0.0
        %5390 = vmatprep.subr.mxu0 0.0
        %5391 = vmatpush1.msra.mxu0 0.0
        %5392 = vmatprep.subr.mxu0 0.0
        %5393 = vmatpush1.msra.mxu0 0.0
        %5394 = vmatprep.subr.mxu0 0.0
        %5395 = vmatpush1.msra.mxu0 0.0
        %5396 = vmatprep.subr.mxu0 0.0
        %5397 = vmatpush1.msra.mxu0 0.0
        %5398 = vmatprep.subr.mxu0 0.0
        %5399 = vmatpush1.msra.mxu0 0.0
        %5400 = vmatprep.subr.mxu0 0.0
        %5401 = vmatpush1.msra.mxu0 0.0
        %5402 = vmatprep.subr.mxu0 0.0
        %5403 = vmatpush1.msra.mxu0 0.0
        %5404 = vmatprep.subr.mxu0 0.0
        %5405 = vmatpush1.msra.mxu0 0.0
        %5406 = vmatprep.subr.mxu0 0.0
        %5407 = vmatpush1.msra.mxu0 0.0
        %5408 = vmatprep.subr.mxu0 0.0
        %5409 = vmatpush1.msra.mxu0 0.0
        %5410 = vmatprep.subr.mxu0 0.0
        %5411 = vmatpush1.msra.mxu0 0.0
        %5412 = vmatprep.subr.mxu0 0.0
        %5413 = vmatpush1.msra.mxu0 0.0
        %5414 = vmatprep.subr.mxu0 0.0
        %5415 = vmatpush1.msra.mxu0 0.0
        %5416 = vmatprep.subr.mxu0 0.0
        %5417 = vmatpush1.msra.mxu0 0.0
        %5418 = vmatprep.subr.mxu0 0.0
        %5419 = vmatpush1.msra.mxu0 0.0
        %5420 = vmatprep.subr.mxu0 0.0
        %5421 = vmatpush1.msra.mxu0 0.0
        %5422 = vmatprep.subr.mxu0 0.0
        %5423 = vmatpush1.msra.mxu0 0.0
        %5424 = vmatprep.subr.mxu0 0.0
        %5425 = vmatpush1.msra.mxu0 0.0
        %5426 = vmatprep.subr.mxu0 0.0
        %5427 = vmatpush1.msra.mxu0 0.0
        %5428 = vmatprep.subr.mxu0 0.0
        %5429 = vmatpush1.msra.mxu0 0.0
        %5430 = vmatprep.subr.mxu0 0.0
        %5431 = vmatpush1.msra.mxu0 0.0
        %5432 = vmatprep.subr.mxu0 0.0
        %5433 = vmatpush1.msra.mxu0 0.0
        %5434 = vmatprep.subr.mxu0 0.0
        %5435 = vmatpush1.msra.mxu0 0.0
        %5436 = vmatprep.subr.mxu0 0.0
        %5437 = vmatpush1.msra.mxu0 0.0
        %5438 = vmatprep.mubr.f32.mxu0 0.0
        %5439 = vmatmul.mubr.f32.gmra.mrb[0].mxu0 %v5363
        %v5440 = vpop.f32.mrb[0].mxu0
        %v5441 = vadd.f32 0.0, %v5440
        %v5442 = vpop.f32.mrb[0].mxu0
        %5443 = vmatprep.mubr.f32.mxu0 0.0
        %5444 = vmatmul.mubr.f32.gmra.mrb[0].mxu0 %v5366
        %v5445 = vpop.f32.mrb[0].mxu0
        %v5446 = vadd.f32 0.0, %v5445
        %v5447 = vpop.f32.mrb[0].mxu0
        %5448 = vmatprep.mubr.f32.mxu0 0.0
        %5449 = vmatmul.mubr.f32.gmra.mrb[0].mxu0 %v5369
        %v5450 = vpop.f32.mrb[0].mxu0
        %v5451 = vadd.f32 0.0, %v5450
        %v5452 = vpop.f32.mrb[0].mxu0
        %5453 = vmatprep.mubr.f32.mxu0 0.0
        %5454 = vmatmul.mubr.f32.gmra.mrb[0].mxu0 %v5372
        %v5455 = vpop.f32.mrb[0].mxu0
        %v5456 = vadd.f32 0.0, %v5455
        %v5457 = vpop.f32.mrb[0].mxu0
        %5458 = vdwg.mxu0
        %v5459 = vadd.f32 %v5353, %v5441
        %v5460 = vadd.f32 %v5354, %v5446
        %v5461 = vadd.f32 %v5355, %v5451
        %v5462 = vadd.f32 %v5356, %v5456
        %s5463 = scalar_lea.vmem %s35, 96
        %v5464 = vld [vmem:[%s5463] sm:$0xff]
        %v5465 = vld [vmem:[%s5463 + $0x8] sm:$0xff]
        %v5466 = vld [vmem:[%s5463 + $0x10] sm:$0xff]
        %v5467 = vld [vmem:[%s5463 + $0x18] sm:$0xff]
        %v5469 = vsel %vm1669, %v5464, 0
        %v5472 = vsel %vm1669, %v5465, 0
        %v5475 = vsel %vm1669, %v5466, 0
        %v5478 = vsel %vm1669, %v5467, 0
        %5480 = vmatprep.subr.mxu0 0.0
        %5481 = vmatpush1.msra.mxu0 %v1565
        %5482 = vmatprep.subr.mxu0 0.0
        %5483 = vmatpush1.msra.mxu0 %v1570
        %5484 = vmatprep.subr.mxu0 0.0
        %5485 = vmatpush1.msra.mxu0 %v1575
        %5486 = vmatprep.subr.mxu0 0.0
        %5487 = vmatpush1.msra.mxu0 %v1580
        %5488 = vmatprep.subr.mxu0 0.0
        %5489 = vmatpush1.msra.mxu0 0.0
        %5490 = vmatprep.subr.mxu0 0.0
        %5491 = vmatpush1.msra.mxu0 0.0
        %5492 = vmatprep.subr.mxu0 0.0
        %5493 = vmatpush1.msra.mxu0 0.0
        %5494 = vmatprep.subr.mxu0 0.0
        %5495 = vmatpush1.msra.mxu0 0.0
        %5496 = vmatprep.subr.mxu0 0.0
        %5497 = vmatpush1.msra.mxu0 0.0
        %5498 = vmatprep.subr.mxu0 0.0
        %5499 = vmatpush1.msra.mxu0 0.0
        %5500 = vmatprep.subr.mxu0 0.0
        %5501 = vmatpush1.msra.mxu0 0.0
        %5502 = vmatprep.subr.mxu0 0.0
        %5503 = vmatpush1.msra.mxu0 0.0
        %5504 = vmatprep.subr.mxu0 0.0
        %5505 = vmatpush1.msra.mxu0 0.0
        %5506 = vmatprep.subr.mxu0 0.0
        %5507 = vmatpush1.msra.mxu0 0.0
        %5508 = vmatprep.subr.mxu0 0.0
        %5509 = vmatpush1.msra.mxu0 0.0
        %5510 = vmatprep.subr.mxu0 0.0
        %5511 = vmatpush1.msra.mxu0 0.0
        %5512 = vmatprep.subr.mxu0 0.0
        %5513 = vmatpush1.msra.mxu0 0.0
        %5514 = vmatprep.subr.mxu0 0.0
        %5515 = vmatpush1.msra.mxu0 0.0
        %5516 = vmatprep.subr.mxu0 0.0
        %5517 = vmatpush1.msra.mxu0 0.0
        %5518 = vmatprep.subr.mxu0 0.0
        %5519 = vmatpush1.msra.mxu0 0.0
        %5520 = vmatprep.subr.mxu0 0.0
        %5521 = vmatpush1.msra.mxu0 0.0
        %5522 = vmatprep.subr.mxu0 0.0
        %5523 = vmatpush1.msra.mxu0 0.0
        %5524 = vmatprep.subr.mxu0 0.0
        %5525 = vmatpush1.msra.mxu0 0.0
        %5526 = vmatprep.subr.mxu0 0.0
        %5527 = vmatpush1.msra.mxu0 0.0
        %5528 = vmatprep.subr.mxu0 0.0
        %5529 = vmatpush1.msra.mxu0 0.0
        %5530 = vmatprep.subr.mxu0 0.0
        %5531 = vmatpush1.msra.mxu0 0.0
        %5532 = vmatprep.subr.mxu0 0.0
        %5533 = vmatpush1.msra.mxu0 0.0
        %5534 = vmatprep.subr.mxu0 0.0
        %5535 = vmatpush1.msra.mxu0 0.0
        %5536 = vmatprep.subr.mxu0 0.0
        %5537 = vmatpush1.msra.mxu0 0.0
        %5538 = vmatprep.subr.mxu0 0.0
        %5539 = vmatpush1.msra.mxu0 0.0
        %5540 = vmatprep.subr.mxu0 0.0
        %5541 = vmatpush1.msra.mxu0 0.0
        %5542 = vmatprep.subr.mxu0 0.0
        %5543 = vmatpush1.msra.mxu0 0.0
        %5544 = vmatprep.mubr.f32.mxu0 0.0
        %5545 = vmatmul.mubr.f32.gmra.mrb[0].mxu0 %v5469
        %v5546 = vpop.f32.mrb[0].mxu0
        %v5547 = vadd.f32 0.0, %v5546
        %v5548 = vpop.f32.mrb[0].mxu0
        %5549 = vmatprep.mubr.f32.mxu0 0.0
        %5550 = vmatmul.mubr.f32.gmra.mrb[0].mxu0 %v5472
        %v5551 = vpop.f32.mrb[0].mxu0
        %v5552 = vadd.f32 0.0, %v5551
        %v5553 = vpop.f32.mrb[0].mxu0
        %5554 = vmatprep.mubr.f32.mxu0 0.0
        %5555 = vmatmul.mubr.f32.gmra.mrb[0].mxu0 %v5475
        %v5556 = vpop.f32.mrb[0].mxu0
        %v5557 = vadd.f32 0.0, %v5556
        %v5558 = vpop.f32.mrb[0].mxu0
        %5559 = vmatprep.mubr.f32.mxu0 0.0
        %5560 = vmatmul.mubr.f32.gmra.mrb[0].mxu0 %v5478
        %v5561 = vpop.f32.mrb[0].mxu0
        %v5562 = vadd.f32 0.0, %v5561
        %v5563 = vpop.f32.mrb[0].mxu0
        %5564 = vdwg.mxu0
        %5565 = vrot.lane.b32.xlu0 %v5547, 127
        %v5566 = vpop.permute.xlu0 %5565
        %5567 = vrot.lane.b32.xlu0 %v5552, 127
        %v5568 = vpop.permute.xlu0 %5567
        %5569 = vrot.lane.b32.xlu0 %v5557, 127
        %v5570 = vpop.permute.xlu0 %5569
        %5571 = vrot.lane.b32.xlu0 %v5562, 127
        %v5572 = vpop.permute.xlu0 %5571
        %v5573 = vsel %vm1988, %v5566, 0.0
        %v5574 = vsel %vm1988, %v5568, 0.0
        %v5575 = vsel %vm1988, %v5570, 0.0
        %v5576 = vsel %vm1988, %v5572, 0.0
        %v5577 = vadd.f32 %v5459, %v5573
        %v5578 = vadd.f32 %v5460, %v5574
        %v5579 = vadd.f32 %v5461, %v5575
        %v5580 = vadd.f32 %v5462, %v5576
        %s5581 = scalar_lea.vmem %s35, 128
        %v5582 = vld [vmem:[%s5581] sm:$0xff]
        %v5583 = vld [vmem:[%s5581 + $0x8] sm:$0xff]
        %v5584 = vld [vmem:[%s5581 + $0x10] sm:$0xff]
        %v5585 = vld [vmem:[%s5581 + $0x18] sm:$0xff]
        %v5587 = vsel %vm1669, %v5582, 0
        %v5590 = vsel %vm1669, %v5583, 0
        %v5593 = vsel %vm1669, %v5584, 0
        %v5596 = vsel %vm1669, %v5585, 0
        %5598 = vmatprep.subr.mxu0 0.0
        %5599 = vmatpush1.msra.mxu0 %v1565
        %5600 = vmatprep.subr.mxu0 0.0
        %5601 = vmatpush1.msra.mxu0 %v1570
        %5602 = vmatprep.subr.mxu0 0.0
        %5603 = vmatpush1.msra.mxu0 %v1575
        %5604 = vmatprep.subr.mxu0 0.0
        %5605 = vmatpush1.msra.mxu0 %v1580
        %5606 = vmatprep.subr.mxu0 0.0
        %5607 = vmatpush1.msra.mxu0 0.0
        %5608 = vmatprep.subr.mxu0 0.0
        %5609 = vmatpush1.msra.mxu0 0.0
        %5610 = vmatprep.subr.mxu0 0.0
        %5611 = vmatpush1.msra.mxu0 0.0
        %5612 = vmatprep.subr.mxu0 0.0
        %5613 = vmatpush1.msra.mxu0 0.0
        %5614 = vmatprep.subr.mxu0 0.0
        %5615 = vmatpush1.msra.mxu0 0.0
        %5616 = vmatprep.subr.mxu0 0.0
        %5617 = vmatpush1.msra.mxu0 0.0
        %5618 = vmatprep.subr.mxu0 0.0
        %5619 = vmatpush1.msra.mxu0 0.0
        %5620 = vmatprep.subr.mxu0 0.0
        %5621 = vmatpush1.msra.mxu0 0.0
        %5622 = vmatprep.subr.mxu0 0.0
        %5623 = vmatpush1.msra.mxu0 0.0
        %5624 = vmatprep.subr.mxu0 0.0
        %5625 = vmatpush1.msra.mxu0 0.0
        %5626 = vmatprep.subr.mxu0 0.0
        %5627 = vmatpush1.msra.mxu0 0.0
        %5628 = vmatprep.subr.mxu0 0.0
        %5629 = vmatpush1.msra.mxu0 0.0
        %5630 = vmatprep.subr.mxu0 0.0
        %5631 = vmatpush1.msra.mxu0 0.0
        %5632 = vmatprep.subr.mxu0 0.0
        %5633 = vmatpush1.msra.mxu0 0.0
        %5634 = vmatprep.subr.mxu0 0.0
        %5635 = vmatpush1.msra.mxu0 0.0
        %5636 = vmatprep.subr.mxu0 0.0
        %5637 = vmatpush1.msra.mxu0 0.0
        %5638 = vmatprep.subr.mxu0 0.0
        %5639 = vmatpush1.msra.mxu0 0.0
        %5640 = vmatprep.subr.mxu0 0.0
        %5641 = vmatpush1.msra.mxu0 0.0
        %5642 = vmatprep.subr.mxu0 0.0
        %5643 = vmatpush1.msra.mxu0 0.0
        %5644 = vmatprep.subr.mxu0 0.0
        %5645 = vmatpush1.msra.mxu0 0.0
        %5646 = vmatprep.subr.mxu0 0.0
        %5647 = vmatpush1.msra.mxu0 0.0
        %5648 = vmatprep.subr.mxu0 0.0
        %5649 = vmatpush1.msra.mxu0 0.0
        %5650 = vmatprep.subr.mxu0 0.0
        %5651 = vmatpush1.msra.mxu0 0.0
        %5652 = vmatprep.subr.mxu0 0.0
        %5653 = vmatpush1.msra.mxu0 0.0
        %5654 = vmatprep.subr.mxu0 0.0
        %5655 = vmatpush1.msra.mxu0 0.0
        %5656 = vmatprep.subr.mxu0 0.0
        %5657 = vmatpush1.msra.mxu0 0.0
        %5658 = vmatprep.subr.mxu0 0.0
        %5659 = vmatpush1.msra.mxu0 0.0
        %5660 = vmatprep.subr.mxu0 0.0
        %5661 = vmatpush1.msra.mxu0 0.0
        %5662 = vmatprep.mubr.f32.mxu0 0.0
        %5663 = vmatmul.mubr.f32.gmra.mrb[0].mxu0 %v5587
        %v5664 = vpop.f32.mrb[0].mxu0
        %v5665 = vadd.f32 0.0, %v5664
        %v5666 = vpop.f32.mrb[0].mxu0
        %5667 = vmatprep.mubr.f32.mxu0 0.0
        %5668 = vmatmul.mubr.f32.gmra.mrb[0].mxu0 %v5590
        %v5669 = vpop.f32.mrb[0].mxu0
        %v5670 = vadd.f32 0.0, %v5669
        %v5671 = vpop.f32.mrb[0].mxu0
        %5672 = vmatprep.mubr.f32.mxu0 0.0
        %5673 = vmatmul.mubr.f32.gmra.mrb[0].mxu0 %v5593
        %v5674 = vpop.f32.mrb[0].mxu0
        %v5675 = vadd.f32 0.0, %v5674
        %v5676 = vpop.f32.mrb[0].mxu0
        %5677 = vmatprep.mubr.f32.mxu0 0.0
        %5678 = vmatmul.mubr.f32.gmra.mrb[0].mxu0 %v5596
        %v5679 = vpop.f32.mrb[0].mxu0
        %v5680 = vadd.f32 0.0, %v5679
        %v5681 = vpop.f32.mrb[0].mxu0
        %5682 = vdwg.mxu0
        %5683 = vrot.lane.b32.xlu0 %v5665, 126
        %v5684 = vpop.permute.xlu0 %5683
        %5685 = vrot.lane.b32.xlu0 %v5670, 126
        %v5686 = vpop.permute.xlu0 %5685
        %5687 = vrot.lane.b32.xlu0 %v5675, 126
        %v5688 = vpop.permute.xlu0 %5687
        %5689 = vrot.lane.b32.xlu0 %v5680, 126
        %v5690 = vpop.permute.xlu0 %5689
        %v5691 = vsel %vm2474, %v5684, 0.0
        %v5692 = vsel %vm2474, %v5686, 0.0
        %v5693 = vsel %vm2474, %v5688, 0.0
        %v5694 = vsel %vm2474, %v5690, 0.0
        %v5695 = vadd.f32 %v5577, %v5691
        %v5696 = vadd.f32 %v5578, %v5692
        %v5697 = vadd.f32 %v5579, %v5693
        %v5698 = vadd.f32 %v5580, %v5694
        %v5699 = vld [vmem:[%s37] sm:$0xff]
        %v5700 = vld [vmem:[%s37 + $0x8] sm:$0xff]
        %v5701 = vld [vmem:[%s37 + $0x10] sm:$0xff]
        %v5702 = vld [vmem:[%s37 + $0x18] sm:$0xff]
        %5704 = vset.pattern.permute.xlu0 0
        %5705 = vperm.xlu0 %5704, %v5699
        %v5706 = vpop.permute.xlu0 %5705
        %5709 = vset.pattern.permute.xlu0 0
        %5710 = vperm.xlu0 %5709, %v5700
        %v5711 = vpop.permute.xlu0 %5710
        %5714 = vset.pattern.permute.xlu0 0
        %5715 = vperm.xlu0 %5714, %v5701
        %v5716 = vpop.permute.xlu0 %5715
        %5719 = vset.pattern.permute.xlu0 0
        %5720 = vperm.xlu0 %5719, %v5702
        %v5721 = vpop.permute.xlu0 %5720
        %v5723 = vadd.f32 %v5695, %v5706
        %v5724 = vadd.f32 %v5696, %v5711
        %v5725 = vadd.f32 %v5697, %v5716
        %v5726 = vadd.f32 %v5698, %v5721
        %v5727 = vmul.f32 %v5108, %v5723
        %v5728 = vmul.f32 %v5113, %v5724
        %v5729 = vmul.f32 %v5118, %v5725
        %v5730 = vmul.f32 %v5123, %v5726
        %v5731 = vmul.f32 %v1625, %v5727
        %v5732 = vmul.f32 %v1630, %v5728
        %v5733 = vmul.f32 %v1635, %v5729
        %v5734 = vmul.f32 %v1640, %v5730
        %v5735 = vld [vmem:[%s43] sm:$0xff]
        %v5736 = vld [vmem:[%s43 + $0x8] sm:$0xff]
        %v5737 = vld [vmem:[%s43 + $0x10] sm:$0xff]
        %v5738 = vld [vmem:[%s43 + $0x18] sm:$0xff]
        %v5739 = vld [vmem:[%s43 + $0x20] sm:$0xff]
        %v5740 = vld [vmem:[%s43 + $0x28] sm:$0xff]
        %v5741 = vld [vmem:[%s43 + $0x30] sm:$0xff]
        %v5742 = vld [vmem:[%s43 + $0x38] sm:$0xff]
        %v5743 = vld [vmem:[%s43 + $0x40] sm:$0xff]
        %v5744 = vld [vmem:[%s43 + $0x48] sm:$0xff]
        %v5745 = vld [vmem:[%s43 + $0x50] sm:$0xff]
        %v5746 = vld [vmem:[%s43 + $0x58] sm:$0xff]
        %v5748 = vsel %vm1669, %v5735, 0
        %v5751 = vsel %vm1669, %v5736, 0
        %v5754 = vsel %vm1669, %v5737, 0
        %v5757 = vsel %vm1669, %v5738, 0
        %v5760 = vsel %vm1669, %v5739, 0
        %v5763 = vsel %vm1669, %v5740, 0
        %v5766 = vsel %vm1669, %v5741, 0
        %v5769 = vsel %vm1669, %v5742, 0
        %v5772 = vsel %vm1669, %v5743, 0
        %v5775 = vsel %vm1669, %v5744, 0
        %v5778 = vsel %vm1669, %v5745, 0
        %v5781 = vsel %vm1669, %v5746, 0
        %5783 = vmatprep.subr.mxu0 0.0
        %5784 = vmatpush1.msra.mxu0 %v5731
        %5785 = vmatprep.subr.mxu0 0.0
        %5786 = vmatpush1.msra.mxu0 %v5732
        %5787 = vmatprep.subr.mxu0 0.0
        %5788 = vmatpush1.msra.mxu0 %v5733
        %5789 = vmatprep.subr.mxu0 0.0
        %5790 = vmatpush1.msra.mxu0 %v5734
        %5791 = vmatprep.subr.mxu0 0.0
        %5792 = vmatpush1.msra.mxu0 0.0
        %5793 = vmatprep.subr.mxu0 0.0
        %5794 = vmatpush1.msra.mxu0 0.0
        %5795 = vmatprep.subr.mxu0 0.0
        %5796 = vmatpush1.msra.mxu0 0.0
        %5797 = vmatprep.subr.mxu0 0.0
        %5798 = vmatpush1.msra.mxu0 0.0
        %5799 = vmatprep.subr.mxu0 0.0
        %5800 = vmatpush1.msra.mxu0 0.0
        %5801 = vmatprep.subr.mxu0 0.0
        %5802 = vmatpush1.msra.mxu0 0.0
        %5803 = vmatprep.subr.mxu0 0.0
        %5804 = vmatpush1.msra.mxu0 0.0
        %5805 = vmatprep.subr.mxu0 0.0
        %5806 = vmatpush1.msra.mxu0 0.0
        %5807 = vmatprep.subr.mxu0 0.0
        %5808 = vmatpush1.msra.mxu0 0.0
        %5809 = vmatprep.subr.mxu0 0.0
        %5810 = vmatpush1.msra.mxu0 0.0
        %5811 = vmatprep.subr.mxu0 0.0
        %5812 = vmatpush1.msra.mxu0 0.0
        %5813 = vmatprep.subr.mxu0 0.0
        %5814 = vmatpush1.msra.mxu0 0.0
        %5815 = vmatprep.subr.mxu0 0.0
        %5816 = vmatpush1.msra.mxu0 0.0
        %5817 = vmatprep.subr.mxu0 0.0
        %5818 = vmatpush1.msra.mxu0 0.0
        %5819 = vmatprep.subr.mxu0 0.0
        %5820 = vmatpush1.msra.mxu0 0.0
        %5821 = vmatprep.subr.mxu0 0.0
        %5822 = vmatpush1.msra.mxu0 0.0
        %5823 = vmatprep.subr.mxu0 0.0
        %5824 = vmatpush1.msra.mxu0 0.0
        %5825 = vmatprep.subr.mxu0 0.0
        %5826 = vmatpush1.msra.mxu0 0.0
        %5827 = vmatprep.subr.mxu0 0.0
        %5828 = vmatpush1.msra.mxu0 0.0
        %5829 = vmatprep.subr.mxu0 0.0
        %5830 = vmatpush1.msra.mxu0 0.0
        %5831 = vmatprep.subr.mxu0 0.0
        %5832 = vmatpush1.msra.mxu0 0.0
        %5833 = vmatprep.subr.mxu0 0.0
        %5834 = vmatpush1.msra.mxu0 0.0
        %5835 = vmatprep.subr.mxu0 0.0
        %5836 = vmatpush1.msra.mxu0 0.0
        %5837 = vmatprep.subr.mxu0 0.0
        %5838 = vmatpush1.msra.mxu0 0.0
        %5839 = vmatprep.subr.mxu0 0.0
        %5840 = vmatpush1.msra.mxu0 0.0
        %5841 = vmatprep.subr.mxu0 0.0
        %5842 = vmatpush1.msra.mxu0 0.0
        %5843 = vmatprep.subr.mxu0 0.0
        %5844 = vmatpush1.msra.mxu0 0.0
        %5845 = vmatprep.subr.mxu0 0.0
        %5846 = vmatpush1.msra.mxu0 0.0
        %5847 = vmatprep.mubr.f32.mxu0 0.0
        %5848 = vmatmul.mubr.f32.gmra.mrb[0].mxu0 %v5748
        %v5849 = vpop.f32.mrb[0].mxu0
        %v5850 = vadd.f32 0.0, %v5849
        %v5851 = vpop.f32.mrb[0].mxu0
        %5852 = vmatprep.mubr.f32.mxu0 0.0
        %5853 = vmatmul.mubr.f32.gmra.mrb[0].mxu0 %v5751
        %v5854 = vpop.f32.mrb[0].mxu0
        %v5855 = vadd.f32 0.0, %v5854
        %v5856 = vpop.f32.mrb[0].mxu0
        %5857 = vmatprep.mubr.f32.mxu0 0.0
        %5858 = vmatmul.mubr.f32.gmra.mrb[0].mxu0 %v5754
        %v5859 = vpop.f32.mrb[0].mxu0
        %v5860 = vadd.f32 0.0, %v5859
        %v5861 = vpop.f32.mrb[0].mxu0
        %5862 = vmatprep.mubr.f32.mxu0 0.0
        %5863 = vmatmul.mubr.f32.gmra.mrb[0].mxu0 %v5757
        %v5864 = vpop.f32.mrb[0].mxu0
        %v5865 = vadd.f32 0.0, %v5864
        %v5866 = vpop.f32.mrb[0].mxu0
        %5867 = vmatprep.mubr.f32.mxu0 0.0
        %5868 = vmatmul.mubr.f32.gmra.mrb[0].mxu0 %v5760
        %v5869 = vpop.f32.mrb[0].mxu0
        %v5870 = vadd.f32 0.0, %v5869
        %v5871 = vpop.f32.mrb[0].mxu0
        %5872 = vmatprep.mubr.f32.mxu0 0.0
        %5873 = vmatmul.mubr.f32.gmra.mrb[0].mxu0 %v5763
        %v5874 = vpop.f32.mrb[0].mxu0
        %v5875 = vadd.f32 0.0, %v5874
        %v5876 = vpop.f32.mrb[0].mxu0
        %5877 = vmatprep.mubr.f32.mxu0 0.0
        %5878 = vmatmul.mubr.f32.gmra.mrb[0].mxu0 %v5766
        %v5879 = vpop.f32.mrb[0].mxu0
        %v5880 = vadd.f32 0.0, %v5879
        %v5881 = vpop.f32.mrb[0].mxu0
        %5882 = vmatprep.mubr.f32.mxu0 0.0
        %5883 = vmatmul.mubr.f32.gmra.mrb[0].mxu0 %v5769
        %v5884 = vpop.f32.mrb[0].mxu0
        %v5885 = vadd.f32 0.0, %v5884
        %v5886 = vpop.f32.mrb[0].mxu0
        %5887 = vmatprep.mubr.f32.mxu0 0.0
        %5888 = vmatmul.mubr.f32.gmra.mrb[0].mxu0 %v5772
        %v5889 = vpop.f32.mrb[0].mxu0
        %v5890 = vadd.f32 0.0, %v5889
        %v5891 = vpop.f32.mrb[0].mxu0
        %5892 = vmatprep.mubr.f32.mxu0 0.0
        %5893 = vmatmul.mubr.f32.gmra.mrb[0].mxu0 %v5775
        %v5894 = vpop.f32.mrb[0].mxu0
        %v5895 = vadd.f32 0.0, %v5894
        %v5896 = vpop.f32.mrb[0].mxu0
        %5897 = vmatprep.mubr.f32.mxu0 0.0
        %5898 = vmatmul.mubr.f32.gmra.mrb[0].mxu0 %v5778
        %v5899 = vpop.f32.mrb[0].mxu0
        %v5900 = vadd.f32 0.0, %v5899
        %v5901 = vpop.f32.mrb[0].mxu0
        %5902 = vmatprep.mubr.f32.mxu0 0.0
        %5903 = vmatmul.mubr.f32.gmra.mrb[0].mxu0 %v5781
        %v5904 = vpop.f32.mrb[0].mxu0
        %v5905 = vadd.f32 0.0, %v5904
        %v5906 = vpop.f32.mrb[0].mxu0
        %5907 = vdwg.mxu0
        %v5908 = vadd.f32 %v3545, %v5850
        %v5909 = vadd.f32 %v3546, %v5855
        %v5910 = vadd.f32 %v3547, %v5860
        %v5911 = vadd.f32 %v3548, %v5865
        %v5912 = vadd.f32 %v3549, %v5870
        %v5913 = vadd.f32 %v3550, %v5875
        %v5914 = vadd.f32 %v3551, %v5880
        %v5915 = vadd.f32 %v3552, %v5885
        %v5916 = vadd.f32 %v3553, %v5890
        %v5917 = vadd.f32 %v3554, %v5895
        %v5918 = vadd.f32 %v3555, %v5900
        %v5919 = vadd.f32 %v3556, %v5905
        %v5920 = vld [vmem:[%s45] sm:$0xff]
        %v5921 = vld [vmem:[%s45 + $0x8] sm:$0xff]
        %v5922 = vld [vmem:[%s45 + $0x10] sm:$0xff]
        %v5923 = vld [vmem:[%s45 + $0x18] sm:$0xff]
        %v5925 = vsel %vm1669, %v5920, 0
        %v5928 = vsel %vm1669, %v5921, 0
        %v5931 = vsel %vm1669, %v5922, 0
        %v5934 = vsel %vm1669, %v5923, 0
        %5936 = vmatprep.subr.mxu0 0.0
        %5937 = vmatpush1.msra.mxu0 %v1585
        %5938 = vmatprep.subr.mxu0 0.0
        %5939 = vmatpush1.msra.mxu0 %v1590
        %5940 = vmatprep.subr.mxu0 0.0
        %5941 = vmatpush1.msra.mxu0 %v1595
        %5942 = vmatprep.subr.mxu0 0.0
        %5943 = vmatpush1.msra.mxu0 %v1600
        %5944 = vmatprep.subr.mxu0 0.0
        %5945 = vmatpush1.msra.mxu0 0.0
        %5946 = vmatprep.subr.mxu0 0.0
        %5947 = vmatpush1.msra.mxu0 0.0
        %5948 = vmatprep.subr.mxu0 0.0
        %5949 = vmatpush1.msra.mxu0 0.0
        %5950 = vmatprep.subr.mxu0 0.0
        %5951 = vmatpush1.msra.mxu0 0.0
        %5952 = vmatprep.subr.mxu0 0.0
        %5953 = vmatpush1.msra.mxu0 0.0
        %5954 = vmatprep.subr.mxu0 0.0
        %5955 = vmatpush1.msra.mxu0 0.0
        %5956 = vmatprep.subr.mxu0 0.0
        %5957 = vmatpush1.msra.mxu0 0.0
        %5958 = vmatprep.subr.mxu0 0.0
        %5959 = vmatpush1.msra.mxu0 0.0
        %5960 = vmatprep.subr.mxu0 0.0
        %5961 = vmatpush1.msra.mxu0 0.0
        %5962 = vmatprep.subr.mxu0 0.0
        %5963 = vmatpush1.msra.mxu0 0.0
        %5964 = vmatprep.subr.mxu0 0.0
        %5965 = vmatpush1.msra.mxu0 0.0
        %5966 = vmatprep.subr.mxu0 0.0
        %5967 = vmatpush1.msra.mxu0 0.0
        %5968 = vmatprep.subr.mxu0 0.0
        %5969 = vmatpush1.msra.mxu0 0.0
        %5970 = vmatprep.subr.mxu0 0.0
        %5971 = vmatpush1.msra.mxu0 0.0
        %5972 = vmatprep.subr.mxu0 0.0
        %5973 = vmatpush1.msra.mxu0 0.0
        %5974 = vmatprep.subr.mxu0 0.0
        %5975 = vmatpush1.msra.mxu0 0.0
        %5976 = vmatprep.subr.mxu0 0.0
        %5977 = vmatpush1.msra.mxu0 0.0
        %5978 = vmatprep.subr.mxu0 0.0
        %5979 = vmatpush1.msra.mxu0 0.0
        %5980 = vmatprep.subr.mxu0 0.0
        %5981 = vmatpush1.msra.mxu0 0.0
        %5982 = vmatprep.subr.mxu0 0.0
        %5983 = vmatpush1.msra.mxu0 0.0
        %5984 = vmatprep.subr.mxu0 0.0
        %5985 = vmatpush1.msra.mxu0 0.0
        %5986 = vmatprep.subr.mxu0 0.0
        %5987 = vmatpush1.msra.mxu0 0.0
        %5988 = vmatprep.subr.mxu0 0.0
        %5989 = vmatpush1.msra.mxu0 0.0
        %5990 = vmatprep.subr.mxu0 0.0
        %5991 = vmatpush1.msra.mxu0 0.0
        %5992 = vmatprep.subr.mxu0 0.0
        %5993 = vmatpush1.msra.mxu0 0.0
        %5994 = vmatprep.subr.mxu0 0.0
        %5995 = vmatpush1.msra.mxu0 0.0
        %5996 = vmatprep.subr.mxu0 0.0
        %5997 = vmatpush1.msra.mxu0 0.0
        %5998 = vmatprep.subr.mxu0 0.0
        %5999 = vmatpush1.msra.mxu0 0.0
        %6000 = vmatprep.mubr.f32.mxu0 0.0
        %6001 = vmatmul.mubr.f32.gmra.mrb[0].mxu0 %v5925
        %v6002 = vpop.f32.mrb[0].mxu0
        %v6003 = vadd.f32 0.0, %v6002
        %v6004 = vpop.f32.mrb[0].mxu0
        %6005 = vmatprep.mubr.f32.mxu0 0.0
        %6006 = vmatmul.mubr.f32.gmra.mrb[0].mxu0 %v5928
        %v6007 = vpop.f32.mrb[0].mxu0
        %v6008 = vadd.f32 0.0, %v6007
        %v6009 = vpop.f32.mrb[0].mxu0
        %6010 = vmatprep.mubr.f32.mxu0 0.0
        %6011 = vmatmul.mubr.f32.gmra.mrb[0].mxu0 %v5931
        %v6012 = vpop.f32.mrb[0].mxu0
        %v6013 = vadd.f32 0.0, %v6012
        %v6014 = vpop.f32.mrb[0].mxu0
        %6015 = vmatprep.mubr.f32.mxu0 0.0
        %6016 = vmatmul.mubr.f32.gmra.mrb[0].mxu0 %v5934
        %v6017 = vpop.f32.mrb[0].mxu0
        %v6018 = vadd.f32 0.0, %v6017
        %v6019 = vpop.f32.mrb[0].mxu0
        %6020 = vdwg.mxu0
        %6021 = vrot.lane.b32.xlu0 %v6003, 3
        %v6022 = vpop.permute.xlu0 %6021
        %6023 = vrot.lane.b32.xlu0 %v6008, 3
        %v6024 = vpop.permute.xlu0 %6023
        %6025 = vrot.lane.b32.xlu0 %v6013, 3
        %v6026 = vpop.permute.xlu0 %6025
        %6027 = vrot.lane.b32.xlu0 %v6018, 3
        %v6028 = vpop.permute.xlu0 %6027
        %v6029 = vsel %vm4493, %v6022, 0.0
        %v6030 = vsel %vm4493, %v6024, 0.0
        %v6031 = vsel %vm4493, %v6026, 0.0
        %v6032 = vsel %vm4493, %v6028, 0.0
        %s6033 = scalar_lea.vmem %s45, 32
        %v6034 = vld [vmem:[%s6033] sm:$0xff]
        %v6035 = vld [vmem:[%s6033 + $0x8] sm:$0xff]
        %v6036 = vld [vmem:[%s6033 + $0x10] sm:$0xff]
        %v6037 = vld [vmem:[%s6033 + $0x18] sm:$0xff]
        %v6039 = vsel %vm1669, %v6034, 0
        %v6042 = vsel %vm1669, %v6035, 0
        %v6045 = vsel %vm1669, %v6036, 0
        %v6048 = vsel %vm1669, %v6037, 0
        %6050 = vmatprep.subr.mxu0 0.0
        %6051 = vmatpush1.msra.mxu0 %v1585
        %6052 = vmatprep.subr.mxu0 0.0
        %6053 = vmatpush1.msra.mxu0 %v1590
        %6054 = vmatprep.subr.mxu0 0.0
        %6055 = vmatpush1.msra.mxu0 %v1595
        %6056 = vmatprep.subr.mxu0 0.0
        %6057 = vmatpush1.msra.mxu0 %v1600
        %6058 = vmatprep.subr.mxu0 0.0
        %6059 = vmatpush1.msra.mxu0 0.0
        %6060 = vmatprep.subr.mxu0 0.0
        %6061 = vmatpush1.msra.mxu0 0.0
        %6062 = vmatprep.subr.mxu0 0.0
        %6063 = vmatpush1.msra.mxu0 0.0
        %6064 = vmatprep.subr.mxu0 0.0
        %6065 = vmatpush1.msra.mxu0 0.0
        %6066 = vmatprep.subr.mxu0 0.0
        %6067 = vmatpush1.msra.mxu0 0.0
        %6068 = vmatprep.subr.mxu0 0.0
        %6069 = vmatpush1.msra.mxu0 0.0
        %6070 = vmatprep.subr.mxu0 0.0
        %6071 = vmatpush1.msra.mxu0 0.0
        %6072 = vmatprep.subr.mxu0 0.0
        %6073 = vmatpush1.msra.mxu0 0.0
        %6074 = vmatprep.subr.mxu0 0.0
        %6075 = vmatpush1.msra.mxu0 0.0
        %6076 = vmatprep.subr.mxu0 0.0
        %6077 = vmatpush1.msra.mxu0 0.0
        %6078 = vmatprep.subr.mxu0 0.0
        %6079 = vmatpush1.msra.mxu0 0.0
        %6080 = vmatprep.subr.mxu0 0.0
        %6081 = vmatpush1.msra.mxu0 0.0
        %6082 = vmatprep.subr.mxu0 0.0
        %6083 = vmatpush1.msra.mxu0 0.0
        %6084 = vmatprep.subr.mxu0 0.0
        %6085 = vmatpush1.msra.mxu0 0.0
        %6086 = vmatprep.subr.mxu0 0.0
        %6087 = vmatpush1.msra.mxu0 0.0
        %6088 = vmatprep.subr.mxu0 0.0
        %6089 = vmatpush1.msra.mxu0 0.0
        %6090 = vmatprep.subr.mxu0 0.0
        %6091 = vmatpush1.msra.mxu0 0.0
        %6092 = vmatprep.subr.mxu0 0.0
        %6093 = vmatpush1.msra.mxu0 0.0
        %6094 = vmatprep.subr.mxu0 0.0
        %6095 = vmatpush1.msra.mxu0 0.0
        %6096 = vmatprep.subr.mxu0 0.0
        %6097 = vmatpush1.msra.mxu0 0.0
        %6098 = vmatprep.subr.mxu0 0.0
        %6099 = vmatpush1.msra.mxu0 0.0
        %6100 = vmatprep.subr.mxu0 0.0
        %6101 = vmatpush1.msra.mxu0 0.0
        %6102 = vmatprep.subr.mxu0 0.0
        %6103 = vmatpush1.msra.mxu0 0.0
        %6104 = vmatprep.subr.mxu0 0.0
        %6105 = vmatpush1.msra.mxu0 0.0
        %6106 = vmatprep.subr.mxu0 0.0
        %6107 = vmatpush1.msra.mxu0 0.0
        %6108 = vmatprep.subr.mxu0 0.0
        %6109 = vmatpush1.msra.mxu0 0.0
        %6110 = vmatprep.subr.mxu0 0.0
        %6111 = vmatpush1.msra.mxu0 0.0
        %6112 = vmatprep.subr.mxu0 0.0
        %6113 = vmatpush1.msra.mxu0 0.0
        %6114 = vmatprep.mubr.f32.mxu0 0.0
        %6115 = vmatmul.mubr.f32.gmra.mrb[0].mxu0 %v6039
        %v6116 = vpop.f32.mrb[0].mxu0
        %v6117 = vadd.f32 0.0, %v6116
        %v6118 = vpop.f32.mrb[0].mxu0
        %6119 = vmatprep.mubr.f32.mxu0 0.0
        %6120 = vmatmul.mubr.f32.gmra.mrb[0].mxu0 %v6042
        %v6121 = vpop.f32.mrb[0].mxu0
        %v6122 = vadd.f32 0.0, %v6121
        %v6123 = vpop.f32.mrb[0].mxu0
        %6124 = vmatprep.mubr.f32.mxu0 0.0
        %6125 = vmatmul.mubr.f32.gmra.mrb[0].mxu0 %v6045
        %v6126 = vpop.f32.mrb[0].mxu0
        %v6127 = vadd.f32 0.0, %v6126
        %v6128 = vpop.f32.mrb[0].mxu0
        %6129 = vmatprep.mubr.f32.mxu0 0.0
        %6130 = vmatmul.mubr.f32.gmra.mrb[0].mxu0 %v6048
        %v6131 = vpop.f32.mrb[0].mxu0
        %v6132 = vadd.f32 0.0, %v6131
        %v6133 = vpop.f32.mrb[0].mxu0
        %6134 = vdwg.mxu0
        %6135 = vrot.lane.b32.xlu0 %v6117, 2
        %v6136 = vpop.permute.xlu0 %6135
        %6137 = vrot.lane.b32.xlu0 %v6122, 2
        %v6138 = vpop.permute.xlu0 %6137
        %6139 = vrot.lane.b32.xlu0 %v6127, 2
        %v6140 = vpop.permute.xlu0 %6139
        %6141 = vrot.lane.b32.xlu0 %v6132, 2
        %v6142 = vpop.permute.xlu0 %6141
        %v6143 = vsel %vm2249, %v6136, 0.0
        %v6144 = vsel %vm2249, %v6138, 0.0
        %v6145 = vsel %vm2249, %v6140, 0.0
        %v6146 = vsel %vm2249, %v6142, 0.0
        %v6147 = vadd.f32 %v6029, %v6143
        %v6148 = vadd.f32 %v6030, %v6144
        %v6149 = vadd.f32 %v6031, %v6145
        %v6150 = vadd.f32 %v6032, %v6146
        %s6151 = scalar_lea.vmem %s45, 64
        %v6152 = vld [vmem:[%s6151] sm:$0xff]
        %v6153 = vld [vmem:[%s6151 + $0x8] sm:$0xff]
        %v6154 = vld [vmem:[%s6151 + $0x10] sm:$0xff]
        %v6155 = vld [vmem:[%s6151 + $0x18] sm:$0xff]
        %v6157 = vsel %vm1669, %v6152, 0
        %v6160 = vsel %vm1669, %v6153, 0
        %v6163 = vsel %vm1669, %v6154, 0
        %v6166 = vsel %vm1669, %v6155, 0
        %6168 = vmatprep.subr.mxu0 0.0
        %6169 = vmatpush1.msra.mxu0 %v1585
        %6170 = vmatprep.subr.mxu0 0.0
        %6171 = vmatpush1.msra.mxu0 %v1590
        %6172 = vmatprep.subr.mxu0 0.0
        %6173 = vmatpush1.msra.mxu0 %v1595
        %6174 = vmatprep.subr.mxu0 0.0
        %6175 = vmatpush1.msra.mxu0 %v1600
        %6176 = vmatprep.subr.mxu0 0.0
        %6177 = vmatpush1.msra.mxu0 0.0
        %6178 = vmatprep.subr.mxu0 0.0
        %6179 = vmatpush1.msra.mxu0 0.0
        %6180 = vmatprep.subr.mxu0 0.0
        %6181 = vmatpush1.msra.mxu0 0.0
        %6182 = vmatprep.subr.mxu0 0.0
        %6183 = vmatpush1.msra.mxu0 0.0
        %6184 = vmatprep.subr.mxu0 0.0
        %6185 = vmatpush1.msra.mxu0 0.0
        %6186 = vmatprep.subr.mxu0 0.0
        %6187 = vmatpush1.msra.mxu0 0.0
        %6188 = vmatprep.subr.mxu0 0.0
        %6189 = vmatpush1.msra.mxu0 0.0
        %6190 = vmatprep.subr.mxu0 0.0
        %6191 = vmatpush1.msra.mxu0 0.0
        %6192 = vmatprep.subr.mxu0 0.0
        %6193 = vmatpush1.msra.mxu0 0.0
        %6194 = vmatprep.subr.mxu0 0.0
        %6195 = vmatpush1.msra.mxu0 0.0
        %6196 = vmatprep.subr.mxu0 0.0
        %6197 = vmatpush1.msra.mxu0 0.0
        %6198 = vmatprep.subr.mxu0 0.0
        %6199 = vmatpush1.msra.mxu0 0.0
        %6200 = vmatprep.subr.mxu0 0.0
        %6201 = vmatpush1.msra.mxu0 0.0
        %6202 = vmatprep.subr.mxu0 0.0
        %6203 = vmatpush1.msra.mxu0 0.0
        %6204 = vmatprep.subr.mxu0 0.0
        %6205 = vmatpush1.msra.mxu0 0.0
        %6206 = vmatprep.subr.mxu0 0.0
        %6207 = vmatpush1.msra.mxu0 0.0
        %6208 = vmatprep.subr.mxu0 0.0
        %6209 = vmatpush1.msra.mxu0 0.0
        %6210 = vmatprep.subr.mxu0 0.0
        %6211 = vmatpush1.msra.mxu0 0.0
        %6212 = vmatprep.subr.mxu0 0.0
        %6213 = vmatpush1.msra.mxu0 0.0
        %6214 = vmatprep.subr.mxu0 0.0
        %6215 = vmatpush1.msra.mxu0 0.0
        %6216 = vmatprep.subr.mxu0 0.0
        %6217 = vmatpush1.msra.mxu0 0.0
        %6218 = vmatprep.subr.mxu0 0.0
        %6219 = vmatpush1.msra.mxu0 0.0
        %6220 = vmatprep.subr.mxu0 0.0
        %6221 = vmatpush1.msra.mxu0 0.0
        %6222 = vmatprep.subr.mxu0 0.0
        %6223 = vmatpush1.msra.mxu0 0.0
        %6224 = vmatprep.subr.mxu0 0.0
        %6225 = vmatpush1.msra.mxu0 0.0
        %6226 = vmatprep.subr.mxu0 0.0
        %6227 = vmatpush1.msra.mxu0 0.0
        %6228 = vmatprep.subr.mxu0 0.0
        %6229 = vmatpush1.msra.mxu0 0.0
        %6230 = vmatprep.subr.mxu0 0.0
        %6231 = vmatpush1.msra.mxu0 0.0
        %6232 = vmatprep.mubr.f32.mxu0 0.0
        %6233 = vmatmul.mubr.f32.gmra.mrb[0].mxu0 %v6157
        %v6234 = vpop.f32.mrb[0].mxu0
        %v6235 = vadd.f32 0.0, %v6234
        %v6236 = vpop.f32.mrb[0].mxu0
        %6237 = vmatprep.mubr.f32.mxu0 0.0
        %6238 = vmatmul.mubr.f32.gmra.mrb[0].mxu0 %v6160
        %v6239 = vpop.f32.mrb[0].mxu0
        %v6240 = vadd.f32 0.0, %v6239
        %v6241 = vpop.f32.mrb[0].mxu0
        %6242 = vmatprep.mubr.f32.mxu0 0.0
        %6243 = vmatmul.mubr.f32.gmra.mrb[0].mxu0 %v6163
        %v6244 = vpop.f32.mrb[0].mxu0
        %v6245 = vadd.f32 0.0, %v6244
        %v6246 = vpop.f32.mrb[0].mxu0
        %6247 = vmatprep.mubr.f32.mxu0 0.0
        %6248 = vmatmul.mubr.f32.gmra.mrb[0].mxu0 %v6166
        %v6249 = vpop.f32.mrb[0].mxu0
        %v6250 = vadd.f32 0.0, %v6249
        %v6251 = vpop.f32.mrb[0].mxu0
        %6252 = vdwg.mxu0
        %6253 = vrot.lane.b32.xlu0 %v6235, 1
        %v6254 = vpop.permute.xlu0 %6253
        %6255 = vrot.lane.b32.xlu0 %v6240, 1
        %v6256 = vpop.permute.xlu0 %6255
        %6257 = vrot.lane.b32.xlu0 %v6245, 1
        %v6258 = vpop.permute.xlu0 %6257
        %6259 = vrot.lane.b32.xlu0 %v6250, 1
        %v6260 = vpop.permute.xlu0 %6259
        %v6261 = vsel %vm1767, %v6254, 0.0
        %v6262 = vsel %vm1767, %v6256, 0.0
        %v6263 = vsel %vm1767, %v6258, 0.0
        %v6264 = vsel %vm1767, %v6260, 0.0
        %v6265 = vadd.f32 %v6147, %v6261
        %v6266 = vadd.f32 %v6148, %v6262
        %v6267 = vadd.f32 %v6149, %v6263
        %v6268 = vadd.f32 %v6150, %v6264
        %s6269 = scalar_lea.vmem %s45, 96
        %v6270 = vld [vmem:[%s6269] sm:$0xff]
        %v6271 = vld [vmem:[%s6269 + $0x8] sm:$0xff]
        %v6272 = vld [vmem:[%s6269 + $0x10] sm:$0xff]
        %v6273 = vld [vmem:[%s6269 + $0x18] sm:$0xff]
        %v6275 = vsel %vm1669, %v6270, 0
        %v6278 = vsel %vm1669, %v6271, 0
        %v6281 = vsel %vm1669, %v6272, 0
        %v6284 = vsel %vm1669, %v6273, 0
        %6286 = vmatprep.subr.mxu0 0.0
        %6287 = vmatpush1.msra.mxu0 %v1585
        %6288 = vmatprep.subr.mxu0 0.0
        %6289 = vmatpush1.msra.mxu0 %v1590
        %6290 = vmatprep.subr.mxu0 0.0
        %6291 = vmatpush1.msra.mxu0 %v1595
        %6292 = vmatprep.subr.mxu0 0.0
        %6293 = vmatpush1.msra.mxu0 %v1600
        %6294 = vmatprep.subr.mxu0 0.0
        %6295 = vmatpush1.msra.mxu0 0.0
        %6296 = vmatprep.subr.mxu0 0.0
        %6297 = vmatpush1.msra.mxu0 0.0
        %6298 = vmatprep.subr.mxu0 0.0
        %6299 = vmatpush1.msra.mxu0 0.0
        %6300 = vmatprep.subr.mxu0 0.0
        %6301 = vmatpush1.msra.mxu0 0.0
        %6302 = vmatprep.subr.mxu0 0.0
        %6303 = vmatpush1.msra.mxu0 0.0
        %6304 = vmatprep.subr.mxu0 0.0
        %6305 = vmatpush1.msra.mxu0 0.0
        %6306 = vmatprep.subr.mxu0 0.0
        %6307 = vmatpush1.msra.mxu0 0.0
        %6308 = vmatprep.subr.mxu0 0.0
        %6309 = vmatpush1.msra.mxu0 0.0
        %6310 = vmatprep.subr.mxu0 0.0
        %6311 = vmatpush1.msra.mxu0 0.0
        %6312 = vmatprep.subr.mxu0 0.0
        %6313 = vmatpush1.msra.mxu0 0.0
        %6314 = vmatprep.subr.mxu0 0.0
        %6315 = vmatpush1.msra.mxu0 0.0
        %6316 = vmatprep.subr.mxu0 0.0
        %6317 = vmatpush1.msra.mxu0 0.0
        %6318 = vmatprep.subr.mxu0 0.0
        %6319 = vmatpush1.msra.mxu0 0.0
        %6320 = vmatprep.subr.mxu0 0.0
        %6321 = vmatpush1.msra.mxu0 0.0
        %6322 = vmatprep.subr.mxu0 0.0
        %6323 = vmatpush1.msra.mxu0 0.0
        %6324 = vmatprep.subr.mxu0 0.0
        %6325 = vmatpush1.msra.mxu0 0.0
        %6326 = vmatprep.subr.mxu0 0.0
        %6327 = vmatpush1.msra.mxu0 0.0
        %6328 = vmatprep.subr.mxu0 0.0
        %6329 = vmatpush1.msra.mxu0 0.0
        %6330 = vmatprep.subr.mxu0 0.0
        %6331 = vmatpush1.msra.mxu0 0.0
        %6332 = vmatprep.subr.mxu0 0.0
        %6333 = vmatpush1.msra.mxu0 0.0
        %6334 = vmatprep.subr.mxu0 0.0
        %6335 = vmatpush1.msra.mxu0 0.0
        %6336 = vmatprep.subr.mxu0 0.0
        %6337 = vmatpush1.msra.mxu0 0.0
        %6338 = vmatprep.subr.mxu0 0.0
        %6339 = vmatpush1.msra.mxu0 0.0
        %6340 = vmatprep.subr.mxu0 0.0
        %6341 = vmatpush1.msra.mxu0 0.0
        %6342 = vmatprep.subr.mxu0 0.0
        %6343 = vmatpush1.msra.mxu0 0.0
        %6344 = vmatprep.subr.mxu0 0.0
        %6345 = vmatpush1.msra.mxu0 0.0
        %6346 = vmatprep.subr.mxu0 0.0
        %6347 = vmatpush1.msra.mxu0 0.0
        %6348 = vmatprep.subr.mxu0 0.0
        %6349 = vmatpush1.msra.mxu0 0.0
        %6350 = vmatprep.mubr.f32.mxu0 0.0
        %6351 = vmatmul.mubr.f32.gmra.mrb[0].mxu0 %v6275
        %v6352 = vpop.f32.mrb[0].mxu0
        %v6353 = vadd.f32 0.0, %v6352
        %v6354 = vpop.f32.mrb[0].mxu0
        %6355 = vmatprep.mubr.f32.mxu0 0.0
        %6356 = vmatmul.mubr.f32.gmra.mrb[0].mxu0 %v6278
        %v6357 = vpop.f32.mrb[0].mxu0
        %v6358 = vadd.f32 0.0, %v6357
        %v6359 = vpop.f32.mrb[0].mxu0
        %6360 = vmatprep.mubr.f32.mxu0 0.0
        %6361 = vmatmul.mubr.f32.gmra.mrb[0].mxu0 %v6281
        %v6362 = vpop.f32.mrb[0].mxu0
        %v6363 = vadd.f32 0.0, %v6362
        %v6364 = vpop.f32.mrb[0].mxu0
        %6365 = vmatprep.mubr.f32.mxu0 0.0
        %6366 = vmatmul.mubr.f32.gmra.mrb[0].mxu0 %v6284
        %v6367 = vpop.f32.mrb[0].mxu0
        %v6368 = vadd.f32 0.0, %v6367
        %v6369 = vpop.f32.mrb[0].mxu0
        %6370 = vdwg.mxu0
        %v6371 = vadd.f32 %v6265, %v6353
        %v6372 = vadd.f32 %v6266, %v6358
        %v6373 = vadd.f32 %v6267, %v6363
        %v6374 = vadd.f32 %v6268, %v6368
        %s6375 = scalar_lea.vmem %s45, 128
        %v6376 = vld [vmem:[%s6375] sm:$0xff]
        %v6377 = vld [vmem:[%s6375 + $0x8] sm:$0xff]
        %v6378 = vld [vmem:[%s6375 + $0x10] sm:$0xff]
        %v6379 = vld [vmem:[%s6375 + $0x18] sm:$0xff]
        %v6381 = vsel %vm1669, %v6376, 0
        %v6384 = vsel %vm1669, %v6377, 0
        %v6387 = vsel %vm1669, %v6378, 0
        %v6390 = vsel %vm1669, %v6379, 0
        %6392 = vmatprep.subr.mxu0 0.0
        %6393 = vmatpush1.msra.mxu0 %v1585
        %6394 = vmatprep.subr.mxu0 0.0
        %6395 = vmatpush1.msra.mxu0 %v1590
        %6396 = vmatprep.subr.mxu0 0.0
        %6397 = vmatpush1.msra.mxu0 %v1595
        %6398 = vmatprep.subr.mxu0 0.0
        %6399 = vmatpush1.msra.mxu0 %v1600
        %6400 = vmatprep.subr.mxu0 0.0
        %6401 = vmatpush1.msra.mxu0 0.0
        %6402 = vmatprep.subr.mxu0 0.0
        %6403 = vmatpush1.msra.mxu0 0.0
        %6404 = vmatprep.subr.mxu0 0.0
        %6405 = vmatpush1.msra.mxu0 0.0
        %6406 = vmatprep.subr.mxu0 0.0
        %6407 = vmatpush1.msra.mxu0 0.0
        %6408 = vmatprep.subr.mxu0 0.0
        %6409 = vmatpush1.msra.mxu0 0.0
        %6410 = vmatprep.subr.mxu0 0.0
        %6411 = vmatpush1.msra.mxu0 0.0
        %6412 = vmatprep.subr.mxu0 0.0
        %6413 = vmatpush1.msra.mxu0 0.0
        %6414 = vmatprep.subr.mxu0 0.0
        %6415 = vmatpush1.msra.mxu0 0.0
        %6416 = vmatprep.subr.mxu0 0.0
        %6417 = vmatpush1.msra.mxu0 0.0
        %6418 = vmatprep.subr.mxu0 0.0
        %6419 = vmatpush1.msra.mxu0 0.0
        %6420 = vmatprep.subr.mxu0 0.0
        %6421 = vmatpush1.msra.mxu0 0.0
        %6422 = vmatprep.subr.mxu0 0.0
        %6423 = vmatpush1.msra.mxu0 0.0
        %6424 = vmatprep.subr.mxu0 0.0
        %6425 = vmatpush1.msra.mxu0 0.0
        %6426 = vmatprep.subr.mxu0 0.0
        %6427 = vmatpush1.msra.mxu0 0.0
        %6428 = vmatprep.subr.mxu0 0.0
        %6429 = vmatpush1.msra.mxu0 0.0
        %6430 = vmatprep.subr.mxu0 0.0
        %6431 = vmatpush1.msra.mxu0 0.0
        %6432 = vmatprep.subr.mxu0 0.0
        %6433 = vmatpush1.msra.mxu0 0.0
        %6434 = vmatprep.subr.mxu0 0.0
        %6435 = vmatpush1.msra.mxu0 0.0
        %6436 = vmatprep.subr.mxu0 0.0
        %6437 = vmatpush1.msra.mxu0 0.0
        %6438 = vmatprep.subr.mxu0 0.0
        %6439 = vmatpush1.msra.mxu0 0.0
        %6440 = vmatprep.subr.mxu0 0.0
        %6441 = vmatpush1.msra.mxu0 0.0
        %6442 = vmatprep.subr.mxu0 0.0
        %6443 = vmatpush1.msra.mxu0 0.0
        %6444 = vmatprep.subr.mxu0 0.0
        %6445 = vmatpush1.msra.mxu0 0.0
        %6446 = vmatprep.subr.mxu0 0.0
        %6447 = vmatpush1.msra.mxu0 0.0
        %6448 = vmatprep.subr.mxu0 0.0
        %6449 = vmatpush1.msra.mxu0 0.0
        %6450 = vmatprep.subr.mxu0 0.0
        %6451 = vmatpush1.msra.mxu0 0.0
        %6452 = vmatprep.subr.mxu0 0.0
        %6453 = vmatpush1.msra.mxu0 0.0
        %6454 = vmatprep.subr.mxu0 0.0
        %6455 = vmatpush1.msra.mxu0 0.0
        %6456 = vmatprep.mubr.f32.mxu0 0.0
        %6457 = vmatmul.mubr.f32.gmra.mrb[0].mxu0 %v6381
        %v6458 = vpop.f32.mrb[0].mxu0
        %v6459 = vadd.f32 0.0, %v6458
        %v6460 = vpop.f32.mrb[0].mxu0
        %6461 = vmatprep.mubr.f32.mxu0 0.0
        %6462 = vmatmul.mubr.f32.gmra.mrb[0].mxu0 %v6384
        %v6463 = vpop.f32.mrb[0].mxu0
        %v6464 = vadd.f32 0.0, %v6463
        %v6465 = vpop.f32.mrb[0].mxu0
        %6466 = vmatprep.mubr.f32.mxu0 0.0
        %6467 = vmatmul.mubr.f32.gmra.mrb[0].mxu0 %v6387
        %v6468 = vpop.f32.mrb[0].mxu0
        %v6469 = vadd.f32 0.0, %v6468
        %v6470 = vpop.f32.mrb[0].mxu0
        %6471 = vmatprep.mubr.f32.mxu0 0.0
        %6472 = vmatmul.mubr.f32.gmra.mrb[0].mxu0 %v6390
        %v6473 = vpop.f32.mrb[0].mxu0
        %v6474 = vadd.f32 0.0, %v6473
        %v6475 = vpop.f32.mrb[0].mxu0
        %6476 = vdwg.mxu0
        %6477 = vrot.lane.b32.xlu0 %v6459, 127
        %v6478 = vpop.permute.xlu0 %6477
        %6479 = vrot.lane.b32.xlu0 %v6464, 127
        %v6480 = vpop.permute.xlu0 %6479
        %6481 = vrot.lane.b32.xlu0 %v6469, 127
        %v6482 = vpop.permute.xlu0 %6481
        %6483 = vrot.lane.b32.xlu0 %v6474, 127
        %v6484 = vpop.permute.xlu0 %6483
        %v6485 = vsel %vm1988, %v6478, 0.0
        %v6486 = vsel %vm1988, %v6480, 0.0
        %v6487 = vsel %vm1988, %v6482, 0.0
        %v6488 = vsel %vm1988, %v6484, 0.0
        %v6489 = vadd.f32 %v6371, %v6485
        %v6490 = vadd.f32 %v6372, %v6486
        %v6491 = vadd.f32 %v6373, %v6487
        %v6492 = vadd.f32 %v6374, %v6488
        %s6493 = scalar_lea.vmem %s45, 160
        %v6494 = vld [vmem:[%s6493] sm:$0xff]
        %v6495 = vld [vmem:[%s6493 + $0x8] sm:$0xff]
        %v6496 = vld [vmem:[%s6493 + $0x10] sm:$0xff]
        %v6497 = vld [vmem:[%s6493 + $0x18] sm:$0xff]
        %v6499 = vsel %vm1669, %v6494, 0
        %v6502 = vsel %vm1669, %v6495, 0
        %v6505 = vsel %vm1669, %v6496, 0
        %v6508 = vsel %vm1669, %v6497, 0
        %6510 = vmatprep.subr.mxu0 0.0
        %6511 = vmatpush1.msra.mxu0 %v1585
        %6512 = vmatprep.subr.mxu0 0.0
        %6513 = vmatpush1.msra.mxu0 %v1590
        %6514 = vmatprep.subr.mxu0 0.0
        %6515 = vmatpush1.msra.mxu0 %v1595
        %6516 = vmatprep.subr.mxu0 0.0
        %6517 = vmatpush1.msra.mxu0 %v1600
        %6518 = vmatprep.subr.mxu0 0.0
        %6519 = vmatpush1.msra.mxu0 0.0
        %6520 = vmatprep.subr.mxu0 0.0
        %6521 = vmatpush1.msra.mxu0 0.0
        %6522 = vmatprep.subr.mxu0 0.0
        %6523 = vmatpush1.msra.mxu0 0.0
        %6524 = vmatprep.subr.mxu0 0.0
        %6525 = vmatpush1.msra.mxu0 0.0
        %6526 = vmatprep.subr.mxu0 0.0
        %6527 = vmatpush1.msra.mxu0 0.0
        %6528 = vmatprep.subr.mxu0 0.0
        %6529 = vmatpush1.msra.mxu0 0.0
        %6530 = vmatprep.subr.mxu0 0.0
        %6531 = vmatpush1.msra.mxu0 0.0
        %6532 = vmatprep.subr.mxu0 0.0
        %6533 = vmatpush1.msra.mxu0 0.0
        %6534 = vmatprep.subr.mxu0 0.0
        %6535 = vmatpush1.msra.mxu0 0.0
        %6536 = vmatprep.subr.mxu0 0.0
        %6537 = vmatpush1.msra.mxu0 0.0
        %6538 = vmatprep.subr.mxu0 0.0
        %6539 = vmatpush1.msra.mxu0 0.0
        %6540 = vmatprep.subr.mxu0 0.0
        %6541 = vmatpush1.msra.mxu0 0.0
        %6542 = vmatprep.subr.mxu0 0.0
        %6543 = vmatpush1.msra.mxu0 0.0
        %6544 = vmatprep.subr.mxu0 0.0
        %6545 = vmatpush1.msra.mxu0 0.0
        %6546 = vmatprep.subr.mxu0 0.0
        %6547 = vmatpush1.msra.mxu0 0.0
        %6548 = vmatprep.subr.mxu0 0.0
        %6549 = vmatpush1.msra.mxu0 0.0
        %6550 = vmatprep.subr.mxu0 0.0
        %6551 = vmatpush1.msra.mxu0 0.0
        %6552 = vmatprep.subr.mxu0 0.0
        %6553 = vmatpush1.msra.mxu0 0.0
        %6554 = vmatprep.subr.mxu0 0.0
        %6555 = vmatpush1.msra.mxu0 0.0
        %6556 = vmatprep.subr.mxu0 0.0
        %6557 = vmatpush1.msra.mxu0 0.0
        %6558 = vmatprep.subr.mxu0 0.0
        %6559 = vmatpush1.msra.mxu0 0.0
        %6560 = vmatprep.subr.mxu0 0.0
        %6561 = vmatpush1.msra.mxu0 0.0
        %6562 = vmatprep.subr.mxu0 0.0
        %6563 = vmatpush1.msra.mxu0 0.0
        %6564 = vmatprep.subr.mxu0 0.0
        %6565 = vmatpush1.msra.mxu0 0.0
        %6566 = vmatprep.subr.mxu0 0.0
        %6567 = vmatpush1.msra.mxu0 0.0
        %6568 = vmatprep.subr.mxu0 0.0
        %6569 = vmatpush1.msra.mxu0 0.0
        %6570 = vmatprep.subr.mxu0 0.0
        %6571 = vmatpush1.msra.mxu0 0.0
        %6572 = vmatprep.subr.mxu0 0.0
        %6573 = vmatpush1.msra.mxu0 0.0
        %6574 = vmatprep.mubr.f32.mxu0 0.0
        %6575 = vmatmul.mubr.f32.gmra.mrb[0].mxu0 %v6499
        %v6576 = vpop.f32.mrb[0].mxu0
        %v6577 = vadd.f32 0.0, %v6576
        %v6578 = vpop.f32.mrb[0].mxu0
        %6579 = vmatprep.mubr.f32.mxu0 0.0
        %6580 = vmatmul.mubr.f32.gmra.mrb[0].mxu0 %v6502
        %v6581 = vpop.f32.mrb[0].mxu0
        %v6582 = vadd.f32 0.0, %v6581
        %v6583 = vpop.f32.mrb[0].mxu0
        %6584 = vmatprep.mubr.f32.mxu0 0.0
        %6585 = vmatmul.mubr.f32.gmra.mrb[0].mxu0 %v6505
        %v6586 = vpop.f32.mrb[0].mxu0
        %v6587 = vadd.f32 0.0, %v6586
        %v6588 = vpop.f32.mrb[0].mxu0
        %6589 = vmatprep.mubr.f32.mxu0 0.0
        %6590 = vmatmul.mubr.f32.gmra.mrb[0].mxu0 %v6508
        %v6591 = vpop.f32.mrb[0].mxu0
        %v6592 = vadd.f32 0.0, %v6591
        %v6593 = vpop.f32.mrb[0].mxu0
        %6594 = vdwg.mxu0
        %6595 = vrot.lane.b32.xlu0 %v6577, 126
        %v6596 = vpop.permute.xlu0 %6595
        %6597 = vrot.lane.b32.xlu0 %v6582, 126
        %v6598 = vpop.permute.xlu0 %6597
        %6599 = vrot.lane.b32.xlu0 %v6587, 126
        %v6600 = vpop.permute.xlu0 %6599
        %6601 = vrot.lane.b32.xlu0 %v6592, 126
        %v6602 = vpop.permute.xlu0 %6601
        %v6603 = vsel %vm2474, %v6596, 0.0
        %v6604 = vsel %vm2474, %v6598, 0.0
        %v6605 = vsel %vm2474, %v6600, 0.0
        %v6606 = vsel %vm2474, %v6602, 0.0
        %v6607 = vadd.f32 %v6489, %v6603
        %v6608 = vadd.f32 %v6490, %v6604
        %v6609 = vadd.f32 %v6491, %v6605
        %v6610 = vadd.f32 %v6492, %v6606
        %s6611 = scalar_lea.vmem %s45, 192
        %v6612 = vld [vmem:[%s6611] sm:$0xff]
        %v6613 = vld [vmem:[%s6611 + $0x8] sm:$0xff]
        %v6614 = vld [vmem:[%s6611 + $0x10] sm:$0xff]
        %v6615 = vld [vmem:[%s6611 + $0x18] sm:$0xff]
        %v6617 = vsel %vm1669, %v6612, 0
        %v6620 = vsel %vm1669, %v6613, 0
        %v6623 = vsel %vm1669, %v6614, 0
        %v6626 = vsel %vm1669, %v6615, 0
        %6628 = vmatprep.subr.mxu0 0.0
        %6629 = vmatpush1.msra.mxu0 %v1585
        %6630 = vmatprep.subr.mxu0 0.0
        %6631 = vmatpush1.msra.mxu0 %v1590
        %6632 = vmatprep.subr.mxu0 0.0
        %6633 = vmatpush1.msra.mxu0 %v1595
        %6634 = vmatprep.subr.mxu0 0.0
        %6635 = vmatpush1.msra.mxu0 %v1600
        %6636 = vmatprep.subr.mxu0 0.0
        %6637 = vmatpush1.msra.mxu0 0.0
        %6638 = vmatprep.subr.mxu0 0.0
        %6639 = vmatpush1.msra.mxu0 0.0
        %6640 = vmatprep.subr.mxu0 0.0
        %6641 = vmatpush1.msra.mxu0 0.0
        %6642 = vmatprep.subr.mxu0 0.0
        %6643 = vmatpush1.msra.mxu0 0.0
        %6644 = vmatprep.subr.mxu0 0.0
        %6645 = vmatpush1.msra.mxu0 0.0
        %6646 = vmatprep.subr.mxu0 0.0
        %6647 = vmatpush1.msra.mxu0 0.0
        %6648 = vmatprep.subr.mxu0 0.0
        %6649 = vmatpush1.msra.mxu0 0.0
        %6650 = vmatprep.subr.mxu0 0.0
        %6651 = vmatpush1.msra.mxu0 0.0
        %6652 = vmatprep.subr.mxu0 0.0
        %6653 = vmatpush1.msra.mxu0 0.0
        %6654 = vmatprep.subr.mxu0 0.0
        %6655 = vmatpush1.msra.mxu0 0.0
        %6656 = vmatprep.subr.mxu0 0.0
        %6657 = vmatpush1.msra.mxu0 0.0
        %6658 = vmatprep.subr.mxu0 0.0
        %6659 = vmatpush1.msra.mxu0 0.0
        %6660 = vmatprep.subr.mxu0 0.0
        %6661 = vmatpush1.msra.mxu0 0.0
        %6662 = vmatprep.subr.mxu0 0.0
        %6663 = vmatpush1.msra.mxu0 0.0
        %6664 = vmatprep.subr.mxu0 0.0
        %6665 = vmatpush1.msra.mxu0 0.0
        %6666 = vmatprep.subr.mxu0 0.0
        %6667 = vmatpush1.msra.mxu0 0.0
        %6668 = vmatprep.subr.mxu0 0.0
        %6669 = vmatpush1.msra.mxu0 0.0
        %6670 = vmatprep.subr.mxu0 0.0
        %6671 = vmatpush1.msra.mxu0 0.0
        %6672 = vmatprep.subr.mxu0 0.0
        %6673 = vmatpush1.msra.mxu0 0.0
        %6674 = vmatprep.subr.mxu0 0.0
        %6675 = vmatpush1.msra.mxu0 0.0
        %6676 = vmatprep.subr.mxu0 0.0
        %6677 = vmatpush1.msra.mxu0 0.0
        %6678 = vmatprep.subr.mxu0 0.0
        %6679 = vmatpush1.msra.mxu0 0.0
        %6680 = vmatprep.subr.mxu0 0.0
        %6681 = vmatpush1.msra.mxu0 0.0
        %6682 = vmatprep.subr.mxu0 0.0
        %6683 = vmatpush1.msra.mxu0 0.0
        %6684 = vmatprep.subr.mxu0 0.0
        %6685 = vmatpush1.msra.mxu0 0.0
        %6686 = vmatprep.subr.mxu0 0.0
        %6687 = vmatpush1.msra.mxu0 0.0
        %6688 = vmatprep.subr.mxu0 0.0
        %6689 = vmatpush1.msra.mxu0 0.0
        %6690 = vmatprep.subr.mxu0 0.0
        %6691 = vmatpush1.msra.mxu0 0.0
        %6692 = vmatprep.mubr.f32.mxu0 0.0
        %6693 = vmatmul.mubr.f32.gmra.mrb[0].mxu0 %v6617
        %v6694 = vpop.f32.mrb[0].mxu0
        %v6695 = vadd.f32 0.0, %v6694
        %v6696 = vpop.f32.mrb[0].mxu0
        %6697 = vmatprep.mubr.f32.mxu0 0.0
        %6698 = vmatmul.mubr.f32.gmra.mrb[0].mxu0 %v6620
        %v6699 = vpop.f32.mrb[0].mxu0
        %v6700 = vadd.f32 0.0, %v6699
        %v6701 = vpop.f32.mrb[0].mxu0
        %6702 = vmatprep.mubr.f32.mxu0 0.0
        %6703 = vmatmul.mubr.f32.gmra.mrb[0].mxu0 %v6623
        %v6704 = vpop.f32.mrb[0].mxu0
        %v6705 = vadd.f32 0.0, %v6704
        %v6706 = vpop.f32.mrb[0].mxu0
        %6707 = vmatprep.mubr.f32.mxu0 0.0
        %6708 = vmatmul.mubr.f32.gmra.mrb[0].mxu0 %v6626
        %v6709 = vpop.f32.mrb[0].mxu0
        %v6710 = vadd.f32 0.0, %v6709
        %v6711 = vpop.f32.mrb[0].mxu0
        %6712 = vdwg.mxu0
        %6713 = vrot.lane.b32.xlu0 %v6695, 125
        %v6714 = vpop.permute.xlu0 %6713
        %6715 = vrot.lane.b32.xlu0 %v6700, 125
        %v6716 = vpop.permute.xlu0 %6715
        %6717 = vrot.lane.b32.xlu0 %v6705, 125
        %v6718 = vpop.permute.xlu0 %6717
        %6719 = vrot.lane.b32.xlu0 %v6710, 125
        %v6720 = vpop.permute.xlu0 %6719
        %v6721 = vsel %vm4718, %v6714, 0.0
        %v6722 = vsel %vm4718, %v6716, 0.0
        %v6723 = vsel %vm4718, %v6718, 0.0
        %v6724 = vsel %vm4718, %v6720, 0.0
        %v6725 = vadd.f32 %v6607, %v6721
        %v6726 = vadd.f32 %v6608, %v6722
        %v6727 = vadd.f32 %v6609, %v6723
        %v6728 = vadd.f32 %v6610, %v6724
        %v6729 = vld [vmem:[%s47] sm:$0xff]
        %v6730 = vld [vmem:[%s47 + $0x8] sm:$0xff]
        %v6731 = vld [vmem:[%s47 + $0x10] sm:$0xff]
        %v6732 = vld [vmem:[%s47 + $0x18] sm:$0xff]
        %6734 = vset.pattern.permute.xlu0 0
        %6735 = vperm.xlu0 %6734, %v6729
        %v6736 = vpop.permute.xlu0 %6735
        %6739 = vset.pattern.permute.xlu0 0
        %6740 = vperm.xlu0 %6739, %v6730
        %v6741 = vpop.permute.xlu0 %6740
        %6744 = vset.pattern.permute.xlu0 0
        %6745 = vperm.xlu0 %6744, %v6731
        %v6746 = vpop.permute.xlu0 %6745
        %6749 = vset.pattern.permute.xlu0 0
        %6750 = vperm.xlu0 %6749, %v6732
        %v6751 = vpop.permute.xlu0 %6750
        %v6753 = vadd.f32 %v6725, %v6736
        %v6754 = vadd.f32 %v6726, %v6741
        %v6755 = vadd.f32 %v6727, %v6746
        %v6756 = vadd.f32 %v6728, %v6751
        %v6757 = vld [vmem:[%s49] sm:$0xff]
        %v6758 = vld [vmem:[%s49 + $0x8] sm:$0xff]
        %v6759 = vld [vmem:[%s49 + $0x10] sm:$0xff]
        %v6760 = vld [vmem:[%s49 + $0x18] sm:$0xff]
        %v6762 = vsel %vm1669, %v6757, 0
        %v6765 = vsel %vm1669, %v6758, 0
        %v6768 = vsel %vm1669, %v6759, 0
        %v6771 = vsel %vm1669, %v6760, 0
        %6773 = vmatprep.subr.mxu0 0.0
        %6774 = vmatpush1.msra.mxu0 %v6753
        %6775 = vmatprep.subr.mxu0 0.0
        %6776 = vmatpush1.msra.mxu0 %v6754
        %6777 = vmatprep.subr.mxu0 0.0
        %6778 = vmatpush1.msra.mxu0 %v6755
        %6779 = vmatprep.subr.mxu0 0.0
        %6780 = vmatpush1.msra.mxu0 %v6756
        %6781 = vmatprep.subr.mxu0 0.0
        %6782 = vmatpush1.msra.mxu0 0.0
        %6783 = vmatprep.subr.mxu0 0.0
        %6784 = vmatpush1.msra.mxu0 0.0
        %6785 = vmatprep.subr.mxu0 0.0
        %6786 = vmatpush1.msra.mxu0 0.0
        %6787 = vmatprep.subr.mxu0 0.0
        %6788 = vmatpush1.msra.mxu0 0.0
        %6789 = vmatprep.subr.mxu0 0.0
        %6790 = vmatpush1.msra.mxu0 0.0
        %6791 = vmatprep.subr.mxu0 0.0
        %6792 = vmatpush1.msra.mxu0 0.0
        %6793 = vmatprep.subr.mxu0 0.0
        %6794 = vmatpush1.msra.mxu0 0.0
        %6795 = vmatprep.subr.mxu0 0.0
        %6796 = vmatpush1.msra.mxu0 0.0
        %6797 = vmatprep.subr.mxu0 0.0
        %6798 = vmatpush1.msra.mxu0 0.0
        %6799 = vmatprep.subr.mxu0 0.0
        %6800 = vmatpush1.msra.mxu0 0.0
        %6801 = vmatprep.subr.mxu0 0.0
        %6802 = vmatpush1.msra.mxu0 0.0
        %6803 = vmatprep.subr.mxu0 0.0
        %6804 = vmatpush1.msra.mxu0 0.0
        %6805 = vmatprep.subr.mxu0 0.0
        %6806 = vmatpush1.msra.mxu0 0.0
        %6807 = vmatprep.subr.mxu0 0.0
        %6808 = vmatpush1.msra.mxu0 0.0
        %6809 = vmatprep.subr.mxu0 0.0
        %6810 = vmatpush1.msra.mxu0 0.0
        %6811 = vmatprep.subr.mxu0 0.0
        %6812 = vmatpush1.msra.mxu0 0.0
        %6813 = vmatprep.subr.mxu0 0.0
        %6814 = vmatpush1.msra.mxu0 0.0
        %6815 = vmatprep.subr.mxu0 0.0
        %6816 = vmatpush1.msra.mxu0 0.0
        %6817 = vmatprep.subr.mxu0 0.0
        %6818 = vmatpush1.msra.mxu0 0.0
        %6819 = vmatprep.subr.mxu0 0.0
        %6820 = vmatpush1.msra.mxu0 0.0
        %6821 = vmatprep.subr.mxu0 0.0
        %6822 = vmatpush1.msra.mxu0 0.0
        %6823 = vmatprep.subr.mxu0 0.0
        %6824 = vmatpush1.msra.mxu0 0.0
        %6825 = vmatprep.subr.mxu0 0.0
        %6826 = vmatpush1.msra.mxu0 0.0
        %6827 = vmatprep.subr.mxu0 0.0
        %6828 = vmatpush1.msra.mxu0 0.0
        %6829 = vmatprep.subr.mxu0 0.0
        %6830 = vmatpush1.msra.mxu0 0.0
        %6831 = vmatprep.subr.mxu0 0.0
        %6832 = vmatpush1.msra.mxu0 0.0
        %6833 = vmatprep.subr.mxu0 0.0
        %6834 = vmatpush1.msra.mxu0 0.0
        %6835 = vmatprep.subr.mxu0 0.0
        %6836 = vmatpush1.msra.mxu0 0.0
        %6837 = vmatprep.mubr.f32.mxu0 0.0
        %6838 = vmatmul.mubr.f32.gmra.mrb[0].mxu0 %v6762
        %v6839 = vpop.f32.mrb[0].mxu0
        %v6840 = vadd.f32 0.0, %v6839
        %v6841 = vpop.f32.mrb[0].mxu0
        %6842 = vmatprep.mubr.f32.mxu0 0.0
        %6843 = vmatmul.mubr.f32.gmra.mrb[0].mxu0 %v6765
        %v6844 = vpop.f32.mrb[0].mxu0
        %v6845 = vadd.f32 0.0, %v6844
        %v6846 = vpop.f32.mrb[0].mxu0
        %6847 = vmatprep.mubr.f32.mxu0 0.0
        %6848 = vmatmul.mubr.f32.gmra.mrb[0].mxu0 %v6768
        %v6849 = vpop.f32.mrb[0].mxu0
        %v6850 = vadd.f32 0.0, %v6849
        %v6851 = vpop.f32.mrb[0].mxu0
        %6852 = vmatprep.mubr.f32.mxu0 0.0
        %6853 = vmatmul.mubr.f32.gmra.mrb[0].mxu0 %v6771
        %v6854 = vpop.f32.mrb[0].mxu0
        %v6855 = vadd.f32 0.0, %v6854
        %v6856 = vpop.f32.mrb[0].mxu0
        %6857 = vdwg.mxu0
        %vm6858 = vcmp.ge.s32.totalorder %v1664, 16
        %6859 = vrot.lane.b32.xlu0 %v6840, 16
        %v6860 = vpop.permute.xlu0 %6859
        %6861 = vrot.lane.b32.xlu0 %v6845, 16
        %v6862 = vpop.permute.xlu0 %6861
        %6863 = vrot.lane.b32.xlu0 %v6850, 16
        %v6864 = vpop.permute.xlu0 %6863
        %6865 = vrot.lane.b32.xlu0 %v6855, 16
        %v6866 = vpop.permute.xlu0 %6865
        %v6867 = vsel %vm6858, %v6860, 0.0
        %v6868 = vsel %vm6858, %v6862, 0.0
        %v6869 = vsel %vm6858, %v6864, 0.0
        %v6870 = vsel %vm6858, %v6866, 0.0
        %s6871 = scalar_lea.vmem %s49, 32
        %v6872 = vld [vmem:[%s6871] sm:$0xff]
        %v6873 = vld [vmem:[%s6871 + $0x8] sm:$0xff]
        %v6874 = vld [vmem:[%s6871 + $0x10] sm:$0xff]
        %v6875 = vld [vmem:[%s6871 + $0x18] sm:$0xff]
        %v6877 = vsel %vm1669, %v6872, 0
        %v6880 = vsel %vm1669, %v6873, 0
        %v6883 = vsel %vm1669, %v6874, 0
        %v6886 = vsel %vm1669, %v6875, 0
        %6888 = vmatprep.subr.mxu0 0.0
        %6889 = vmatpush1.msra.mxu0 %v6753
        %6890 = vmatprep.subr.mxu0 0.0
        %6891 = vmatpush1.msra.mxu0 %v6754
        %6892 = vmatprep.subr.mxu0 0.0
        %6893 = vmatpush1.msra.mxu0 %v6755
        %6894 = vmatprep.subr.mxu0 0.0
        %6895 = vmatpush1.msra.mxu0 %v6756
        %6896 = vmatprep.subr.mxu0 0.0
        %6897 = vmatpush1.msra.mxu0 0.0
        %6898 = vmatprep.subr.mxu0 0.0
        %6899 = vmatpush1.msra.mxu0 0.0
        %6900 = vmatprep.subr.mxu0 0.0
        %6901 = vmatpush1.msra.mxu0 0.0
        %6902 = vmatprep.subr.mxu0 0.0
        %6903 = vmatpush1.msra.mxu0 0.0
        %6904 = vmatprep.subr.mxu0 0.0
        %6905 = vmatpush1.msra.mxu0 0.0
        %6906 = vmatprep.subr.mxu0 0.0
        %6907 = vmatpush1.msra.mxu0 0.0
        %6908 = vmatprep.subr.mxu0 0.0
        %6909 = vmatpush1.msra.mxu0 0.0
        %6910 = vmatprep.subr.mxu0 0.0
        %6911 = vmatpush1.msra.mxu0 0.0
        %6912 = vmatprep.subr.mxu0 0.0
        %6913 = vmatpush1.msra.mxu0 0.0
        %6914 = vmatprep.subr.mxu0 0.0
        %6915 = vmatpush1.msra.mxu0 0.0
        %6916 = vmatprep.subr.mxu0 0.0
        %6917 = vmatpush1.msra.mxu0 0.0
        %6918 = vmatprep.subr.mxu0 0.0
        %6919 = vmatpush1.msra.mxu0 0.0
        %6920 = vmatprep.subr.mxu0 0.0
        %6921 = vmatpush1.msra.mxu0 0.0
        %6922 = vmatprep.subr.mxu0 0.0
        %6923 = vmatpush1.msra.mxu0 0.0
        %6924 = vmatprep.subr.mxu0 0.0
        %6925 = vmatpush1.msra.mxu0 0.0
        %6926 = vmatprep.subr.mxu0 0.0
        %6927 = vmatpush1.msra.mxu0 0.0
        %6928 = vmatprep.subr.mxu0 0.0
        %6929 = vmatpush1.msra.mxu0 0.0
        %6930 = vmatprep.subr.mxu0 0.0
        %6931 = vmatpush1.msra.mxu0 0.0
        %6932 = vmatprep.subr.mxu0 0.0
        %6933 = vmatpush1.msra.mxu0 0.0
        %6934 = vmatprep.subr.mxu0 0.0
        %6935 = vmatpush1.msra.mxu0 0.0
        %6936 = vmatprep.subr.mxu0 0.0
        %6937 = vmatpush1.msra.mxu0 0.0
        %6938 = vmatprep.subr.mxu0 0.0
        %6939 = vmatpush1.msra.mxu0 0.0
        %6940 = vmatprep.subr.mxu0 0.0
        %6941 = vmatpush1.msra.mxu0 0.0
        %6942 = vmatprep.subr.mxu0 0.0
        %6943 = vmatpush1.msra.mxu0 0.0
        %6944 = vmatprep.subr.mxu0 0.0
        %6945 = vmatpush1.msra.mxu0 0.0
        %6946 = vmatprep.subr.mxu0 0.0
        %6947 = vmatpush1.msra.mxu0 0.0
        %6948 = vmatprep.subr.mxu0 0.0
        %6949 = vmatpush1.msra.mxu0 0.0
        %6950 = vmatprep.subr.mxu0 0.0
        %6951 = vmatpush1.msra.mxu0 0.0
        %6952 = vmatprep.mubr.f32.mxu0 0.0
        %6953 = vmatmul.mubr.f32.gmra.mrb[0].mxu0 %v6877
        %v6954 = vpop.f32.mrb[0].mxu0
        %v6955 = vadd.f32 0.0, %v6954
        %v6956 = vpop.f32.mrb[0].mxu0
        %6957 = vmatprep.mubr.f32.mxu0 0.0
        %6958 = vmatmul.mubr.f32.gmra.mrb[0].mxu0 %v6880
        %v6959 = vpop.f32.mrb[0].mxu0
        %v6960 = vadd.f32 0.0, %v6959
        %v6961 = vpop.f32.mrb[0].mxu0
        %6962 = vmatprep.mubr.f32.mxu0 0.0
        %6963 = vmatmul.mubr.f32.gmra.mrb[0].mxu0 %v6883
        %v6964 = vpop.f32.mrb[0].mxu0
        %v6965 = vadd.f32 0.0, %v6964
        %v6966 = vpop.f32.mrb[0].mxu0
        %6967 = vmatprep.mubr.f32.mxu0 0.0
        %6968 = vmatmul.mubr.f32.gmra.mrb[0].mxu0 %v6886
        %v6969 = vpop.f32.mrb[0].mxu0
        %v6970 = vadd.f32 0.0, %v6969
        %v6971 = vpop.f32.mrb[0].mxu0
        %6972 = vdwg.mxu0
        %vm6973 = vcmp.ge.s32.totalorder %v1664, 12
        %6974 = vrot.lane.b32.xlu0 %v6955, 12
        %v6975 = vpop.permute.xlu0 %6974
        %6976 = vrot.lane.b32.xlu0 %v6960, 12
        %v6977 = vpop.permute.xlu0 %6976
        %6978 = vrot.lane.b32.xlu0 %v6965, 12
        %v6979 = vpop.permute.xlu0 %6978
        %6980 = vrot.lane.b32.xlu0 %v6970, 12
        %v6981 = vpop.permute.xlu0 %6980
        %v6982 = vsel %vm6973, %v6975, 0.0
        %v6983 = vsel %vm6973, %v6977, 0.0
        %v6984 = vsel %vm6973, %v6979, 0.0
        %v6985 = vsel %vm6973, %v6981, 0.0
        %v6986 = vadd.f32 %v6867, %v6982
        %v6987 = vadd.f32 %v6868, %v6983
        %v6988 = vadd.f32 %v6869, %v6984
        %v6989 = vadd.f32 %v6870, %v6985
        %s6990 = scalar_lea.vmem %s49, 64
        %v6991 = vld [vmem:[%s6990] sm:$0xff]
        %v6992 = vld [vmem:[%s6990 + $0x8] sm:$0xff]
        %v6993 = vld [vmem:[%s6990 + $0x10] sm:$0xff]
        %v6994 = vld [vmem:[%s6990 + $0x18] sm:$0xff]
        %v6996 = vsel %vm1669, %v6991, 0
        %v6999 = vsel %vm1669, %v6992, 0
        %v7002 = vsel %vm1669, %v6993, 0
        %v7005 = vsel %vm1669, %v6994, 0
        %7007 = vmatprep.subr.mxu0 0.0
        %7008 = vmatpush1.msra.mxu0 %v6753
        %7009 = vmatprep.subr.mxu0 0.0
        %7010 = vmatpush1.msra.mxu0 %v6754
        %7011 = vmatprep.subr.mxu0 0.0
        %7012 = vmatpush1.msra.mxu0 %v6755
        %7013 = vmatprep.subr.mxu0 0.0
        %7014 = vmatpush1.msra.mxu0 %v6756
        %7015 = vmatprep.subr.mxu0 0.0
        %7016 = vmatpush1.msra.mxu0 0.0
        %7017 = vmatprep.subr.mxu0 0.0
        %7018 = vmatpush1.msra.mxu0 0.0
        %7019 = vmatprep.subr.mxu0 0.0
        %7020 = vmatpush1.msra.mxu0 0.0
        %7021 = vmatprep.subr.mxu0 0.0
        %7022 = vmatpush1.msra.mxu0 0.0
        %7023 = vmatprep.subr.mxu0 0.0
        %7024 = vmatpush1.msra.mxu0 0.0
        %7025 = vmatprep.subr.mxu0 0.0
        %7026 = vmatpush1.msra.mxu0 0.0
        %7027 = vmatprep.subr.mxu0 0.0
        %7028 = vmatpush1.msra.mxu0 0.0
        %7029 = vmatprep.subr.mxu0 0.0
        %7030 = vmatpush1.msra.mxu0 0.0
        %7031 = vmatprep.subr.mxu0 0.0
        %7032 = vmatpush1.msra.mxu0 0.0
        %7033 = vmatprep.subr.mxu0 0.0
        %7034 = vmatpush1.msra.mxu0 0.0
        %7035 = vmatprep.subr.mxu0 0.0
        %7036 = vmatpush1.msra.mxu0 0.0
        %7037 = vmatprep.subr.mxu0 0.0
        %7038 = vmatpush1.msra.mxu0 0.0
        %7039 = vmatprep.subr.mxu0 0.0
        %7040 = vmatpush1.msra.mxu0 0.0
        %7041 = vmatprep.subr.mxu0 0.0
        %7042 = vmatpush1.msra.mxu0 0.0
        %7043 = vmatprep.subr.mxu0 0.0
        %7044 = vmatpush1.msra.mxu0 0.0
        %7045 = vmatprep.subr.mxu0 0.0
        %7046 = vmatpush1.msra.mxu0 0.0
        %7047 = vmatprep.subr.mxu0 0.0
        %7048 = vmatpush1.msra.mxu0 0.0
        %7049 = vmatprep.subr.mxu0 0.0
        %7050 = vmatpush1.msra.mxu0 0.0
        %7051 = vmatprep.subr.mxu0 0.0
        %7052 = vmatpush1.msra.mxu0 0.0
        %7053 = vmatprep.subr.mxu0 0.0
        %7054 = vmatpush1.msra.mxu0 0.0
        %7055 = vmatprep.subr.mxu0 0.0
        %7056 = vmatpush1.msra.mxu0 0.0
        %7057 = vmatprep.subr.mxu0 0.0
        %7058 = vmatpush1.msra.mxu0 0.0
        %7059 = vmatprep.subr.mxu0 0.0
        %7060 = vmatpush1.msra.mxu0 0.0
        %7061 = vmatprep.subr.mxu0 0.0
        %7062 = vmatpush1.msra.mxu0 0.0
        %7063 = vmatprep.subr.mxu0 0.0
        %7064 = vmatpush1.msra.mxu0 0.0
        %7065 = vmatprep.subr.mxu0 0.0
        %7066 = vmatpush1.msra.mxu0 0.0
        %7067 = vmatprep.subr.mxu0 0.0
        %7068 = vmatpush1.msra.mxu0 0.0
        %7069 = vmatprep.subr.mxu0 0.0
        %7070 = vmatpush1.msra.mxu0 0.0
        %7071 = vmatprep.mubr.f32.mxu0 0.0
        %7072 = vmatmul.mubr.f32.gmra.mrb[0].mxu0 %v6996
        %v7073 = vpop.f32.mrb[0].mxu0
        %v7074 = vadd.f32 0.0, %v7073
        %v7075 = vpop.f32.mrb[0].mxu0
        %7076 = vmatprep.mubr.f32.mxu0 0.0
        %7077 = vmatmul.mubr.f32.gmra.mrb[0].mxu0 %v6999
        %v7078 = vpop.f32.mrb[0].mxu0
        %v7079 = vadd.f32 0.0, %v7078
        %v7080 = vpop.f32.mrb[0].mxu0
        %7081 = vmatprep.mubr.f32.mxu0 0.0
        %7082 = vmatmul.mubr.f32.gmra.mrb[0].mxu0 %v7002
        %v7083 = vpop.f32.mrb[0].mxu0
        %v7084 = vadd.f32 0.0, %v7083
        %v7085 = vpop.f32.mrb[0].mxu0
        %7086 = vmatprep.mubr.f32.mxu0 0.0
        %7087 = vmatmul.mubr.f32.gmra.mrb[0].mxu0 %v7005
        %v7088 = vpop.f32.mrb[0].mxu0
        %v7089 = vadd.f32 0.0, %v7088
        %v7090 = vpop.f32.mrb[0].mxu0
        %7091 = vdwg.mxu0
        %vm7092 = vcmp.ge.s32.totalorder %v1664, 8
        %7093 = vrot.lane.b32.xlu0 %v7074, 8
        %v7094 = vpop.permute.xlu0 %7093
        %7095 = vrot.lane.b32.xlu0 %v7079, 8
        %v7096 = vpop.permute.xlu0 %7095
        %7097 = vrot.lane.b32.xlu0 %v7084, 8
        %v7098 = vpop.permute.xlu0 %7097
        %7099 = vrot.lane.b32.xlu0 %v7089, 8
        %v7100 = vpop.permute.xlu0 %7099
        %v7101 = vsel %vm7092, %v7094, 0.0
        %v7102 = vsel %vm7092, %v7096, 0.0
        %v7103 = vsel %vm7092, %v7098, 0.0
        %v7104 = vsel %vm7092, %v7100, 0.0
        %v7105 = vadd.f32 %v6986, %v7101
        %v7106 = vadd.f32 %v6987, %v7102
        %v7107 = vadd.f32 %v6988, %v7103
        %v7108 = vadd.f32 %v6989, %v7104
        %s7109 = scalar_lea.vmem %s49, 96
        %v7110 = vld [vmem:[%s7109] sm:$0xff]
        %v7111 = vld [vmem:[%s7109 + $0x8] sm:$0xff]
        %v7112 = vld [vmem:[%s7109 + $0x10] sm:$0xff]
        %v7113 = vld [vmem:[%s7109 + $0x18] sm:$0xff]
        %v7115 = vsel %vm1669, %v7110, 0
        %v7118 = vsel %vm1669, %v7111, 0
        %v7121 = vsel %vm1669, %v7112, 0
        %v7124 = vsel %vm1669, %v7113, 0
        %7126 = vmatprep.subr.mxu0 0.0
        %7127 = vmatpush1.msra.mxu0 %v6753
        %7128 = vmatprep.subr.mxu0 0.0
        %7129 = vmatpush1.msra.mxu0 %v6754
        %7130 = vmatprep.subr.mxu0 0.0
        %7131 = vmatpush1.msra.mxu0 %v6755
        %7132 = vmatprep.subr.mxu0 0.0
        %7133 = vmatpush1.msra.mxu0 %v6756
        %7134 = vmatprep.subr.mxu0 0.0
        %7135 = vmatpush1.msra.mxu0 0.0
        %7136 = vmatprep.subr.mxu0 0.0
        %7137 = vmatpush1.msra.mxu0 0.0
        %7138 = vmatprep.subr.mxu0 0.0
        %7139 = vmatpush1.msra.mxu0 0.0
        %7140 = vmatprep.subr.mxu0 0.0
        %7141 = vmatpush1.msra.mxu0 0.0
        %7142 = vmatprep.subr.mxu0 0.0
        %7143 = vmatpush1.msra.mxu0 0.0
        %7144 = vmatprep.subr.mxu0 0.0
        %7145 = vmatpush1.msra.mxu0 0.0
        %7146 = vmatprep.subr.mxu0 0.0
        %7147 = vmatpush1.msra.mxu0 0.0
        %7148 = vmatprep.subr.mxu0 0.0
        %7149 = vmatpush1.msra.mxu0 0.0
        %7150 = vmatprep.subr.mxu0 0.0
        %7151 = vmatpush1.msra.mxu0 0.0
        %7152 = vmatprep.subr.mxu0 0.0
        %7153 = vmatpush1.msra.mxu0 0.0
        %7154 = vmatprep.subr.mxu0 0.0
        %7155 = vmatpush1.msra.mxu0 0.0
        %7156 = vmatprep.subr.mxu0 0.0
        %7157 = vmatpush1.msra.mxu0 0.0
        %7158 = vmatprep.subr.mxu0 0.0
        %7159 = vmatpush1.msra.mxu0 0.0
        %7160 = vmatprep.subr.mxu0 0.0
        %7161 = vmatpush1.msra.mxu0 0.0
        %7162 = vmatprep.subr.mxu0 0.0
        %7163 = vmatpush1.msra.mxu0 0.0
        %7164 = vmatprep.subr.mxu0 0.0
        %7165 = vmatpush1.msra.mxu0 0.0
        %7166 = vmatprep.subr.mxu0 0.0
        %7167 = vmatpush1.msra.mxu0 0.0
        %7168 = vmatprep.subr.mxu0 0.0
        %7169 = vmatpush1.msra.mxu0 0.0
        %7170 = vmatprep.subr.mxu0 0.0
        %7171 = vmatpush1.msra.mxu0 0.0
        %7172 = vmatprep.subr.mxu0 0.0
        %7173 = vmatpush1.msra.mxu0 0.0
        %7174 = vmatprep.subr.mxu0 0.0
        %7175 = vmatpush1.msra.mxu0 0.0
        %7176 = vmatprep.subr.mxu0 0.0
        %7177 = vmatpush1.msra.mxu0 0.0
        %7178 = vmatprep.subr.mxu0 0.0
        %7179 = vmatpush1.msra.mxu0 0.0
        %7180 = vmatprep.subr.mxu0 0.0
        %7181 = vmatpush1.msra.mxu0 0.0
        %7182 = vmatprep.subr.mxu0 0.0
        %7183 = vmatpush1.msra.mxu0 0.0
        %7184 = vmatprep.subr.mxu0 0.0
        %7185 = vmatpush1.msra.mxu0 0.0
        %7186 = vmatprep.subr.mxu0 0.0
        %7187 = vmatpush1.msra.mxu0 0.0
        %7188 = vmatprep.subr.mxu0 0.0
        %7189 = vmatpush1.msra.mxu0 0.0
        %7190 = vmatprep.mubr.f32.mxu0 0.0
        %7191 = vmatmul.mubr.f32.gmra.mrb[0].mxu0 %v7115
        %v7192 = vpop.f32.mrb[0].mxu0
        %v7193 = vadd.f32 0.0, %v7192
        %v7194 = vpop.f32.mrb[0].mxu0
        %7195 = vmatprep.mubr.f32.mxu0 0.0
        %7196 = vmatmul.mubr.f32.gmra.mrb[0].mxu0 %v7118
        %v7197 = vpop.f32.mrb[0].mxu0
        %v7198 = vadd.f32 0.0, %v7197
        %v7199 = vpop.f32.mrb[0].mxu0
        %7200 = vmatprep.mubr.f32.mxu0 0.0
        %7201 = vmatmul.mubr.f32.gmra.mrb[0].mxu0 %v7121
        %v7202 = vpop.f32.mrb[0].mxu0
        %v7203 = vadd.f32 0.0, %v7202
        %v7204 = vpop.f32.mrb[0].mxu0
        %7205 = vmatprep.mubr.f32.mxu0 0.0
        %7206 = vmatmul.mubr.f32.gmra.mrb[0].mxu0 %v7124
        %v7207 = vpop.f32.mrb[0].mxu0
        %v7208 = vadd.f32 0.0, %v7207
        %v7209 = vpop.f32.mrb[0].mxu0
        %7210 = vdwg.mxu0
        %7211 = vrot.lane.b32.xlu0 %v7193, 4
        %v7212 = vpop.permute.xlu0 %7211
        %7213 = vrot.lane.b32.xlu0 %v7198, 4
        %v7214 = vpop.permute.xlu0 %7213
        %7215 = vrot.lane.b32.xlu0 %v7203, 4
        %v7216 = vpop.permute.xlu0 %7215
        %7217 = vrot.lane.b32.xlu0 %v7208, 4
        %v7218 = vpop.permute.xlu0 %7217
        %v7219 = vsel %vm2134, %v7212, 0.0
        %v7220 = vsel %vm2134, %v7214, 0.0
        %v7221 = vsel %vm2134, %v7216, 0.0
        %v7222 = vsel %vm2134, %v7218, 0.0
        %v7223 = vadd.f32 %v7105, %v7219
        %v7224 = vadd.f32 %v7106, %v7220
        %v7225 = vadd.f32 %v7107, %v7221
        %v7226 = vadd.f32 %v7108, %v7222
        %s7227 = scalar_lea.vmem %s49, 128
        %v7228 = vld [vmem:[%s7227] sm:$0xff]
        %v7229 = vld [vmem:[%s7227 + $0x8] sm:$0xff]
        %v7230 = vld [vmem:[%s7227 + $0x10] sm:$0xff]
        %v7231 = vld [vmem:[%s7227 + $0x18] sm:$0xff]
        %v7233 = vsel %vm1669, %v7228, 0
        %v7236 = vsel %vm1669, %v7229, 0
        %v7239 = vsel %vm1669, %v7230, 0
        %v7242 = vsel %vm1669, %v7231, 0
        %7244 = vmatprep.subr.mxu0 0.0
        %7245 = vmatpush1.msra.mxu0 %v6753
        %7246 = vmatprep.subr.mxu0 0.0
        %7247 = vmatpush1.msra.mxu0 %v6754
        %7248 = vmatprep.subr.mxu0 0.0
        %7249 = vmatpush1.msra.mxu0 %v6755
        %7250 = vmatprep.subr.mxu0 0.0
        %7251 = vmatpush1.msra.mxu0 %v6756
        %7252 = vmatprep.subr.mxu0 0.0
        %7253 = vmatpush1.msra.mxu0 0.0
        %7254 = vmatprep.subr.mxu0 0.0
        %7255 = vmatpush1.msra.mxu0 0.0
        %7256 = vmatprep.subr.mxu0 0.0
        %7257 = vmatpush1.msra.mxu0 0.0
        %7258 = vmatprep.subr.mxu0 0.0
        %7259 = vmatpush1.msra.mxu0 0.0
        %7260 = vmatprep.subr.mxu0 0.0
        %7261 = vmatpush1.msra.mxu0 0.0
        %7262 = vmatprep.subr.mxu0 0.0
        %7263 = vmatpush1.msra.mxu0 0.0
        %7264 = vmatprep.subr.mxu0 0.0
        %7265 = vmatpush1.msra.mxu0 0.0
        %7266 = vmatprep.subr.mxu0 0.0
        %7267 = vmatpush1.msra.mxu0 0.0
        %7268 = vmatprep.subr.mxu0 0.0
        %7269 = vmatpush1.msra.mxu0 0.0
        %7270 = vmatprep.subr.mxu0 0.0
        %7271 = vmatpush1.msra.mxu0 0.0
        %7272 = vmatprep.subr.mxu0 0.0
        %7273 = vmatpush1.msra.mxu0 0.0
        %7274 = vmatprep.subr.mxu0 0.0
        %7275 = vmatpush1.msra.mxu0 0.0
        %7276 = vmatprep.subr.mxu0 0.0
        %7277 = vmatpush1.msra.mxu0 0.0
        %7278 = vmatprep.subr.mxu0 0.0
        %7279 = vmatpush1.msra.mxu0 0.0
        %7280 = vmatprep.subr.mxu0 0.0
        %7281 = vmatpush1.msra.mxu0 0.0
        %7282 = vmatprep.subr.mxu0 0.0
        %7283 = vmatpush1.msra.mxu0 0.0
        %7284 = vmatprep.subr.mxu0 0.0
        %7285 = vmatpush1.msra.mxu0 0.0
        %7286 = vmatprep.subr.mxu0 0.0
        %7287 = vmatpush1.msra.mxu0 0.0
        %7288 = vmatprep.subr.mxu0 0.0
        %7289 = vmatpush1.msra.mxu0 0.0
        %7290 = vmatprep.subr.mxu0 0.0
        %7291 = vmatpush1.msra.mxu0 0.0
        %7292 = vmatprep.subr.mxu0 0.0
        %7293 = vmatpush1.msra.mxu0 0.0
        %7294 = vmatprep.subr.mxu0 0.0
        %7295 = vmatpush1.msra.mxu0 0.0
        %7296 = vmatprep.subr.mxu0 0.0
        %7297 = vmatpush1.msra.mxu0 0.0
        %7298 = vmatprep.subr.mxu0 0.0
        %7299 = vmatpush1.msra.mxu0 0.0
        %7300 = vmatprep.subr.mxu0 0.0
        %7301 = vmatpush1.msra.mxu0 0.0
        %7302 = vmatprep.subr.mxu0 0.0
        %7303 = vmatpush1.msra.mxu0 0.0
        %7304 = vmatprep.subr.mxu0 0.0
        %7305 = vmatpush1.msra.mxu0 0.0
        %7306 = vmatprep.subr.mxu0 0.0
        %7307 = vmatpush1.msra.mxu0 0.0
        %7308 = vmatprep.mubr.f32.mxu0 0.0
        %7309 = vmatmul.mubr.f32.gmra.mrb[0].mxu0 %v7233
        %v7310 = vpop.f32.mrb[0].mxu0
        %v7311 = vadd.f32 0.0, %v7310
        %v7312 = vpop.f32.mrb[0].mxu0
        %7313 = vmatprep.mubr.f32.mxu0 0.0
        %7314 = vmatmul.mubr.f32.gmra.mrb[0].mxu0 %v7236
        %v7315 = vpop.f32.mrb[0].mxu0
        %v7316 = vadd.f32 0.0, %v7315
        %v7317 = vpop.f32.mrb[0].mxu0
        %7318 = vmatprep.mubr.f32.mxu0 0.0
        %7319 = vmatmul.mubr.f32.gmra.mrb[0].mxu0 %v7239
        %v7320 = vpop.f32.mrb[0].mxu0
        %v7321 = vadd.f32 0.0, %v7320
        %v7322 = vpop.f32.mrb[0].mxu0
        %7323 = vmatprep.mubr.f32.mxu0 0.0
        %7324 = vmatmul.mubr.f32.gmra.mrb[0].mxu0 %v7242
        %v7325 = vpop.f32.mrb[0].mxu0
        %v7326 = vadd.f32 0.0, %v7325
        %v7327 = vpop.f32.mrb[0].mxu0
        %7328 = vdwg.mxu0
        %v7329 = vadd.f32 %v7223, %v7311
        %v7330 = vadd.f32 %v7224, %v7316
        %v7331 = vadd.f32 %v7225, %v7321
        %v7332 = vadd.f32 %v7226, %v7326
        %s7333 = scalar_lea.vmem %s49, 160
        %v7334 = vld [vmem:[%s7333] sm:$0xff]
        %v7335 = vld [vmem:[%s7333 + $0x8] sm:$0xff]
        %v7336 = vld [vmem:[%s7333 + $0x10] sm:$0xff]
        %v7337 = vld [vmem:[%s7333 + $0x18] sm:$0xff]
        %v7339 = vsel %vm1669, %v7334, 0
        %v7342 = vsel %vm1669, %v7335, 0
        %v7345 = vsel %vm1669, %v7336, 0
        %v7348 = vsel %vm1669, %v7337, 0
        %7350 = vmatprep.subr.mxu0 0.0
        %7351 = vmatpush1.msra.mxu0 %v6753
        %7352 = vmatprep.subr.mxu0 0.0
        %7353 = vmatpush1.msra.mxu0 %v6754
        %7354 = vmatprep.subr.mxu0 0.0
        %7355 = vmatpush1.msra.mxu0 %v6755
        %7356 = vmatprep.subr.mxu0 0.0
        %7357 = vmatpush1.msra.mxu0 %v6756
        %7358 = vmatprep.subr.mxu0 0.0
        %7359 = vmatpush1.msra.mxu0 0.0
        %7360 = vmatprep.subr.mxu0 0.0
        %7361 = vmatpush1.msra.mxu0 0.0
        %7362 = vmatprep.subr.mxu0 0.0
        %7363 = vmatpush1.msra.mxu0 0.0
        %7364 = vmatprep.subr.mxu0 0.0
        %7365 = vmatpush1.msra.mxu0 0.0
        %7366 = vmatprep.subr.mxu0 0.0
        %7367 = vmatpush1.msra.mxu0 0.0
        %7368 = vmatprep.subr.mxu0 0.0
        %7369 = vmatpush1.msra.mxu0 0.0
        %7370 = vmatprep.subr.mxu0 0.0
        %7371 = vmatpush1.msra.mxu0 0.0
        %7372 = vmatprep.subr.mxu0 0.0
        %7373 = vmatpush1.msra.mxu0 0.0
        %7374 = vmatprep.subr.mxu0 0.0
        %7375 = vmatpush1.msra.mxu0 0.0
        %7376 = vmatprep.subr.mxu0 0.0
        %7377 = vmatpush1.msra.mxu0 0.0
        %7378 = vmatprep.subr.mxu0 0.0
        %7379 = vmatpush1.msra.mxu0 0.0
        %7380 = vmatprep.subr.mxu0 0.0
        %7381 = vmatpush1.msra.mxu0 0.0
        %7382 = vmatprep.subr.mxu0 0.0
        %7383 = vmatpush1.msra.mxu0 0.0
        %7384 = vmatprep.subr.mxu0 0.0
        %7385 = vmatpush1.msra.mxu0 0.0
        %7386 = vmatprep.subr.mxu0 0.0
        %7387 = vmatpush1.msra.mxu0 0.0
        %7388 = vmatprep.subr.mxu0 0.0
        %7389 = vmatpush1.msra.mxu0 0.0
        %7390 = vmatprep.subr.mxu0 0.0
        %7391 = vmatpush1.msra.mxu0 0.0
        %7392 = vmatprep.subr.mxu0 0.0
        %7393 = vmatpush1.msra.mxu0 0.0
        %7394 = vmatprep.subr.mxu0 0.0
        %7395 = vmatpush1.msra.mxu0 0.0
        %7396 = vmatprep.subr.mxu0 0.0
        %7397 = vmatpush1.msra.mxu0 0.0
        %7398 = vmatprep.subr.mxu0 0.0
        %7399 = vmatpush1.msra.mxu0 0.0
        %7400 = vmatprep.subr.mxu0 0.0
        %7401 = vmatpush1.msra.mxu0 0.0
        %7402 = vmatprep.subr.mxu0 0.0
        %7403 = vmatpush1.msra.mxu0 0.0
        %7404 = vmatprep.subr.mxu0 0.0
        %7405 = vmatpush1.msra.mxu0 0.0
        %7406 = vmatprep.subr.mxu0 0.0
        %7407 = vmatpush1.msra.mxu0 0.0
        %7408 = vmatprep.subr.mxu0 0.0
        %7409 = vmatpush1.msra.mxu0 0.0
        %7410 = vmatprep.subr.mxu0 0.0
        %7411 = vmatpush1.msra.mxu0 0.0
        %7412 = vmatprep.subr.mxu0 0.0
        %7413 = vmatpush1.msra.mxu0 0.0
        %7414 = vmatprep.mubr.f32.mxu0 0.0
        %7415 = vmatmul.mubr.f32.gmra.mrb[0].mxu0 %v7339
        %v7416 = vpop.f32.mrb[0].mxu0
        %v7417 = vadd.f32 0.0, %v7416
        %v7418 = vpop.f32.mrb[0].mxu0
        %7419 = vmatprep.mubr.f32.mxu0 0.0
        %7420 = vmatmul.mubr.f32.gmra.mrb[0].mxu0 %v7342
        %v7421 = vpop.f32.mrb[0].mxu0
        %v7422 = vadd.f32 0.0, %v7421
        %v7423 = vpop.f32.mrb[0].mxu0
        %7424 = vmatprep.mubr.f32.mxu0 0.0
        %7425 = vmatmul.mubr.f32.gmra.mrb[0].mxu0 %v7345
        %v7426 = vpop.f32.mrb[0].mxu0
        %v7427 = vadd.f32 0.0, %v7426
        %v7428 = vpop.f32.mrb[0].mxu0
        %7429 = vmatprep.mubr.f32.mxu0 0.0
        %7430 = vmatmul.mubr.f32.gmra.mrb[0].mxu0 %v7348
        %v7431 = vpop.f32.mrb[0].mxu0
        %v7432 = vadd.f32 0.0, %v7431
        %v7433 = vpop.f32.mrb[0].mxu0
        %7434 = vdwg.mxu0
        %7435 = vrot.lane.b32.xlu0 %v7417, 124
        %v7436 = vpop.permute.xlu0 %7435
        %7437 = vrot.lane.b32.xlu0 %v7422, 124
        %v7438 = vpop.permute.xlu0 %7437
        %7439 = vrot.lane.b32.xlu0 %v7427, 124
        %v7440 = vpop.permute.xlu0 %7439
        %7441 = vrot.lane.b32.xlu0 %v7432, 124
        %v7442 = vpop.permute.xlu0 %7441
        %v7443 = vsel %vm2593, %v7436, 0.0
        %v7444 = vsel %vm2593, %v7438, 0.0
        %v7445 = vsel %vm2593, %v7440, 0.0
        %v7446 = vsel %vm2593, %v7442, 0.0
        %v7447 = vadd.f32 %v7329, %v7443
        %v7448 = vadd.f32 %v7330, %v7444
        %v7449 = vadd.f32 %v7331, %v7445
        %v7450 = vadd.f32 %v7332, %v7446
        %s7451 = scalar_lea.vmem %s49, 192
        %v7452 = vld [vmem:[%s7451] sm:$0xff]
        %v7453 = vld [vmem:[%s7451 + $0x8] sm:$0xff]
        %v7454 = vld [vmem:[%s7451 + $0x10] sm:$0xff]
        %v7455 = vld [vmem:[%s7451 + $0x18] sm:$0xff]
        %v7457 = vsel %vm1669, %v7452, 0
        %v7460 = vsel %vm1669, %v7453, 0
        %v7463 = vsel %vm1669, %v7454, 0
        %v7466 = vsel %vm1669, %v7455, 0
        %7468 = vmatprep.subr.mxu0 0.0
        %7469 = vmatpush1.msra.mxu0 %v6753
        %7470 = vmatprep.subr.mxu0 0.0
        %7471 = vmatpush1.msra.mxu0 %v6754
        %7472 = vmatprep.subr.mxu0 0.0
        %7473 = vmatpush1.msra.mxu0 %v6755
        %7474 = vmatprep.subr.mxu0 0.0
        %7475 = vmatpush1.msra.mxu0 %v6756
        %7476 = vmatprep.subr.mxu0 0.0
        %7477 = vmatpush1.msra.mxu0 0.0
        %7478 = vmatprep.subr.mxu0 0.0
        %7479 = vmatpush1.msra.mxu0 0.0
        %7480 = vmatprep.subr.mxu0 0.0
        %7481 = vmatpush1.msra.mxu0 0.0
        %7482 = vmatprep.subr.mxu0 0.0
        %7483 = vmatpush1.msra.mxu0 0.0
        %7484 = vmatprep.subr.mxu0 0.0
        %7485 = vmatpush1.msra.mxu0 0.0
        %7486 = vmatprep.subr.mxu0 0.0
        %7487 = vmatpush1.msra.mxu0 0.0
        %7488 = vmatprep.subr.mxu0 0.0
        %7489 = vmatpush1.msra.mxu0 0.0
        %7490 = vmatprep.subr.mxu0 0.0
        %7491 = vmatpush1.msra.mxu0 0.0
        %7492 = vmatprep.subr.mxu0 0.0
        %7493 = vmatpush1.msra.mxu0 0.0
        %7494 = vmatprep.subr.mxu0 0.0
        %7495 = vmatpush1.msra.mxu0 0.0
        %7496 = vmatprep.subr.mxu0 0.0
        %7497 = vmatpush1.msra.mxu0 0.0
        %7498 = vmatprep.subr.mxu0 0.0
        %7499 = vmatpush1.msra.mxu0 0.0
        %7500 = vmatprep.subr.mxu0 0.0
        %7501 = vmatpush1.msra.mxu0 0.0
        %7502 = vmatprep.subr.mxu0 0.0
        %7503 = vmatpush1.msra.mxu0 0.0
        %7504 = vmatprep.subr.mxu0 0.0
        %7505 = vmatpush1.msra.mxu0 0.0
        %7506 = vmatprep.subr.mxu0 0.0
        %7507 = vmatpush1.msra.mxu0 0.0
        %7508 = vmatprep.subr.mxu0 0.0
        %7509 = vmatpush1.msra.mxu0 0.0
        %7510 = vmatprep.subr.mxu0 0.0
        %7511 = vmatpush1.msra.mxu0 0.0
        %7512 = vmatprep.subr.mxu0 0.0
        %7513 = vmatpush1.msra.mxu0 0.0
        %7514 = vmatprep.subr.mxu0 0.0
        %7515 = vmatpush1.msra.mxu0 0.0
        %7516 = vmatprep.subr.mxu0 0.0
        %7517 = vmatpush1.msra.mxu0 0.0
        %7518 = vmatprep.subr.mxu0 0.0
        %7519 = vmatpush1.msra.mxu0 0.0
        %7520 = vmatprep.subr.mxu0 0.0
        %7521 = vmatpush1.msra.mxu0 0.0
        %7522 = vmatprep.subr.mxu0 0.0
        %7523 = vmatpush1.msra.mxu0 0.0
        %7524 = vmatprep.subr.mxu0 0.0
        %7525 = vmatpush1.msra.mxu0 0.0
        %7526 = vmatprep.subr.mxu0 0.0
        %7527 = vmatpush1.msra.mxu0 0.0
        %7528 = vmatprep.subr.mxu0 0.0
        %7529 = vmatpush1.msra.mxu0 0.0
        %7530 = vmatprep.subr.mxu0 0.0
        %7531 = vmatpush1.msra.mxu0 0.0
        %7532 = vmatprep.mubr.f32.mxu0 0.0
        %7533 = vmatmul.mubr.f32.gmra.mrb[0].mxu0 %v7457
        %v7534 = vpop.f32.mrb[0].mxu0
        %v7535 = vadd.f32 0.0, %v7534
        %v7536 = vpop.f32.mrb[0].mxu0
        %7537 = vmatprep.mubr.f32.mxu0 0.0
        %7538 = vmatmul.mubr.f32.gmra.mrb[0].mxu0 %v7460
        %v7539 = vpop.f32.mrb[0].mxu0
        %v7540 = vadd.f32 0.0, %v7539
        %v7541 = vpop.f32.mrb[0].mxu0
        %7542 = vmatprep.mubr.f32.mxu0 0.0
        %7543 = vmatmul.mubr.f32.gmra.mrb[0].mxu0 %v7463
        %v7544 = vpop.f32.mrb[0].mxu0
        %v7545 = vadd.f32 0.0, %v7544
        %v7546 = vpop.f32.mrb[0].mxu0
        %7547 = vmatprep.mubr.f32.mxu0 0.0
        %7548 = vmatmul.mubr.f32.gmra.mrb[0].mxu0 %v7466
        %v7549 = vpop.f32.mrb[0].mxu0
        %v7550 = vadd.f32 0.0, %v7549
        %v7551 = vpop.f32.mrb[0].mxu0
        %7552 = vdwg.mxu0
        %vm7553 = vcmp.lt.s32.totalorder %v1664, 120
        %7554 = vrot.lane.b32.xlu0 %v7535, 120
        %v7555 = vpop.permute.xlu0 %7554
        %7556 = vrot.lane.b32.xlu0 %v7540, 120
        %v7557 = vpop.permute.xlu0 %7556
        %7558 = vrot.lane.b32.xlu0 %v7545, 120
        %v7559 = vpop.permute.xlu0 %7558
        %7560 = vrot.lane.b32.xlu0 %v7550, 120
        %v7561 = vpop.permute.xlu0 %7560
        %v7562 = vsel %vm7553, %v7555, 0.0
        %v7563 = vsel %vm7553, %v7557, 0.0
        %v7564 = vsel %vm7553, %v7559, 0.0
        %v7565 = vsel %vm7553, %v7561, 0.0
        %v7566 = vadd.f32 %v7447, %v7562
        %v7567 = vadd.f32 %v7448, %v7563
        %v7568 = vadd.f32 %v7449, %v7564
        %v7569 = vadd.f32 %v7450, %v7565
        %s7570 = scalar_lea.vmem %s49, 224
        %v7571 = vld [vmem:[%s7570] sm:$0xff]
        %v7572 = vld [vmem:[%s7570 + $0x8] sm:$0xff]
        %v7573 = vld [vmem:[%s7570 + $0x10] sm:$0xff]
        %v7574 = vld [vmem:[%s7570 + $0x18] sm:$0xff]
        %v7576 = vsel %vm1669, %v7571, 0
        %v7579 = vsel %vm1669, %v7572, 0
        %v7582 = vsel %vm1669, %v7573, 0
        %v7585 = vsel %vm1669, %v7574, 0
        %7587 = vmatprep.subr.mxu0 0.0
        %7588 = vmatpush1.msra.mxu0 %v6753
        %7589 = vmatprep.subr.mxu0 0.0
        %7590 = vmatpush1.msra.mxu0 %v6754
        %7591 = vmatprep.subr.mxu0 0.0
        %7592 = vmatpush1.msra.mxu0 %v6755
        %7593 = vmatprep.subr.mxu0 0.0
        %7594 = vmatpush1.msra.mxu0 %v6756
        %7595 = vmatprep.subr.mxu0 0.0
        %7596 = vmatpush1.msra.mxu0 0.0
        %7597 = vmatprep.subr.mxu0 0.0
        %7598 = vmatpush1.msra.mxu0 0.0
        %7599 = vmatprep.subr.mxu0 0.0
        %7600 = vmatpush1.msra.mxu0 0.0
        %7601 = vmatprep.subr.mxu0 0.0
        %7602 = vmatpush1.msra.mxu0 0.0
        %7603 = vmatprep.subr.mxu0 0.0
        %7604 = vmatpush1.msra.mxu0 0.0
        %7605 = vmatprep.subr.mxu0 0.0
        %7606 = vmatpush1.msra.mxu0 0.0
        %7607 = vmatprep.subr.mxu0 0.0
        %7608 = vmatpush1.msra.mxu0 0.0
        %7609 = vmatprep.subr.mxu0 0.0
        %7610 = vmatpush1.msra.mxu0 0.0
        %7611 = vmatprep.subr.mxu0 0.0
        %7612 = vmatpush1.msra.mxu0 0.0
        %7613 = vmatprep.subr.mxu0 0.0
        %7614 = vmatpush1.msra.mxu0 0.0
        %7615 = vmatprep.subr.mxu0 0.0
        %7616 = vmatpush1.msra.mxu0 0.0
        %7617 = vmatprep.subr.mxu0 0.0
        %7618 = vmatpush1.msra.mxu0 0.0
        %7619 = vmatprep.subr.mxu0 0.0
        %7620 = vmatpush1.msra.mxu0 0.0
        %7621 = vmatprep.subr.mxu0 0.0
        %7622 = vmatpush1.msra.mxu0 0.0
        %7623 = vmatprep.subr.mxu0 0.0
        %7624 = vmatpush1.msra.mxu0 0.0
        %7625 = vmatprep.subr.mxu0 0.0
        %7626 = vmatpush1.msra.mxu0 0.0
        %7627 = vmatprep.subr.mxu0 0.0
        %7628 = vmatpush1.msra.mxu0 0.0
        %7629 = vmatprep.subr.mxu0 0.0
        %7630 = vmatpush1.msra.mxu0 0.0
        %7631 = vmatprep.subr.mxu0 0.0
        %7632 = vmatpush1.msra.mxu0 0.0
        %7633 = vmatprep.subr.mxu0 0.0
        %7634 = vmatpush1.msra.mxu0 0.0
        %7635 = vmatprep.subr.mxu0 0.0
        %7636 = vmatpush1.msra.mxu0 0.0
        %7637 = vmatprep.subr.mxu0 0.0
        %7638 = vmatpush1.msra.mxu0 0.0
        %7639 = vmatprep.subr.mxu0 0.0
        %7640 = vmatpush1.msra.mxu0 0.0
        %7641 = vmatprep.subr.mxu0 0.0
        %7642 = vmatpush1.msra.mxu0 0.0
        %7643 = vmatprep.subr.mxu0 0.0
        %7644 = vmatpush1.msra.mxu0 0.0
        %7645 = vmatprep.subr.mxu0 0.0
        %7646 = vmatpush1.msra.mxu0 0.0
        %7647 = vmatprep.subr.mxu0 0.0
        %7648 = vmatpush1.msra.mxu0 0.0
        %7649 = vmatprep.subr.mxu0 0.0
        %7650 = vmatpush1.msra.mxu0 0.0
        %7651 = vmatprep.mubr.f32.mxu0 0.0
        %7652 = vmatmul.mubr.f32.gmra.mrb[0].mxu0 %v7576
        %v7653 = vpop.f32.mrb[0].mxu0
        %v7654 = vadd.f32 0.0, %v7653
        %v7655 = vpop.f32.mrb[0].mxu0
        %7656 = vmatprep.mubr.f32.mxu0 0.0
        %7657 = vmatmul.mubr.f32.gmra.mrb[0].mxu0 %v7579
        %v7658 = vpop.f32.mrb[0].mxu0
        %v7659 = vadd.f32 0.0, %v7658
        %v7660 = vpop.f32.mrb[0].mxu0
        %7661 = vmatprep.mubr.f32.mxu0 0.0
        %7662 = vmatmul.mubr.f32.gmra.mrb[0].mxu0 %v7582
        %v7663 = vpop.f32.mrb[0].mxu0
        %v7664 = vadd.f32 0.0, %v7663
        %v7665 = vpop.f32.mrb[0].mxu0
        %7666 = vmatprep.mubr.f32.mxu0 0.0
        %7667 = vmatmul.mubr.f32.gmra.mrb[0].mxu0 %v7585
        %v7668 = vpop.f32.mrb[0].mxu0
        %v7669 = vadd.f32 0.0, %v7668
        %v7670 = vpop.f32.mrb[0].mxu0
        %7671 = vdwg.mxu0
        %vm7672 = vcmp.lt.s32.totalorder %v1664, 116
        %7673 = vrot.lane.b32.xlu0 %v7654, 116
        %v7674 = vpop.permute.xlu0 %7673
        %7675 = vrot.lane.b32.xlu0 %v7659, 116
        %v7676 = vpop.permute.xlu0 %7675
        %7677 = vrot.lane.b32.xlu0 %v7664, 116
        %v7678 = vpop.permute.xlu0 %7677
        %7679 = vrot.lane.b32.xlu0 %v7669, 116
        %v7680 = vpop.permute.xlu0 %7679
        %v7681 = vsel %vm7672, %v7674, 0.0
        %v7682 = vsel %vm7672, %v7676, 0.0
        %v7683 = vsel %vm7672, %v7678, 0.0
        %v7684 = vsel %vm7672, %v7680, 0.0
        %v7685 = vadd.f32 %v7566, %v7681
        %v7686 = vadd.f32 %v7567, %v7682
        %v7687 = vadd.f32 %v7568, %v7683
        %v7688 = vadd.f32 %v7569, %v7684
        %s7689 = scalar_lea.vmem %s49, 256
        %v7690 = vld [vmem:[%s7689] sm:$0xff]
        %v7691 = vld [vmem:[%s7689 + $0x8] sm:$0xff]
        %v7692 = vld [vmem:[%s7689 + $0x10] sm:$0xff]
        %v7693 = vld [vmem:[%s7689 + $0x18] sm:$0xff]
        %v7695 = vsel %vm1669, %v7690, 0
        %v7698 = vsel %vm1669, %v7691, 0
        %v7701 = vsel %vm1669, %v7692, 0
        %v7704 = vsel %vm1669, %v7693, 0
        %7706 = vmatprep.subr.mxu0 0.0
        %7707 = vmatpush1.msra.mxu0 %v6753
        %7708 = vmatprep.subr.mxu0 0.0
        %7709 = vmatpush1.msra.mxu0 %v6754
        %7710 = vmatprep.subr.mxu0 0.0
        %7711 = vmatpush1.msra.mxu0 %v6755
        %7712 = vmatprep.subr.mxu0 0.0
        %7713 = vmatpush1.msra.mxu0 %v6756
        %7714 = vmatprep.subr.mxu0 0.0
        %7715 = vmatpush1.msra.mxu0 0.0
        %7716 = vmatprep.subr.mxu0 0.0
        %7717 = vmatpush1.msra.mxu0 0.0
        %7718 = vmatprep.subr.mxu0 0.0
        %7719 = vmatpush1.msra.mxu0 0.0
        %7720 = vmatprep.subr.mxu0 0.0
        %7721 = vmatpush1.msra.mxu0 0.0
        %7722 = vmatprep.subr.mxu0 0.0
        %7723 = vmatpush1.msra.mxu0 0.0
        %7724 = vmatprep.subr.mxu0 0.0
        %7725 = vmatpush1.msra.mxu0 0.0
        %7726 = vmatprep.subr.mxu0 0.0
        %7727 = vmatpush1.msra.mxu0 0.0
        %7728 = vmatprep.subr.mxu0 0.0
        %7729 = vmatpush1.msra.mxu0 0.0
        %7730 = vmatprep.subr.mxu0 0.0
        %7731 = vmatpush1.msra.mxu0 0.0
        %7732 = vmatprep.subr.mxu0 0.0
        %7733 = vmatpush1.msra.mxu0 0.0
        %7734 = vmatprep.subr.mxu0 0.0
        %7735 = vmatpush1.msra.mxu0 0.0
        %7736 = vmatprep.subr.mxu0 0.0
        %7737 = vmatpush1.msra.mxu0 0.0
        %7738 = vmatprep.subr.mxu0 0.0
        %7739 = vmatpush1.msra.mxu0 0.0
        %7740 = vmatprep.subr.mxu0 0.0
        %7741 = vmatpush1.msra.mxu0 0.0
        %7742 = vmatprep.subr.mxu0 0.0
        %7743 = vmatpush1.msra.mxu0 0.0
        %7744 = vmatprep.subr.mxu0 0.0
        %7745 = vmatpush1.msra.mxu0 0.0
        %7746 = vmatprep.subr.mxu0 0.0
        %7747 = vmatpush1.msra.mxu0 0.0
        %7748 = vmatprep.subr.mxu0 0.0
        %7749 = vmatpush1.msra.mxu0 0.0
        %7750 = vmatprep.subr.mxu0 0.0
        %7751 = vmatpush1.msra.mxu0 0.0
        %7752 = vmatprep.subr.mxu0 0.0
        %7753 = vmatpush1.msra.mxu0 0.0
        %7754 = vmatprep.subr.mxu0 0.0
        %7755 = vmatpush1.msra.mxu0 0.0
        %7756 = vmatprep.subr.mxu0 0.0
        %7757 = vmatpush1.msra.mxu0 0.0
        %7758 = vmatprep.subr.mxu0 0.0
        %7759 = vmatpush1.msra.mxu0 0.0
        %7760 = vmatprep.subr.mxu0 0.0
        %7761 = vmatpush1.msra.mxu0 0.0
        %7762 = vmatprep.subr.mxu0 0.0
        %7763 = vmatpush1.msra.mxu0 0.0
        %7764 = vmatprep.subr.mxu0 0.0
        %7765 = vmatpush1.msra.mxu0 0.0
        %7766 = vmatprep.subr.mxu0 0.0
        %7767 = vmatpush1.msra.mxu0 0.0
        %7768 = vmatprep.subr.mxu0 0.0
        %7769 = vmatpush1.msra.mxu0 0.0
        %7770 = vmatprep.mubr.f32.mxu0 0.0
        %7771 = vmatmul.mubr.f32.gmra.mrb[0].mxu0 %v7695
        %v7772 = vpop.f32.mrb[0].mxu0
        %v7773 = vadd.f32 0.0, %v7772
        %v7774 = vpop.f32.mrb[0].mxu0
        %7775 = vmatprep.mubr.f32.mxu0 0.0
        %7776 = vmatmul.mubr.f32.gmra.mrb[0].mxu0 %v7698
        %v7777 = vpop.f32.mrb[0].mxu0
        %v7778 = vadd.f32 0.0, %v7777
        %v7779 = vpop.f32.mrb[0].mxu0
        %7780 = vmatprep.mubr.f32.mxu0 0.0
        %7781 = vmatmul.mubr.f32.gmra.mrb[0].mxu0 %v7701
        %v7782 = vpop.f32.mrb[0].mxu0
        %v7783 = vadd.f32 0.0, %v7782
        %v7784 = vpop.f32.mrb[0].mxu0
        %7785 = vmatprep.mubr.f32.mxu0 0.0
        %7786 = vmatmul.mubr.f32.gmra.mrb[0].mxu0 %v7704
        %v7787 = vpop.f32.mrb[0].mxu0
        %v7788 = vadd.f32 0.0, %v7787
        %v7789 = vpop.f32.mrb[0].mxu0
        %7790 = vdwg.mxu0
        %vm7791 = vcmp.lt.s32.totalorder %v1664, 112
        %7792 = vrot.lane.b32.xlu0 %v7773, 112
        %v7793 = vpop.permute.xlu0 %7792
        %7794 = vrot.lane.b32.xlu0 %v7778, 112
        %v7795 = vpop.permute.xlu0 %7794
        %7796 = vrot.lane.b32.xlu0 %v7783, 112
        %v7797 = vpop.permute.xlu0 %7796
        %7798 = vrot.lane.b32.xlu0 %v7788, 112
        %v7799 = vpop.permute.xlu0 %7798
        %v7800 = vsel %vm7791, %v7793, 0.0
        %v7801 = vsel %vm7791, %v7795, 0.0
        %v7802 = vsel %vm7791, %v7797, 0.0
        %v7803 = vsel %vm7791, %v7799, 0.0
        %v7804 = vadd.f32 %v7685, %v7800
        %v7805 = vadd.f32 %v7686, %v7801
        %v7806 = vadd.f32 %v7687, %v7802
        %v7807 = vadd.f32 %v7688, %v7803
        %v7808 = vld [vmem:[%s51] sm:$0xff]
        %v7809 = vld [vmem:[%s51 + $0x8] sm:$0xff]
        %v7810 = vld [vmem:[%s51 + $0x10] sm:$0xff]
        %v7811 = vld [vmem:[%s51 + $0x18] sm:$0xff]
        %7813 = vset.pattern.permute.xlu0 0
        %7814 = vperm.xlu0 %7813, %v7808
        %v7815 = vpop.permute.xlu0 %7814
        %7818 = vset.pattern.permute.xlu0 0
        %7819 = vperm.xlu0 %7818, %v7809
        %v7820 = vpop.permute.xlu0 %7819
        %7823 = vset.pattern.permute.xlu0 0
        %7824 = vperm.xlu0 %7823, %v7810
        %v7825 = vpop.permute.xlu0 %7824
        %7828 = vset.pattern.permute.xlu0 0
        %7829 = vperm.xlu0 %7828, %v7811
        %v7830 = vpop.permute.xlu0 %7829
        %v7832 = vadd.f32 %v7804, %v7815
        %v7833 = vadd.f32 %v7805, %v7820
        %v7834 = vadd.f32 %v7806, %v7825
        %v7835 = vadd.f32 %v7807, %v7830
        %v7836 = vld [vmem:[#allocation16] sm:$0xff]
        %v7837 = vld [vmem:[#allocation16 + $0x8] sm:$0xff]
        %v7838 = vld [vmem:[#allocation16 + $0x10] sm:$0xff]
        %v7839 = vld [vmem:[#allocation16 + $0x18] sm:$0xff]
        %v7840 = vld [vmem:[%s59] sm:$0xff]
        %v7841 = vld [vmem:[%s59 + $0x8] sm:$0xff]
        %v7842 = vld [vmem:[%s59 + $0x10] sm:$0xff]
        %v7843 = vld [vmem:[%s59 + $0x18] sm:$0xff]
        %7845 = vset.pattern.permute.xlu0 0
        %7846 = vperm.xlu0 %7845, %v7840
        %v7847 = vpop.permute.xlu0 %7846
        %7850 = vset.pattern.permute.xlu0 0
        %7851 = vperm.xlu0 %7850, %v7841
        %v7852 = vpop.permute.xlu0 %7851
        %7855 = vset.pattern.permute.xlu0 0
        %7856 = vperm.xlu0 %7855, %v7842
        %v7857 = vpop.permute.xlu0 %7856
        %7860 = vset.pattern.permute.xlu0 0
        %7861 = vperm.xlu0 %7860, %v7843
        %v7862 = vpop.permute.xlu0 %7861
        %v7865 = vsel %vm1669, %v7836, 0
        %v7868 = vsel %vm1669, %v7837, 0
        %v7871 = vsel %vm1669, %v7838, 0
        %v7874 = vsel %vm1669, %v7839, 0
        %7876 = vmatprep.subr.mxu0 0.0
        %7877 = vmatpush1.msra.mxu0 %v7832
        %7878 = vmatprep.subr.mxu0 0.0
        %7879 = vmatpush1.msra.mxu0 %v7833
        %7880 = vmatprep.subr.mxu0 0.0
        %7881 = vmatpush1.msra.mxu0 %v7834
        %7882 = vmatprep.subr.mxu0 0.0
        %7883 = vmatpush1.msra.mxu0 %v7835
        %7884 = vmatprep.subr.mxu0 0.0
        %7885 = vmatpush1.msra.mxu0 0.0
        %7886 = vmatprep.subr.mxu0 0.0
        %7887 = vmatpush1.msra.mxu0 0.0
        %7888 = vmatprep.subr.mxu0 0.0
        %7889 = vmatpush1.msra.mxu0 0.0
        %7890 = vmatprep.subr.mxu0 0.0
        %7891 = vmatpush1.msra.mxu0 0.0
        %7892 = vmatprep.subr.mxu0 0.0
        %7893 = vmatpush1.msra.mxu0 0.0
        %7894 = vmatprep.subr.mxu0 0.0
        %7895 = vmatpush1.msra.mxu0 0.0
        %7896 = vmatprep.subr.mxu0 0.0
        %7897 = vmatpush1.msra.mxu0 0.0
        %7898 = vmatprep.subr.mxu0 0.0
        %7899 = vmatpush1.msra.mxu0 0.0
        %7900 = vmatprep.subr.mxu0 0.0
        %7901 = vmatpush1.msra.mxu0 0.0
        %7902 = vmatprep.subr.mxu0 0.0
        %7903 = vmatpush1.msra.mxu0 0.0
        %7904 = vmatprep.subr.mxu0 0.0
        %7905 = vmatpush1.msra.mxu0 0.0
        %7906 = vmatprep.subr.mxu0 0.0
        %7907 = vmatpush1.msra.mxu0 0.0
        %7908 = vmatprep.subr.mxu0 0.0
        %7909 = vmatpush1.msra.mxu0 0.0
        %7910 = vmatprep.subr.mxu0 0.0
        %7911 = vmatpush1.msra.mxu0 0.0
        %7912 = vmatprep.subr.mxu0 0.0
        %7913 = vmatpush1.msra.mxu0 0.0
        %7914 = vmatprep.subr.mxu0 0.0
        %7915 = vmatpush1.msra.mxu0 0.0
        %7916 = vmatprep.subr.mxu0 0.0
        %7917 = vmatpush1.msra.mxu0 0.0
        %7918 = vmatprep.subr.mxu0 0.0
        %7919 = vmatpush1.msra.mxu0 0.0
        %7920 = vmatprep.subr.mxu0 0.0
        %7921 = vmatpush1.msra.mxu0 0.0
        %7922 = vmatprep.subr.mxu0 0.0
        %7923 = vmatpush1.msra.mxu0 0.0
        %7924 = vmatprep.subr.mxu0 0.0
        %7925 = vmatpush1.msra.mxu0 0.0
        %7926 = vmatprep.subr.mxu0 0.0
        %7927 = vmatpush1.msra.mxu0 0.0
        %7928 = vmatprep.subr.mxu0 0.0
        %7929 = vmatpush1.msra.mxu0 0.0
        %7930 = vmatprep.subr.mxu0 0.0
        %7931 = vmatpush1.msra.mxu0 0.0
        %7932 = vmatprep.subr.mxu0 0.0
        %7933 = vmatpush1.msra.mxu0 0.0
        %7934 = vmatprep.subr.mxu0 0.0
        %7935 = vmatpush1.msra.mxu0 0.0
        %7936 = vmatprep.subr.mxu0 0.0
        %7937 = vmatpush1.msra.mxu0 0.0
        %7938 = vmatprep.subr.mxu0 0.0
        %7939 = vmatpush1.msra.mxu0 0.0
        %7940 = vmatprep.mubr.f32.mxu0 0.0
        %7941 = vmatmul.mubr.f32.gmra.mrb[0].mxu0 %v7865
        %v7942 = vpop.f32.mrb[0].mxu0
        %v7943 = vadd.f32 %v7847, %v7942
        %v7944 = vpop.f32.mrb[0].mxu0
        %7945 = vmatprep.mubr.f32.mxu0 0.0
        %7946 = vmatmul.mubr.f32.gmra.mrb[0].mxu0 %v7868
        %v7947 = vpop.f32.mrb[0].mxu0
        %v7948 = vadd.f32 %v7852, %v7947
        %v7949 = vpop.f32.mrb[0].mxu0
        %7950 = vmatprep.mubr.f32.mxu0 0.0
        %7951 = vmatmul.mubr.f32.gmra.mrb[0].mxu0 %v7871
        %v7952 = vpop.f32.mrb[0].mxu0
        %v7953 = vadd.f32 %v7857, %v7952
        %v7954 = vpop.f32.mrb[0].mxu0
        %7955 = vmatprep.mubr.f32.mxu0 0.0
        %7956 = vmatmul.mubr.f32.gmra.mrb[0].mxu0 %v7874
        %v7957 = vpop.f32.mrb[0].mxu0
        %v7958 = vadd.f32 %v7862, %v7957
        %v7959 = vpop.f32.mrb[0].mxu0
        %7960 = vdwg.mxu0
        %v7961 = vld [vmem:[%s53] sm:$0xff]
        %v7962 = vld [vmem:[%s53 + $0x8] sm:$0xff]
        %v7963 = vld [vmem:[%s53 + $0x10] sm:$0xff]
        %v7964 = vld [vmem:[%s53 + $0x18] sm:$0xff]
        %v7966 = vsel %vm1669, %v7961, 0
        %v7969 = vsel %vm1669, %v7962, 0
        %v7972 = vsel %vm1669, %v7963, 0
        %v7975 = vsel %vm1669, %v7964, 0
        %7977 = vmatprep.subr.mxu0 0.0
        %7978 = vmatpush1.msra.mxu0 %v1585
        %7979 = vmatprep.subr.mxu0 0.0
        %7980 = vmatpush1.msra.mxu0 %v1590
        %7981 = vmatprep.subr.mxu0 0.0
        %7982 = vmatpush1.msra.mxu0 %v1595
        %7983 = vmatprep.subr.mxu0 0.0
        %7984 = vmatpush1.msra.mxu0 %v1600
        %7985 = vmatprep.subr.mxu0 0.0
        %7986 = vmatpush1.msra.mxu0 0.0
        %7987 = vmatprep.subr.mxu0 0.0
        %7988 = vmatpush1.msra.mxu0 0.0
        %7989 = vmatprep.subr.mxu0 0.0
        %7990 = vmatpush1.msra.mxu0 0.0
        %7991 = vmatprep.subr.mxu0 0.0
        %7992 = vmatpush1.msra.mxu0 0.0
        %7993 = vmatprep.subr.mxu0 0.0
        %7994 = vmatpush1.msra.mxu0 0.0
        %7995 = vmatprep.subr.mxu0 0.0
        %7996 = vmatpush1.msra.mxu0 0.0
        %7997 = vmatprep.subr.mxu0 0.0
        %7998 = vmatpush1.msra.mxu0 0.0
        %7999 = vmatprep.subr.mxu0 0.0
        %8000 = vmatpush1.msra.mxu0 0.0
        %8001 = vmatprep.subr.mxu0 0.0
        %8002 = vmatpush1.msra.mxu0 0.0
        %8003 = vmatprep.subr.mxu0 0.0
        %8004 = vmatpush1.msra.mxu0 0.0
        %8005 = vmatprep.subr.mxu0 0.0
        %8006 = vmatpush1.msra.mxu0 0.0
        %8007 = vmatprep.subr.mxu0 0.0
        %8008 = vmatpush1.msra.mxu0 0.0
        %8009 = vmatprep.subr.mxu0 0.0
        %8010 = vmatpush1.msra.mxu0 0.0
        %8011 = vmatprep.subr.mxu0 0.0
        %8012 = vmatpush1.msra.mxu0 0.0
        %8013 = vmatprep.subr.mxu0 0.0
        %8014 = vmatpush1.msra.mxu0 0.0
        %8015 = vmatprep.subr.mxu0 0.0
        %8016 = vmatpush1.msra.mxu0 0.0
        %8017 = vmatprep.subr.mxu0 0.0
        %8018 = vmatpush1.msra.mxu0 0.0
        %8019 = vmatprep.subr.mxu0 0.0
        %8020 = vmatpush1.msra.mxu0 0.0
        %8021 = vmatprep.subr.mxu0 0.0
        %8022 = vmatpush1.msra.mxu0 0.0
        %8023 = vmatprep.subr.mxu0 0.0
        %8024 = vmatpush1.msra.mxu0 0.0
        %8025 = vmatprep.subr.mxu0 0.0
        %8026 = vmatpush1.msra.mxu0 0.0
        %8027 = vmatprep.subr.mxu0 0.0
        %8028 = vmatpush1.msra.mxu0 0.0
        %8029 = vmatprep.subr.mxu0 0.0
        %8030 = vmatpush1.msra.mxu0 0.0
        %8031 = vmatprep.subr.mxu0 0.0
        %8032 = vmatpush1.msra.mxu0 0.0
        %8033 = vmatprep.subr.mxu0 0.0
        %8034 = vmatpush1.msra.mxu0 0.0
        %8035 = vmatprep.subr.mxu0 0.0
        %8036 = vmatpush1.msra.mxu0 0.0
        %8037 = vmatprep.subr.mxu0 0.0
        %8038 = vmatpush1.msra.mxu0 0.0
        %8039 = vmatprep.subr.mxu0 0.0
        %8040 = vmatpush1.msra.mxu0 0.0
        %8041 = vmatprep.mubr.f32.mxu0 0.0
        %8042 = vmatmul.mubr.f32.gmra.mrb[0].mxu0 %v7966
        %v8043 = vpop.f32.mrb[0].mxu0
        %v8044 = vadd.f32 0.0, %v8043
        %v8045 = vpop.f32.mrb[0].mxu0
        %8046 = vmatprep.mubr.f32.mxu0 0.0
        %8047 = vmatmul.mubr.f32.gmra.mrb[0].mxu0 %v7969
        %v8048 = vpop.f32.mrb[0].mxu0
        %v8049 = vadd.f32 0.0, %v8048
        %v8050 = vpop.f32.mrb[0].mxu0
        %8051 = vmatprep.mubr.f32.mxu0 0.0
        %8052 = vmatmul.mubr.f32.gmra.mrb[0].mxu0 %v7972
        %v8053 = vpop.f32.mrb[0].mxu0
        %v8054 = vadd.f32 0.0, %v8053
        %v8055 = vpop.f32.mrb[0].mxu0
        %8056 = vmatprep.mubr.f32.mxu0 0.0
        %8057 = vmatmul.mubr.f32.gmra.mrb[0].mxu0 %v7975
        %v8058 = vpop.f32.mrb[0].mxu0
        %v8059 = vadd.f32 0.0, %v8058
        %v8060 = vpop.f32.mrb[0].mxu0
        %8061 = vdwg.mxu0
        %8062 = vrot.lane.b32.xlu0 %v8044, 3
        %v8063 = vpop.permute.xlu0 %8062
        %8064 = vrot.lane.b32.xlu0 %v8049, 3
        %v8065 = vpop.permute.xlu0 %8064
        %8066 = vrot.lane.b32.xlu0 %v8054, 3
        %v8067 = vpop.permute.xlu0 %8066
        %8068 = vrot.lane.b32.xlu0 %v8059, 3
        %v8069 = vpop.permute.xlu0 %8068
        %v8070 = vsel %vm4493, %v8063, 0.0
        %v8071 = vsel %vm4493, %v8065, 0.0
        %v8072 = vsel %vm4493, %v8067, 0.0
        %v8073 = vsel %vm4493, %v8069, 0.0
        %s8074 = scalar_lea.vmem %s53, 32
        %v8075 = vld [vmem:[%s8074] sm:$0xff]
        %v8076 = vld [vmem:[%s8074 + $0x8] sm:$0xff]
        %v8077 = vld [vmem:[%s8074 + $0x10] sm:$0xff]
        %v8078 = vld [vmem:[%s8074 + $0x18] sm:$0xff]
        %v8080 = vsel %vm1669, %v8075, 0
        %v8083 = vsel %vm1669, %v8076, 0
        %v8086 = vsel %vm1669, %v8077, 0
        %v8089 = vsel %vm1669, %v8078, 0
        %8091 = vmatprep.subr.mxu0 0.0
        %8092 = vmatpush1.msra.mxu0 %v1585
        %8093 = vmatprep.subr.mxu0 0.0
        %8094 = vmatpush1.msra.mxu0 %v1590
        %8095 = vmatprep.subr.mxu0 0.0
        %8096 = vmatpush1.msra.mxu0 %v1595
        %8097 = vmatprep.subr.mxu0 0.0
        %8098 = vmatpush1.msra.mxu0 %v1600
        %8099 = vmatprep.subr.mxu0 0.0
        %8100 = vmatpush1.msra.mxu0 0.0
        %8101 = vmatprep.subr.mxu0 0.0
        %8102 = vmatpush1.msra.mxu0 0.0
        %8103 = vmatprep.subr.mxu0 0.0
        %8104 = vmatpush1.msra.mxu0 0.0
        %8105 = vmatprep.subr.mxu0 0.0
        %8106 = vmatpush1.msra.mxu0 0.0
        %8107 = vmatprep.subr.mxu0 0.0
        %8108 = vmatpush1.msra.mxu0 0.0
        %8109 = vmatprep.subr.mxu0 0.0
        %8110 = vmatpush1.msra.mxu0 0.0
        %8111 = vmatprep.subr.mxu0 0.0
        %8112 = vmatpush1.msra.mxu0 0.0
        %8113 = vmatprep.subr.mxu0 0.0
        %8114 = vmatpush1.msra.mxu0 0.0
        %8115 = vmatprep.subr.mxu0 0.0
        %8116 = vmatpush1.msra.mxu0 0.0
        %8117 = vmatprep.subr.mxu0 0.0
        %8118 = vmatpush1.msra.mxu0 0.0
        %8119 = vmatprep.subr.mxu0 0.0
        %8120 = vmatpush1.msra.mxu0 0.0
        %8121 = vmatprep.subr.mxu0 0.0
        %8122 = vmatpush1.msra.mxu0 0.0
        %8123 = vmatprep.subr.mxu0 0.0
        %8124 = vmatpush1.msra.mxu0 0.0
        %8125 = vmatprep.subr.mxu0 0.0
        %8126 = vmatpush1.msra.mxu0 0.0
        %8127 = vmatprep.subr.mxu0 0.0
        %8128 = vmatpush1.msra.mxu0 0.0
        %8129 = vmatprep.subr.mxu0 0.0
        %8130 = vmatpush1.msra.mxu0 0.0
        %8131 = vmatprep.subr.mxu0 0.0
        %8132 = vmatpush1.msra.mxu0 0.0
        %8133 = vmatprep.subr.mxu0 0.0
        %8134 = vmatpush1.msra.mxu0 0.0
        %8135 = vmatprep.subr.mxu0 0.0
        %8136 = vmatpush1.msra.mxu0 0.0
        %8137 = vmatprep.subr.mxu0 0.0
        %8138 = vmatpush1.msra.mxu0 0.0
        %8139 = vmatprep.subr.mxu0 0.0
        %8140 = vmatpush1.msra.mxu0 0.0
        %8141 = vmatprep.subr.mxu0 0.0
        %8142 = vmatpush1.msra.mxu0 0.0
        %8143 = vmatprep.subr.mxu0 0.0
        %8144 = vmatpush1.msra.mxu0 0.0
        %8145 = vmatprep.subr.mxu0 0.0
        %8146 = vmatpush1.msra.mxu0 0.0
        %8147 = vmatprep.subr.mxu0 0.0
        %8148 = vmatpush1.msra.mxu0 0.0
        %8149 = vmatprep.subr.mxu0 0.0
        %8150 = vmatpush1.msra.mxu0 0.0
        %8151 = vmatprep.subr.mxu0 0.0
        %8152 = vmatpush1.msra.mxu0 0.0
        %8153 = vmatprep.subr.mxu0 0.0
        %8154 = vmatpush1.msra.mxu0 0.0
        %8155 = vmatprep.mubr.f32.mxu0 0.0
        %8156 = vmatmul.mubr.f32.gmra.mrb[0].mxu0 %v8080
        %v8157 = vpop.f32.mrb[0].mxu0
        %v8158 = vadd.f32 0.0, %v8157
        %v8159 = vpop.f32.mrb[0].mxu0
        %8160 = vmatprep.mubr.f32.mxu0 0.0
        %8161 = vmatmul.mubr.f32.gmra.mrb[0].mxu0 %v8083
        %v8162 = vpop.f32.mrb[0].mxu0
        %v8163 = vadd.f32 0.0, %v8162
        %v8164 = vpop.f32.mrb[0].mxu0
        %8165 = vmatprep.mubr.f32.mxu0 0.0
        %8166 = vmatmul.mubr.f32.gmra.mrb[0].mxu0 %v8086
        %v8167 = vpop.f32.mrb[0].mxu0
        %v8168 = vadd.f32 0.0, %v8167
        %v8169 = vpop.f32.mrb[0].mxu0
        %8170 = vmatprep.mubr.f32.mxu0 0.0
        %8171 = vmatmul.mubr.f32.gmra.mrb[0].mxu0 %v8089
        %v8172 = vpop.f32.mrb[0].mxu0
        %v8173 = vadd.f32 0.0, %v8172
        %v8174 = vpop.f32.mrb[0].mxu0
        %8175 = vdwg.mxu0
        %8176 = vrot.lane.b32.xlu0 %v8158, 2
        %v8177 = vpop.permute.xlu0 %8176
        %8178 = vrot.lane.b32.xlu0 %v8163, 2
        %v8179 = vpop.permute.xlu0 %8178
        %8180 = vrot.lane.b32.xlu0 %v8168, 2
        %v8181 = vpop.permute.xlu0 %8180
        %8182 = vrot.lane.b32.xlu0 %v8173, 2
        %v8183 = vpop.permute.xlu0 %8182
        %v8184 = vsel %vm2249, %v8177, 0.0
        %v8185 = vsel %vm2249, %v8179, 0.0
        %v8186 = vsel %vm2249, %v8181, 0.0
        %v8187 = vsel %vm2249, %v8183, 0.0
        %v8188 = vadd.f32 %v8070, %v8184
        %v8189 = vadd.f32 %v8071, %v8185
        %v8190 = vadd.f32 %v8072, %v8186
        %v8191 = vadd.f32 %v8073, %v8187
        %s8192 = scalar_lea.vmem %s53, 64
        %v8193 = vld [vmem:[%s8192] sm:$0xff]
        %v8194 = vld [vmem:[%s8192 + $0x8] sm:$0xff]
        %v8195 = vld [vmem:[%s8192 + $0x10] sm:$0xff]
        %v8196 = vld [vmem:[%s8192 + $0x18] sm:$0xff]
        %v8198 = vsel %vm1669, %v8193, 0
        %v8201 = vsel %vm1669, %v8194, 0
        %v8204 = vsel %vm1669, %v8195, 0
        %v8207 = vsel %vm1669, %v8196, 0
        %8209 = vmatprep.subr.mxu0 0.0
        %8210 = vmatpush1.msra.mxu0 %v1585
        %8211 = vmatprep.subr.mxu0 0.0
        %8212 = vmatpush1.msra.mxu0 %v1590
        %8213 = vmatprep.subr.mxu0 0.0
        %8214 = vmatpush1.msra.mxu0 %v1595
        %8215 = vmatprep.subr.mxu0 0.0
        %8216 = vmatpush1.msra.mxu0 %v1600
        %8217 = vmatprep.subr.mxu0 0.0
        %8218 = vmatpush1.msra.mxu0 0.0
        %8219 = vmatprep.subr.mxu0 0.0
        %8220 = vmatpush1.msra.mxu0 0.0
        %8221 = vmatprep.subr.mxu0 0.0
        %8222 = vmatpush1.msra.mxu0 0.0
        %8223 = vmatprep.subr.mxu0 0.0
        %8224 = vmatpush1.msra.mxu0 0.0
        %8225 = vmatprep.subr.mxu0 0.0
        %8226 = vmatpush1.msra.mxu0 0.0
        %8227 = vmatprep.subr.mxu0 0.0
        %8228 = vmatpush1.msra.mxu0 0.0
        %8229 = vmatprep.subr.mxu0 0.0
        %8230 = vmatpush1.msra.mxu0 0.0
        %8231 = vmatprep.subr.mxu0 0.0
        %8232 = vmatpush1.msra.mxu0 0.0
        %8233 = vmatprep.subr.mxu0 0.0
        %8234 = vmatpush1.msra.mxu0 0.0
        %8235 = vmatprep.subr.mxu0 0.0
        %8236 = vmatpush1.msra.mxu0 0.0
        %8237 = vmatprep.subr.mxu0 0.0
        %8238 = vmatpush1.msra.mxu0 0.0
        %8239 = vmatprep.subr.mxu0 0.0
        %8240 = vmatpush1.msra.mxu0 0.0
        %8241 = vmatprep.subr.mxu0 0.0
        %8242 = vmatpush1.msra.mxu0 0.0
        %8243 = vmatprep.subr.mxu0 0.0
        %8244 = vmatpush1.msra.mxu0 0.0
        %8245 = vmatprep.subr.mxu0 0.0
        %8246 = vmatpush1.msra.mxu0 0.0
        %8247 = vmatprep.subr.mxu0 0.0
        %8248 = vmatpush1.msra.mxu0 0.0
        %8249 = vmatprep.subr.mxu0 0.0
        %8250 = vmatpush1.msra.mxu0 0.0
        %8251 = vmatprep.subr.mxu0 0.0
        %8252 = vmatpush1.msra.mxu0 0.0
        %8253 = vmatprep.subr.mxu0 0.0
        %8254 = vmatpush1.msra.mxu0 0.0
        %8255 = vmatprep.subr.mxu0 0.0
        %8256 = vmatpush1.msra.mxu0 0.0
        %8257 = vmatprep.subr.mxu0 0.0
        %8258 = vmatpush1.msra.mxu0 0.0
        %8259 = vmatprep.subr.mxu0 0.0
        %8260 = vmatpush1.msra.mxu0 0.0
        %8261 = vmatprep.subr.mxu0 0.0
        %8262 = vmatpush1.msra.mxu0 0.0
        %8263 = vmatprep.subr.mxu0 0.0
        %8264 = vmatpush1.msra.mxu0 0.0
        %8265 = vmatprep.subr.mxu0 0.0
        %8266 = vmatpush1.msra.mxu0 0.0
        %8267 = vmatprep.subr.mxu0 0.0
        %8268 = vmatpush1.msra.mxu0 0.0
        %8269 = vmatprep.subr.mxu0 0.0
        %8270 = vmatpush1.msra.mxu0 0.0
        %8271 = vmatprep.subr.mxu0 0.0
        %8272 = vmatpush1.msra.mxu0 0.0
        %8273 = vmatprep.mubr.f32.mxu0 0.0
        %8274 = vmatmul.mubr.f32.gmra.mrb[0].mxu0 %v8198
        %v8275 = vpop.f32.mrb[0].mxu0
        %v8276 = vadd.f32 0.0, %v8275
        %v8277 = vpop.f32.mrb[0].mxu0
        %8278 = vmatprep.mubr.f32.mxu0 0.0
        %8279 = vmatmul.mubr.f32.gmra.mrb[0].mxu0 %v8201
        %v8280 = vpop.f32.mrb[0].mxu0
        %v8281 = vadd.f32 0.0, %v8280
        %v8282 = vpop.f32.mrb[0].mxu0
        %8283 = vmatprep.mubr.f32.mxu0 0.0
        %8284 = vmatmul.mubr.f32.gmra.mrb[0].mxu0 %v8204
        %v8285 = vpop.f32.mrb[0].mxu0
        %v8286 = vadd.f32 0.0, %v8285
        %v8287 = vpop.f32.mrb[0].mxu0
        %8288 = vmatprep.mubr.f32.mxu0 0.0
        %8289 = vmatmul.mubr.f32.gmra.mrb[0].mxu0 %v8207
        %v8290 = vpop.f32.mrb[0].mxu0
        %v8291 = vadd.f32 0.0, %v8290
        %v8292 = vpop.f32.mrb[0].mxu0
        %8293 = vdwg.mxu0
        %8294 = vrot.lane.b32.xlu0 %v8276, 1
        %v8295 = vpop.permute.xlu0 %8294
        %8296 = vrot.lane.b32.xlu0 %v8281, 1
        %v8297 = vpop.permute.xlu0 %8296
        %8298 = vrot.lane.b32.xlu0 %v8286, 1
        %v8299 = vpop.permute.xlu0 %8298
        %8300 = vrot.lane.b32.xlu0 %v8291, 1
        %v8301 = vpop.permute.xlu0 %8300
        %v8302 = vsel %vm1767, %v8295, 0.0
        %v8303 = vsel %vm1767, %v8297, 0.0
        %v8304 = vsel %vm1767, %v8299, 0.0
        %v8305 = vsel %vm1767, %v8301, 0.0
        %v8306 = vadd.f32 %v8188, %v8302
        %v8307 = vadd.f32 %v8189, %v8303
        %v8308 = vadd.f32 %v8190, %v8304
        %v8309 = vadd.f32 %v8191, %v8305
        %s8310 = scalar_lea.vmem %s53, 96
        %v8311 = vld [vmem:[%s8310] sm:$0xff]
        %v8312 = vld [vmem:[%s8310 + $0x8] sm:$0xff]
        %v8313 = vld [vmem:[%s8310 + $0x10] sm:$0xff]
        %v8314 = vld [vmem:[%s8310 + $0x18] sm:$0xff]
        %v8316 = vsel %vm1669, %v8311, 0
        %v8319 = vsel %vm1669, %v8312, 0
        %v8322 = vsel %vm1669, %v8313, 0
        %v8325 = vsel %vm1669, %v8314, 0
        %8327 = vmatprep.subr.mxu0 0.0
        %8328 = vmatpush1.msra.mxu0 %v1585
        %8329 = vmatprep.subr.mxu0 0.0
        %8330 = vmatpush1.msra.mxu0 %v1590
        %8331 = vmatprep.subr.mxu0 0.0
        %8332 = vmatpush1.msra.mxu0 %v1595
        %8333 = vmatprep.subr.mxu0 0.0
        %8334 = vmatpush1.msra.mxu0 %v1600
        %8335 = vmatprep.subr.mxu0 0.0
        %8336 = vmatpush1.msra.mxu0 0.0
        %8337 = vmatprep.subr.mxu0 0.0
        %8338 = vmatpush1.msra.mxu0 0.0
        %8339 = vmatprep.subr.mxu0 0.0
        %8340 = vmatpush1.msra.mxu0 0.0
        %8341 = vmatprep.subr.mxu0 0.0
        %8342 = vmatpush1.msra.mxu0 0.0
        %8343 = vmatprep.subr.mxu0 0.0
        %8344 = vmatpush1.msra.mxu0 0.0
        %8345 = vmatprep.subr.mxu0 0.0
        %8346 = vmatpush1.msra.mxu0 0.0
        %8347 = vmatprep.subr.mxu0 0.0
        %8348 = vmatpush1.msra.mxu0 0.0
        %8349 = vmatprep.subr.mxu0 0.0
        %8350 = vmatpush1.msra.mxu0 0.0
        %8351 = vmatprep.subr.mxu0 0.0
        %8352 = vmatpush1.msra.mxu0 0.0
        %8353 = vmatprep.subr.mxu0 0.0
        %8354 = vmatpush1.msra.mxu0 0.0
        %8355 = vmatprep.subr.mxu0 0.0
        %8356 = vmatpush1.msra.mxu0 0.0
        %8357 = vmatprep.subr.mxu0 0.0
        %8358 = vmatpush1.msra.mxu0 0.0
        %8359 = vmatprep.subr.mxu0 0.0
        %8360 = vmatpush1.msra.mxu0 0.0
        %8361 = vmatprep.subr.mxu0 0.0
        %8362 = vmatpush1.msra.mxu0 0.0
        %8363 = vmatprep.subr.mxu0 0.0
        %8364 = vmatpush1.msra.mxu0 0.0
        %8365 = vmatprep.subr.mxu0 0.0
        %8366 = vmatpush1.msra.mxu0 0.0
        %8367 = vmatprep.subr.mxu0 0.0
        %8368 = vmatpush1.msra.mxu0 0.0
        %8369 = vmatprep.subr.mxu0 0.0
        %8370 = vmatpush1.msra.mxu0 0.0
        %8371 = vmatprep.subr.mxu0 0.0
        %8372 = vmatpush1.msra.mxu0 0.0
        %8373 = vmatprep.subr.mxu0 0.0
        %8374 = vmatpush1.msra.mxu0 0.0
        %8375 = vmatprep.subr.mxu0 0.0
        %8376 = vmatpush1.msra.mxu0 0.0
        %8377 = vmatprep.subr.mxu0 0.0
        %8378 = vmatpush1.msra.mxu0 0.0
        %8379 = vmatprep.subr.mxu0 0.0
        %8380 = vmatpush1.msra.mxu0 0.0
        %8381 = vmatprep.subr.mxu0 0.0
        %8382 = vmatpush1.msra.mxu0 0.0
        %8383 = vmatprep.subr.mxu0 0.0
        %8384 = vmatpush1.msra.mxu0 0.0
        %8385 = vmatprep.subr.mxu0 0.0
        %8386 = vmatpush1.msra.mxu0 0.0
        %8387 = vmatprep.subr.mxu0 0.0
        %8388 = vmatpush1.msra.mxu0 0.0
        %8389 = vmatprep.subr.mxu0 0.0
        %8390 = vmatpush1.msra.mxu0 0.0
        %8391 = vmatprep.mubr.f32.mxu0 0.0
        %8392 = vmatmul.mubr.f32.gmra.mrb[0].mxu0 %v8316
        %v8393 = vpop.f32.mrb[0].mxu0
        %v8394 = vadd.f32 0.0, %v8393
        %v8395 = vpop.f32.mrb[0].mxu0
        %8396 = vmatprep.mubr.f32.mxu0 0.0
        %8397 = vmatmul.mubr.f32.gmra.mrb[0].mxu0 %v8319
        %v8398 = vpop.f32.mrb[0].mxu0
        %v8399 = vadd.f32 0.0, %v8398
        %v8400 = vpop.f32.mrb[0].mxu0
        %8401 = vmatprep.mubr.f32.mxu0 0.0
        %8402 = vmatmul.mubr.f32.gmra.mrb[0].mxu0 %v8322
        %v8403 = vpop.f32.mrb[0].mxu0
        %v8404 = vadd.f32 0.0, %v8403
        %v8405 = vpop.f32.mrb[0].mxu0
        %8406 = vmatprep.mubr.f32.mxu0 0.0
        %8407 = vmatmul.mubr.f32.gmra.mrb[0].mxu0 %v8325
        %v8408 = vpop.f32.mrb[0].mxu0
        %v8409 = vadd.f32 0.0, %v8408
        %v8410 = vpop.f32.mrb[0].mxu0
        %8411 = vdwg.mxu0
        %v8412 = vadd.f32 %v8306, %v8394
        %v8413 = vadd.f32 %v8307, %v8399
        %v8414 = vadd.f32 %v8308, %v8404
        %v8415 = vadd.f32 %v8309, %v8409
        %s8416 = scalar_lea.vmem %s53, 128
        %v8417 = vld [vmem:[%s8416] sm:$0xff]
        %v8418 = vld [vmem:[%s8416 + $0x8] sm:$0xff]
        %v8419 = vld [vmem:[%s8416 + $0x10] sm:$0xff]
        %v8420 = vld [vmem:[%s8416 + $0x18] sm:$0xff]
        %v8422 = vsel %vm1669, %v8417, 0
        %v8425 = vsel %vm1669, %v8418, 0
        %v8428 = vsel %vm1669, %v8419, 0
        %v8431 = vsel %vm1669, %v8420, 0
        %8433 = vmatprep.subr.mxu0 0.0
        %8434 = vmatpush1.msra.mxu0 %v1585
        %8435 = vmatprep.subr.mxu0 0.0
        %8436 = vmatpush1.msra.mxu0 %v1590
        %8437 = vmatprep.subr.mxu0 0.0
        %8438 = vmatpush1.msra.mxu0 %v1595
        %8439 = vmatprep.subr.mxu0 0.0
        %8440 = vmatpush1.msra.mxu0 %v1600
        %8441 = vmatprep.subr.mxu0 0.0
        %8442 = vmatpush1.msra.mxu0 0.0
        %8443 = vmatprep.subr.mxu0 0.0
        %8444 = vmatpush1.msra.mxu0 0.0
        %8445 = vmatprep.subr.mxu0 0.0
        %8446 = vmatpush1.msra.mxu0 0.0
        %8447 = vmatprep.subr.mxu0 0.0
        %8448 = vmatpush1.msra.mxu0 0.0
        %8449 = vmatprep.subr.mxu0 0.0
        %8450 = vmatpush1.msra.mxu0 0.0
        %8451 = vmatprep.subr.mxu0 0.0
        %8452 = vmatpush1.msra.mxu0 0.0
        %8453 = vmatprep.subr.mxu0 0.0
        %8454 = vmatpush1.msra.mxu0 0.0
        %8455 = vmatprep.subr.mxu0 0.0
        %8456 = vmatpush1.msra.mxu0 0.0
        %8457 = vmatprep.subr.mxu0 0.0
        %8458 = vmatpush1.msra.mxu0 0.0
        %8459 = vmatprep.subr.mxu0 0.0
        %8460 = vmatpush1.msra.mxu0 0.0
        %8461 = vmatprep.subr.mxu0 0.0
        %8462 = vmatpush1.msra.mxu0 0.0
        %8463 = vmatprep.subr.mxu0 0.0
        %8464 = vmatpush1.msra.mxu0 0.0
        %8465 = vmatprep.subr.mxu0 0.0
        %8466 = vmatpush1.msra.mxu0 0.0
        %8467 = vmatprep.subr.mxu0 0.0
        %8468 = vmatpush1.msra.mxu0 0.0
        %8469 = vmatprep.subr.mxu0 0.0
        %8470 = vmatpush1.msra.mxu0 0.0
        %8471 = vmatprep.subr.mxu0 0.0
        %8472 = vmatpush1.msra.mxu0 0.0
        %8473 = vmatprep.subr.mxu0 0.0
        %8474 = vmatpush1.msra.mxu0 0.0
        %8475 = vmatprep.subr.mxu0 0.0
        %8476 = vmatpush1.msra.mxu0 0.0
        %8477 = vmatprep.subr.mxu0 0.0
        %8478 = vmatpush1.msra.mxu0 0.0
        %8479 = vmatprep.subr.mxu0 0.0
        %8480 = vmatpush1.msra.mxu0 0.0
        %8481 = vmatprep.subr.mxu0 0.0
        %8482 = vmatpush1.msra.mxu0 0.0
        %8483 = vmatprep.subr.mxu0 0.0
        %8484 = vmatpush1.msra.mxu0 0.0
        %8485 = vmatprep.subr.mxu0 0.0
        %8486 = vmatpush1.msra.mxu0 0.0
        %8487 = vmatprep.subr.mxu0 0.0
        %8488 = vmatpush1.msra.mxu0 0.0
        %8489 = vmatprep.subr.mxu0 0.0
        %8490 = vmatpush1.msra.mxu0 0.0
        %8491 = vmatprep.subr.mxu0 0.0
        %8492 = vmatpush1.msra.mxu0 0.0
        %8493 = vmatprep.subr.mxu0 0.0
        %8494 = vmatpush1.msra.mxu0 0.0
        %8495 = vmatprep.subr.mxu0 0.0
        %8496 = vmatpush1.msra.mxu0 0.0
        %8497 = vmatprep.mubr.f32.mxu0 0.0
        %8498 = vmatmul.mubr.f32.gmra.mrb[0].mxu0 %v8422
        %v8499 = vpop.f32.mrb[0].mxu0
        %v8500 = vadd.f32 0.0, %v8499
        %v8501 = vpop.f32.mrb[0].mxu0
        %8502 = vmatprep.mubr.f32.mxu0 0.0
        %8503 = vmatmul.mubr.f32.gmra.mrb[0].mxu0 %v8425
        %v8504 = vpop.f32.mrb[0].mxu0
        %v8505 = vadd.f32 0.0, %v8504
        %v8506 = vpop.f32.mrb[0].mxu0
        %8507 = vmatprep.mubr.f32.mxu0 0.0
        %8508 = vmatmul.mubr.f32.gmra.mrb[0].mxu0 %v8428
        %v8509 = vpop.f32.mrb[0].mxu0
        %v8510 = vadd.f32 0.0, %v8509
        %v8511 = vpop.f32.mrb[0].mxu0
        %8512 = vmatprep.mubr.f32.mxu0 0.0
        %8513 = vmatmul.mubr.f32.gmra.mrb[0].mxu0 %v8431
        %v8514 = vpop.f32.mrb[0].mxu0
        %v8515 = vadd.f32 0.0, %v8514
        %v8516 = vpop.f32.mrb[0].mxu0
        %8517 = vdwg.mxu0
        %8518 = vrot.lane.b32.xlu0 %v8500, 127
        %v8519 = vpop.permute.xlu0 %8518
        %8520 = vrot.lane.b32.xlu0 %v8505, 127
        %v8521 = vpop.permute.xlu0 %8520
        %8522 = vrot.lane.b32.xlu0 %v8510, 127
        %v8523 = vpop.permute.xlu0 %8522
        %8524 = vrot.lane.b32.xlu0 %v8515, 127
        %v8525 = vpop.permute.xlu0 %8524
        %v8526 = vsel %vm1988, %v8519, 0.0
        %v8527 = vsel %vm1988, %v8521, 0.0
        %v8528 = vsel %vm1988, %v8523, 0.0
        %v8529 = vsel %vm1988, %v8525, 0.0
        %v8530 = vadd.f32 %v8412, %v8526
        %v8531 = vadd.f32 %v8413, %v8527
        %v8532 = vadd.f32 %v8414, %v8528
        %v8533 = vadd.f32 %v8415, %v8529
        %s8534 = scalar_lea.vmem %s53, 160
        %v8535 = vld [vmem:[%s8534] sm:$0xff]
        %v8536 = vld [vmem:[%s8534 + $0x8] sm:$0xff]
        %v8537 = vld [vmem:[%s8534 + $0x10] sm:$0xff]
        %v8538 = vld [vmem:[%s8534 + $0x18] sm:$0xff]
        %v8540 = vsel %vm1669, %v8535, 0
        %v8543 = vsel %vm1669, %v8536, 0
        %v8546 = vsel %vm1669, %v8537, 0
        %v8549 = vsel %vm1669, %v8538, 0
        %8551 = vmatprep.subr.mxu0 0.0
        %8552 = vmatpush1.msra.mxu0 %v1585
        %8553 = vmatprep.subr.mxu0 0.0
        %8554 = vmatpush1.msra.mxu0 %v1590
        %8555 = vmatprep.subr.mxu0 0.0
        %8556 = vmatpush1.msra.mxu0 %v1595
        %8557 = vmatprep.subr.mxu0 0.0
        %8558 = vmatpush1.msra.mxu0 %v1600
        %8559 = vmatprep.subr.mxu0 0.0
        %8560 = vmatpush1.msra.mxu0 0.0
        %8561 = vmatprep.subr.mxu0 0.0
        %8562 = vmatpush1.msra.mxu0 0.0
        %8563 = vmatprep.subr.mxu0 0.0
        %8564 = vmatpush1.msra.mxu0 0.0
        %8565 = vmatprep.subr.mxu0 0.0
        %8566 = vmatpush1.msra.mxu0 0.0
        %8567 = vmatprep.subr.mxu0 0.0
        %8568 = vmatpush1.msra.mxu0 0.0
        %8569 = vmatprep.subr.mxu0 0.0
        %8570 = vmatpush1.msra.mxu0 0.0
        %8571 = vmatprep.subr.mxu0 0.0
        %8572 = vmatpush1.msra.mxu0 0.0
        %8573 = vmatprep.subr.mxu0 0.0
        %8574 = vmatpush1.msra.mxu0 0.0
        %8575 = vmatprep.subr.mxu0 0.0
        %8576 = vmatpush1.msra.mxu0 0.0
        %8577 = vmatprep.subr.mxu0 0.0
        %8578 = vmatpush1.msra.mxu0 0.0
        %8579 = vmatprep.subr.mxu0 0.0
        %8580 = vmatpush1.msra.mxu0 0.0
        %8581 = vmatprep.subr.mxu0 0.0
        %8582 = vmatpush1.msra.mxu0 0.0
        %8583 = vmatprep.subr.mxu0 0.0
        %8584 = vmatpush1.msra.mxu0 0.0
        %8585 = vmatprep.subr.mxu0 0.0
        %8586 = vmatpush1.msra.mxu0 0.0
        %8587 = vmatprep.subr.mxu0 0.0
        %8588 = vmatpush1.msra.mxu0 0.0
        %8589 = vmatprep.subr.mxu0 0.0
        %8590 = vmatpush1.msra.mxu0 0.0
        %8591 = vmatprep.subr.mxu0 0.0
        %8592 = vmatpush1.msra.mxu0 0.0
        %8593 = vmatprep.subr.mxu0 0.0
        %8594 = vmatpush1.msra.mxu0 0.0
        %8595 = vmatprep.subr.mxu0 0.0
        %8596 = vmatpush1.msra.mxu0 0.0
        %8597 = vmatprep.subr.mxu0 0.0
        %8598 = vmatpush1.msra.mxu0 0.0
        %8599 = vmatprep.subr.mxu0 0.0
        %8600 = vmatpush1.msra.mxu0 0.0
        %8601 = vmatprep.subr.mxu0 0.0
        %8602 = vmatpush1.msra.mxu0 0.0
        %8603 = vmatprep.subr.mxu0 0.0
        %8604 = vmatpush1.msra.mxu0 0.0
        %8605 = vmatprep.subr.mxu0 0.0
        %8606 = vmatpush1.msra.mxu0 0.0
        %8607 = vmatprep.subr.mxu0 0.0
        %8608 = vmatpush1.msra.mxu0 0.0
        %8609 = vmatprep.subr.mxu0 0.0
        %8610 = vmatpush1.msra.mxu0 0.0
        %8611 = vmatprep.subr.mxu0 0.0
        %8612 = vmatpush1.msra.mxu0 0.0
        %8613 = vmatprep.subr.mxu0 0.0
        %8614 = vmatpush1.msra.mxu0 0.0
        %8615 = vmatprep.mubr.f32.mxu0 0.0
        %8616 = vmatmul.mubr.f32.gmra.mrb[0].mxu0 %v8540
        %v8617 = vpop.f32.mrb[0].mxu0
        %v8618 = vadd.f32 0.0, %v8617
        %v8619 = vpop.f32.mrb[0].mxu0
        %8620 = vmatprep.mubr.f32.mxu0 0.0
        %8621 = vmatmul.mubr.f32.gmra.mrb[0].mxu0 %v8543
        %v8622 = vpop.f32.mrb[0].mxu0
        %v8623 = vadd.f32 0.0, %v8622
        %v8624 = vpop.f32.mrb[0].mxu0
        %8625 = vmatprep.mubr.f32.mxu0 0.0
        %8626 = vmatmul.mubr.f32.gmra.mrb[0].mxu0 %v8546
        %v8627 = vpop.f32.mrb[0].mxu0
        %v8628 = vadd.f32 0.0, %v8627
        %v8629 = vpop.f32.mrb[0].mxu0
        %8630 = vmatprep.mubr.f32.mxu0 0.0
        %8631 = vmatmul.mubr.f32.gmra.mrb[0].mxu0 %v8549
        %v8632 = vpop.f32.mrb[0].mxu0
        %v8633 = vadd.f32 0.0, %v8632
        %v8634 = vpop.f32.mrb[0].mxu0
        %8635 = vdwg.mxu0
        %8636 = vrot.lane.b32.xlu0 %v8618, 126
        %v8637 = vpop.permute.xlu0 %8636
        %8638 = vrot.lane.b32.xlu0 %v8623, 126
        %v8639 = vpop.permute.xlu0 %8638
        %8640 = vrot.lane.b32.xlu0 %v8628, 126
        %v8641 = vpop.permute.xlu0 %8640
        %8642 = vrot.lane.b32.xlu0 %v8633, 126
        %v8643 = vpop.permute.xlu0 %8642
        %v8644 = vsel %vm2474, %v8637, 0.0
        %v8645 = vsel %vm2474, %v8639, 0.0
        %v8646 = vsel %vm2474, %v8641, 0.0
        %v8647 = vsel %vm2474, %v8643, 0.0
        %v8648 = vadd.f32 %v8530, %v8644
        %v8649 = vadd.f32 %v8531, %v8645
        %v8650 = vadd.f32 %v8532, %v8646
        %v8651 = vadd.f32 %v8533, %v8647
        %s8652 = scalar_lea.vmem %s53, 192
        %v8653 = vld [vmem:[%s8652] sm:$0xff]
        %v8654 = vld [vmem:[%s8652 + $0x8] sm:$0xff]
        %v8655 = vld [vmem:[%s8652 + $0x10] sm:$0xff]
        %v8656 = vld [vmem:[%s8652 + $0x18] sm:$0xff]
        %v8658 = vsel %vm1669, %v8653, 0
        %v8661 = vsel %vm1669, %v8654, 0
        %v8664 = vsel %vm1669, %v8655, 0
        %v8667 = vsel %vm1669, %v8656, 0
        %8669 = vmatprep.subr.mxu0 0.0
        %8670 = vmatpush1.msra.mxu0 %v1585
        %8671 = vmatprep.subr.mxu0 0.0
        %8672 = vmatpush1.msra.mxu0 %v1590
        %8673 = vmatprep.subr.mxu0 0.0
        %8674 = vmatpush1.msra.mxu0 %v1595
        %8675 = vmatprep.subr.mxu0 0.0
        %8676 = vmatpush1.msra.mxu0 %v1600
        %8677 = vmatprep.subr.mxu0 0.0
        %8678 = vmatpush1.msra.mxu0 0.0
        %8679 = vmatprep.subr.mxu0 0.0
        %8680 = vmatpush1.msra.mxu0 0.0
        %8681 = vmatprep.subr.mxu0 0.0
        %8682 = vmatpush1.msra.mxu0 0.0
        %8683 = vmatprep.subr.mxu0 0.0
        %8684 = vmatpush1.msra.mxu0 0.0
        %8685 = vmatprep.subr.mxu0 0.0
        %8686 = vmatpush1.msra.mxu0 0.0
        %8687 = vmatprep.subr.mxu0 0.0
        %8688 = vmatpush1.msra.mxu0 0.0
        %8689 = vmatprep.subr.mxu0 0.0
        %8690 = vmatpush1.msra.mxu0 0.0
        %8691 = vmatprep.subr.mxu0 0.0
        %8692 = vmatpush1.msra.mxu0 0.0
        %8693 = vmatprep.subr.mxu0 0.0
        %8694 = vmatpush1.msra.mxu0 0.0
        %8695 = vmatprep.subr.mxu0 0.0
        %8696 = vmatpush1.msra.mxu0 0.0
        %8697 = vmatprep.subr.mxu0 0.0
        %8698 = vmatpush1.msra.mxu0 0.0
        %8699 = vmatprep.subr.mxu0 0.0
        %8700 = vmatpush1.msra.mxu0 0.0
        %8701 = vmatprep.subr.mxu0 0.0
        %8702 = vmatpush1.msra.mxu0 0.0
        %8703 = vmatprep.subr.mxu0 0.0
        %8704 = vmatpush1.msra.mxu0 0.0
        %8705 = vmatprep.subr.mxu0 0.0
        %8706 = vmatpush1.msra.mxu0 0.0
        %8707 = vmatprep.subr.mxu0 0.0
        %8708 = vmatpush1.msra.mxu0 0.0
        %8709 = vmatprep.subr.mxu0 0.0
        %8710 = vmatpush1.msra.mxu0 0.0
        %8711 = vmatprep.subr.mxu0 0.0
        %8712 = vmatpush1.msra.mxu0 0.0
        %8713 = vmatprep.subr.mxu0 0.0
        %8714 = vmatpush1.msra.mxu0 0.0
        %8715 = vmatprep.subr.mxu0 0.0
        %8716 = vmatpush1.msra.mxu0 0.0
        %8717 = vmatprep.subr.mxu0 0.0
        %8718 = vmatpush1.msra.mxu0 0.0
        %8719 = vmatprep.subr.mxu0 0.0
        %8720 = vmatpush1.msra.mxu0 0.0
        %8721 = vmatprep.subr.mxu0 0.0
        %8722 = vmatpush1.msra.mxu0 0.0
        %8723 = vmatprep.subr.mxu0 0.0
        %8724 = vmatpush1.msra.mxu0 0.0
        %8725 = vmatprep.subr.mxu0 0.0
        %8726 = vmatpush1.msra.mxu0 0.0
        %8727 = vmatprep.subr.mxu0 0.0
        %8728 = vmatpush1.msra.mxu0 0.0
        %8729 = vmatprep.subr.mxu0 0.0
        %8730 = vmatpush1.msra.mxu0 0.0
        %8731 = vmatprep.subr.mxu0 0.0
        %8732 = vmatpush1.msra.mxu0 0.0
        %8733 = vmatprep.mubr.f32.mxu0 0.0
        %8734 = vmatmul.mubr.f32.gmra.mrb[0].mxu0 %v8658
        %v8735 = vpop.f32.mrb[0].mxu0
        %v8736 = vadd.f32 0.0, %v8735
        %v8737 = vpop.f32.mrb[0].mxu0
        %8738 = vmatprep.mubr.f32.mxu0 0.0
        %8739 = vmatmul.mubr.f32.gmra.mrb[0].mxu0 %v8661
        %v8740 = vpop.f32.mrb[0].mxu0
        %v8741 = vadd.f32 0.0, %v8740
        %v8742 = vpop.f32.mrb[0].mxu0
        %8743 = vmatprep.mubr.f32.mxu0 0.0
        %8744 = vmatmul.mubr.f32.gmra.mrb[0].mxu0 %v8664
        %v8745 = vpop.f32.mrb[0].mxu0
        %v8746 = vadd.f32 0.0, %v8745
        %v8747 = vpop.f32.mrb[0].mxu0
        %8748 = vmatprep.mubr.f32.mxu0 0.0
        %8749 = vmatmul.mubr.f32.gmra.mrb[0].mxu0 %v8667
        %v8750 = vpop.f32.mrb[0].mxu0
        %v8751 = vadd.f32 0.0, %v8750
        %v8752 = vpop.f32.mrb[0].mxu0
        %8753 = vdwg.mxu0
        %8754 = vrot.lane.b32.xlu0 %v8736, 125
        %v8755 = vpop.permute.xlu0 %8754
        %8756 = vrot.lane.b32.xlu0 %v8741, 125
        %v8757 = vpop.permute.xlu0 %8756
        %8758 = vrot.lane.b32.xlu0 %v8746, 125
        %v8759 = vpop.permute.xlu0 %8758
        %8760 = vrot.lane.b32.xlu0 %v8751, 125
        %v8761 = vpop.permute.xlu0 %8760
        %v8762 = vsel %vm4718, %v8755, 0.0
        %v8763 = vsel %vm4718, %v8757, 0.0
        %v8764 = vsel %vm4718, %v8759, 0.0
        %v8765 = vsel %vm4718, %v8761, 0.0
        %v8766 = vadd.f32 %v8648, %v8762
        %v8767 = vadd.f32 %v8649, %v8763
        %v8768 = vadd.f32 %v8650, %v8764
        %v8769 = vadd.f32 %v8651, %v8765
        %v8770 = vld [vmem:[%s55] sm:$0xff]
        %v8771 = vld [vmem:[%s55 + $0x8] sm:$0xff]
        %v8772 = vld [vmem:[%s55 + $0x10] sm:$0xff]
        %v8773 = vld [vmem:[%s55 + $0x18] sm:$0xff]
        %8775 = vset.pattern.permute.xlu0 0
        %8776 = vperm.xlu0 %8775, %v8770
        %v8777 = vpop.permute.xlu0 %8776
        %8780 = vset.pattern.permute.xlu0 0
        %8781 = vperm.xlu0 %8780, %v8771
        %v8782 = vpop.permute.xlu0 %8781
        %8785 = vset.pattern.permute.xlu0 0
        %8786 = vperm.xlu0 %8785, %v8772
        %v8787 = vpop.permute.xlu0 %8786
        %8790 = vset.pattern.permute.xlu0 0
        %8791 = vperm.xlu0 %8790, %v8773
        %v8792 = vpop.permute.xlu0 %8791
        %v8794 = vadd.f32 %v8766, %v8777
        %v8795 = vadd.f32 %v8767, %v8782
        %v8796 = vadd.f32 %v8768, %v8787
        %v8797 = vadd.f32 %v8769, %v8792
        %v8798 = vmul.f32 %v7943, %v8794
        %v8799 = vmul.f32 %v7948, %v8795
        %v8800 = vmul.f32 %v7953, %v8796
        %v8801 = vmul.f32 %v7958, %v8797
        %v8802 = vmul.f32 %v1645, %v8798
        %v8803 = vmul.f32 %v1650, %v8799
        %v8804 = vmul.f32 %v1655, %v8800
        %v8805 = vmul.f32 %v1660, %v8801
        %v8806 = vld [vmem:[%s61] sm:$0xff]
        %v8807 = vld [vmem:[%s61 + $0x8] sm:$0xff]
        %v8808 = vld [vmem:[%s61 + $0x10] sm:$0xff]
        %v8809 = vld [vmem:[%s61 + $0x18] sm:$0xff]
        %v8810 = vld [vmem:[%s61 + $0x20] sm:$0xff]
        %v8811 = vld [vmem:[%s61 + $0x28] sm:$0xff]
        %v8812 = vld [vmem:[%s61 + $0x30] sm:$0xff]
        %v8813 = vld [vmem:[%s61 + $0x38] sm:$0xff]
        %v8814 = vld [vmem:[%s61 + $0x40] sm:$0xff]
        %v8815 = vld [vmem:[%s61 + $0x48] sm:$0xff]
        %v8816 = vld [vmem:[%s61 + $0x50] sm:$0xff]
        %v8817 = vld [vmem:[%s61 + $0x58] sm:$0xff]
        %v8819 = vsel %vm1669, %v8806, 0
        %v8822 = vsel %vm1669, %v8807, 0
        %v8825 = vsel %vm1669, %v8808, 0
        %v8828 = vsel %vm1669, %v8809, 0
        %v8831 = vsel %vm1669, %v8810, 0
        %v8834 = vsel %vm1669, %v8811, 0
        %v8837 = vsel %vm1669, %v8812, 0
        %v8840 = vsel %vm1669, %v8813, 0
        %v8843 = vsel %vm1669, %v8814, 0
        %v8846 = vsel %vm1669, %v8815, 0
        %v8849 = vsel %vm1669, %v8816, 0
        %v8852 = vsel %vm1669, %v8817, 0
        %8854 = vmatprep.subr.mxu0 0.0
        %8855 = vmatpush1.msra.mxu0 %v8802
        %8856 = vmatprep.subr.mxu0 0.0
        %8857 = vmatpush1.msra.mxu0 %v8803
        %8858 = vmatprep.subr.mxu0 0.0
        %8859 = vmatpush1.msra.mxu0 %v8804
        %8860 = vmatprep.subr.mxu0 0.0
        %8861 = vmatpush1.msra.mxu0 %v8805
        %8862 = vmatprep.subr.mxu0 0.0
        %8863 = vmatpush1.msra.mxu0 0.0
        %8864 = vmatprep.subr.mxu0 0.0
        %8865 = vmatpush1.msra.mxu0 0.0
        %8866 = vmatprep.subr.mxu0 0.0
        %8867 = vmatpush1.msra.mxu0 0.0
        %8868 = vmatprep.subr.mxu0 0.0
        %8869 = vmatpush1.msra.mxu0 0.0
        %8870 = vmatprep.subr.mxu0 0.0
        %8871 = vmatpush1.msra.mxu0 0.0
        %8872 = vmatprep.subr.mxu0 0.0
        %8873 = vmatpush1.msra.mxu0 0.0
        %8874 = vmatprep.subr.mxu0 0.0
        %8875 = vmatpush1.msra.mxu0 0.0
        %8876 = vmatprep.subr.mxu0 0.0
        %8877 = vmatpush1.msra.mxu0 0.0
        %8878 = vmatprep.subr.mxu0 0.0
        %8879 = vmatpush1.msra.mxu0 0.0
        %8880 = vmatprep.subr.mxu0 0.0
        %8881 = vmatpush1.msra.mxu0 0.0
        %8882 = vmatprep.subr.mxu0 0.0
        %8883 = vmatpush1.msra.mxu0 0.0
        %8884 = vmatprep.subr.mxu0 0.0
        %8885 = vmatpush1.msra.mxu0 0.0
        %8886 = vmatprep.subr.mxu0 0.0
        %8887 = vmatpush1.msra.mxu0 0.0
        %8888 = vmatprep.subr.mxu0 0.0
        %8889 = vmatpush1.msra.mxu0 0.0
        %8890 = vmatprep.subr.mxu0 0.0
        %8891 = vmatpush1.msra.mxu0 0.0
        %8892 = vmatprep.subr.mxu0 0.0
        %8893 = vmatpush1.msra.mxu0 0.0
        %8894 = vmatprep.subr.mxu0 0.0
        %8895 = vmatpush1.msra.mxu0 0.0
        %8896 = vmatprep.subr.mxu0 0.0
        %8897 = vmatpush1.msra.mxu0 0.0
        %8898 = vmatprep.subr.mxu0 0.0
        %8899 = vmatpush1.msra.mxu0 0.0
        %8900 = vmatprep.subr.mxu0 0.0
        %8901 = vmatpush1.msra.mxu0 0.0
        %8902 = vmatprep.subr.mxu0 0.0
        %8903 = vmatpush1.msra.mxu0 0.0
        %8904 = vmatprep.subr.mxu0 0.0
        %8905 = vmatpush1.msra.mxu0 0.0
        %8906 = vmatprep.subr.mxu0 0.0
        %8907 = vmatpush1.msra.mxu0 0.0
        %8908 = vmatprep.subr.mxu0 0.0
        %8909 = vmatpush1.msra.mxu0 0.0
        %8910 = vmatprep.subr.mxu0 0.0
        %8911 = vmatpush1.msra.mxu0 0.0
        %8912 = vmatprep.subr.mxu0 0.0
        %8913 = vmatpush1.msra.mxu0 0.0
        %8914 = vmatprep.subr.mxu0 0.0
        %8915 = vmatpush1.msra.mxu0 0.0
        %8916 = vmatprep.subr.mxu0 0.0
        %8917 = vmatpush1.msra.mxu0 0.0
        %8918 = vmatprep.mubr.f32.mxu0 0.0
        %8919 = vmatmul.mubr.f32.gmra.mrb[0].mxu0 %v8819
        %v8920 = vpop.f32.mrb[0].mxu0
        %v8921 = vadd.f32 0.0, %v8920
        %v8922 = vpop.f32.mrb[0].mxu0
        %8923 = vmatprep.mubr.f32.mxu0 0.0
        %8924 = vmatmul.mubr.f32.gmra.mrb[0].mxu0 %v8822
        %v8925 = vpop.f32.mrb[0].mxu0
        %v8926 = vadd.f32 0.0, %v8925
        %v8927 = vpop.f32.mrb[0].mxu0
        %8928 = vmatprep.mubr.f32.mxu0 0.0
        %8929 = vmatmul.mubr.f32.gmra.mrb[0].mxu0 %v8825
        %v8930 = vpop.f32.mrb[0].mxu0
        %v8931 = vadd.f32 0.0, %v8930
        %v8932 = vpop.f32.mrb[0].mxu0
        %8933 = vmatprep.mubr.f32.mxu0 0.0
        %8934 = vmatmul.mubr.f32.gmra.mrb[0].mxu0 %v8828
        %v8935 = vpop.f32.mrb[0].mxu0
        %v8936 = vadd.f32 0.0, %v8935
        %v8937 = vpop.f32.mrb[0].mxu0
        %8938 = vmatprep.mubr.f32.mxu0 0.0
        %8939 = vmatmul.mubr.f32.gmra.mrb[0].mxu0 %v8831
        %v8940 = vpop.f32.mrb[0].mxu0
        %v8941 = vadd.f32 0.0, %v8940
        %v8942 = vpop.f32.mrb[0].mxu0
        %8943 = vmatprep.mubr.f32.mxu0 0.0
        %8944 = vmatmul.mubr.f32.gmra.mrb[0].mxu0 %v8834
        %v8945 = vpop.f32.mrb[0].mxu0
        %v8946 = vadd.f32 0.0, %v8945
        %v8947 = vpop.f32.mrb[0].mxu0
        %8948 = vmatprep.mubr.f32.mxu0 0.0
        %8949 = vmatmul.mubr.f32.gmra.mrb[0].mxu0 %v8837
        %v8950 = vpop.f32.mrb[0].mxu0
        %v8951 = vadd.f32 0.0, %v8950
        %v8952 = vpop.f32.mrb[0].mxu0
        %8953 = vmatprep.mubr.f32.mxu0 0.0
        %8954 = vmatmul.mubr.f32.gmra.mrb[0].mxu0 %v8840
        %v8955 = vpop.f32.mrb[0].mxu0
        %v8956 = vadd.f32 0.0, %v8955
        %v8957 = vpop.f32.mrb[0].mxu0
        %8958 = vmatprep.mubr.f32.mxu0 0.0
        %8959 = vmatmul.mubr.f32.gmra.mrb[0].mxu0 %v8843
        %v8960 = vpop.f32.mrb[0].mxu0
        %v8961 = vadd.f32 0.0, %v8960
        %v8962 = vpop.f32.mrb[0].mxu0
        %8963 = vmatprep.mubr.f32.mxu0 0.0
        %8964 = vmatmul.mubr.f32.gmra.mrb[0].mxu0 %v8846
        %v8965 = vpop.f32.mrb[0].mxu0
        %v8966 = vadd.f32 0.0, %v8965
        %v8967 = vpop.f32.mrb[0].mxu0
        %8968 = vmatprep.mubr.f32.mxu0 0.0
        %8969 = vmatmul.mubr.f32.gmra.mrb[0].mxu0 %v8849
        %v8970 = vpop.f32.mrb[0].mxu0
        %v8971 = vadd.f32 0.0, %v8970
        %v8972 = vpop.f32.mrb[0].mxu0
        %8973 = vmatprep.mubr.f32.mxu0 0.0
        %8974 = vmatmul.mubr.f32.gmra.mrb[0].mxu0 %v8852
        %v8975 = vpop.f32.mrb[0].mxu0
        %v8976 = vadd.f32 0.0, %v8975
        %v8977 = vpop.f32.mrb[0].mxu0
        %8978 = vdwg.mxu0
        %v8979 = vadd.f32 %v5908, %v8921
        %v8980 = vadd.f32 %v5909, %v8926
        %v8981 = vadd.f32 %v5910, %v8931
        %v8982 = vadd.f32 %v5911, %v8936
        %v8983 = vadd.f32 %v5912, %v8941
        %v8984 = vadd.f32 %v5913, %v8946
        %v8985 = vadd.f32 %v5914, %v8951
        %v8986 = vadd.f32 %v5915, %v8956
        %v8987 = vadd.f32 %v5916, %v8961
        %v8988 = vadd.f32 %v5917, %v8966
        %v8989 = vadd.f32 %v5918, %v8971
        %v8990 = vadd.f32 %v5919, %v8976
        %v8991 = vld [vmem:[%s7] sm:$0xff]
        %v8992 = vld [vmem:[%s7 + $0x8] sm:$0xff]
        %v8993 = vld [vmem:[%s7 + $0x10] sm:$0xff]
        %v8994 = vld [vmem:[%s7 + $0x18] sm:$0xff]
        %v8995 = vld [vmem:[%s7 + $0x20] sm:$0xff]
        %v8996 = vld [vmem:[%s7 + $0x28] sm:$0xff]
        %v8997 = vld [vmem:[%s7 + $0x30] sm:$0xff]
        %v8998 = vld [vmem:[%s7 + $0x38] sm:$0xff]
        %v8999 = vld [vmem:[%s7 + $0x40] sm:$0xff]
        %v9000 = vld [vmem:[%s7 + $0x48] sm:$0xff]
        %v9001 = vld [vmem:[%s7 + $0x50] sm:$0xff]
        %v9002 = vld [vmem:[%s7 + $0x58] sm:$0xff]
        %9004 = vset.pattern.permute.xlu0 0
        %9005 = vperm.xlu0 %9004, %v8991
        %v9006 = vpop.permute.xlu0 %9005
        %9009 = vset.pattern.permute.xlu0 0
        %9010 = vperm.xlu0 %9009, %v8992
        %v9011 = vpop.permute.xlu0 %9010
        %9014 = vset.pattern.permute.xlu0 0
        %9015 = vperm.xlu0 %9014, %v8993
        %v9016 = vpop.permute.xlu0 %9015
        %9019 = vset.pattern.permute.xlu0 0
        %9020 = vperm.xlu0 %9019, %v8994
        %v9021 = vpop.permute.xlu0 %9020
        %9024 = vset.pattern.permute.xlu0 0
        %9025 = vperm.xlu0 %9024, %v8995
        %v9026 = vpop.permute.xlu0 %9025
        %9029 = vset.pattern.permute.xlu0 0
        %9030 = vperm.xlu0 %9029, %v8996
        %v9031 = vpop.permute.xlu0 %9030
        %9034 = vset.pattern.permute.xlu0 0
        %9035 = vperm.xlu0 %9034, %v8997
        %v9036 = vpop.permute.xlu0 %9035
        %9039 = vset.pattern.permute.xlu0 0
        %9040 = vperm.xlu0 %9039, %v8998
        %v9041 = vpop.permute.xlu0 %9040
        %9044 = vset.pattern.permute.xlu0 0
        %9045 = vperm.xlu0 %9044, %v8999
        %v9046 = vpop.permute.xlu0 %9045
        %9049 = vset.pattern.permute.xlu0 0
        %9050 = vperm.xlu0 %9049, %v9000
        %v9051 = vpop.permute.xlu0 %9050
        %9054 = vset.pattern.permute.xlu0 0
        %9055 = vperm.xlu0 %9054, %v9001
        %v9056 = vpop.permute.xlu0 %9055
        %9059 = vset.pattern.permute.xlu0 0
        %9060 = vperm.xlu0 %9059, %v9002
        %v9061 = vpop.permute.xlu0 %9060
        %v9063 = vadd.f32 %v8979, %v9006
        %v9064 = vadd.f32 %v8980, %v9011
        %v9065 = vadd.f32 %v8981, %v9016
        %v9066 = vadd.f32 %v8982, %v9021
        %v9067 = vadd.f32 %v8983, %v9026
        %v9068 = vadd.f32 %v8984, %v9031
        %v9069 = vadd.f32 %v8985, %v9036
        %v9070 = vadd.f32 %v8986, %v9041
        %v9071 = vadd.f32 %v8987, %v9046
        %v9072 = vadd.f32 %v8988, %v9051
        %v9073 = vadd.f32 %v8989, %v9056
        %v9074 = vadd.f32 %v8990, %v9061
        %9075 = vst [vmem:[%s1092] sm:$0xff] %v9063
        %9076 = vst [vmem:[%s1092 + $0x8] sm:$0xff] %v9064
        %9077 = vst [vmem:[%s1092 + $0x10] sm:$0xff] %v9065
        %9078 = vst [vmem:[%s1092 + $0x18] sm:$0xff] %v9066
        %9079 = vst [vmem:[%s1092 + $0x20] sm:$0xff] %v9067
        %9080 = vst [vmem:[%s1092 + $0x28] sm:$0xff] %v9068
        %9081 = vst [vmem:[%s1092 + $0x30] sm:$0xff] %v9069
        %9082 = vst [vmem:[%s1092 + $0x38] sm:$0xff] %v9070
        %9083 = vst [vmem:[%s1092 + $0x40] sm:$0xff] %v9071
        %9084 = vst [vmem:[%s1092 + $0x48] sm:$0xff] %v9072
        %9085 = vst [vmem:[%s1092 + $0x50] sm:$0xff] %v9073
        %9086 = vst [vmem:[%s1092 + $0x58] sm:$0xff] %v9074
        %s9087 = sand.u32 %s748, 1
        %s9088 = scalar_lea.sflag [#allocation4], %s9087
        %s9089 = sand.u32 %s748, 1
        %s9090 = smul.addr %s9089, 96
        %s9091 = scalar_lea.vmem [#allocation17], %s9090
        // Predicated region
        $region181: #{tpu_custom_call.1} parent=143 // pred_check
          %p9092 = pneg %p758
        $region182: #{tpu_custom_call.1} parent=143 // pred_check_branch
          %9094 = sbr.rel (%p9092) target = $region184
        $region183: #{tpu_custom_call.1} parent=143 // pred_region
          %s9096 = ssub.s32 1536, 1536
          %9097 = vsyncadd %s9088, %s9096
          %s9098 = smul.addr %s84, 12
          %s9099 = smul.addr %s9098, 128
          %s9100 = scalar_lea.hbm %s63, %s9099
          %s9101 = sshll.u32 %s9091, 4
          %s9102 = int_to_ptr.vmem [resolvable:$true] %s9101
          %9107 = dma.vmem_to_hbm [thread:$0]  %s9102, 1536, %s9100, %s9088, 128, 128, 8
        $region184: #{tpu_custom_call.1} parent=143 // pred_fallthru
          _
      $region144: #{tpu_custom_call.1} parent=5 // pred_fallthru
        _
      %p9108 = scmp.le.s32.totalorder 2, %s79
      // Predicated region
      $region185: #{tpu_custom_call.1} parent=5 // pred_check
        %p9109 = pneg %p9108
      $region186: #{tpu_custom_call.1} parent=5 // pred_check_branch
        %9111 = sbr.rel (%p9109) target = $region188
      $region187: #{tpu_custom_call.1} parent=5 // pred_region
        %s9112 = ssub.s32 %s79, 2
        // Predicated region
        $region189: #{tpu_custom_call.1} parent=187 // pred_check
          %p9113 = pneg %p764
        $region190: #{tpu_custom_call.1} parent=187 // pred_check_branch
          %9115 = sbr.rel (%p9113) target = $region192
        $region191: #{tpu_custom_call.1} parent=187 // pred_region
          %s9116 = sand.u32 %s749, 1
          %s9117 = scalar_lea.sflag [#allocation4], %s9116
          %s9118 = sand.u32 %s749, 1
          %s9119 = smul.addr %s9118, 96
          %s9120 = scalar_lea.vmem [#allocation17], %s9119
          %9121 = dma.done %s9117, 1536
        $region192: #{tpu_custom_call.1} parent=187 // pred_fallthru
          _
      $region188: #{tpu_custom_call.1} parent=5 // pred_fallthru
        _
    $region6: #{tpu_custom_call.1} parent=1 // loop_footer
      %s83 = sadd.s32 1, %s79
    $region7: #{tpu_custom_call.1} parent=1 // loop_footer_branch
      %78 = sbr.rel target = $region3
    $region8: #{tpu_custom_call.1} parent=1 // loop_exit
      _
    %9122 = vsyncpa [#allocation3], 1
    %s9123 = scalar_lea.sflag [#allocation3], 1
    %9124 = vsyncpa %s9123, 1
    %9125 = vsyncpa [#allocation6], 1
    %9126 = vsyncpa [#allocation9], 1
    %9127 = vsyncpa [#allocation12], 1
    %9128 = vsyncpa [#allocation15], 1
    %9129 = vsyncpa [#allocation4], 1
    %s9130 = scalar_lea.sflag [#allocation4], 1
    %9131 = vsyncpa %s9130, 1

</llo_original>
